<compile_context>
chip_gen: v5e
topology: v5e:2x2
jax: 0.10.0
libtpu: 0.0.40
codegen_flags: <defaults>
</compile_context>

<pallas_src>
import jax
import jax.numpy as jnp
from jax.experimental import pallas as pl
from jax.experimental.pallas import tpu as pltpu

CPAD = 128  # lane-dense channel padding (one full vreg lane width)


# ---------------------------------------------------------------------------
# Kernel
# ---------------------------------------------------------------------------
def conv_block_kernel(x_ref, w1_ref, b1_ref, g1_ref, be1_ref,
                      w2_ref, b2_ref, g2_ref, be2_ref,
                      o_ref, xpad_ref):
    """Fully fused conv_block forward.

    x_ref    : (N, H, W, Cin)        input, f32, NHWC
    w*_ref   : (9, CPAD, CPAD)       conv weights, tap-major (kw*3+kh), padded
    b*/g*/be*: (1, CPAD)             conv bias / BN gamma / BN beta, f32, padded
    o_ref    : (N*H*W, CPAD)         lane-dense output slab, f32
    xpad_ref : (N, H+2, W+2, CPAD)   VMEM scratch: padded activation (reused)
    """
    N, H, W, cin = x_ref.shape
    cpad = xpad_ref.shape[-1]
    M = N * H * W
    inv_m = 1.0 / float(M)
    adt = xpad_ref.dtype                       # MXU operand dtype (f32 / bf16)

    # ---- zero ONLY the 1-pixel border strips of the padded scratch ----------
    xpad_ref[:, 0:1, :, :] = jnp.zeros((N, 1, W + 2, cpad), adt)
    xpad_ref[:, H + 1:H + 2, :, :] = jnp.zeros((N, 1, W + 2, cpad), adt)
    xpad_ref[:, :, 0:1, :] = jnp.zeros((N, H + 2, 1, cpad), adt)
    xpad_ref[:, :, W + 1:W + 2, :] = jnp.zeros((N, H + 2, 1, cpad), adt)

    # ---- interior: channel-pad the input to the full 128 lanes, dense store -
    x = x_ref[...].astype(adt)
    if cin < cpad:
        x = jnp.concatenate(
            [x, jnp.zeros((N, H, W, cpad - cin), adt)], axis=-1)
    xpad_ref[:, 1:H + 1, 1:W + 1, :] = x

    def conv_bn_relu(w_ref, b_ref, g_ref, be_ref):
        # Direct per-tap accumulation (no materialized im2col patch).
        # The dx-shifted load (W = sublane axis -> relayout) is hoisted out of
        # the tap loop; the 3 dy (H-axis) slices of the loaded value are free.
        acc = jnp.zeros((M, cpad), jnp.float32)
        for dx in range(3):                                  # dx == kw
            x_dx = xpad_ref[:, :, dx:dx + W, :]              # (N, H+2, W, cpad)
            for dy in range(3):                              # dy == kh
                piece = x_dx[:, dy:dy + H, :, :].reshape(M, cpad)
                acc = acc + jnp.dot(piece, w_ref[dx * 3 + dy],
                                    preferred_element_type=jnp.float32)
        acc = acc + b_ref[...]                               # conv bias

        # BatchNorm2d training-mode forward: batch stats over N*H*W, biased
        # variance, eps=1e-5.  Two-pass (centered) variance in f32.
        mean = jnp.sum(acc, axis=0, keepdims=True) * inv_m
        diff = acc - mean
        var = jnp.sum(diff * diff, axis=0, keepdims=True) * inv_m
        y = diff * jax.lax.rsqrt(var + 1e-5)
        y = y * g_ref[...] + be_ref[...]
        return jnp.maximum(y, 0.0)                           # ReLU

    # ---- stage 1: conv(ch_in -> ch_out) + BN + ReLU --------------------------
    y1 = conv_bn_relu(w1_ref, b1_ref, g1_ref, be1_ref)       # (M, cpad) f32

    # Stage-1 activation stays in VMEM: rewrite the (still zero-bordered)
    # padded scratch interior.  gamma/beta are zero-padded in the wrapper, so
    # padded channel lanes of y1 are exactly zero.
    xpad_ref[:, 1:H + 1, 1:W + 1, :] = y1.reshape(N, H, W, cpad).astype(adt)

    # ---- stage 2: conv(ch_out -> ch_out) + BN + ReLU -------------------------
    y2 = conv_bn_relu(w2_ref, b2_ref, g2_ref, be2_ref)       # (M, cpad) f32

    # Lane-dense, sublane-aligned, unmasked store; wrapper slices to cout.
    o_ref[...] = y2


# ---------------------------------------------------------------------------
# Wrapper
# ---------------------------------------------------------------------------
def _default_mxu_dtype():
    """bf16 MXU operands on v6/v7 (bf16-native MXU), f32 elsewhere."""
    try:
        kind = jax.devices()[0].device_kind.lower()
    except Exception:
        return jnp.float32
    return jnp.bfloat16 if ("v6" in kind or "v7" in kind) else jnp.float32


def _prep_conv_weight(w_oihw, cpad, mxu_dtype):
    """(Cout, Cin, 3, 3) -> (9, cpad, cpad), tap-major (kw*3+kh), zero-padded."""
    cout, cin = w_oihw.shape[0], w_oihw.shape[1]
    wt = jnp.transpose(w_oihw.astype(jnp.float32), (3, 2, 1, 0))  # (kW,kH,Cin,Cout)
    wt = jnp.pad(wt, ((0, 0), (0, 0), (0, cpad - cin), (0, cpad - cout)))
    return wt.reshape(9, cpad, cpad).astype(mxu_dtype)


def _prep_channel_vec(v, cpad):
    """(C,) -> (1, cpad) f32, ZERO-padded.

    Zero padding (including gamma) is an invariant the kernel relies on: it
    keeps padded channel lanes exactly zero through every fused stage.
    """
    return jnp.pad(v.astype(jnp.float32), (0, cpad - v.shape[0])).reshape(1, cpad)


def _vmem_limit_bytes(n, h, w, cin, cpad, mxu_dtype):
    """Generation-aware VMEM budget derived from the actual buffer sizes."""
    mb = jnp.dtype(mxu_dtype).itemsize
    m = n * h * w
    need = (n * h * w * cin * 4                       # input
            + 2 * 9 * cpad * cpad * mb                # weight slabs
            + 6 * cpad * 4                            # bias / gamma / beta
            + m * cpad * 4                            # lane-dense output slab
            + n * (h + 2) * (w + 2) * cpad * mb       # padded-activation scratch
            + 4 * m * cpad * 4)                       # live f32 temporaries
    try:
        kind = jax.devices()[0].device_kind.lower()
    except Exception:
        kind = ""
    cap_mib = 48 if "v7" in kind else 100             # v7x: 64 MiB physical / TC
    return int(min(max(2 * need, 32 * 2 ** 20), cap_mib * 2 ** 20))


def conv_block_forward_nhwc(x_nhwc, params, *, mxu_dtype=None):
    """Fused conv_block on NHWC input (preferred entry point; no transposes)."""
    if mxu_dtype is None:
        mxu_dtype = _default_mxu_dtype()
    N, H, W, cin = x_nhwc.shape
    cout = params["w1"].shape[0]
    cpad = CPAD
    assert cin <= cpad and cout <= cpad, (
        f"ch_in/ch_out must be <= {cpad}; got {cin}/{cout} "
        "(TODO(synk): multi lane-tile channels)")

    args = (
        x_nhwc.astype(jnp.float32),
        _prep_conv_weight(params["w1"], cpad, mxu_dtype),
        _prep_channel_vec(params["b1"], cpad),
        _prep_channel_vec(params["g1"], cpad),
        _prep_channel_vec(params["be1"], cpad),
        _prep_conv_weight(params["w2"], cpad, mxu_dtype),
        _prep_channel_vec(params["b2"], cpad),
        _prep_channel_vec(params["g2"], cpad),
        _prep_channel_vec(params["be2"], cpad),
    )

    vmem = pl.BlockSpec(memory_space=pltpu.MemorySpace.VMEM)
    out_slab = pl.pallas_call(
        conv_block_kernel,
        out_shape=jax.ShapeDtypeStruct((N * H * W, cpad), jnp.float32),
        in_specs=[vmem] * 9,
        out_specs=vmem,
        scratch_shapes=[
            pltpu.VMEM((N, H + 2, W + 2, cpad), mxu_dtype),   # padded activation
        ],
        compiler_params=pltpu.CompilerParams(
            vmem_limit_bytes=_vmem_limit_bytes(N, H, W, cin, cpad, mxu_dtype)),
    )(*args)

    return out_slab.reshape(N, H, W, cpad)[..., :cout]


@jax.jit
def conv_block_forward(x_nchw, params):
    """Full conv_block forward. Input/output in NCHW like PyTorch."""
    x = jnp.transpose(x_nchw, (0, 2, 3, 1))          # NCHW -> NHWC
    y = conv_block_forward_nhwc(x, params)
    return jnp.transpose(y, (0, 3, 1, 2))            # NHWC -> NCHW


# ---------------------------------------------------------------------------
# Params + pure-JAX reference (for a numerical sanity check)
# ---------------------------------------------------------------------------
def init_conv_block_params(key, ch_in, ch_out):
    k1, k2, k3, k4 = jax.random.split(key, 4)
    return {
        "w1": 0.1 * jax.random.normal(k1, (ch_out, ch_in, 3, 3), jnp.float32),
        "b1": 0.1 * jax.random.normal(k2, (ch_out,), jnp.float32),
        "g1": jnp.ones((ch_out,), jnp.float32),
        "be1": jnp.zeros((ch_out,), jnp.float32),
        "w2": 0.1 * jax.random.normal(k3, (ch_out, ch_out, 3, 3), jnp.float32),
        "b2": 0.1 * jax.random.normal(k4, (ch_out,), jnp.float32),
        "g2": jnp.ones((ch_out,), jnp.float32),
        "be2": jnp.zeros((ch_out,), jnp.float32),
    }


def _reference_forward(x_nchw, params):
    """Plain XLA reference of the same module (training-mode BN forward)."""
    # TODO(synk): PyTorch's BatchNorm also updates running_mean/var buffers
    # (momentum); that bookkeeping does not affect the forward output and is
    # not emitted here.
    def stage(x, w, b, g, be):
        y = jax.lax.conv_general_dilated(
            x, w, window_strides=(1, 1), padding=((1, 1), (1, 1)),
            dimension_numbers=("NCHW", "OIHW", "NCHW"),
            precision=jax.lax.Precision.HIGHEST)
        y = y + b[None, :, None, None]
        mean = jnp.mean(y, axis=(0, 2, 3), keepdims=True)
        var = jnp.mean((y - mean) ** 2, axis=(0, 2, 3), keepdims=True)
        y = (y - mean) * jax.lax.rsqrt(var + 1e-5)
        y = y * g[None, :, None, None] + be[None, :, None, None]
        return jnp.maximum(y, 0.0)

    x = stage(x_nchw, params["w1"], params["b1"], params["g1"], params["be1"])
    x = stage(x, params["w2"], params["b2"], params["g2"], params["be2"])
    return x


# ---------------------------------------------------------------------------
if __name__ == "__main__":
    key = jax.random.PRNGKey(0)
    kx, kp = jax.random.split(key)

    N, CH_IN, CH_OUT, H, W = 2, 4, 8, 16, 16
    x = jax.random.normal(kx, (N, CH_IN, H, W), jnp.float32)
    params = init_conv_block_params(kp, CH_IN, CH_OUT)

    out = jax.block_until_ready(conv_block_forward(x, params))
    assert out.shape == (N, CH_OUT, H, W), out.shape
    assert out.dtype == jnp.float32

    # Numerical sanity check against a pure-XLA implementation of the module.
    ref = jax.block_until_ready(_reference_forward(x, params))
    tol = 6e-2 if _default_mxu_dtype() == jnp.bfloat16 else 5e-3
    max_err = float(jnp.max(jnp.abs(out - ref)))
    assert max_err < tol, f"max abs error vs reference: {max_err} (tol {tol})"

    print("KERNEL_OK")
</pallas_src>

<mosaic_0001>
module attributes {stable_mosaic.version = 11 : i64} {
  func.func @conv_block_kernel(%arg0: memref<2x16x16x4xf32, #tpu.memory_space<vmem>>, %arg1: memref<9x128x128xf32, #tpu.memory_space<vmem>>, %arg2: memref<1x128xf32, #tpu.memory_space<vmem>>, %arg3: memref<1x128xf32, #tpu.memory_space<vmem>>, %arg4: memref<1x128xf32, #tpu.memory_space<vmem>>, %arg5: memref<9x128x128xf32, #tpu.memory_space<vmem>>, %arg6: memref<1x128xf32, #tpu.memory_space<vmem>>, %arg7: memref<1x128xf32, #tpu.memory_space<vmem>>, %arg8: memref<1x128xf32, #tpu.memory_space<vmem>>, %arg9: memref<512x128xf32, #tpu.memory_space<vmem>>, %arg10: memref<2x18x18x128xf32, #tpu.memory_space<vmem>>) attributes {dimension_semantics = [], scalar_prefetch = 0 : i64, scratch_operands = 1 : i64, tpu.core_type = #tpu.core_type<tc>} {
    %cst = arith.constant 0.000000e+00 : f32
    %0 = vector.broadcast %cst : f32 to vector<2x1x18x128xf32>
    %c0 = arith.constant 0 : index
    %c0_0 = arith.constant 0 : index
    %c0_1 = arith.constant 0 : index
    %c0_2 = arith.constant 0 : index
    %1 = vector.load %arg10[%c0, %c0_0, %c0_1, %c0_2] : memref<2x18x18x128xf32, #tpu.memory_space<vmem>>, vector<2x1x18x128xf32>
    tpu.vector_store %arg10[%c0, %c0_0, %c0_1, %c0_2], %0 {strides = array<i32>} : memref<2x18x18x128xf32, #tpu.memory_space<vmem>>, vector<2x1x18x128xf32>,
    %cst_3 = arith.constant 0.000000e+00 : f32
    %2 = vector.broadcast %cst_3 : f32 to vector<2x1x18x128xf32>
    %c0_4 = arith.constant 0 : index
    %c17 = arith.constant 17 : index
    %c0_5 = arith.constant 0 : index
    %c0_6 = arith.constant 0 : index
    %3 = vector.load %arg10[%c0_4, %c17, %c0_5, %c0_6] : memref<2x18x18x128xf32, #tpu.memory_space<vmem>>, vector<2x1x18x128xf32>
    tpu.vector_store %arg10[%c0_4, %c17, %c0_5, %c0_6], %2 {strides = array<i32>} : memref<2x18x18x128xf32, #tpu.memory_space<vmem>>, vector<2x1x18x128xf32>,
    %cst_7 = arith.constant 0.000000e+00 : f32
    %4 = vector.broadcast %cst_7 : f32 to vector<2x18x1x128xf32>
    %c0_8 = arith.constant 0 : index
    %c0_9 = arith.constant 0 : index
    %c0_10 = arith.constant 0 : index
    %c0_11 = arith.constant 0 : index
    %5 = vector.load %arg10[%c0_8, %c0_9, %c0_10, %c0_11] : memref<2x18x18x128xf32, #tpu.memory_space<vmem>>, vector<2x18x1x128xf32>
    tpu.vector_store %arg10[%c0_8, %c0_9, %c0_10, %c0_11], %4 {strides = array<i32>} : memref<2x18x18x128xf32, #tpu.memory_space<vmem>>, vector<2x18x1x128xf32>,
    %cst_12 = arith.constant 0.000000e+00 : f32
    %6 = vector.broadcast %cst_12 : f32 to vector<2x18x1x128xf32>
    %c0_13 = arith.constant 0 : index
    %c0_14 = arith.constant 0 : index
    %c17_15 = arith.constant 17 : index
    %c0_16 = arith.constant 0 : index
    %7 = vector.load %arg10[%c0_13, %c0_14, %c17_15, %c0_16] : memref<2x18x18x128xf32, #tpu.memory_space<vmem>>, vector<2x18x1x128xf32>
    tpu.vector_store %arg10[%c0_13, %c0_14, %c17_15, %c0_16], %6 {strides = array<i32>} : memref<2x18x18x128xf32, #tpu.memory_space<vmem>>, vector<2x18x1x128xf32>,
    %c0_17 = arith.constant 0 : index
    %c0_18 = arith.constant 0 : index
    %c0_19 = arith.constant 0 : index
    %c0_20 = arith.constant 0 : index
    %8 = vector.load %arg0[%c0_17, %c0_18, %c0_19, %c0_20] : memref<2x16x16x4xf32, #tpu.memory_space<vmem>>, vector<2x16x16x4xf32>
    %cst_21 = arith.constant 0.000000e+00 : f32
    %9 = vector.broadcast %cst_21 : f32 to vector<2x16x16x124xf32>
    %10 = tpu.concatenate %8, %9 in 3 : vector<2x16x16x4xf32>, vector<2x16x16x124xf32> -> vector<2x16x16x128xf32>
    %c0_22 = arith.constant 0 : index
    %c1 = arith.constant 1 : index
    %c1_23 = arith.constant 1 : index
    %c0_24 = arith.constant 0 : index
    %11 = vector.load %arg10[%c0_22, %c1, %c1_23, %c0_24] : memref<2x18x18x128xf32, #tpu.memory_space<vmem>>, vector<2x16x16x128xf32>
    tpu.vector_store %arg10[%c0_22, %c1, %c1_23, %c0_24], %10 {strides = array<i32>} : memref<2x18x18x128xf32, #tpu.memory_space<vmem>>, vector<2x16x16x128xf32>,
    %cst_25 = arith.constant 0.000000e+00 : f32
    %12 = vector.broadcast %cst_25 : f32 to vector<512x128xf32>
    %c0_26 = arith.constant 0 : index
    %c0_27 = arith.constant 0 : index
    %c0_28 = arith.constant 0 : index
    %c0_29 = arith.constant 0 : index
    %13 = vector.load %arg10[%c0_26, %c0_27, %c0_28, %c0_29] : memref<2x18x18x128xf32, #tpu.memory_space<vmem>>, vector<2x18x16x128xf32>
    %14 = vector.extract_strided_slice %13 {offsets = [0, 0, 0, 0], sizes = [2, 16, 16, 128], strides = [1, 1, 1, 1]} : vector<2x18x16x128xf32> to vector<2x16x16x128xf32>
    %15 = vector.shape_cast %14 : vector<2x16x16x128xf32> to vector<512x128xf32>
    %c0_30 = arith.constant 0 : index
    %c0_31 = arith.constant 0 : index
    %c0_32 = arith.constant 0 : index
    %16 = vector.load %arg1[%c0_30, %c0_31, %c0_32] : memref<9x128x128xf32, #tpu.memory_space<vmem>>, vector<1x128x128xf32>
    %17 = vector.shape_cast %16 : vector<1x128x128xf32> to vector<128x128xf32>
    %cst_33 = arith.constant dense<0.000000e+00> : vector<512x128xf32>
    %18 = tpu.matmul %15, %17, %cst_33 {dimension_numbers = #tpu.dot_dimension_numbers<[1], [0], [0], [1], [0, 0, 1, 1], [], []>} : vector<512x128xf32>, vector<128x128xf32>, vector<512x128xf32> -> vector<512x128xf32>
    %19 = arith.addf %12, %18 : vector<512x128xf32>
    %20 = vector.extract_strided_slice %13 {offsets = [0, 1, 0, 0], sizes = [2, 16, 16, 128], strides = [1, 1, 1, 1]} : vector<2x18x16x128xf32> to vector<2x16x16x128xf32>
    %21 = vector.shape_cast %20 : vector<2x16x16x128xf32> to vector<512x128xf32>
    %c1_34 = arith.constant 1 : index
    %c0_35 = arith.constant 0 : index
    %c0_36 = arith.constant 0 : index
    %22 = vector.load %arg1[%c1_34, %c0_35, %c0_36] : memref<9x128x128xf32, #tpu.memory_space<vmem>>, vector<1x128x128xf32>
    %23 = vector.shape_cast %22 : vector<1x128x128xf32> to vector<128x128xf32>
    %cst_37 = arith.constant dense<0.000000e+00> : vector<512x128xf32>
    %24 = tpu.matmul %21, %23, %cst_37 {dimension_numbers = #tpu.dot_dimension_numbers<[1], [0], [0], [1], [0, 0, 1, 1], [], []>} : vector<512x128xf32>, vector<128x128xf32>, vector<512x128xf32> -> vector<512x128xf32>
    %25 = arith.addf %19, %24 : vector<512x128xf32>
    %26 = vector.extract_strided_slice %13 {offsets = [0, 2, 0, 0], sizes = [2, 16, 16, 128], strides = [1, 1, 1, 1]} : vector<2x18x16x128xf32> to vector<2x16x16x128xf32>
    %27 = vector.shape_cast %26 : vector<2x16x16x128xf32> to vector<512x128xf32>
    %c2 = arith.constant 2 : index
    %c0_38 = arith.constant 0 : index
    %c0_39 = arith.constant 0 : index
    %28 = vector.load %arg1[%c2, %c0_38, %c0_39] : memref<9x128x128xf32, #tpu.memory_space<vmem>>, vector<1x128x128xf32>
    %29 = vector.shape_cast %28 : vector<1x128x128xf32> to vector<128x128xf32>
    %cst_40 = arith.constant dense<0.000000e+00> : vector<512x128xf32>
    %30 = tpu.matmul %27, %29, %cst_40 {dimension_numbers = #tpu.dot_dimension_numbers<[1], [0], [0], [1], [0, 0, 1, 1], [], []>} : vector<512x128xf32>, vector<128x128xf32>, vector<512x128xf32> -> vector<512x128xf32>
    %31 = arith.addf %25, %30 : vector<512x128xf32>
    %c0_41 = arith.constant 0 : index
    %c0_42 = arith.constant 0 : index
    %c1_43 = arith.constant 1 : index
    %c0_44 = arith.constant 0 : index
    %32 = vector.load %arg10[%c0_41, %c0_42, %c1_43, %c0_44] : memref<2x18x18x128xf32, #tpu.memory_space<vmem>>, vector<2x18x16x128xf32>
    %33 = vector.extract_strided_slice %32 {offsets = [0, 0, 0, 0], sizes = [2, 16, 16, 128], strides = [1, 1, 1, 1]} : vector<2x18x16x128xf32> to vector<2x16x16x128xf32>
    %34 = vector.shape_cast %33 : vector<2x16x16x128xf32> to vector<512x128xf32>
    %c3 = arith.constant 3 : index
    %c0_45 = arith.constant 0 : index
    %c0_46 = arith.constant 0 : index
    %35 = vector.load %arg1[%c3, %c0_45, %c0_46] : memref<9x128x128xf32, #tpu.memory_space<vmem>>, vector<1x128x128xf32>
    %36 = vector.shape_cast %35 : vector<1x128x128xf32> to vector<128x128xf32>
    %cst_47 = arith.constant dense<0.000000e+00> : vector<512x128xf32>
    %37 = tpu.matmul %34, %36, %cst_47 {dimension_numbers = #tpu.dot_dimension_numbers<[1], [0], [0], [1], [0, 0, 1, 1], [], []>} : vector<512x128xf32>, vector<128x128xf32>, vector<512x128xf32> -> vector<512x128xf32>
    %38 = arith.addf %31, %37 : vector<512x128xf32>
    %39 = vector.extract_strided_slice %32 {offsets = [0, 1, 0, 0], sizes = [2, 16, 16, 128], strides = [1, 1, 1, 1]} : vector<2x18x16x128xf32> to vector<2x16x16x128xf32>
    %40 = vector.shape_cast %39 : vector<2x16x16x128xf32> to vector<512x128xf32>
    %c4 = arith.constant 4 : index
    %c0_48 = arith.constant 0 : index
    %c0_49 = arith.constant 0 : index
    %41 = vector.load %arg1[%c4, %c0_48, %c0_49] : memref<9x128x128xf32, #tpu.memory_space<vmem>>, vector<1x128x128xf32>
    %42 = vector.shape_cast %41 : vector<1x128x128xf32> to vector<128x128xf32>
    %cst_50 = arith.constant dense<0.000000e+00> : vector<512x128xf32>
    %43 = tpu.matmul %40, %42, %cst_50 {dimension_numbers = #tpu.dot_dimension_numbers<[1], [0], [0], [1], [0, 0, 1, 1], [], []>} : vector<512x128xf32>, vector<128x128xf32>, vector<512x128xf32> -> vector<512x128xf32>
    %44 = arith.addf %38, %43 : vector<512x128xf32>
    %45 = vector.extract_strided_slice %32 {offsets = [0, 2, 0, 0], sizes = [2, 16, 16, 128], strides = [1, 1, 1, 1]} : vector<2x18x16x128xf32> to vector<2x16x16x128xf32>
    %46 = vector.shape_cast %45 : vector<2x16x16x128xf32> to vector<512x128xf32>
    %c5 = arith.constant 5 : index
    %c0_51 = arith.constant 0 : index
    %c0_52 = arith.constant 0 : index
    %47 = vector.load %arg1[%c5, %c0_51, %c0_52] : memref<9x128x128xf32, #tpu.memory_space<vmem>>, vector<1x128x128xf32>
    %48 = vector.shape_cast %47 : vector<1x128x128xf32> to vector<128x128xf32>
    %cst_53 = arith.constant dense<0.000000e+00> : vector<512x128xf32>
    %49 = tpu.matmul %46, %48, %cst_53 {dimension_numbers = #tpu.dot_dimension_numbers<[1], [0], [0], [1], [0, 0, 1, 1], [], []>} : vector<512x128xf32>, vector<128x128xf32>, vector<512x128xf32> -> vector<512x128xf32>
    %50 = arith.addf %44, %49 : vector<512x128xf32>
    %c0_54 = arith.constant 0 : index
    %c0_55 = arith.constant 0 : index
    %c2_56 = arith.constant 2 : index
    %c0_57 = arith.constant 0 : index
    %51 = vector.load %arg10[%c0_54, %c0_55, %c2_56, %c0_57] : memref<2x18x18x128xf32, #tpu.memory_space<vmem>>, vector<2x18x16x128xf32>
    %52 = vector.extract_strided_slice %51 {offsets = [0, 0, 0, 0], sizes = [2, 16, 16, 128], strides = [1, 1, 1, 1]} : vector<2x18x16x128xf32> to vector<2x16x16x128xf32>
    %53 = vector.shape_cast %52 : vector<2x16x16x128xf32> to vector<512x128xf32>
    %c6 = arith.constant 6 : index
    %c0_58 = arith.constant 0 : index
    %c0_59 = arith.constant 0 : index
    %54 = vector.load %arg1[%c6, %c0_58, %c0_59] : memref<9x128x128xf32, #tpu.memory_space<vmem>>, vector<1x128x128xf32>
    %55 = vector.shape_cast %54 : vector<1x128x128xf32> to vector<128x128xf32>
    %cst_60 = arith.constant dense<0.000000e+00> : vector<512x128xf32>
    %56 = tpu.matmul %53, %55, %cst_60 {dimension_numbers = #tpu.dot_dimension_numbers<[1], [0], [0], [1], [0, 0, 1, 1], [], []>} : vector<512x128xf32>, vector<128x128xf32>, vector<512x128xf32> -> vector<512x128xf32>
    %57 = arith.addf %50, %56 : vector<512x128xf32>
    %58 = vector.extract_strided_slice %51 {offsets = [0, 1, 0, 0], sizes = [2, 16, 16, 128], strides = [1, 1, 1, 1]} : vector<2x18x16x128xf32> to vector<2x16x16x128xf32>
    %59 = vector.shape_cast %58 : vector<2x16x16x128xf32> to vector<512x128xf32>
    %c7 = arith.constant 7 : index
    %c0_61 = arith.constant 0 : index
    %c0_62 = arith.constant 0 : index
    %60 = vector.load %arg1[%c7, %c0_61, %c0_62] : memref<9x128x128xf32, #tpu.memory_space<vmem>>, vector<1x128x128xf32>
    %61 = vector.shape_cast %60 : vector<1x128x128xf32> to vector<128x128xf32>
    %cst_63 = arith.constant dense<0.000000e+00> : vector<512x128xf32>
    %62 = tpu.matmul %59, %61, %cst_63 {dimension_numbers = #tpu.dot_dimension_numbers<[1], [0], [0], [1], [0, 0, 1, 1], [], []>} : vector<512x128xf32>, vector<128x128xf32>, vector<512x128xf32> -> vector<512x128xf32>
    %63 = arith.addf %57, %62 : vector<512x128xf32>
    %64 = vector.extract_strided_slice %51 {offsets = [0, 2, 0, 0], sizes = [2, 16, 16, 128], strides = [1, 1, 1, 1]} : vector<2x18x16x128xf32> to vector<2x16x16x128xf32>
    %65 = vector.shape_cast %64 : vector<2x16x16x128xf32> to vector<512x128xf32>
    %c8 = arith.constant 8 : index
    %c0_64 = arith.constant 0 : index
    %c0_65 = arith.constant 0 : index
    %66 = vector.load %arg1[%c8, %c0_64, %c0_65] : memref<9x128x128xf32, #tpu.memory_space<vmem>>, vector<1x128x128xf32>
    %67 = vector.shape_cast %66 : vector<1x128x128xf32> to vector<128x128xf32>
    %cst_66 = arith.constant dense<0.000000e+00> : vector<512x128xf32>
    %68 = tpu.matmul %65, %67, %cst_66 {dimension_numbers = #tpu.dot_dimension_numbers<[1], [0], [0], [1], [0, 0, 1, 1], [], []>} : vector<512x128xf32>, vector<128x128xf32>, vector<512x128xf32> -> vector<512x128xf32>
    %69 = arith.addf %63, %68 : vector<512x128xf32>
    %c0_67 = arith.constant 0 : index
    %c0_68 = arith.constant 0 : index
    %70 = vector.load %arg2[%c0_67, %c0_68] : memref<1x128xf32, #tpu.memory_space<vmem>>, vector<1x128xf32>
    %71 = vector.broadcast %70 : vector<1x128xf32> to vector<512x128xf32>
    %72 = arith.addf %69, %71 : vector<512x128xf32>
    %cst_69 = arith.constant dense<0.000000e+00> : vector<128xf32>
    %73 = vector.multi_reduction <add>, %72, %cst_69 [0] : vector<512x128xf32> to vector<128xf32>
    %74 = vector.shape_cast %73 : vector<128xf32> to vector<1x128xf32>
    %cst_70 = arith.constant 0.001953125 : f32
    %75 = vector.broadcast %cst_70 : f32 to vector<1x128xf32>
    %76 = arith.mulf %74, %75 : vector<1x128xf32>
    %77 = vector.broadcast %76 : vector<1x128xf32> to vector<512x128xf32>
    %78 = arith.subf %72, %77 : vector<512x128xf32>
    %79 = arith.mulf %78, %78 : vector<512x128xf32>
    %cst_71 = arith.constant dense<0.000000e+00> : vector<128xf32>
    %80 = vector.multi_reduction <add>, %79, %cst_71 [0] : vector<512x128xf32> to vector<128xf32>
    %81 = vector.shape_cast %80 : vector<128xf32> to vector<1x128xf32>
    %cst_72 = arith.constant 0.001953125 : f32
    %82 = vector.broadcast %cst_72 : f32 to vector<1x128xf32>
    %83 = arith.mulf %81, %82 : vector<1x128xf32>
    %cst_73 = arith.constant 9.99999974E-6 : f32
    %84 = vector.broadcast %cst_73 : f32 to vector<1x128xf32>
    %85 = arith.addf %83, %84 : vector<1x128xf32>
    %86 = math.rsqrt %85 : vector<1x128xf32>
    %87 = vector.broadcast %86 : vector<1x128xf32> to vector<512x128xf32>
    %88 = arith.mulf %78, %87 : vector<512x128xf32>
    %c0_74 = arith.constant 0 : index
    %c0_75 = arith.constant 0 : index
    %89 = vector.load %arg3[%c0_74, %c0_75] : memref<1x128xf32, #tpu.memory_space<vmem>>, vector<1x128xf32>
    %90 = vector.broadcast %89 : vector<1x128xf32> to vector<512x128xf32>
    %91 = arith.mulf %88, %90 : vector<512x128xf32>
    %c0_76 = arith.constant 0 : index
    %c0_77 = arith.constant 0 : index
    %92 = vector.load %arg4[%c0_76, %c0_77] : memref<1x128xf32, #tpu.memory_space<vmem>>, vector<1x128xf32>
    %93 = vector.broadcast %92 : vector<1x128xf32> to vector<512x128xf32>
    %94 = arith.addf %91, %93 : vector<512x128xf32>
    %cst_78 = arith.constant 0.000000e+00 : f32
    %95 = vector.broadcast %cst_78 : f32 to vector<512x128xf32>
    %96 = arith.maximumf %94, %95 : vector<512x128xf32>
    %97 = vector.shape_cast %96 : vector<512x128xf32> to vector<2x16x16x128xf32>
    %c0_79 = arith.constant 0 : index
    %c1_80 = arith.constant 1 : index
    %c1_81 = arith.constant 1 : index
    %c0_82 = arith.constant 0 : index
    %98 = vector.load %arg10[%c0_79, %c1_80, %c1_81, %c0_82] : memref<2x18x18x128xf32, #tpu.memory_space<vmem>>, vector<2x16x16x128xf32>
    tpu.vector_store %arg10[%c0_79, %c1_80, %c1_81, %c0_82], %97 {strides = array<i32>} : memref<2x18x18x128xf32, #tpu.memory_space<vmem>>, vector<2x16x16x128xf32>,
    %cst_83 = arith.constant 0.000000e+00 : f32
    %99 = vector.broadcast %cst_83 : f32 to vector<512x128xf32>
    %c0_84 = arith.constant 0 : index
    %c0_85 = arith.constant 0 : index
    %c0_86 = arith.constant 0 : index
    %c0_87 = arith.constant 0 : index
    %100 = vector.load %arg10[%c0_84, %c0_85, %c0_86, %c0_87] : memref<2x18x18x128xf32, #tpu.memory_space<vmem>>, vector<2x18x16x128xf32>
    %101 = vector.extract_strided_slice %100 {offsets = [0, 0, 0, 0], sizes = [2, 16, 16, 128], strides = [1, 1, 1, 1]} : vector<2x18x16x128xf32> to vector<2x16x16x128xf32>
    %102 = vector.shape_cast %101 : vector<2x16x16x128xf32> to vector<512x128xf32>
    %c0_88 = arith.constant 0 : index
    %c0_89 = arith.constant 0 : index
    %c0_90 = arith.constant 0 : index
    %103 = vector.load %arg5[%c0_88, %c0_89, %c0_90] : memref<9x128x128xf32, #tpu.memory_space<vmem>>, vector<1x128x128xf32>
    %104 = vector.shape_cast %103 : vector<1x128x128xf32> to vector<128x128xf32>
    %cst_91 = arith.constant dense<0.000000e+00> : vector<512x128xf32>
    %105 = tpu.matmul %102, %104, %cst_91 {dimension_numbers = #tpu.dot_dimension_numbers<[1], [0], [0], [1], [0, 0, 1, 1], [], []>} : vector<512x128xf32>, vector<128x128xf32>, vector<512x128xf32> -> vector<512x128xf32>
    %106 = arith.addf %99, %105 : vector<512x128xf32>
    %107 = vector.extract_strided_slice %100 {offsets = [0, 1, 0, 0], sizes = [2, 16, 16, 128], strides = [1, 1, 1, 1]} : vector<2x18x16x128xf32> to vector<2x16x16x128xf32>
    %108 = vector.shape_cast %107 : vector<2x16x16x128xf32> to vector<512x128xf32>
    %c1_92 = arith.constant 1 : index
    %c0_93 = arith.constant 0 : index
    %c0_94 = arith.constant 0 : index
    %109 = vector.load %arg5[%c1_92, %c0_93, %c0_94] : memref<9x128x128xf32, #tpu.memory_space<vmem>>, vector<1x128x128xf32>
    %110 = vector.shape_cast %109 : vector<1x128x128xf32> to vector<128x128xf32>
    %cst_95 = arith.constant dense<0.000000e+00> : vector<512x128xf32>
    %111 = tpu.matmul %108, %110, %cst_95 {dimension_numbers = #tpu.dot_dimension_numbers<[1], [0], [0], [1], [0, 0, 1, 1], [], []>} : vector<512x128xf32>, vector<128x128xf32>, vector<512x128xf32> -> vector<512x128xf32>
    %112 = arith.addf %106, %111 : vector<512x128xf32>
    %113 = vector.extract_strided_slice %100 {offsets = [0, 2, 0, 0], sizes = [2, 16, 16, 128], strides = [1, 1, 1, 1]} : vector<2x18x16x128xf32> to vector<2x16x16x128xf32>
    %114 = vector.shape_cast %113 : vector<2x16x16x128xf32> to vector<512x128xf32>
    %c2_96 = arith.constant 2 : index
    %c0_97 = arith.constant 0 : index
    %c0_98 = arith.constant 0 : index
    %115 = vector.load %arg5[%c2_96, %c0_97, %c0_98] : memref<9x128x128xf32, #tpu.memory_space<vmem>>, vector<1x128x128xf32>
    %116 = vector.shape_cast %115 : vector<1x128x128xf32> to vector<128x128xf32>
    %cst_99 = arith.constant dense<0.000000e+00> : vector<512x128xf32>
    %117 = tpu.matmul %114, %116, %cst_99 {dimension_numbers = #tpu.dot_dimension_numbers<[1], [0], [0], [1], [0, 0, 1, 1], [], []>} : vector<512x128xf32>, vector<128x128xf32>, vector<512x128xf32> -> vector<512x128xf32>
    %118 = arith.addf %112, %117 : vector<512x128xf32>
    %c0_100 = arith.constant 0 : index
    %c0_101 = arith.constant 0 : index
    %c1_102 = arith.constant 1 : index
    %c0_103 = arith.constant 0 : index
    %119 = vector.load %arg10[%c0_100, %c0_101, %c1_102, %c0_103] : memref<2x18x18x128xf32, #tpu.memory_space<vmem>>, vector<2x18x16x128xf32>
    %120 = vector.extract_strided_slice %119 {offsets = [0, 0, 0, 0], sizes = [2, 16, 16, 128], strides = [1, 1, 1, 1]} : vector<2x18x16x128xf32> to vector<2x16x16x128xf32>
    %121 = vector.shape_cast %120 : vector<2x16x16x128xf32> to vector<512x128xf32>
    %c3_104 = arith.constant 3 : index
    %c0_105 = arith.constant 0 : index
    %c0_106 = arith.constant 0 : index
    %122 = vector.load %arg5[%c3_104, %c0_105, %c0_106] : memref<9x128x128xf32, #tpu.memory_space<vmem>>, vector<1x128x128xf32>
    %123 = vector.shape_cast %122 : vector<1x128x128xf32> to vector<128x128xf32>
    %cst_107 = arith.constant dense<0.000000e+00> : vector<512x128xf32>
    %124 = tpu.matmul %121, %123, %cst_107 {dimension_numbers = #tpu.dot_dimension_numbers<[1], [0], [0], [1], [0, 0, 1, 1], [], []>} : vector<512x128xf32>, vector<128x128xf32>, vector<512x128xf32> -> vector<512x128xf32>
    %125 = arith.addf %118, %124 : vector<512x128xf32>
    %126 = vector.extract_strided_slice %119 {offsets = [0, 1, 0, 0], sizes = [2, 16, 16, 128], strides = [1, 1, 1, 1]} : vector<2x18x16x128xf32> to vector<2x16x16x128xf32>
    %127 = vector.shape_cast %126 : vector<2x16x16x128xf32> to vector<512x128xf32>
    %c4_108 = arith.constant 4 : index
    %c0_109 = arith.constant 0 : index
    %c0_110 = arith.constant 0 : index
    %128 = vector.load %arg5[%c4_108, %c0_109, %c0_110] : memref<9x128x128xf32, #tpu.memory_space<vmem>>, vector<1x128x128xf32>
    %129 = vector.shape_cast %128 : vector<1x128x128xf32> to vector<128x128xf32>
    %cst_111 = arith.constant dense<0.000000e+00> : vector<512x128xf32>
    %130 = tpu.matmul %127, %129, %cst_111 {dimension_numbers = #tpu.dot_dimension_numbers<[1], [0], [0], [1], [0, 0, 1, 1], [], []>} : vector<512x128xf32>, vector<128x128xf32>, vector<512x128xf32> -> vector<512x128xf32>
    %131 = arith.addf %125, %130 : vector<512x128xf32>
    %132 = vector.extract_strided_slice %119 {offsets = [0, 2, 0, 0], sizes = [2, 16, 16, 128], strides = [1, 1, 1, 1]} : vector<2x18x16x128xf32> to vector<2x16x16x128xf32>
    %133 = vector.shape_cast %132 : vector<2x16x16x128xf32> to vector<512x128xf32>
    %c5_112 = arith.constant 5 : index
    %c0_113 = arith.constant 0 : index
    %c0_114 = arith.constant 0 : index
    %134 = vector.load %arg5[%c5_112, %c0_113, %c0_114] : memref<9x128x128xf32, #tpu.memory_space<vmem>>, vector<1x128x128xf32>
    %135 = vector.shape_cast %134 : vector<1x128x128xf32> to vector<128x128xf32>
    %cst_115 = arith.constant dense<0.000000e+00> : vector<512x128xf32>
    %136 = tpu.matmul %133, %135, %cst_115 {dimension_numbers = #tpu.dot_dimension_numbers<[1], [0], [0], [1], [0, 0, 1, 1], [], []>} : vector<512x128xf32>, vector<128x128xf32>, vector<512x128xf32> -> vector<512x128xf32>
    %137 = arith.addf %131, %136 : vector<512x128xf32>
    %c0_116 = arith.constant 0 : index
    %c0_117 = arith.constant 0 : index
    %c2_118 = arith.constant 2 : index
    %c0_119 = arith.constant 0 : index
    %138 = vector.load %arg10[%c0_116, %c0_117, %c2_118, %c0_119] : memref<2x18x18x128xf32, #tpu.memory_space<vmem>>, vector<2x18x16x128xf32>
    %139 = vector.extract_strided_slice %138 {offsets = [0, 0, 0, 0], sizes = [2, 16, 16, 128], strides = [1, 1, 1, 1]} : vector<2x18x16x128xf32> to vector<2x16x16x128xf32>
    %140 = vector.shape_cast %139 : vector<2x16x16x128xf32> to vector<512x128xf32>
    %c6_120 = arith.constant 6 : index
    %c0_121 = arith.constant 0 : index
    %c0_122 = arith.constant 0 : index
    %141 = vector.load %arg5[%c6_120, %c0_121, %c0_122] : memref<9x128x128xf32, #tpu.memory_space<vmem>>, vector<1x128x128xf32>
    %142 = vector.shape_cast %141 : vector<1x128x128xf32> to vector<128x128xf32>
    %cst_123 = arith.constant dense<0.000000e+00> : vector<512x128xf32>
    %143 = tpu.matmul %140, %142, %cst_123 {dimension_numbers = #tpu.dot_dimension_numbers<[1], [0], [0], [1], [0, 0, 1, 1], [], []>} : vector<512x128xf32>, vector<128x128xf32>, vector<512x128xf32> -> vector<512x128xf32>
    %144 = arith.addf %137, %143 : vector<512x128xf32>
    %145 = vector.extract_strided_slice %138 {offsets = [0, 1, 0, 0], sizes = [2, 16, 16, 128], strides = [1, 1, 1, 1]} : vector<2x18x16x128xf32> to vector<2x16x16x128xf32>
    %146 = vector.shape_cast %145 : vector<2x16x16x128xf32> to vector<512x128xf32>
    %c7_124 = arith.constant 7 : index
    %c0_125 = arith.constant 0 : index
    %c0_126 = arith.constant 0 : index
    %147 = vector.load %arg5[%c7_124, %c0_125, %c0_126] : memref<9x128x128xf32, #tpu.memory_space<vmem>>, vector<1x128x128xf32>
    %148 = vector.shape_cast %147 : vector<1x128x128xf32> to vector<128x128xf32>
    %cst_127 = arith.constant dense<0.000000e+00> : vector<512x128xf32>
    %149 = tpu.matmul %146, %148, %cst_127 {dimension_numbers = #tpu.dot_dimension_numbers<[1], [0], [0], [1], [0, 0, 1, 1], [], []>} : vector<512x128xf32>, vector<128x128xf32>, vector<512x128xf32> -> vector<512x128xf32>
    %150 = arith.addf %144, %149 : vector<512x128xf32>
    %151 = vector.extract_strided_slice %138 {offsets = [0, 2, 0, 0], sizes = [2, 16, 16, 128], strides = [1, 1, 1, 1]} : vector<2x18x16x128xf32> to vector<2x16x16x128xf32>
    %152 = vector.shape_cast %151 : vector<2x16x16x128xf32> to vector<512x128xf32>
    %c8_128 = arith.constant 8 : index
    %c0_129 = arith.constant 0 : index
    %c0_130 = arith.constant 0 : index
    %153 = vector.load %arg5[%c8_128, %c0_129, %c0_130] : memref<9x128x128xf32, #tpu.memory_space<vmem>>, vector<1x128x128xf32>
    %154 = vector.shape_cast %153 : vector<1x128x128xf32> to vector<128x128xf32>
    %cst_131 = arith.constant dense<0.000000e+00> : vector<512x128xf32>
    %155 = tpu.matmul %152, %154, %cst_131 {dimension_numbers = #tpu.dot_dimension_numbers<[1], [0], [0], [1], [0, 0, 1, 1], [], []>} : vector<512x128xf32>, vector<128x128xf32>, vector<512x128xf32> -> vector<512x128xf32>
    %156 = arith.addf %150, %155 : vector<512x128xf32>
    %c0_132 = arith.constant 0 : index
    %c0_133 = arith.constant 0 : index
    %157 = vector.load %arg6[%c0_132, %c0_133] : memref<1x128xf32, #tpu.memory_space<vmem>>, vector<1x128xf32>
    %158 = vector.broadcast %157 : vector<1x128xf32> to vector<512x128xf32>
    %159 = arith.addf %156, %158 : vector<512x128xf32>
    %cst_134 = arith.constant dense<0.000000e+00> : vector<128xf32>
    %160 = vector.multi_reduction <add>, %159, %cst_134 [0] : vector<512x128xf32> to vector<128xf32>
    %161 = vector.shape_cast %160 : vector<128xf32> to vector<1x128xf32>
    %cst_135 = arith.constant 0.001953125 : f32
    %162 = vector.broadcast %cst_135 : f32 to vector<1x128xf32>
    %163 = arith.mulf %161, %162 : vector<1x128xf32>
    %164 = vector.broadcast %163 : vector<1x128xf32> to vector<512x128xf32>
    %165 = arith.subf %159, %164 : vector<512x128xf32>
    %166 = arith.mulf %165, %165 : vector<512x128xf32>
    %cst_136 = arith.constant dense<0.000000e+00> : vector<128xf32>
    %167 = vector.multi_reduction <add>, %166, %cst_136 [0] : vector<512x128xf32> to vector<128xf32>
    %168 = vector.shape_cast %167 : vector<128xf32> to vector<1x128xf32>
    %cst_137 = arith.constant 0.001953125 : f32
    %169 = vector.broadcast %cst_137 : f32 to vector<1x128xf32>
    %170 = arith.mulf %168, %169 : vector<1x128xf32>
    %cst_138 = arith.constant 9.99999974E-6 : f32
    %171 = vector.broadcast %cst_138 : f32 to vector<1x128xf32>
    %172 = arith.addf %170, %171 : vector<1x128xf32>
    %173 = math.rsqrt %172 : vector<1x128xf32>
    %174 = vector.broadcast %173 : vector<1x128xf32> to vector<512x128xf32>
    %175 = arith.mulf %165, %174 : vector<512x128xf32>
    %c0_139 = arith.constant 0 : index
    %c0_140 = arith.constant 0 : index
    %176 = vector.load %arg7[%c0_139, %c0_140] : memref<1x128xf32, #tpu.memory_space<vmem>>, vector<1x128xf32>
    %177 = vector.broadcast %176 : vector<1x128xf32> to vector<512x128xf32>
    %178 = arith.mulf %175, %177 : vector<512x128xf32>
    %c0_141 = arith.constant 0 : index
    %c0_142 = arith.constant 0 : index
    %179 = vector.load %arg8[%c0_141, %c0_142] : memref<1x128xf32, #tpu.memory_space<vmem>>, vector<1x128xf32>
    %180 = vector.broadcast %179 : vector<1x128xf32> to vector<512x128xf32>
    %181 = arith.addf %178, %180 : vector<512x128xf32>
    %cst_143 = arith.constant 0.000000e+00 : f32
    %182 = vector.broadcast %cst_143 : f32 to vector<512x128xf32>
    %183 = arith.maximumf %181, %182 : vector<512x128xf32>
    %c0_144 = arith.constant 0 : index
    %c0_145 = arith.constant 0 : index
    %184 = vector.load %arg9[%c0_144, %c0_145] : memref<512x128xf32, #tpu.memory_space<vmem>>, vector<512x128xf32>
    tpu.vector_store %arg9[%c0_144, %c0_145], %183 {strides = array<i32>} : memref<512x128xf32, #tpu.memory_space<vmem>>, vector<512x128xf32>,
    return
  }
}

</mosaic_0001>

<llo_original>
// kernel: conv_block_forward.1
$region0: #{conv_block_forward.1}
  #allocation0 [shape = 'u32[]', space=smem, size = 0x4, offset = 0x4, fixed_abs, tag = 'smem constant byte address 0x4 - core index']
  #allocation1 [shape = 'u32[72,128]{1,0:T(1,128)}', space=vmem, size = 0x9000, scoped, tag = 'internal scratch']
  #allocation2 [shape = 'f32[2,18,18,128]{3,2,1,0:T(8,128)}', space=vmem, size = 0x6c000, scoped, tag = 'scratch operand']
  %s0 = inlined_call_operand.vmem [shape: f32[2,16,16,4], index: 0, kind: input, shape index: {}]
  %s1 = inlined_call_operand.vmem [shape: f32[9,128,128], index: 1, kind: input, shape index: {}]
  %s2 = inlined_call_operand.vmem [shape: f32[1,128], index: 2, kind: input, shape index: {}]
  %s3 = inlined_call_operand.vmem [shape: f32[1,128], index: 3, kind: input, shape index: {}]
  %s4 = inlined_call_operand.vmem [shape: f32[1,128], index: 4, kind: input, shape index: {}]
  %s5 = inlined_call_operand.vmem [shape: f32[9,128,128], index: 5, kind: input, shape index: {}]
  %s6 = inlined_call_operand.vmem [shape: f32[1,128], index: 6, kind: input, shape index: {}]
  %s7 = inlined_call_operand.vmem [shape: f32[1,128], index: 7, kind: input, shape index: {}]
  %s8 = inlined_call_operand.vmem [shape: f32[1,128], index: 8, kind: input, shape index: {}]
  %s9 = inlined_call_operand.vmem [shape: f32[512,128], index: 9, kind: output, shape index: {}]
  %s10 = sld [smem:[#allocation0]]
  $region46: #{conv_block_forward.1} parent=0
    _
  %s12 = ssub.s32 1, %s10
  %s13 = scalar_select 0, %s12, %s10
  // Predicated region
  $region2: #{conv_block_forward.1} parent=0 // pred_check
    _
  $region3: #{conv_block_forward.1} parent=0 // pred_check_branch
    %15 = sbr.rel (0) target = $region5
  $region4: #{conv_block_forward.1} parent=0 // pred_region
    _
  $region5: #{conv_block_forward.1} parent=0 // pred_fallthru
    _
  // Predicated region
  $region6: #{conv_block_forward.1} parent=0 // pred_check
    _
  $region7: #{conv_block_forward.1} parent=0 // pred_check_branch
    %17 = sbr.rel (0) target = $region9
  $region8: #{conv_block_forward.1} parent=0 // pred_region
    _
  $region9: #{conv_block_forward.1} parent=0 // pred_fallthru
    _
  // Predicated region
  $region10: #{conv_block_forward.1} parent=0 // pred_check
    _
  $region11: #{conv_block_forward.1} parent=0 // pred_check_branch
    %19 = sbr.rel (0) target = $region13
  $region12: #{conv_block_forward.1} parent=0 // pred_region
    _
  $region13: #{conv_block_forward.1} parent=0 // pred_fallthru
    _
  // Predicated region
  $region14: #{conv_block_forward.1} parent=0 // pred_check
    _
  $region15: #{conv_block_forward.1} parent=0 // pred_check_branch
    %21 = sbr.rel (0) target = $region17
  $region16: #{conv_block_forward.1} parent=0 // pred_region
    _
  $region17: #{conv_block_forward.1} parent=0 // pred_fallthru
    _
  // Predicated region
  $region18: #{conv_block_forward.1} parent=0 // pred_check
    _
  $region19: #{conv_block_forward.1} parent=0 // pred_check_branch
    %23 = sbr.rel (0) target = $region21
  $region20: #{conv_block_forward.1} parent=0 // pred_region
    _
  $region21: #{conv_block_forward.1} parent=0 // pred_fallthru
    _
  // Predicated region
  $region22: #{conv_block_forward.1} parent=0 // pred_check
    _
  $region23: #{conv_block_forward.1} parent=0 // pred_check_branch
    %25 = sbr.rel (0) target = $region25
  $region24: #{conv_block_forward.1} parent=0 // pred_region
    _
  $region25: #{conv_block_forward.1} parent=0 // pred_fallthru
    _
  // Predicated region
  $region26: #{conv_block_forward.1} parent=0 // pred_check
    _
  $region27: #{conv_block_forward.1} parent=0 // pred_check_branch
    %27 = sbr.rel (0) target = $region29
  $region28: #{conv_block_forward.1} parent=0 // pred_region
    _
  $region29: #{conv_block_forward.1} parent=0 // pred_fallthru
    _
  // Predicated region
  $region30: #{conv_block_forward.1} parent=0 // pred_check
    _
  $region31: #{conv_block_forward.1} parent=0 // pred_check_branch
    %29 = sbr.rel (0) target = $region33
  $region32: #{conv_block_forward.1} parent=0 // pred_region
    _
  $region33: #{conv_block_forward.1} parent=0 // pred_fallthru
    _
  // Predicated region
  $region34: #{conv_block_forward.1} parent=0 // pred_check
    _
  $region35: #{conv_block_forward.1} parent=0 // pred_check_branch
    %31 = sbr.rel (0) target = $region37
  $region36: #{conv_block_forward.1} parent=0 // pred_region
    _
  $region37: #{conv_block_forward.1} parent=0 // pred_fallthru
    _
  %32 = vst [vmem:[#allocation2] sm:$0xff] 0.0
  %33 = vst [vmem:[#allocation2 + $0x8] sm:$0xff] 0.0
  %34 = vst [vmem:[#allocation2 + $0x10] sm:$0x3] 0.0
  %35 = vst [vmem:[#allocation2 + $0x1b0] sm:$0xff] 0.0
  %36 = vst [vmem:[#allocation2 + $0x1b8] sm:$0xff] 0.0
  %37 = vst [vmem:[#allocation2 + $0x1c0] sm:$0x3] 0.0
  %s38 = scalar_lea.vmem [#allocation2], 408
  %39 = vst [vmem:[%s38] sm:$0xff] 0.0
  %40 = vst [vmem:[%s38 + $0x8] sm:$0xff] 0.0
  %41 = vst [vmem:[%s38 + $0x10] sm:$0x3] 0.0
  %42 = vst [vmem:[%s38 + $0x1b0] sm:$0xff] 0.0
  %43 = vst [vmem:[%s38 + $0x1b8] sm:$0xff] 0.0
  %44 = vst [vmem:[%s38 + $0x1c0] sm:$0x3] 0.0
  %45 = vst [vmem:[#allocation2] sm:$0x1] 0.0
  %46 = vst [vmem:[#allocation2 + $0x18] sm:$0x1] 0.0
  %47 = vst [vmem:[#allocation2 + $0x30] sm:$0x1] 0.0
  %48 = vst [vmem:[#allocation2 + $0x48] sm:$0x1] 0.0
  %49 = vst [vmem:[#allocation2 + $0x60] sm:$0x1] 0.0
  %50 = vst [vmem:[#allocation2 + $0x78] sm:$0x1] 0.0
  %51 = vst [vmem:[#allocation2 + $0x90] sm:$0x1] 0.0
  %52 = vst [vmem:[#allocation2 + $0xa8] sm:$0x1] 0.0
  %53 = vst [vmem:[#allocation2 + $0xc0] sm:$0x1] 0.0
  %54 = vst [vmem:[#allocation2 + $0xd8] sm:$0x1] 0.0
  %55 = vst [vmem:[#allocation2 + $0xf0] sm:$0x1] 0.0
  %56 = vst [vmem:[#allocation2 + $0x108] sm:$0x1] 0.0
  %57 = vst [vmem:[#allocation2 + $0x120] sm:$0x1] 0.0
  %58 = vst [vmem:[#allocation2 + $0x138] sm:$0x1] 0.0
  %59 = vst [vmem:[#allocation2 + $0x150] sm:$0x1] 0.0
  %60 = vst [vmem:[#allocation2 + $0x168] sm:$0x1] 0.0
  %61 = vst [vmem:[#allocation2 + $0x180] sm:$0x1] 0.0
  %62 = vst [vmem:[#allocation2 + $0x198] sm:$0x1] 0.0
  %63 = vst [vmem:[#allocation2 + $0x1b0] sm:$0x1] 0.0
  %64 = vst [vmem:[#allocation2 + $0x1c8] sm:$0x1] 0.0
  %65 = vst [vmem:[#allocation2 + $0x1e0] sm:$0x1] 0.0
  %66 = vst [vmem:[#allocation2 + $0x1f8] sm:$0x1] 0.0
  %67 = vst [vmem:[#allocation2 + $0x210] sm:$0x1] 0.0
  %68 = vst [vmem:[#allocation2 + $0x228] sm:$0x1] 0.0
  %69 = vst [vmem:[#allocation2 + $0x240] sm:$0x1] 0.0
  %70 = vst [vmem:[#allocation2 + $0x258] sm:$0x1] 0.0
  %71 = vst [vmem:[#allocation2 + $0x270] sm:$0x1] 0.0
  %72 = vst [vmem:[#allocation2 + $0x288] sm:$0x1] 0.0
  %73 = vst [vmem:[#allocation2 + $0x2a0] sm:$0x1] 0.0
  %74 = vst [vmem:[#allocation2 + $0x2b8] sm:$0x1] 0.0
  %75 = vst [vmem:[#allocation2 + $0x2d0] sm:$0x1] 0.0
  %76 = vst [vmem:[#allocation2 + $0x2e8] sm:$0x1] 0.0
  %77 = vst [vmem:[#allocation2 + $0x300] sm:$0x1] 0.0
  %78 = vst [vmem:[#allocation2 + $0x318] sm:$0x1] 0.0
  %79 = vst [vmem:[#allocation2 + $0x330] sm:$0x1] 0.0
  %80 = vst [vmem:[#allocation2 + $0x348] sm:$0x1] 0.0
  %81 = vst [vmem:[#allocation2 + $0x11] sm:$0x1] 0.0
  %82 = vst [vmem:[#allocation2 + $0x29] sm:$0x1] 0.0
  %83 = vst [vmem:[#allocation2 + $0x41] sm:$0x1] 0.0
  %84 = vst [vmem:[#allocation2 + $0x59] sm:$0x1] 0.0
  %85 = vst [vmem:[#allocation2 + $0x71] sm:$0x1] 0.0
  %86 = vst [vmem:[#allocation2 + $0x89] sm:$0x1] 0.0
  %87 = vst [vmem:[#allocation2 + $0xa1] sm:$0x1] 0.0
  %88 = vst [vmem:[#allocation2 + $0xb9] sm:$0x1] 0.0
  %89 = vst [vmem:[#allocation2 + $0xd1] sm:$0x1] 0.0
  %90 = vst [vmem:[#allocation2 + $0xe9] sm:$0x1] 0.0
  %91 = vst [vmem:[#allocation2 + $0x101] sm:$0x1] 0.0
  %92 = vst [vmem:[#allocation2 + $0x119] sm:$0x1] 0.0
  %93 = vst [vmem:[#allocation2 + $0x131] sm:$0x1] 0.0
  %94 = vst [vmem:[#allocation2 + $0x149] sm:$0x1] 0.0
  %95 = vst [vmem:[#allocation2 + $0x161] sm:$0x1] 0.0
  %96 = vst [vmem:[#allocation2 + $0x179] sm:$0x1] 0.0
  %97 = vst [vmem:[#allocation2 + $0x191] sm:$0x1] 0.0
  %98 = vst [vmem:[#allocation2 + $0x1a9] sm:$0x1] 0.0
  %99 = vst [vmem:[#allocation2 + $0x1c1] sm:$0x1] 0.0
  %100 = vst [vmem:[#allocation2 + $0x1d9] sm:$0x1] 0.0
  %101 = vst [vmem:[#allocation2 + $0x1f1] sm:$0x1] 0.0
  %102 = vst [vmem:[#allocation2 + $0x209] sm:$0x1] 0.0
  %103 = vst [vmem:[#allocation2 + $0x221] sm:$0x1] 0.0
  %104 = vst [vmem:[#allocation2 + $0x239] sm:$0x1] 0.0
  %105 = vst [vmem:[#allocation2 + $0x251] sm:$0x1] 0.0
  %106 = vst [vmem:[#allocation2 + $0x269] sm:$0x1] 0.0
  %107 = vst [vmem:[#allocation2 + $0x281] sm:$0x1] 0.0
  %108 = vst [vmem:[#allocation2 + $0x299] sm:$0x1] 0.0
  %109 = vst [vmem:[#allocation2 + $0x2b1] sm:$0x1] 0.0
  %110 = vst [vmem:[#allocation2 + $0x2c9] sm:$0x1] 0.0
  %111 = vst [vmem:[#allocation2 + $0x2e1] sm:$0x1] 0.0
  %112 = vst [vmem:[#allocation2 + $0x2f9] sm:$0x1] 0.0
  %113 = vst [vmem:[#allocation2 + $0x311] sm:$0x1] 0.0
  %114 = vst [vmem:[#allocation2 + $0x329] sm:$0x1] 0.0
  %115 = vst [vmem:[#allocation2 + $0x341] sm:$0x1] 0.0
  %116 = vst [vmem:[#allocation2 + $0x359] sm:$0x1] 0.0
  %v117 = vld [vmem:[%s0] sm:$0xff]
  %v118 = vld [vmem:[%s0 + $0x8] sm:$0xff]
  %v119 = vld [vmem:[%s0 + $0x10] sm:$0xff]
  %v120 = vld [vmem:[%s0 + $0x18] sm:$0xff]
  %v121 = vld [vmem:[%s0 + $0x20] sm:$0xff]
  %v122 = vld [vmem:[%s0 + $0x28] sm:$0xff]
  %v123 = vld [vmem:[%s0 + $0x30] sm:$0xff]
  %v124 = vld [vmem:[%s0 + $0x38] sm:$0xff]
  %v125 = vld [vmem:[%s0 + $0x40] sm:$0xff]
  %v126 = vld [vmem:[%s0 + $0x48] sm:$0xff]
  %v127 = vld [vmem:[%s0 + $0x50] sm:$0xff]
  %v128 = vld [vmem:[%s0 + $0x58] sm:$0xff]
  %v129 = vld [vmem:[%s0 + $0x60] sm:$0xff]
  %v130 = vld [vmem:[%s0 + $0x68] sm:$0xff]
  %v131 = vld [vmem:[%s0 + $0x70] sm:$0xff]
  %v132 = vld [vmem:[%s0 + $0x78] sm:$0xff]
  %v133 = vld [vmem:[%s0 + $0x80] sm:$0xff]
  %v134 = vld [vmem:[%s0 + $0x88] sm:$0xff]
  %v135 = vld [vmem:[%s0 + $0x90] sm:$0xff]
  %v136 = vld [vmem:[%s0 + $0x98] sm:$0xff]
  %v137 = vld [vmem:[%s0 + $0xa0] sm:$0xff]
  %v138 = vld [vmem:[%s0 + $0xa8] sm:$0xff]
  %v139 = vld [vmem:[%s0 + $0xb0] sm:$0xff]
  %v140 = vld [vmem:[%s0 + $0xb8] sm:$0xff]
  %v141 = vld [vmem:[%s0 + $0xc0] sm:$0xff]
  %v142 = vld [vmem:[%s0 + $0xc8] sm:$0xff]
  %v143 = vld [vmem:[%s0 + $0xd0] sm:$0xff]
  %v144 = vld [vmem:[%s0 + $0xd8] sm:$0xff]
  %v145 = vld [vmem:[%s0 + $0xe0] sm:$0xff]
  %v146 = vld [vmem:[%s0 + $0xe8] sm:$0xff]
  %v147 = vld [vmem:[%s0 + $0xf0] sm:$0xff]
  %v148 = vld [vmem:[%s0 + $0xf8] sm:$0xff]
  %v149 = vld [vmem:[%s0 + $0x100] sm:$0xff]
  %v150 = vld [vmem:[%s0 + $0x108] sm:$0xff]
  %v151 = vld [vmem:[%s0 + $0x110] sm:$0xff]
  %v152 = vld [vmem:[%s0 + $0x118] sm:$0xff]
  %v153 = vld [vmem:[%s0 + $0x120] sm:$0xff]
  %v154 = vld [vmem:[%s0 + $0x128] sm:$0xff]
  %v155 = vld [vmem:[%s0 + $0x130] sm:$0xff]
  %v156 = vld [vmem:[%s0 + $0x138] sm:$0xff]
  %v157 = vld [vmem:[%s0 + $0x140] sm:$0xff]
  %v158 = vld [vmem:[%s0 + $0x148] sm:$0xff]
  %v159 = vld [vmem:[%s0 + $0x150] sm:$0xff]
  %v160 = vld [vmem:[%s0 + $0x158] sm:$0xff]
  %v161 = vld [vmem:[%s0 + $0x160] sm:$0xff]
  %v162 = vld [vmem:[%s0 + $0x168] sm:$0xff]
  %v163 = vld [vmem:[%s0 + $0x170] sm:$0xff]
  %v164 = vld [vmem:[%s0 + $0x178] sm:$0xff]
  %v165 = vld [vmem:[%s0 + $0x180] sm:$0xff]
  %v166 = vld [vmem:[%s0 + $0x188] sm:$0xff]
  %v167 = vld [vmem:[%s0 + $0x190] sm:$0xff]
  %v168 = vld [vmem:[%s0 + $0x198] sm:$0xff]
  %v169 = vld [vmem:[%s0 + $0x1a0] sm:$0xff]
  %v170 = vld [vmem:[%s0 + $0x1a8] sm:$0xff]
  %v171 = vld [vmem:[%s0 + $0x1b0] sm:$0xff]
  %v172 = vld [vmem:[%s0 + $0x1b8] sm:$0xff]
  %v173 = vld [vmem:[%s0 + $0x1c0] sm:$0xff]
  %v174 = vld [vmem:[%s0 + $0x1c8] sm:$0xff]
  %v175 = vld [vmem:[%s0 + $0x1d0] sm:$0xff]
  %v176 = vld [vmem:[%s0 + $0x1d8] sm:$0xff]
  %v177 = vld [vmem:[%s0 + $0x1e0] sm:$0xff]
  %v178 = vld [vmem:[%s0 + $0x1e8] sm:$0xff]
  %v179 = vld [vmem:[%s0 + $0x1f0] sm:$0xff]
  %v180 = vld [vmem:[%s0 + $0x1f8] sm:$0xff]
  %vm181 = vcmask 31744
  %v182 = vsel %vm181, %v117, 0.0
  %v183 = vsel %vm181, %v118, 0.0
  %v184 = vsel %vm181, %v119, 0.0
  %v185 = vsel %vm181, %v120, 0.0
  %v186 = vsel %vm181, %v121, 0.0
  %v187 = vsel %vm181, %v122, 0.0
  %v188 = vsel %vm181, %v123, 0.0
  %v189 = vsel %vm181, %v124, 0.0
  %v190 = vsel %vm181, %v125, 0.0
  %v191 = vsel %vm181, %v126, 0.0
  %v192 = vsel %vm181, %v127, 0.0
  %v193 = vsel %vm181, %v128, 0.0
  %v194 = vsel %vm181, %v129, 0.0
  %v195 = vsel %vm181, %v130, 0.0
  %v196 = vsel %vm181, %v131, 0.0
  %v197 = vsel %vm181, %v132, 0.0
  %v198 = vsel %vm181, %v133, 0.0
  %v199 = vsel %vm181, %v134, 0.0
  %v200 = vsel %vm181, %v135, 0.0
  %v201 = vsel %vm181, %v136, 0.0
  %v202 = vsel %vm181, %v137, 0.0
  %v203 = vsel %vm181, %v138, 0.0
  %v204 = vsel %vm181, %v139, 0.0
  %v205 = vsel %vm181, %v140, 0.0
  %v206 = vsel %vm181, %v141, 0.0
  %v207 = vsel %vm181, %v142, 0.0
  %v208 = vsel %vm181, %v143, 0.0
  %v209 = vsel %vm181, %v144, 0.0
  %v210 = vsel %vm181, %v145, 0.0
  %v211 = vsel %vm181, %v146, 0.0
  %v212 = vsel %vm181, %v147, 0.0
  %v213 = vsel %vm181, %v148, 0.0
  %v214 = vsel %vm181, %v149, 0.0
  %v215 = vsel %vm181, %v150, 0.0
  %v216 = vsel %vm181, %v151, 0.0
  %v217 = vsel %vm181, %v152, 0.0
  %v218 = vsel %vm181, %v153, 0.0
  %v219 = vsel %vm181, %v154, 0.0
  %v220 = vsel %vm181, %v155, 0.0
  %v221 = vsel %vm181, %v156, 0.0
  %v222 = vsel %vm181, %v157, 0.0
  %v223 = vsel %vm181, %v158, 0.0
  %v224 = vsel %vm181, %v159, 0.0
  %v225 = vsel %vm181, %v160, 0.0
  %v226 = vsel %vm181, %v161, 0.0
  %v227 = vsel %vm181, %v162, 0.0
  %v228 = vsel %vm181, %v163, 0.0
  %v229 = vsel %vm181, %v164, 0.0
  %v230 = vsel %vm181, %v165, 0.0
  %v231 = vsel %vm181, %v166, 0.0
  %v232 = vsel %vm181, %v167, 0.0
  %v233 = vsel %vm181, %v168, 0.0
  %v234 = vsel %vm181, %v169, 0.0
  %v235 = vsel %vm181, %v170, 0.0
  %v236 = vsel %vm181, %v171, 0.0
  %v237 = vsel %vm181, %v172, 0.0
  %v238 = vsel %vm181, %v173, 0.0
  %v239 = vsel %vm181, %v174, 0.0
  %v240 = vsel %vm181, %v175, 0.0
  %v241 = vsel %vm181, %v176, 0.0
  %v242 = vsel %vm181, %v177, 0.0
  %v243 = vsel %vm181, %v178, 0.0
  %v244 = vsel %vm181, %v179, 0.0
  %v245 = vsel %vm181, %v180, 0.0
  %s246 = scalar_lea.vmem [#allocation2], 24
  %247 = vst [vmem:[%s246 + $0x1] sm:$0xff] %v182
  %248 = vst [vmem:[%s246 + $0x9] sm:$0xff] %v183
  %249 = vst [vmem:[%s246 + $0x19] sm:$0xff] %v184
  %250 = vst [vmem:[%s246 + $0x21] sm:$0xff] %v185
  %251 = vst [vmem:[%s246 + $0x31] sm:$0xff] %v186
  %252 = vst [vmem:[%s246 + $0x39] sm:$0xff] %v187
  %253 = vst [vmem:[%s246 + $0x49] sm:$0xff] %v188
  %254 = vst [vmem:[%s246 + $0x51] sm:$0xff] %v189
  %255 = vst [vmem:[%s246 + $0x61] sm:$0xff] %v190
  %256 = vst [vmem:[%s246 + $0x69] sm:$0xff] %v191
  %257 = vst [vmem:[%s246 + $0x79] sm:$0xff] %v192
  %258 = vst [vmem:[%s246 + $0x81] sm:$0xff] %v193
  %259 = vst [vmem:[%s246 + $0x91] sm:$0xff] %v194
  %260 = vst [vmem:[%s246 + $0x99] sm:$0xff] %v195
  %261 = vst [vmem:[%s246 + $0xa9] sm:$0xff] %v196
  %262 = vst [vmem:[%s246 + $0xb1] sm:$0xff] %v197
  %263 = vst [vmem:[%s246 + $0xc1] sm:$0xff] %v198
  %264 = vst [vmem:[%s246 + $0xc9] sm:$0xff] %v199
  %265 = vst [vmem:[%s246 + $0xd9] sm:$0xff] %v200
  %266 = vst [vmem:[%s246 + $0xe1] sm:$0xff] %v201
  %267 = vst [vmem:[%s246 + $0xf1] sm:$0xff] %v202
  %268 = vst [vmem:[%s246 + $0xf9] sm:$0xff] %v203
  %269 = vst [vmem:[%s246 + $0x109] sm:$0xff] %v204
  %270 = vst [vmem:[%s246 + $0x111] sm:$0xff] %v205
  %271 = vst [vmem:[%s246 + $0x121] sm:$0xff] %v206
  %272 = vst [vmem:[%s246 + $0x129] sm:$0xff] %v207
  %273 = vst [vmem:[%s246 + $0x139] sm:$0xff] %v208
  %274 = vst [vmem:[%s246 + $0x141] sm:$0xff] %v209
  %275 = vst [vmem:[%s246 + $0x151] sm:$0xff] %v210
  %276 = vst [vmem:[%s246 + $0x159] sm:$0xff] %v211
  %277 = vst [vmem:[%s246 + $0x169] sm:$0xff] %v212
  %278 = vst [vmem:[%s246 + $0x171] sm:$0xff] %v213
  %279 = vst [vmem:[%s246 + $0x1b1] sm:$0xff] %v214
  %280 = vst [vmem:[%s246 + $0x1b9] sm:$0xff] %v215
  %281 = vst [vmem:[%s246 + $0x1c9] sm:$0xff] %v216
  %282 = vst [vmem:[%s246 + $0x1d1] sm:$0xff] %v217
  %283 = vst [vmem:[%s246 + $0x1e1] sm:$0xff] %v218
  %284 = vst [vmem:[%s246 + $0x1e9] sm:$0xff] %v219
  %285 = vst [vmem:[%s246 + $0x1f9] sm:$0xff] %v220
  %286 = vst [vmem:[%s246 + $0x201] sm:$0xff] %v221
  %287 = vst [vmem:[%s246 + $0x211] sm:$0xff] %v222
  %288 = vst [vmem:[%s246 + $0x219] sm:$0xff] %v223
  %289 = vst [vmem:[%s246 + $0x229] sm:$0xff] %v224
  %290 = vst [vmem:[%s246 + $0x231] sm:$0xff] %v225
  %291 = vst [vmem:[%s246 + $0x241] sm:$0xff] %v226
  %292 = vst [vmem:[%s246 + $0x249] sm:$0xff] %v227
  %293 = vst [vmem:[%s246 + $0x259] sm:$0xff] %v228
  %294 = vst [vmem:[%s246 + $0x261] sm:$0xff] %v229
  %295 = vst [vmem:[%s246 + $0x271] sm:$0xff] %v230
  %296 = vst [vmem:[%s246 + $0x279] sm:$0xff] %v231
  %297 = vst [vmem:[%s246 + $0x289] sm:$0xff] %v232
  %298 = vst [vmem:[%s246 + $0x291] sm:$0xff] %v233
  %299 = vst [vmem:[%s246 + $0x2a1] sm:$0xff] %v234
  %300 = vst [vmem:[%s246 + $0x2a9] sm:$0xff] %v235
  %301 = vst [vmem:[%s246 + $0x2b9] sm:$0xff] %v236
  %302 = vst [vmem:[%s246 + $0x2c1] sm:$0xff] %v237
  %303 = vst [vmem:[%s246 + $0x2d1] sm:$0xff] %v238
  %304 = vst [vmem:[%s246 + $0x2d9] sm:$0xff] %v239
  %305 = vst [vmem:[%s246 + $0x2e9] sm:$0xff] %v240
  %306 = vst [vmem:[%s246 + $0x2f1] sm:$0xff] %v241
  %307 = vst [vmem:[%s246 + $0x301] sm:$0xff] %v242
  %308 = vst [vmem:[%s246 + $0x309] sm:$0xff] %v243
  %309 = vst [vmem:[%s246 + $0x319] sm:$0xff] %v244
  %310 = vst [vmem:[%s246 + $0x321] sm:$0xff] %v245
  %v311 = vld [vmem:[#allocation2] sm:$0xff]
  %v312 = vld [vmem:[#allocation2 + $0x8] sm:$0xff]
  %v313 = vld [vmem:[#allocation2 + $0x18] sm:$0xff]
  %v314 = vld [vmem:[#allocation2 + $0x20] sm:$0xff]
  %v315 = vld [vmem:[#allocation2 + $0x30] sm:$0xff]
  %v316 = vld [vmem:[#allocation2 + $0x38] sm:$0xff]
  %v317 = vld [vmem:[#allocation2 + $0x48] sm:$0xff]
  %v318 = vld [vmem:[#allocation2 + $0x50] sm:$0xff]
  %v319 = vld [vmem:[#allocation2 + $0x60] sm:$0xff]
  %v320 = vld [vmem:[#allocation2 + $0x68] sm:$0xff]
  %v321 = vld [vmem:[#allocation2 + $0x78] sm:$0xff]
  %v322 = vld [vmem:[#allocation2 + $0x80] sm:$0xff]
  %v323 = vld [vmem:[#allocation2 + $0x90] sm:$0xff]
  %v324 = vld [vmem:[#allocation2 + $0x98] sm:$0xff]
  %v325 = vld [vmem:[#allocation2 + $0xa8] sm:$0xff]
  %v326 = vld [vmem:[#allocation2 + $0xb0] sm:$0xff]
  %v327 = vld [vmem:[#allocation2 + $0xc0] sm:$0xff]
  %v328 = vld [vmem:[#allocation2 + $0xc8] sm:$0xff]
  %v329 = vld [vmem:[#allocation2 + $0xd8] sm:$0xff]
  %v330 = vld [vmem:[#allocation2 + $0xe0] sm:$0xff]
  %v331 = vld [vmem:[#allocation2 + $0xf0] sm:$0xff]
  %v332 = vld [vmem:[#allocation2 + $0xf8] sm:$0xff]
  %v333 = vld [vmem:[#allocation2 + $0x108] sm:$0xff]
  %v334 = vld [vmem:[#allocation2 + $0x110] sm:$0xff]
  %v335 = vld [vmem:[#allocation2 + $0x120] sm:$0xff]
  %v336 = vld [vmem:[#allocation2 + $0x128] sm:$0xff]
  %v337 = vld [vmem:[#allocation2 + $0x138] sm:$0xff]
  %v338 = vld [vmem:[#allocation2 + $0x140] sm:$0xff]
  %v339 = vld [vmem:[#allocation2 + $0x150] sm:$0xff]
  %v340 = vld [vmem:[#allocation2 + $0x158] sm:$0xff]
  %v341 = vld [vmem:[#allocation2 + $0x168] sm:$0xff]
  %v342 = vld [vmem:[#allocation2 + $0x170] sm:$0xff]
  %v343 = vld [vmem:[#allocation2 + $0x180] sm:$0xff]
  %v344 = vld [vmem:[#allocation2 + $0x188] sm:$0xff]
  %v345 = vld [vmem:[#allocation2 + $0x198] sm:$0xff]
  %v346 = vld [vmem:[#allocation2 + $0x1a0] sm:$0xff]
  %v347 = vld [vmem:[#allocation2 + $0x1b0] sm:$0xff]
  %v348 = vld [vmem:[#allocation2 + $0x1b8] sm:$0xff]
  %v349 = vld [vmem:[#allocation2 + $0x1c8] sm:$0xff]
  %v350 = vld [vmem:[#allocation2 + $0x1d0] sm:$0xff]
  %v351 = vld [vmem:[#allocation2 + $0x1e0] sm:$0xff]
  %v352 = vld [vmem:[#allocation2 + $0x1e8] sm:$0xff]
  %v353 = vld [vmem:[#allocation2 + $0x1f8] sm:$0xff]
  %v354 = vld [vmem:[#allocation2 + $0x200] sm:$0xff]
  %v355 = vld [vmem:[#allocation2 + $0x210] sm:$0xff]
  %v356 = vld [vmem:[#allocation2 + $0x218] sm:$0xff]
  %v357 = vld [vmem:[#allocation2 + $0x228] sm:$0xff]
  %v358 = vld [vmem:[#allocation2 + $0x230] sm:$0xff]
  %v359 = vld [vmem:[#allocation2 + $0x240] sm:$0xff]
  %v360 = vld [vmem:[#allocation2 + $0x248] sm:$0xff]
  %v361 = vld [vmem:[#allocation2 + $0x258] sm:$0xff]
  %v362 = vld [vmem:[#allocation2 + $0x260] sm:$0xff]
  %v363 = vld [vmem:[#allocation2 + $0x270] sm:$0xff]
  %v364 = vld [vmem:[#allocation2 + $0x278] sm:$0xff]
  %v365 = vld [vmem:[#allocation2 + $0x288] sm:$0xff]
  %v366 = vld [vmem:[#allocation2 + $0x290] sm:$0xff]
  %v367 = vld [vmem:[#allocation2 + $0x2a0] sm:$0xff]
  %v368 = vld [vmem:[#allocation2 + $0x2a8] sm:$0xff]
  %v369 = vld [vmem:[#allocation2 + $0x2b8] sm:$0xff]
  %v370 = vld [vmem:[#allocation2 + $0x2c0] sm:$0xff]
  %v371 = vld [vmem:[#allocation2 + $0x2d0] sm:$0xff]
  %v372 = vld [vmem:[#allocation2 + $0x2d8] sm:$0xff]
  %v373 = vld [vmem:[#allocation2 + $0x2e8] sm:$0xff]
  %v374 = vld [vmem:[#allocation2 + $0x2f0] sm:$0xff]
  %v375 = vld [vmem:[#allocation2 + $0x300] sm:$0xff]
  %v376 = vld [vmem:[#allocation2 + $0x308] sm:$0xff]
  %v377 = vld [vmem:[#allocation2 + $0x318] sm:$0xff]
  %v378 = vld [vmem:[#allocation2 + $0x320] sm:$0xff]
  %v379 = vld [vmem:[#allocation2 + $0x330] sm:$0xff]
  %v380 = vld [vmem:[#allocation2 + $0x338] sm:$0xff]
  %v381 = vld [vmem:[#allocation2 + $0x348] sm:$0xff]
  %v382 = vld [vmem:[#allocation2 + $0x350] sm:$0xff]
  %v383 = vld [vmem:[%s1] sm:$0xff]
  %v384 = vld [vmem:[%s1 + $0x8] sm:$0xff]
  %v385 = vld [vmem:[%s1 + $0x10] sm:$0xff]
  %v386 = vld [vmem:[%s1 + $0x18] sm:$0xff]
  %v387 = vld [vmem:[%s1 + $0x20] sm:$0xff]
  %v388 = vld [vmem:[%s1 + $0x28] sm:$0xff]
  %v389 = vld [vmem:[%s1 + $0x30] sm:$0xff]
  %v390 = vld [vmem:[%s1 + $0x38] sm:$0xff]
  %v391 = vld [vmem:[%s1 + $0x40] sm:$0xff]
  %v392 = vld [vmem:[%s1 + $0x48] sm:$0xff]
  %v393 = vld [vmem:[%s1 + $0x50] sm:$0xff]
  %v394 = vld [vmem:[%s1 + $0x58] sm:$0xff]
  %v395 = vld [vmem:[%s1 + $0x60] sm:$0xff]
  %v396 = vld [vmem:[%s1 + $0x68] sm:$0xff]
  %v397 = vld [vmem:[%s1 + $0x70] sm:$0xff]
  %v398 = vld [vmem:[%s1 + $0x78] sm:$0xff]
  %s399 = scalar_lea.vmem %s1, 128
  %v400 = vld [vmem:[%s399] sm:$0xff]
  %v401 = vld [vmem:[%s399 + $0x8] sm:$0xff]
  %v402 = vld [vmem:[%s399 + $0x10] sm:$0xff]
  %v403 = vld [vmem:[%s399 + $0x18] sm:$0xff]
  %v404 = vld [vmem:[%s399 + $0x20] sm:$0xff]
  %v405 = vld [vmem:[%s399 + $0x28] sm:$0xff]
  %v406 = vld [vmem:[%s399 + $0x30] sm:$0xff]
  %v407 = vld [vmem:[%s399 + $0x38] sm:$0xff]
  %v408 = vld [vmem:[%s399 + $0x40] sm:$0xff]
  %v409 = vld [vmem:[%s399 + $0x48] sm:$0xff]
  %v410 = vld [vmem:[%s399 + $0x50] sm:$0xff]
  %v411 = vld [vmem:[%s399 + $0x58] sm:$0xff]
  %v412 = vld [vmem:[%s399 + $0x60] sm:$0xff]
  %v413 = vld [vmem:[%s399 + $0x68] sm:$0xff]
  %v414 = vld [vmem:[%s399 + $0x70] sm:$0xff]
  %v415 = vld [vmem:[%s399 + $0x78] sm:$0xff]
  %416 = vmatpush.msra.mxu0 %v415
  %417 = vmatpush.msra.mxu0 %v414
  %418 = vmatpush.msra.mxu0 %v413
  %419 = vmatpush.msra.mxu0 %v412
  %420 = vmatpush.msra.mxu0 %v411
  %421 = vmatpush.msra.mxu0 %v410
  %422 = vmatpush.msra.mxu0 %v409
  %423 = vmatpush.msra.mxu0 %v408
  %424 = vmatpush.msra.mxu0 %v407
  %425 = vmatpush.msra.mxu0 %v406
  %426 = vmatpush.msra.mxu0 %v405
  %427 = vmatpush.msra.mxu0 %v404
  %428 = vmatpush.msra.mxu0 %v403
  %429 = vmatpush.msra.mxu0 %v402
  %430 = vmatpush.msra.mxu0 %v401
  %431 = vmatpush.msra.mxu0 %v400
  %432 = vmatmul.f32.gmra.mxu0 %v313
  %v433 = vpop.f32.mrf.mxu0
  %v434 = vadd.f32 0.0, %v433
  %435 = vmatmul.f32.gmra.mxu0 %v314
  %v436 = vpop.f32.mrf.mxu0
  %v437 = vadd.f32 0.0, %v436
  %438 = vmatmul.f32.gmra.mxu0 %v315
  %v439 = vpop.f32.mrf.mxu0
  %v440 = vadd.f32 0.0, %v439
  %441 = vmatmul.f32.gmra.mxu0 %v316
  %v442 = vpop.f32.mrf.mxu0
  %v443 = vadd.f32 0.0, %v442
  %444 = vmatmul.f32.gmra.mxu0 %v317
  %v445 = vpop.f32.mrf.mxu0
  %v446 = vadd.f32 0.0, %v445
  %447 = vmatmul.f32.gmra.mxu0 %v318
  %v448 = vpop.f32.mrf.mxu0
  %v449 = vadd.f32 0.0, %v448
  %450 = vmatmul.f32.gmra.mxu0 %v319
  %v451 = vpop.f32.mrf.mxu0
  %v452 = vadd.f32 0.0, %v451
  %453 = vmatmul.f32.gmra.mxu0 %v320
  %v454 = vpop.f32.mrf.mxu0
  %v455 = vadd.f32 0.0, %v454
  %456 = vmatmul.f32.gmra.mxu0 %v321
  %v457 = vpop.f32.mrf.mxu0
  %v458 = vadd.f32 0.0, %v457
  %459 = vmatmul.f32.gmra.mxu0 %v322
  %v460 = vpop.f32.mrf.mxu0
  %v461 = vadd.f32 0.0, %v460
  %462 = vmatmul.f32.gmra.mxu0 %v323
  %v463 = vpop.f32.mrf.mxu0
  %v464 = vadd.f32 0.0, %v463
  %465 = vmatmul.f32.gmra.mxu0 %v324
  %v466 = vpop.f32.mrf.mxu0
  %v467 = vadd.f32 0.0, %v466
  %468 = vmatmul.f32.gmra.mxu0 %v325
  %v469 = vpop.f32.mrf.mxu0
  %v470 = vadd.f32 0.0, %v469
  %471 = vmatmul.f32.gmra.mxu0 %v326
  %v472 = vpop.f32.mrf.mxu0
  %v473 = vadd.f32 0.0, %v472
  %474 = vmatmul.f32.gmra.mxu0 %v327
  %v475 = vpop.f32.mrf.mxu0
  %v476 = vadd.f32 0.0, %v475
  %477 = vmatmul.f32.gmra.mxu0 %v328
  %v478 = vpop.f32.mrf.mxu0
  %v479 = vadd.f32 0.0, %v478
  %480 = vmatmul.f32.gmra.mxu0 %v329
  %v481 = vpop.f32.mrf.mxu0
  %v482 = vadd.f32 0.0, %v481
  %483 = vmatmul.f32.gmra.mxu0 %v330
  %v484 = vpop.f32.mrf.mxu0
  %v485 = vadd.f32 0.0, %v484
  %486 = vmatmul.f32.gmra.mxu0 %v331
  %v487 = vpop.f32.mrf.mxu0
  %v488 = vadd.f32 0.0, %v487
  %489 = vmatmul.f32.gmra.mxu0 %v332
  %v490 = vpop.f32.mrf.mxu0
  %v491 = vadd.f32 0.0, %v490
  %492 = vmatmul.f32.gmra.mxu0 %v333
  %v493 = vpop.f32.mrf.mxu0
  %v494 = vadd.f32 0.0, %v493
  %495 = vmatmul.f32.gmra.mxu0 %v334
  %v496 = vpop.f32.mrf.mxu0
  %v497 = vadd.f32 0.0, %v496
  %498 = vmatmul.f32.gmra.mxu0 %v335
  %v499 = vpop.f32.mrf.mxu0
  %v500 = vadd.f32 0.0, %v499
  %501 = vmatmul.f32.gmra.mxu0 %v336
  %v502 = vpop.f32.mrf.mxu0
  %v503 = vadd.f32 0.0, %v502
  %504 = vmatmul.f32.gmra.mxu0 %v337
  %v505 = vpop.f32.mrf.mxu0
  %v506 = vadd.f32 0.0, %v505
  %507 = vmatmul.f32.gmra.mxu0 %v338
  %v508 = vpop.f32.mrf.mxu0
  %v509 = vadd.f32 0.0, %v508
  %510 = vmatmul.f32.gmra.mxu0 %v339
  %v511 = vpop.f32.mrf.mxu0
  %v512 = vadd.f32 0.0, %v511
  %513 = vmatmul.f32.gmra.mxu0 %v340
  %v514 = vpop.f32.mrf.mxu0
  %v515 = vadd.f32 0.0, %v514
  %516 = vmatmul.f32.gmra.mxu0 %v341
  %v517 = vpop.f32.mrf.mxu0
  %v518 = vadd.f32 0.0, %v517
  %519 = vmatmul.f32.gmra.mxu0 %v342
  %v520 = vpop.f32.mrf.mxu0
  %v521 = vadd.f32 0.0, %v520
  %522 = vmatmul.f32.gmra.mxu0 %v343
  %v523 = vpop.f32.mrf.mxu0
  %v524 = vadd.f32 0.0, %v523
  %525 = vmatmul.f32.gmra.mxu0 %v344
  %v526 = vpop.f32.mrf.mxu0
  %v527 = vadd.f32 0.0, %v526
  %528 = vmatmul.f32.gmra.mxu0 %v349
  %v529 = vpop.f32.mrf.mxu0
  %v530 = vadd.f32 0.0, %v529
  %531 = vmatmul.f32.gmra.mxu0 %v350
  %v532 = vpop.f32.mrf.mxu0
  %v533 = vadd.f32 0.0, %v532
  %534 = vmatmul.f32.gmra.mxu0 %v351
  %v535 = vpop.f32.mrf.mxu0
  %v536 = vadd.f32 0.0, %v535
  %537 = vmatmul.f32.gmra.mxu0 %v352
  %v538 = vpop.f32.mrf.mxu0
  %v539 = vadd.f32 0.0, %v538
  %540 = vmatmul.f32.gmra.mxu0 %v353
  %v541 = vpop.f32.mrf.mxu0
  %v542 = vadd.f32 0.0, %v541
  %543 = vmatmul.f32.gmra.mxu0 %v354
  %v544 = vpop.f32.mrf.mxu0
  %v545 = vadd.f32 0.0, %v544
  %546 = vmatmul.f32.gmra.mxu0 %v355
  %v547 = vpop.f32.mrf.mxu0
  %v548 = vadd.f32 0.0, %v547
  %549 = vmatmul.f32.gmra.mxu0 %v356
  %v550 = vpop.f32.mrf.mxu0
  %v551 = vadd.f32 0.0, %v550
  %552 = vmatmul.f32.gmra.mxu0 %v357
  %v553 = vpop.f32.mrf.mxu0
  %v554 = vadd.f32 0.0, %v553
  %555 = vmatmul.f32.gmra.mxu0 %v358
  %v556 = vpop.f32.mrf.mxu0
  %v557 = vadd.f32 0.0, %v556
  %558 = vmatmul.f32.gmra.mxu0 %v359
  %v559 = vpop.f32.mrf.mxu0
  %v560 = vadd.f32 0.0, %v559
  %561 = vmatmul.f32.gmra.mxu0 %v360
  %v562 = vpop.f32.mrf.mxu0
  %v563 = vadd.f32 0.0, %v562
  %564 = vmatmul.f32.gmra.mxu0 %v361
  %v565 = vpop.f32.mrf.mxu0
  %v566 = vadd.f32 0.0, %v565
  %567 = vmatmul.f32.gmra.mxu0 %v362
  %v568 = vpop.f32.mrf.mxu0
  %v569 = vadd.f32 0.0, %v568
  %570 = vmatmul.f32.gmra.mxu0 %v363
  %v571 = vpop.f32.mrf.mxu0
  %v572 = vadd.f32 0.0, %v571
  %573 = vmatmul.f32.gmra.mxu0 %v364
  %v574 = vpop.f32.mrf.mxu0
  %v575 = vadd.f32 0.0, %v574
  %576 = vmatmul.f32.gmra.mxu0 %v365
  %v577 = vpop.f32.mrf.mxu0
  %v578 = vadd.f32 0.0, %v577
  %579 = vmatmul.f32.gmra.mxu0 %v366
  %v580 = vpop.f32.mrf.mxu0
  %v581 = vadd.f32 0.0, %v580
  %582 = vmatmul.f32.gmra.mxu0 %v367
  %v583 = vpop.f32.mrf.mxu0
  %v584 = vadd.f32 0.0, %v583
  %585 = vmatmul.f32.gmra.mxu0 %v368
  %v586 = vpop.f32.mrf.mxu0
  %v587 = vadd.f32 0.0, %v586
  %588 = vmatmul.f32.gmra.mxu0 %v369
  %v589 = vpop.f32.mrf.mxu0
  %v590 = vadd.f32 0.0, %v589
  %591 = vmatmul.f32.gmra.mxu0 %v370
  %v592 = vpop.f32.mrf.mxu0
  %v593 = vadd.f32 0.0, %v592
  %594 = vmatmul.f32.gmra.mxu0 %v371
  %v595 = vpop.f32.mrf.mxu0
  %v596 = vadd.f32 0.0, %v595
  %597 = vmatmul.f32.gmra.mxu0 %v372
  %v598 = vpop.f32.mrf.mxu0
  %v599 = vadd.f32 0.0, %v598
  %600 = vmatmul.f32.gmra.mxu0 %v373
  %v601 = vpop.f32.mrf.mxu0
  %v602 = vadd.f32 0.0, %v601
  %603 = vmatmul.f32.gmra.mxu0 %v374
  %v604 = vpop.f32.mrf.mxu0
  %v605 = vadd.f32 0.0, %v604
  %606 = vmatmul.f32.gmra.mxu0 %v375
  %v607 = vpop.f32.mrf.mxu0
  %v608 = vadd.f32 0.0, %v607
  %609 = vmatmul.f32.gmra.mxu0 %v376
  %v610 = vpop.f32.mrf.mxu0
  %v611 = vadd.f32 0.0, %v610
  %612 = vmatmul.f32.gmra.mxu0 %v377
  %v613 = vpop.f32.mrf.mxu0
  %v614 = vadd.f32 0.0, %v613
  %615 = vmatmul.f32.gmra.mxu0 %v378
  %v616 = vpop.f32.mrf.mxu0
  %v617 = vadd.f32 0.0, %v616
  %618 = vmatmul.f32.gmra.mxu0 %v379
  %v619 = vpop.f32.mrf.mxu0
  %v620 = vadd.f32 0.0, %v619
  %621 = vmatmul.f32.gmra.mxu0 %v380
  %v622 = vpop.f32.mrf.mxu0
  %v623 = vadd.f32 0.0, %v622
  %624 = vdwg.mxu0
  %625 = vmatpush.msra.mxu0 %v398
  %626 = vmatpush.msra.mxu0 %v397
  %627 = vmatpush.msra.mxu0 %v396
  %628 = vmatpush.msra.mxu0 %v395
  %629 = vmatpush.msra.mxu0 %v394
  %630 = vmatpush.msra.mxu0 %v393
  %631 = vmatpush.msra.mxu0 %v392
  %632 = vmatpush.msra.mxu0 %v391
  %633 = vmatpush.msra.mxu0 %v390
  %634 = vmatpush.msra.mxu0 %v389
  %635 = vmatpush.msra.mxu0 %v388
  %636 = vmatpush.msra.mxu0 %v387
  %637 = vmatpush.msra.mxu0 %v386
  %638 = vmatpush.msra.mxu0 %v385
  %639 = vmatpush.msra.mxu0 %v384
  %640 = vmatpush.msra.mxu0 %v383
  %641 = vmatmul.f32.gmra.mxu0 %v311
  %v642 = vpop.f32.mrf.mxu0
  %v643 = vadd.f32 %v434, %v642
  %644 = vmatmul.f32.gmra.mxu0 %v312
  %v645 = vpop.f32.mrf.mxu0
  %v646 = vadd.f32 %v437, %v645
  %647 = vmatmul.f32.gmra.mxu0 %v313
  %v648 = vpop.f32.mrf.mxu0
  %v649 = vadd.f32 %v440, %v648
  %650 = vmatmul.f32.gmra.mxu0 %v314
  %v651 = vpop.f32.mrf.mxu0
  %v652 = vadd.f32 %v443, %v651
  %653 = vmatmul.f32.gmra.mxu0 %v315
  %v654 = vpop.f32.mrf.mxu0
  %v655 = vadd.f32 %v446, %v654
  %656 = vmatmul.f32.gmra.mxu0 %v316
  %v657 = vpop.f32.mrf.mxu0
  %v658 = vadd.f32 %v449, %v657
  %659 = vmatmul.f32.gmra.mxu0 %v317
  %v660 = vpop.f32.mrf.mxu0
  %v661 = vadd.f32 %v452, %v660
  %662 = vmatmul.f32.gmra.mxu0 %v318
  %v663 = vpop.f32.mrf.mxu0
  %v664 = vadd.f32 %v455, %v663
  %665 = vmatmul.f32.gmra.mxu0 %v319
  %v666 = vpop.f32.mrf.mxu0
  %v667 = vadd.f32 %v458, %v666
  %668 = vmatmul.f32.gmra.mxu0 %v320
  %v669 = vpop.f32.mrf.mxu0
  %v670 = vadd.f32 %v461, %v669
  %671 = vmatmul.f32.gmra.mxu0 %v321
  %v672 = vpop.f32.mrf.mxu0
  %v673 = vadd.f32 %v464, %v672
  %674 = vmatmul.f32.gmra.mxu0 %v322
  %v675 = vpop.f32.mrf.mxu0
  %v676 = vadd.f32 %v467, %v675
  %677 = vmatmul.f32.gmra.mxu0 %v323
  %v678 = vpop.f32.mrf.mxu0
  %v679 = vadd.f32 %v470, %v678
  %680 = vmatmul.f32.gmra.mxu0 %v324
  %v681 = vpop.f32.mrf.mxu0
  %v682 = vadd.f32 %v473, %v681
  %683 = vmatmul.f32.gmra.mxu0 %v325
  %v684 = vpop.f32.mrf.mxu0
  %v685 = vadd.f32 %v476, %v684
  %686 = vmatmul.f32.gmra.mxu0 %v326
  %v687 = vpop.f32.mrf.mxu0
  %v688 = vadd.f32 %v479, %v687
  %689 = vmatmul.f32.gmra.mxu0 %v327
  %v690 = vpop.f32.mrf.mxu0
  %v691 = vadd.f32 %v482, %v690
  %692 = vmatmul.f32.gmra.mxu0 %v328
  %v693 = vpop.f32.mrf.mxu0
  %v694 = vadd.f32 %v485, %v693
  %695 = vmatmul.f32.gmra.mxu0 %v329
  %v696 = vpop.f32.mrf.mxu0
  %v697 = vadd.f32 %v488, %v696
  %698 = vmatmul.f32.gmra.mxu0 %v330
  %v699 = vpop.f32.mrf.mxu0
  %v700 = vadd.f32 %v491, %v699
  %701 = vmatmul.f32.gmra.mxu0 %v331
  %v702 = vpop.f32.mrf.mxu0
  %v703 = vadd.f32 %v494, %v702
  %704 = vmatmul.f32.gmra.mxu0 %v332
  %v705 = vpop.f32.mrf.mxu0
  %v706 = vadd.f32 %v497, %v705
  %707 = vmatmul.f32.gmra.mxu0 %v333
  %v708 = vpop.f32.mrf.mxu0
  %v709 = vadd.f32 %v500, %v708
  %710 = vmatmul.f32.gmra.mxu0 %v334
  %v711 = vpop.f32.mrf.mxu0
  %v712 = vadd.f32 %v503, %v711
  %713 = vmatmul.f32.gmra.mxu0 %v335
  %v714 = vpop.f32.mrf.mxu0
  %v715 = vadd.f32 %v506, %v714
  %716 = vmatmul.f32.gmra.mxu0 %v336
  %v717 = vpop.f32.mrf.mxu0
  %v718 = vadd.f32 %v509, %v717
  %719 = vmatmul.f32.gmra.mxu0 %v337
  %v720 = vpop.f32.mrf.mxu0
  %v721 = vadd.f32 %v512, %v720
  %722 = vmatmul.f32.gmra.mxu0 %v338
  %v723 = vpop.f32.mrf.mxu0
  %v724 = vadd.f32 %v515, %v723
  %725 = vmatmul.f32.gmra.mxu0 %v339
  %v726 = vpop.f32.mrf.mxu0
  %v727 = vadd.f32 %v518, %v726
  %728 = vmatmul.f32.gmra.mxu0 %v340
  %v729 = vpop.f32.mrf.mxu0
  %v730 = vadd.f32 %v521, %v729
  %731 = vmatmul.f32.gmra.mxu0 %v341
  %v732 = vpop.f32.mrf.mxu0
  %v733 = vadd.f32 %v524, %v732
  %734 = vmatmul.f32.gmra.mxu0 %v342
  %v735 = vpop.f32.mrf.mxu0
  %v736 = vadd.f32 %v527, %v735
  %737 = vmatmul.f32.gmra.mxu0 %v347
  %v738 = vpop.f32.mrf.mxu0
  %v739 = vadd.f32 %v530, %v738
  %740 = vmatmul.f32.gmra.mxu0 %v348
  %v741 = vpop.f32.mrf.mxu0
  %v742 = vadd.f32 %v533, %v741
  %743 = vmatmul.f32.gmra.mxu0 %v349
  %v744 = vpop.f32.mrf.mxu0
  %v745 = vadd.f32 %v536, %v744
  %746 = vmatmul.f32.gmra.mxu0 %v350
  %v747 = vpop.f32.mrf.mxu0
  %v748 = vadd.f32 %v539, %v747
  %749 = vmatmul.f32.gmra.mxu0 %v351
  %v750 = vpop.f32.mrf.mxu0
  %v751 = vadd.f32 %v542, %v750
  %752 = vmatmul.f32.gmra.mxu0 %v352
  %v753 = vpop.f32.mrf.mxu0
  %v754 = vadd.f32 %v545, %v753
  %755 = vmatmul.f32.gmra.mxu0 %v353
  %v756 = vpop.f32.mrf.mxu0
  %v757 = vadd.f32 %v548, %v756
  %758 = vmatmul.f32.gmra.mxu0 %v354
  %v759 = vpop.f32.mrf.mxu0
  %v760 = vadd.f32 %v551, %v759
  %761 = vmatmul.f32.gmra.mxu0 %v355
  %v762 = vpop.f32.mrf.mxu0
  %v763 = vadd.f32 %v554, %v762
  %764 = vmatmul.f32.gmra.mxu0 %v356
  %v765 = vpop.f32.mrf.mxu0
  %v766 = vadd.f32 %v557, %v765
  %767 = vmatmul.f32.gmra.mxu0 %v357
  %v768 = vpop.f32.mrf.mxu0
  %v769 = vadd.f32 %v560, %v768
  %770 = vmatmul.f32.gmra.mxu0 %v358
  %v771 = vpop.f32.mrf.mxu0
  %v772 = vadd.f32 %v563, %v771
  %773 = vmatmul.f32.gmra.mxu0 %v359
  %v774 = vpop.f32.mrf.mxu0
  %v775 = vadd.f32 %v566, %v774
  %776 = vmatmul.f32.gmra.mxu0 %v360
  %v777 = vpop.f32.mrf.mxu0
  %v778 = vadd.f32 %v569, %v777
  %779 = vmatmul.f32.gmra.mxu0 %v361
  %v780 = vpop.f32.mrf.mxu0
  %v781 = vadd.f32 %v572, %v780
  %782 = vmatmul.f32.gmra.mxu0 %v362
  %v783 = vpop.f32.mrf.mxu0
  %v784 = vadd.f32 %v575, %v783
  %785 = vmatmul.f32.gmra.mxu0 %v363
  %v786 = vpop.f32.mrf.mxu0
  %v787 = vadd.f32 %v578, %v786
  %788 = vmatmul.f32.gmra.mxu0 %v364
  %v789 = vpop.f32.mrf.mxu0
  %v790 = vadd.f32 %v581, %v789
  %791 = vmatmul.f32.gmra.mxu0 %v365
  %v792 = vpop.f32.mrf.mxu0
  %v793 = vadd.f32 %v584, %v792
  %794 = vmatmul.f32.gmra.mxu0 %v366
  %v795 = vpop.f32.mrf.mxu0
  %v796 = vadd.f32 %v587, %v795
  %797 = vmatmul.f32.gmra.mxu0 %v367
  %v798 = vpop.f32.mrf.mxu0
  %v799 = vadd.f32 %v590, %v798
  %800 = vmatmul.f32.gmra.mxu0 %v368
  %v801 = vpop.f32.mrf.mxu0
  %v802 = vadd.f32 %v593, %v801
  %803 = vmatmul.f32.gmra.mxu0 %v369
  %v804 = vpop.f32.mrf.mxu0
  %v805 = vadd.f32 %v596, %v804
  %806 = vmatmul.f32.gmra.mxu0 %v370
  %v807 = vpop.f32.mrf.mxu0
  %v808 = vadd.f32 %v599, %v807
  %809 = vmatmul.f32.gmra.mxu0 %v371
  %v810 = vpop.f32.mrf.mxu0
  %v811 = vadd.f32 %v602, %v810
  %812 = vmatmul.f32.gmra.mxu0 %v372
  %v813 = vpop.f32.mrf.mxu0
  %v814 = vadd.f32 %v605, %v813
  %815 = vmatmul.f32.gmra.mxu0 %v373
  %v816 = vpop.f32.mrf.mxu0
  %v817 = vadd.f32 %v608, %v816
  %818 = vmatmul.f32.gmra.mxu0 %v374
  %v819 = vpop.f32.mrf.mxu0
  %v820 = vadd.f32 %v611, %v819
  %821 = vmatmul.f32.gmra.mxu0 %v375
  %v822 = vpop.f32.mrf.mxu0
  %v823 = vadd.f32 %v614, %v822
  %824 = vmatmul.f32.gmra.mxu0 %v376
  %v825 = vpop.f32.mrf.mxu0
  %v826 = vadd.f32 %v617, %v825
  %827 = vmatmul.f32.gmra.mxu0 %v377
  %v828 = vpop.f32.mrf.mxu0
  %v829 = vadd.f32 %v620, %v828
  %830 = vmatmul.f32.gmra.mxu0 %v378
  %v831 = vpop.f32.mrf.mxu0
  %v832 = vadd.f32 %v623, %v831
  %833 = vdwg.mxu0
  %s834 = scalar_lea.vmem %s1, 256
  %v835 = vld [vmem:[%s834] sm:$0xff]
  %v836 = vld [vmem:[%s834 + $0x8] sm:$0xff]
  %v837 = vld [vmem:[%s834 + $0x10] sm:$0xff]
  %v838 = vld [vmem:[%s834 + $0x18] sm:$0xff]
  %v839 = vld [vmem:[%s834 + $0x20] sm:$0xff]
  %v840 = vld [vmem:[%s834 + $0x28] sm:$0xff]
  %v841 = vld [vmem:[%s834 + $0x30] sm:$0xff]
  %v842 = vld [vmem:[%s834 + $0x38] sm:$0xff]
  %v843 = vld [vmem:[%s834 + $0x40] sm:$0xff]
  %v844 = vld [vmem:[%s834 + $0x48] sm:$0xff]
  %v845 = vld [vmem:[%s834 + $0x50] sm:$0xff]
  %v846 = vld [vmem:[%s834 + $0x58] sm:$0xff]
  %v847 = vld [vmem:[%s834 + $0x60] sm:$0xff]
  %v848 = vld [vmem:[%s834 + $0x68] sm:$0xff]
  %v849 = vld [vmem:[%s834 + $0x70] sm:$0xff]
  %v850 = vld [vmem:[%s834 + $0x78] sm:$0xff]
  %851 = vmatpush.msra.mxu0 %v850
  %852 = vmatpush.msra.mxu0 %v849
  %853 = vmatpush.msra.mxu0 %v848
  %854 = vmatpush.msra.mxu0 %v847
  %855 = vmatpush.msra.mxu0 %v846
  %856 = vmatpush.msra.mxu0 %v845
  %857 = vmatpush.msra.mxu0 %v844
  %858 = vmatpush.msra.mxu0 %v843
  %859 = vmatpush.msra.mxu0 %v842
  %860 = vmatpush.msra.mxu0 %v841
  %861 = vmatpush.msra.mxu0 %v840
  %862 = vmatpush.msra.mxu0 %v839
  %863 = vmatpush.msra.mxu0 %v838
  %864 = vmatpush.msra.mxu0 %v837
  %865 = vmatpush.msra.mxu0 %v836
  %866 = vmatpush.msra.mxu0 %v835
  %867 = vmatmul.f32.gmra.mxu0 %v315
  %v868 = vpop.f32.mrf.mxu0
  %v869 = vadd.f32 0.0, %v868
  %870 = vmatmul.f32.gmra.mxu0 %v316
  %v871 = vpop.f32.mrf.mxu0
  %v872 = vadd.f32 0.0, %v871
  %873 = vmatmul.f32.gmra.mxu0 %v317
  %v874 = vpop.f32.mrf.mxu0
  %v875 = vadd.f32 0.0, %v874
  %876 = vmatmul.f32.gmra.mxu0 %v318
  %v877 = vpop.f32.mrf.mxu0
  %v878 = vadd.f32 0.0, %v877
  %879 = vmatmul.f32.gmra.mxu0 %v319
  %v880 = vpop.f32.mrf.mxu0
  %v881 = vadd.f32 0.0, %v880
  %882 = vmatmul.f32.gmra.mxu0 %v320
  %v883 = vpop.f32.mrf.mxu0
  %v884 = vadd.f32 0.0, %v883
  %885 = vmatmul.f32.gmra.mxu0 %v321
  %v886 = vpop.f32.mrf.mxu0
  %v887 = vadd.f32 0.0, %v886
  %888 = vmatmul.f32.gmra.mxu0 %v322
  %v889 = vpop.f32.mrf.mxu0
  %v890 = vadd.f32 0.0, %v889
  %891 = vmatmul.f32.gmra.mxu0 %v323
  %v892 = vpop.f32.mrf.mxu0
  %v893 = vadd.f32 0.0, %v892
  %894 = vmatmul.f32.gmra.mxu0 %v324
  %v895 = vpop.f32.mrf.mxu0
  %v896 = vadd.f32 0.0, %v895
  %897 = vmatmul.f32.gmra.mxu0 %v325
  %v898 = vpop.f32.mrf.mxu0
  %v899 = vadd.f32 0.0, %v898
  %900 = vmatmul.f32.gmra.mxu0 %v326
  %v901 = vpop.f32.mrf.mxu0
  %v902 = vadd.f32 0.0, %v901
  %903 = vmatmul.f32.gmra.mxu0 %v327
  %v904 = vpop.f32.mrf.mxu0
  %v905 = vadd.f32 0.0, %v904
  %906 = vmatmul.f32.gmra.mxu0 %v328
  %v907 = vpop.f32.mrf.mxu0
  %v908 = vadd.f32 0.0, %v907
  %909 = vmatmul.f32.gmra.mxu0 %v329
  %v910 = vpop.f32.mrf.mxu0
  %v911 = vadd.f32 0.0, %v910
  %912 = vmatmul.f32.gmra.mxu0 %v330
  %v913 = vpop.f32.mrf.mxu0
  %v914 = vadd.f32 0.0, %v913
  %915 = vmatmul.f32.gmra.mxu0 %v331
  %v916 = vpop.f32.mrf.mxu0
  %v917 = vadd.f32 0.0, %v916
  %918 = vmatmul.f32.gmra.mxu0 %v332
  %v919 = vpop.f32.mrf.mxu0
  %v920 = vadd.f32 0.0, %v919
  %921 = vmatmul.f32.gmra.mxu0 %v333
  %v922 = vpop.f32.mrf.mxu0
  %v923 = vadd.f32 0.0, %v922
  %924 = vmatmul.f32.gmra.mxu0 %v334
  %v925 = vpop.f32.mrf.mxu0
  %v926 = vadd.f32 0.0, %v925
  %927 = vmatmul.f32.gmra.mxu0 %v335
  %v928 = vpop.f32.mrf.mxu0
  %v929 = vadd.f32 0.0, %v928
  %930 = vmatmul.f32.gmra.mxu0 %v336
  %v931 = vpop.f32.mrf.mxu0
  %v932 = vadd.f32 0.0, %v931
  %933 = vmatmul.f32.gmra.mxu0 %v337
  %v934 = vpop.f32.mrf.mxu0
  %v935 = vadd.f32 0.0, %v934
  %936 = vmatmul.f32.gmra.mxu0 %v338
  %v937 = vpop.f32.mrf.mxu0
  %v938 = vadd.f32 0.0, %v937
  %939 = vmatmul.f32.gmra.mxu0 %v339
  %v940 = vpop.f32.mrf.mxu0
  %v941 = vadd.f32 0.0, %v940
  %942 = vmatmul.f32.gmra.mxu0 %v340
  %v943 = vpop.f32.mrf.mxu0
  %v944 = vadd.f32 0.0, %v943
  %945 = vmatmul.f32.gmra.mxu0 %v341
  %v946 = vpop.f32.mrf.mxu0
  %v947 = vadd.f32 0.0, %v946
  %948 = vmatmul.f32.gmra.mxu0 %v342
  %v949 = vpop.f32.mrf.mxu0
  %v950 = vadd.f32 0.0, %v949
  %951 = vmatmul.f32.gmra.mxu0 %v343
  %v952 = vpop.f32.mrf.mxu0
  %v953 = vadd.f32 0.0, %v952
  %954 = vmatmul.f32.gmra.mxu0 %v344
  %v955 = vpop.f32.mrf.mxu0
  %v956 = vadd.f32 0.0, %v955
  %957 = vmatmul.f32.gmra.mxu0 %v345
  %v958 = vpop.f32.mrf.mxu0
  %v959 = vadd.f32 0.0, %v958
  %960 = vmatmul.f32.gmra.mxu0 %v346
  %v961 = vpop.f32.mrf.mxu0
  %v962 = vadd.f32 0.0, %v961
  %963 = vmatmul.f32.gmra.mxu0 %v351
  %v964 = vpop.f32.mrf.mxu0
  %v965 = vadd.f32 0.0, %v964
  %966 = vmatmul.f32.gmra.mxu0 %v352
  %v967 = vpop.f32.mrf.mxu0
  %v968 = vadd.f32 0.0, %v967
  %969 = vmatmul.f32.gmra.mxu0 %v353
  %v970 = vpop.f32.mrf.mxu0
  %v971 = vadd.f32 0.0, %v970
  %972 = vmatmul.f32.gmra.mxu0 %v354
  %v973 = vpop.f32.mrf.mxu0
  %v974 = vadd.f32 0.0, %v973
  %975 = vmatmul.f32.gmra.mxu0 %v355
  %v976 = vpop.f32.mrf.mxu0
  %v977 = vadd.f32 0.0, %v976
  %978 = vmatmul.f32.gmra.mxu0 %v356
  %v979 = vpop.f32.mrf.mxu0
  %v980 = vadd.f32 0.0, %v979
  %981 = vmatmul.f32.gmra.mxu0 %v357
  %v982 = vpop.f32.mrf.mxu0
  %v983 = vadd.f32 0.0, %v982
  %984 = vmatmul.f32.gmra.mxu0 %v358
  %v985 = vpop.f32.mrf.mxu0
  %v986 = vadd.f32 0.0, %v985
  %987 = vmatmul.f32.gmra.mxu0 %v359
  %v988 = vpop.f32.mrf.mxu0
  %v989 = vadd.f32 0.0, %v988
  %990 = vmatmul.f32.gmra.mxu0 %v360
  %v991 = vpop.f32.mrf.mxu0
  %v992 = vadd.f32 0.0, %v991
  %993 = vmatmul.f32.gmra.mxu0 %v361
  %v994 = vpop.f32.mrf.mxu0
  %v995 = vadd.f32 0.0, %v994
  %996 = vmatmul.f32.gmra.mxu0 %v362
  %v997 = vpop.f32.mrf.mxu0
  %v998 = vadd.f32 0.0, %v997
  %999 = vmatmul.f32.gmra.mxu0 %v363
  %v1000 = vpop.f32.mrf.mxu0
  %v1001 = vadd.f32 0.0, %v1000
  %1002 = vmatmul.f32.gmra.mxu0 %v364
  %v1003 = vpop.f32.mrf.mxu0
  %v1004 = vadd.f32 0.0, %v1003
  %1005 = vmatmul.f32.gmra.mxu0 %v365
  %v1006 = vpop.f32.mrf.mxu0
  %v1007 = vadd.f32 0.0, %v1006
  %1008 = vmatmul.f32.gmra.mxu0 %v366
  %v1009 = vpop.f32.mrf.mxu0
  %v1010 = vadd.f32 0.0, %v1009
  %1011 = vmatmul.f32.gmra.mxu0 %v367
  %v1012 = vpop.f32.mrf.mxu0
  %v1013 = vadd.f32 0.0, %v1012
  %1014 = vmatmul.f32.gmra.mxu0 %v368
  %v1015 = vpop.f32.mrf.mxu0
  %v1016 = vadd.f32 0.0, %v1015
  %1017 = vmatmul.f32.gmra.mxu0 %v369
  %v1018 = vpop.f32.mrf.mxu0
  %v1019 = vadd.f32 0.0, %v1018
  %1020 = vmatmul.f32.gmra.mxu0 %v370
  %v1021 = vpop.f32.mrf.mxu0
  %v1022 = vadd.f32 0.0, %v1021
  %1023 = vmatmul.f32.gmra.mxu0 %v371
  %v1024 = vpop.f32.mrf.mxu0
  %v1025 = vadd.f32 0.0, %v1024
  %1026 = vmatmul.f32.gmra.mxu0 %v372
  %v1027 = vpop.f32.mrf.mxu0
  %v1028 = vadd.f32 0.0, %v1027
  %1029 = vmatmul.f32.gmra.mxu0 %v373
  %v1030 = vpop.f32.mrf.mxu0
  %v1031 = vadd.f32 0.0, %v1030
  %1032 = vmatmul.f32.gmra.mxu0 %v374
  %v1033 = vpop.f32.mrf.mxu0
  %v1034 = vadd.f32 0.0, %v1033
  %1035 = vmatmul.f32.gmra.mxu0 %v375
  %v1036 = vpop.f32.mrf.mxu0
  %v1037 = vadd.f32 0.0, %v1036
  %1038 = vmatmul.f32.gmra.mxu0 %v376
  %v1039 = vpop.f32.mrf.mxu0
  %v1040 = vadd.f32 0.0, %v1039
  %1041 = vmatmul.f32.gmra.mxu0 %v377
  %v1042 = vpop.f32.mrf.mxu0
  %v1043 = vadd.f32 0.0, %v1042
  %1044 = vmatmul.f32.gmra.mxu0 %v378
  %v1045 = vpop.f32.mrf.mxu0
  %v1046 = vadd.f32 0.0, %v1045
  %1047 = vmatmul.f32.gmra.mxu0 %v379
  %v1048 = vpop.f32.mrf.mxu0
  %v1049 = vadd.f32 0.0, %v1048
  %1050 = vmatmul.f32.gmra.mxu0 %v380
  %v1051 = vpop.f32.mrf.mxu0
  %v1052 = vadd.f32 0.0, %v1051
  %1053 = vmatmul.f32.gmra.mxu0 %v381
  %v1054 = vpop.f32.mrf.mxu0
  %v1055 = vadd.f32 0.0, %v1054
  %1056 = vmatmul.f32.gmra.mxu0 %v382
  %v1057 = vpop.f32.mrf.mxu0
  %v1058 = vadd.f32 0.0, %v1057
  %1059 = vdwg.mxu0
  %v1060 = vadd.f32 %v643, %v869
  %v1061 = vadd.f32 %v646, %v872
  %v1062 = vadd.f32 %v649, %v875
  %v1063 = vadd.f32 %v652, %v878
  %v1064 = vadd.f32 %v655, %v881
  %v1065 = vadd.f32 %v658, %v884
  %v1066 = vadd.f32 %v661, %v887
  %v1067 = vadd.f32 %v664, %v890
  %v1068 = vadd.f32 %v667, %v893
  %v1069 = vadd.f32 %v670, %v896
  %v1070 = vadd.f32 %v673, %v899
  %v1071 = vadd.f32 %v676, %v902
  %v1072 = vadd.f32 %v679, %v905
  %v1073 = vadd.f32 %v682, %v908
  %v1074 = vadd.f32 %v685, %v911
  %v1075 = vadd.f32 %v688, %v914
  %v1076 = vadd.f32 %v691, %v917
  %v1077 = vadd.f32 %v694, %v920
  %v1078 = vadd.f32 %v697, %v923
  %v1079 = vadd.f32 %v700, %v926
  %v1080 = vadd.f32 %v703, %v929
  %v1081 = vadd.f32 %v706, %v932
  %v1082 = vadd.f32 %v709, %v935
  %v1083 = vadd.f32 %v712, %v938
  %v1084 = vadd.f32 %v715, %v941
  %v1085 = vadd.f32 %v718, %v944
  %v1086 = vadd.f32 %v721, %v947
  %v1087 = vadd.f32 %v724, %v950
  %v1088 = vadd.f32 %v727, %v953
  %v1089 = vadd.f32 %v730, %v956
  %v1090 = vadd.f32 %v733, %v959
  %v1091 = vadd.f32 %v736, %v962
  %v1092 = vadd.f32 %v739, %v965
  %v1093 = vadd.f32 %v742, %v968
  %v1094 = vadd.f32 %v745, %v971
  %v1095 = vadd.f32 %v748, %v974
  %v1096 = vadd.f32 %v751, %v977
  %v1097 = vadd.f32 %v754, %v980
  %v1098 = vadd.f32 %v757, %v983
  %v1099 = vadd.f32 %v760, %v986
  %v1100 = vadd.f32 %v763, %v989
  %v1101 = vadd.f32 %v766, %v992
  %v1102 = vadd.f32 %v769, %v995
  %v1103 = vadd.f32 %v772, %v998
  %v1104 = vadd.f32 %v775, %v1001
  %v1105 = vadd.f32 %v778, %v1004
  %v1106 = vadd.f32 %v781, %v1007
  %v1107 = vadd.f32 %v784, %v1010
  %v1108 = vadd.f32 %v787, %v1013
  %v1109 = vadd.f32 %v790, %v1016
  %v1110 = vadd.f32 %v793, %v1019
  %v1111 = vadd.f32 %v796, %v1022
  %v1112 = vadd.f32 %v799, %v1025
  %v1113 = vadd.f32 %v802, %v1028
  %v1114 = vadd.f32 %v805, %v1031
  %v1115 = vadd.f32 %v808, %v1034
  %v1116 = vadd.f32 %v811, %v1037
  %v1117 = vadd.f32 %v814, %v1040
  %v1118 = vadd.f32 %v817, %v1043
  %v1119 = vadd.f32 %v820, %v1046
  %v1120 = vadd.f32 %v823, %v1049
  %v1121 = vadd.f32 %v826, %v1052
  %v1122 = vadd.f32 %v829, %v1055
  %v1123 = vadd.f32 %v832, %v1058
  %v1124 = vld [vmem:[#allocation2 + $0x1] sm:$0xff]
  %v1125 = vld [vmem:[#allocation2 + $0x9] sm:$0xff]
  %v1126 = vld [vmem:[#allocation2 + $0x19] sm:$0xff]
  %v1127 = vld [vmem:[#allocation2 + $0x21] sm:$0xff]
  %v1128 = vld [vmem:[#allocation2 + $0x31] sm:$0xff]
  %v1129 = vld [vmem:[#allocation2 + $0x39] sm:$0xff]
  %v1130 = vld [vmem:[#allocation2 + $0x49] sm:$0xff]
  %v1131 = vld [vmem:[#allocation2 + $0x51] sm:$0xff]
  %v1132 = vld [vmem:[#allocation2 + $0x61] sm:$0xff]
  %v1133 = vld [vmem:[#allocation2 + $0x69] sm:$0xff]
  %v1134 = vld [vmem:[#allocation2 + $0x79] sm:$0xff]
  %v1135 = vld [vmem:[#allocation2 + $0x81] sm:$0xff]
  %v1136 = vld [vmem:[#allocation2 + $0x91] sm:$0xff]
  %v1137 = vld [vmem:[#allocation2 + $0x99] sm:$0xff]
  %v1138 = vld [vmem:[#allocation2 + $0xa9] sm:$0xff]
  %v1139 = vld [vmem:[#allocation2 + $0xb1] sm:$0xff]
  %v1140 = vld [vmem:[#allocation2 + $0xc1] sm:$0xff]
  %v1141 = vld [vmem:[#allocation2 + $0xc9] sm:$0xff]
  %v1142 = vld [vmem:[#allocation2 + $0xd9] sm:$0xff]
  %v1143 = vld [vmem:[#allocation2 + $0xe1] sm:$0xff]
  %v1144 = vld [vmem:[#allocation2 + $0xf1] sm:$0xff]
  %v1145 = vld [vmem:[#allocation2 + $0xf9] sm:$0xff]
  %v1146 = vld [vmem:[#allocation2 + $0x109] sm:$0xff]
  %v1147 = vld [vmem:[#allocation2 + $0x111] sm:$0xff]
  %v1148 = vld [vmem:[#allocation2 + $0x121] sm:$0xff]
  %v1149 = vld [vmem:[#allocation2 + $0x129] sm:$0xff]
  %v1150 = vld [vmem:[#allocation2 + $0x139] sm:$0xff]
  %v1151 = vld [vmem:[#allocation2 + $0x141] sm:$0xff]
  %v1152 = vld [vmem:[#allocation2 + $0x151] sm:$0xff]
  %v1153 = vld [vmem:[#allocation2 + $0x159] sm:$0xff]
  %v1154 = vld [vmem:[#allocation2 + $0x169] sm:$0xff]
  %v1155 = vld [vmem:[#allocation2 + $0x171] sm:$0xff]
  %v1156 = vld [vmem:[#allocation2 + $0x181] sm:$0xff]
  %v1157 = vld [vmem:[#allocation2 + $0x189] sm:$0xff]
  %v1158 = vld [vmem:[#allocation2 + $0x199] sm:$0xff]
  %v1159 = vld [vmem:[#allocation2 + $0x1a1] sm:$0xff]
  %v1160 = vld [vmem:[#allocation2 + $0x1b1] sm:$0xff]
  %v1161 = vld [vmem:[#allocation2 + $0x1b9] sm:$0xff]
  %v1162 = vld [vmem:[#allocation2 + $0x1c9] sm:$0xff]
  %v1163 = vld [vmem:[#allocation2 + $0x1d1] sm:$0xff]
  %v1164 = vld [vmem:[#allocation2 + $0x1e1] sm:$0xff]
  %v1165 = vld [vmem:[#allocation2 + $0x1e9] sm:$0xff]
  %v1166 = vld [vmem:[#allocation2 + $0x1f9] sm:$0xff]
  %v1167 = vld [vmem:[#allocation2 + $0x201] sm:$0xff]
  %v1168 = vld [vmem:[#allocation2 + $0x211] sm:$0xff]
  %v1169 = vld [vmem:[#allocation2 + $0x219] sm:$0xff]
  %v1170 = vld [vmem:[#allocation2 + $0x229] sm:$0xff]
  %v1171 = vld [vmem:[#allocation2 + $0x231] sm:$0xff]
  %v1172 = vld [vmem:[#allocation2 + $0x241] sm:$0xff]
  %v1173 = vld [vmem:[#allocation2 + $0x249] sm:$0xff]
  %v1174 = vld [vmem:[#allocation2 + $0x259] sm:$0xff]
  %v1175 = vld [vmem:[#allocation2 + $0x261] sm:$0xff]
  %v1176 = vld [vmem:[#allocation2 + $0x271] sm:$0xff]
  %v1177 = vld [vmem:[#allocation2 + $0x279] sm:$0xff]
  %v1178 = vld [vmem:[#allocation2 + $0x289] sm:$0xff]
  %v1179 = vld [vmem:[#allocation2 + $0x291] sm:$0xff]
  %v1180 = vld [vmem:[#allocation2 + $0x2a1] sm:$0xff]
  %v1181 = vld [vmem:[#allocation2 + $0x2a9] sm:$0xff]
  %v1182 = vld [vmem:[#allocation2 + $0x2b9] sm:$0xff]
  %v1183 = vld [vmem:[#allocation2 + $0x2c1] sm:$0xff]
  %v1184 = vld [vmem:[#allocation2 + $0x2d1] sm:$0xff]
  %v1185 = vld [vmem:[#allocation2 + $0x2d9] sm:$0xff]
  %v1186 = vld [vmem:[#allocation2 + $0x2e9] sm:$0xff]
  %v1187 = vld [vmem:[#allocation2 + $0x2f1] sm:$0xff]
  %v1188 = vld [vmem:[#allocation2 + $0x301] sm:$0xff]
  %v1189 = vld [vmem:[#allocation2 + $0x309] sm:$0xff]
  %v1190 = vld [vmem:[#allocation2 + $0x319] sm:$0xff]
  %v1191 = vld [vmem:[#allocation2 + $0x321] sm:$0xff]
  %v1192 = vld [vmem:[#allocation2 + $0x331] sm:$0xff]
  %v1193 = vld [vmem:[#allocation2 + $0x339] sm:$0xff]
  %v1194 = vld [vmem:[#allocation2 + $0x349] sm:$0xff]
  %v1195 = vld [vmem:[#allocation2 + $0x351] sm:$0xff]
  %s1196 = scalar_lea.vmem %s1, 384
  %v1197 = vld [vmem:[%s1196] sm:$0xff]
  %v1198 = vld [vmem:[%s1196 + $0x8] sm:$0xff]
  %v1199 = vld [vmem:[%s1196 + $0x10] sm:$0xff]
  %v1200 = vld [vmem:[%s1196 + $0x18] sm:$0xff]
  %v1201 = vld [vmem:[%s1196 + $0x20] sm:$0xff]
  %v1202 = vld [vmem:[%s1196 + $0x28] sm:$0xff]
  %v1203 = vld [vmem:[%s1196 + $0x30] sm:$0xff]
  %v1204 = vld [vmem:[%s1196 + $0x38] sm:$0xff]
  %v1205 = vld [vmem:[%s1196 + $0x40] sm:$0xff]
  %v1206 = vld [vmem:[%s1196 + $0x48] sm:$0xff]
  %v1207 = vld [vmem:[%s1196 + $0x50] sm:$0xff]
  %v1208 = vld [vmem:[%s1196 + $0x58] sm:$0xff]
  %v1209 = vld [vmem:[%s1196 + $0x60] sm:$0xff]
  %v1210 = vld [vmem:[%s1196 + $0x68] sm:$0xff]
  %v1211 = vld [vmem:[%s1196 + $0x70] sm:$0xff]
  %v1212 = vld [vmem:[%s1196 + $0x78] sm:$0xff]
  %1213 = vmatpush.msra.mxu0 %v1212
  %1214 = vmatpush.msra.mxu0 %v1211
  %1215 = vmatpush.msra.mxu0 %v1210
  %1216 = vmatpush.msra.mxu0 %v1209
  %1217 = vmatpush.msra.mxu0 %v1208
  %1218 = vmatpush.msra.mxu0 %v1207
  %1219 = vmatpush.msra.mxu0 %v1206
  %1220 = vmatpush.msra.mxu0 %v1205
  %1221 = vmatpush.msra.mxu0 %v1204
  %1222 = vmatpush.msra.mxu0 %v1203
  %1223 = vmatpush.msra.mxu0 %v1202
  %1224 = vmatpush.msra.mxu0 %v1201
  %1225 = vmatpush.msra.mxu0 %v1200
  %1226 = vmatpush.msra.mxu0 %v1199
  %1227 = vmatpush.msra.mxu0 %v1198
  %1228 = vmatpush.msra.mxu0 %v1197
  %1229 = vmatmul.f32.gmra.mxu0 %v1124
  %v1230 = vpop.f32.mrf.mxu0
  %v1231 = vadd.f32 0.0, %v1230
  %1232 = vmatmul.f32.gmra.mxu0 %v1125
  %v1233 = vpop.f32.mrf.mxu0
  %v1234 = vadd.f32 0.0, %v1233
  %1235 = vmatmul.f32.gmra.mxu0 %v1126
  %v1236 = vpop.f32.mrf.mxu0
  %v1237 = vadd.f32 0.0, %v1236
  %1238 = vmatmul.f32.gmra.mxu0 %v1127
  %v1239 = vpop.f32.mrf.mxu0
  %v1240 = vadd.f32 0.0, %v1239
  %1241 = vmatmul.f32.gmra.mxu0 %v1128
  %v1242 = vpop.f32.mrf.mxu0
  %v1243 = vadd.f32 0.0, %v1242
  %1244 = vmatmul.f32.gmra.mxu0 %v1129
  %v1245 = vpop.f32.mrf.mxu0
  %v1246 = vadd.f32 0.0, %v1245
  %1247 = vmatmul.f32.gmra.mxu0 %v1130
  %v1248 = vpop.f32.mrf.mxu0
  %v1249 = vadd.f32 0.0, %v1248
  %1250 = vmatmul.f32.gmra.mxu0 %v1131
  %v1251 = vpop.f32.mrf.mxu0
  %v1252 = vadd.f32 0.0, %v1251
  %1253 = vmatmul.f32.gmra.mxu0 %v1132
  %v1254 = vpop.f32.mrf.mxu0
  %v1255 = vadd.f32 0.0, %v1254
  %1256 = vmatmul.f32.gmra.mxu0 %v1133
  %v1257 = vpop.f32.mrf.mxu0
  %v1258 = vadd.f32 0.0, %v1257
  %1259 = vmatmul.f32.gmra.mxu0 %v1134
  %v1260 = vpop.f32.mrf.mxu0
  %v1261 = vadd.f32 0.0, %v1260
  %1262 = vmatmul.f32.gmra.mxu0 %v1135
  %v1263 = vpop.f32.mrf.mxu0
  %v1264 = vadd.f32 0.0, %v1263
  %1265 = vmatmul.f32.gmra.mxu0 %v1136
  %v1266 = vpop.f32.mrf.mxu0
  %v1267 = vadd.f32 0.0, %v1266
  %1268 = vmatmul.f32.gmra.mxu0 %v1137
  %v1269 = vpop.f32.mrf.mxu0
  %v1270 = vadd.f32 0.0, %v1269
  %1271 = vmatmul.f32.gmra.mxu0 %v1138
  %v1272 = vpop.f32.mrf.mxu0
  %v1273 = vadd.f32 0.0, %v1272
  %1274 = vmatmul.f32.gmra.mxu0 %v1139
  %v1275 = vpop.f32.mrf.mxu0
  %v1276 = vadd.f32 0.0, %v1275
  %1277 = vmatmul.f32.gmra.mxu0 %v1140
  %v1278 = vpop.f32.mrf.mxu0
  %v1279 = vadd.f32 0.0, %v1278
  %1280 = vmatmul.f32.gmra.mxu0 %v1141
  %v1281 = vpop.f32.mrf.mxu0
  %v1282 = vadd.f32 0.0, %v1281
  %1283 = vmatmul.f32.gmra.mxu0 %v1142
  %v1284 = vpop.f32.mrf.mxu0
  %v1285 = vadd.f32 0.0, %v1284
  %1286 = vmatmul.f32.gmra.mxu0 %v1143
  %v1287 = vpop.f32.mrf.mxu0
  %v1288 = vadd.f32 0.0, %v1287
  %1289 = vmatmul.f32.gmra.mxu0 %v1144
  %v1290 = vpop.f32.mrf.mxu0
  %v1291 = vadd.f32 0.0, %v1290
  %1292 = vmatmul.f32.gmra.mxu0 %v1145
  %v1293 = vpop.f32.mrf.mxu0
  %v1294 = vadd.f32 0.0, %v1293
  %1295 = vmatmul.f32.gmra.mxu0 %v1146
  %v1296 = vpop.f32.mrf.mxu0
  %v1297 = vadd.f32 0.0, %v1296
  %1298 = vmatmul.f32.gmra.mxu0 %v1147
  %v1299 = vpop.f32.mrf.mxu0
  %v1300 = vadd.f32 0.0, %v1299
  %1301 = vmatmul.f32.gmra.mxu0 %v1148
  %v1302 = vpop.f32.mrf.mxu0
  %v1303 = vadd.f32 0.0, %v1302
  %1304 = vmatmul.f32.gmra.mxu0 %v1149
  %v1305 = vpop.f32.mrf.mxu0
  %v1306 = vadd.f32 0.0, %v1305
  %1307 = vmatmul.f32.gmra.mxu0 %v1150
  %v1308 = vpop.f32.mrf.mxu0
  %v1309 = vadd.f32 0.0, %v1308
  %1310 = vmatmul.f32.gmra.mxu0 %v1151
  %v1311 = vpop.f32.mrf.mxu0
  %v1312 = vadd.f32 0.0, %v1311
  %1313 = vmatmul.f32.gmra.mxu0 %v1152
  %v1314 = vpop.f32.mrf.mxu0
  %v1315 = vadd.f32 0.0, %v1314
  %1316 = vmatmul.f32.gmra.mxu0 %v1153
  %v1317 = vpop.f32.mrf.mxu0
  %v1318 = vadd.f32 0.0, %v1317
  %1319 = vmatmul.f32.gmra.mxu0 %v1154
  %v1320 = vpop.f32.mrf.mxu0
  %v1321 = vadd.f32 0.0, %v1320
  %1322 = vmatmul.f32.gmra.mxu0 %v1155
  %v1323 = vpop.f32.mrf.mxu0
  %v1324 = vadd.f32 0.0, %v1323
  %1325 = vmatmul.f32.gmra.mxu0 %v1160
  %v1326 = vpop.f32.mrf.mxu0
  %v1327 = vadd.f32 0.0, %v1326
  %1328 = vmatmul.f32.gmra.mxu0 %v1161
  %v1329 = vpop.f32.mrf.mxu0
  %v1330 = vadd.f32 0.0, %v1329
  %1331 = vmatmul.f32.gmra.mxu0 %v1162
  %v1332 = vpop.f32.mrf.mxu0
  %v1333 = vadd.f32 0.0, %v1332
  %1334 = vmatmul.f32.gmra.mxu0 %v1163
  %v1335 = vpop.f32.mrf.mxu0
  %v1336 = vadd.f32 0.0, %v1335
  %1337 = vmatmul.f32.gmra.mxu0 %v1164
  %v1338 = vpop.f32.mrf.mxu0
  %v1339 = vadd.f32 0.0, %v1338
  %1340 = vmatmul.f32.gmra.mxu0 %v1165
  %v1341 = vpop.f32.mrf.mxu0
  %v1342 = vadd.f32 0.0, %v1341
  %1343 = vmatmul.f32.gmra.mxu0 %v1166
  %v1344 = vpop.f32.mrf.mxu0
  %v1345 = vadd.f32 0.0, %v1344
  %1346 = vmatmul.f32.gmra.mxu0 %v1167
  %v1347 = vpop.f32.mrf.mxu0
  %v1348 = vadd.f32 0.0, %v1347
  %1349 = vmatmul.f32.gmra.mxu0 %v1168
  %v1350 = vpop.f32.mrf.mxu0
  %v1351 = vadd.f32 0.0, %v1350
  %1352 = vmatmul.f32.gmra.mxu0 %v1169
  %v1353 = vpop.f32.mrf.mxu0
  %v1354 = vadd.f32 0.0, %v1353
  %1355 = vmatmul.f32.gmra.mxu0 %v1170
  %v1356 = vpop.f32.mrf.mxu0
  %v1357 = vadd.f32 0.0, %v1356
  %1358 = vmatmul.f32.gmra.mxu0 %v1171
  %v1359 = vpop.f32.mrf.mxu0
  %v1360 = vadd.f32 0.0, %v1359
  %1361 = vmatmul.f32.gmra.mxu0 %v1172
  %v1362 = vpop.f32.mrf.mxu0
  %v1363 = vadd.f32 0.0, %v1362
  %1364 = vmatmul.f32.gmra.mxu0 %v1173
  %v1365 = vpop.f32.mrf.mxu0
  %v1366 = vadd.f32 0.0, %v1365
  %1367 = vmatmul.f32.gmra.mxu0 %v1174
  %v1368 = vpop.f32.mrf.mxu0
  %v1369 = vadd.f32 0.0, %v1368
  %1370 = vmatmul.f32.gmra.mxu0 %v1175
  %v1371 = vpop.f32.mrf.mxu0
  %v1372 = vadd.f32 0.0, %v1371
  %1373 = vmatmul.f32.gmra.mxu0 %v1176
  %v1374 = vpop.f32.mrf.mxu0
  %v1375 = vadd.f32 0.0, %v1374
  %1376 = vmatmul.f32.gmra.mxu0 %v1177
  %v1377 = vpop.f32.mrf.mxu0
  %v1378 = vadd.f32 0.0, %v1377
  %1379 = vmatmul.f32.gmra.mxu0 %v1178
  %v1380 = vpop.f32.mrf.mxu0
  %v1381 = vadd.f32 0.0, %v1380
  %1382 = vmatmul.f32.gmra.mxu0 %v1179
  %v1383 = vpop.f32.mrf.mxu0
  %v1384 = vadd.f32 0.0, %v1383
  %1385 = vmatmul.f32.gmra.mxu0 %v1180
  %v1386 = vpop.f32.mrf.mxu0
  %v1387 = vadd.f32 0.0, %v1386
  %1388 = vmatmul.f32.gmra.mxu0 %v1181
  %v1389 = vpop.f32.mrf.mxu0
  %v1390 = vadd.f32 0.0, %v1389
  %1391 = vmatmul.f32.gmra.mxu0 %v1182
  %v1392 = vpop.f32.mrf.mxu0
  %v1393 = vadd.f32 0.0, %v1392
  %1394 = vmatmul.f32.gmra.mxu0 %v1183
  %v1395 = vpop.f32.mrf.mxu0
  %v1396 = vadd.f32 0.0, %v1395
  %1397 = vmatmul.f32.gmra.mxu0 %v1184
  %v1398 = vpop.f32.mrf.mxu0
  %v1399 = vadd.f32 0.0, %v1398
  %1400 = vmatmul.f32.gmra.mxu0 %v1185
  %v1401 = vpop.f32.mrf.mxu0
  %v1402 = vadd.f32 0.0, %v1401
  %1403 = vmatmul.f32.gmra.mxu0 %v1186
  %v1404 = vpop.f32.mrf.mxu0
  %v1405 = vadd.f32 0.0, %v1404
  %1406 = vmatmul.f32.gmra.mxu0 %v1187
  %v1407 = vpop.f32.mrf.mxu0
  %v1408 = vadd.f32 0.0, %v1407
  %1409 = vmatmul.f32.gmra.mxu0 %v1188
  %v1410 = vpop.f32.mrf.mxu0
  %v1411 = vadd.f32 0.0, %v1410
  %1412 = vmatmul.f32.gmra.mxu0 %v1189
  %v1413 = vpop.f32.mrf.mxu0
  %v1414 = vadd.f32 0.0, %v1413
  %1415 = vmatmul.f32.gmra.mxu0 %v1190
  %v1416 = vpop.f32.mrf.mxu0
  %v1417 = vadd.f32 0.0, %v1416
  %1418 = vmatmul.f32.gmra.mxu0 %v1191
  %v1419 = vpop.f32.mrf.mxu0
  %v1420 = vadd.f32 0.0, %v1419
  %1421 = vdwg.mxu0
  %v1422 = vadd.f32 %v1060, %v1231
  %v1423 = vadd.f32 %v1061, %v1234
  %v1424 = vadd.f32 %v1062, %v1237
  %v1425 = vadd.f32 %v1063, %v1240
  %v1426 = vadd.f32 %v1064, %v1243
  %v1427 = vadd.f32 %v1065, %v1246
  %v1428 = vadd.f32 %v1066, %v1249
  %v1429 = vadd.f32 %v1067, %v1252
  %v1430 = vadd.f32 %v1068, %v1255
  %v1431 = vadd.f32 %v1069, %v1258
  %v1432 = vadd.f32 %v1070, %v1261
  %v1433 = vadd.f32 %v1071, %v1264
  %v1434 = vadd.f32 %v1072, %v1267
  %v1435 = vadd.f32 %v1073, %v1270
  %v1436 = vadd.f32 %v1074, %v1273
  %v1437 = vadd.f32 %v1075, %v1276
  %v1438 = vadd.f32 %v1076, %v1279
  %v1439 = vadd.f32 %v1077, %v1282
  %v1440 = vadd.f32 %v1078, %v1285
  %v1441 = vadd.f32 %v1079, %v1288
  %v1442 = vadd.f32 %v1080, %v1291
  %v1443 = vadd.f32 %v1081, %v1294
  %v1444 = vadd.f32 %v1082, %v1297
  %v1445 = vadd.f32 %v1083, %v1300
  %v1446 = vadd.f32 %v1084, %v1303
  %v1447 = vadd.f32 %v1085, %v1306
  %v1448 = vadd.f32 %v1086, %v1309
  %v1449 = vadd.f32 %v1087, %v1312
  %v1450 = vadd.f32 %v1088, %v1315
  %v1451 = vadd.f32 %v1089, %v1318
  %v1452 = vadd.f32 %v1090, %v1321
  %v1453 = vadd.f32 %v1091, %v1324
  %v1454 = vadd.f32 %v1092, %v1327
  %v1455 = vadd.f32 %v1093, %v1330
  %v1456 = vadd.f32 %v1094, %v1333
  %v1457 = vadd.f32 %v1095, %v1336
  %v1458 = vadd.f32 %v1096, %v1339
  %v1459 = vadd.f32 %v1097, %v1342
  %v1460 = vadd.f32 %v1098, %v1345
  %v1461 = vadd.f32 %v1099, %v1348
  %v1462 = vadd.f32 %v1100, %v1351
  %v1463 = vadd.f32 %v1101, %v1354
  %v1464 = vadd.f32 %v1102, %v1357
  %v1465 = vadd.f32 %v1103, %v1360
  %v1466 = vadd.f32 %v1104, %v1363
  %v1467 = vadd.f32 %v1105, %v1366
  %v1468 = vadd.f32 %v1106, %v1369
  %v1469 = vadd.f32 %v1107, %v1372
  %v1470 = vadd.f32 %v1108, %v1375
  %v1471 = vadd.f32 %v1109, %v1378
  %v1472 = vadd.f32 %v1110, %v1381
  %v1473 = vadd.f32 %v1111, %v1384
  %v1474 = vadd.f32 %v1112, %v1387
  %v1475 = vadd.f32 %v1113, %v1390
  %v1476 = vadd.f32 %v1114, %v1393
  %v1477 = vadd.f32 %v1115, %v1396
  %v1478 = vadd.f32 %v1116, %v1399
  %v1479 = vadd.f32 %v1117, %v1402
  %v1480 = vadd.f32 %v1118, %v1405
  %v1481 = vadd.f32 %v1119, %v1408
  %v1482 = vadd.f32 %v1120, %v1411
  %v1483 = vadd.f32 %v1121, %v1414
  %v1484 = vadd.f32 %v1122, %v1417
  %v1485 = vadd.f32 %v1123, %v1420
  %s1486 = scalar_lea.vmem %s1, 512
  %v1487 = vld [vmem:[%s1486] sm:$0xff]
  %v1488 = vld [vmem:[%s1486 + $0x8] sm:$0xff]
  %v1489 = vld [vmem:[%s1486 + $0x10] sm:$0xff]
  %v1490 = vld [vmem:[%s1486 + $0x18] sm:$0xff]
  %v1491 = vld [vmem:[%s1486 + $0x20] sm:$0xff]
  %v1492 = vld [vmem:[%s1486 + $0x28] sm:$0xff]
  %v1493 = vld [vmem:[%s1486 + $0x30] sm:$0xff]
  %v1494 = vld [vmem:[%s1486 + $0x38] sm:$0xff]
  %v1495 = vld [vmem:[%s1486 + $0x40] sm:$0xff]
  %v1496 = vld [vmem:[%s1486 + $0x48] sm:$0xff]
  %v1497 = vld [vmem:[%s1486 + $0x50] sm:$0xff]
  %v1498 = vld [vmem:[%s1486 + $0x58] sm:$0xff]
  %v1499 = vld [vmem:[%s1486 + $0x60] sm:$0xff]
  %v1500 = vld [vmem:[%s1486 + $0x68] sm:$0xff]
  %v1501 = vld [vmem:[%s1486 + $0x70] sm:$0xff]
  %v1502 = vld [vmem:[%s1486 + $0x78] sm:$0xff]
  %1503 = vmatpush.msra.mxu0 %v1502
  %1504 = vmatpush.msra.mxu0 %v1501
  %1505 = vmatpush.msra.mxu0 %v1500
  %1506 = vmatpush.msra.mxu0 %v1499
  %1507 = vmatpush.msra.mxu0 %v1498
  %1508 = vmatpush.msra.mxu0 %v1497
  %1509 = vmatpush.msra.mxu0 %v1496
  %1510 = vmatpush.msra.mxu0 %v1495
  %1511 = vmatpush.msra.mxu0 %v1494
  %1512 = vmatpush.msra.mxu0 %v1493
  %1513 = vmatpush.msra.mxu0 %v1492
  %1514 = vmatpush.msra.mxu0 %v1491
  %1515 = vmatpush.msra.mxu0 %v1490
  %1516 = vmatpush.msra.mxu0 %v1489
  %1517 = vmatpush.msra.mxu0 %v1488
  %1518 = vmatpush.msra.mxu0 %v1487
  %1519 = vmatmul.f32.gmra.mxu0 %v1126
  %v1520 = vpop.f32.mrf.mxu0
  %v1521 = vadd.f32 0.0, %v1520
  %1522 = vmatmul.f32.gmra.mxu0 %v1127
  %v1523 = vpop.f32.mrf.mxu0
  %v1524 = vadd.f32 0.0, %v1523
  %1525 = vmatmul.f32.gmra.mxu0 %v1128
  %v1526 = vpop.f32.mrf.mxu0
  %v1527 = vadd.f32 0.0, %v1526
  %1528 = vmatmul.f32.gmra.mxu0 %v1129
  %v1529 = vpop.f32.mrf.mxu0
  %v1530 = vadd.f32 0.0, %v1529
  %1531 = vmatmul.f32.gmra.mxu0 %v1130
  %v1532 = vpop.f32.mrf.mxu0
  %v1533 = vadd.f32 0.0, %v1532
  %1534 = vmatmul.f32.gmra.mxu0 %v1131
  %v1535 = vpop.f32.mrf.mxu0
  %v1536 = vadd.f32 0.0, %v1535
  %1537 = vmatmul.f32.gmra.mxu0 %v1132
  %v1538 = vpop.f32.mrf.mxu0
  %v1539 = vadd.f32 0.0, %v1538
  %1540 = vmatmul.f32.gmra.mxu0 %v1133
  %v1541 = vpop.f32.mrf.mxu0
  %v1542 = vadd.f32 0.0, %v1541
  %1543 = vmatmul.f32.gmra.mxu0 %v1134
  %v1544 = vpop.f32.mrf.mxu0
  %v1545 = vadd.f32 0.0, %v1544
  %1546 = vmatmul.f32.gmra.mxu0 %v1135
  %v1547 = vpop.f32.mrf.mxu0
  %v1548 = vadd.f32 0.0, %v1547
  %1549 = vmatmul.f32.gmra.mxu0 %v1136
  %v1550 = vpop.f32.mrf.mxu0
  %v1551 = vadd.f32 0.0, %v1550
  %1552 = vmatmul.f32.gmra.mxu0 %v1137
  %v1553 = vpop.f32.mrf.mxu0
  %v1554 = vadd.f32 0.0, %v1553
  %1555 = vmatmul.f32.gmra.mxu0 %v1138
  %v1556 = vpop.f32.mrf.mxu0
  %v1557 = vadd.f32 0.0, %v1556
  %1558 = vmatmul.f32.gmra.mxu0 %v1139
  %v1559 = vpop.f32.mrf.mxu0
  %v1560 = vadd.f32 0.0, %v1559
  %1561 = vmatmul.f32.gmra.mxu0 %v1140
  %v1562 = vpop.f32.mrf.mxu0
  %v1563 = vadd.f32 0.0, %v1562
  %1564 = vmatmul.f32.gmra.mxu0 %v1141
  %v1565 = vpop.f32.mrf.mxu0
  %v1566 = vadd.f32 0.0, %v1565
  %1567 = vmatmul.f32.gmra.mxu0 %v1142
  %v1568 = vpop.f32.mrf.mxu0
  %v1569 = vadd.f32 0.0, %v1568
  %1570 = vmatmul.f32.gmra.mxu0 %v1143
  %v1571 = vpop.f32.mrf.mxu0
  %v1572 = vadd.f32 0.0, %v1571
  %1573 = vmatmul.f32.gmra.mxu0 %v1144
  %v1574 = vpop.f32.mrf.mxu0
  %v1575 = vadd.f32 0.0, %v1574
  %1576 = vmatmul.f32.gmra.mxu0 %v1145
  %v1577 = vpop.f32.mrf.mxu0
  %v1578 = vadd.f32 0.0, %v1577
  %1579 = vmatmul.f32.gmra.mxu0 %v1146
  %v1580 = vpop.f32.mrf.mxu0
  %v1581 = vadd.f32 0.0, %v1580
  %1582 = vmatmul.f32.gmra.mxu0 %v1147
  %v1583 = vpop.f32.mrf.mxu0
  %v1584 = vadd.f32 0.0, %v1583
  %1585 = vmatmul.f32.gmra.mxu0 %v1148
  %v1586 = vpop.f32.mrf.mxu0
  %v1587 = vadd.f32 0.0, %v1586
  %1588 = vmatmul.f32.gmra.mxu0 %v1149
  %v1589 = vpop.f32.mrf.mxu0
  %v1590 = vadd.f32 0.0, %v1589
  %1591 = vmatmul.f32.gmra.mxu0 %v1150
  %v1592 = vpop.f32.mrf.mxu0
  %v1593 = vadd.f32 0.0, %v1592
  %1594 = vmatmul.f32.gmra.mxu0 %v1151
  %v1595 = vpop.f32.mrf.mxu0
  %v1596 = vadd.f32 0.0, %v1595
  %1597 = vmatmul.f32.gmra.mxu0 %v1152
  %v1598 = vpop.f32.mrf.mxu0
  %v1599 = vadd.f32 0.0, %v1598
  %1600 = vmatmul.f32.gmra.mxu0 %v1153
  %v1601 = vpop.f32.mrf.mxu0
  %v1602 = vadd.f32 0.0, %v1601
  %1603 = vmatmul.f32.gmra.mxu0 %v1154
  %v1604 = vpop.f32.mrf.mxu0
  %v1605 = vadd.f32 0.0, %v1604
  %1606 = vmatmul.f32.gmra.mxu0 %v1155
  %v1607 = vpop.f32.mrf.mxu0
  %v1608 = vadd.f32 0.0, %v1607
  %1609 = vmatmul.f32.gmra.mxu0 %v1156
  %v1610 = vpop.f32.mrf.mxu0
  %v1611 = vadd.f32 0.0, %v1610
  %1612 = vmatmul.f32.gmra.mxu0 %v1157
  %v1613 = vpop.f32.mrf.mxu0
  %v1614 = vadd.f32 0.0, %v1613
  %1615 = vmatmul.f32.gmra.mxu0 %v1162
  %v1616 = vpop.f32.mrf.mxu0
  %v1617 = vadd.f32 0.0, %v1616
  %1618 = vmatmul.f32.gmra.mxu0 %v1163
  %v1619 = vpop.f32.mrf.mxu0
  %v1620 = vadd.f32 0.0, %v1619
  %1621 = vmatmul.f32.gmra.mxu0 %v1164
  %v1622 = vpop.f32.mrf.mxu0
  %v1623 = vadd.f32 0.0, %v1622
  %1624 = vmatmul.f32.gmra.mxu0 %v1165
  %v1625 = vpop.f32.mrf.mxu0
  %v1626 = vadd.f32 0.0, %v1625
  %1627 = vmatmul.f32.gmra.mxu0 %v1166
  %v1628 = vpop.f32.mrf.mxu0
  %v1629 = vadd.f32 0.0, %v1628
  %1630 = vmatmul.f32.gmra.mxu0 %v1167
  %v1631 = vpop.f32.mrf.mxu0
  %v1632 = vadd.f32 0.0, %v1631
  %1633 = vmatmul.f32.gmra.mxu0 %v1168
  %v1634 = vpop.f32.mrf.mxu0
  %v1635 = vadd.f32 0.0, %v1634
  %1636 = vmatmul.f32.gmra.mxu0 %v1169
  %v1637 = vpop.f32.mrf.mxu0
  %v1638 = vadd.f32 0.0, %v1637
  %1639 = vmatmul.f32.gmra.mxu0 %v1170
  %v1640 = vpop.f32.mrf.mxu0
  %v1641 = vadd.f32 0.0, %v1640
  %1642 = vmatmul.f32.gmra.mxu0 %v1171
  %v1643 = vpop.f32.mrf.mxu0
  %v1644 = vadd.f32 0.0, %v1643
  %1645 = vmatmul.f32.gmra.mxu0 %v1172
  %v1646 = vpop.f32.mrf.mxu0
  %v1647 = vadd.f32 0.0, %v1646
  %1648 = vmatmul.f32.gmra.mxu0 %v1173
  %v1649 = vpop.f32.mrf.mxu0
  %v1650 = vadd.f32 0.0, %v1649
  %1651 = vmatmul.f32.gmra.mxu0 %v1174
  %v1652 = vpop.f32.mrf.mxu0
  %v1653 = vadd.f32 0.0, %v1652
  %1654 = vmatmul.f32.gmra.mxu0 %v1175
  %v1655 = vpop.f32.mrf.mxu0
  %v1656 = vadd.f32 0.0, %v1655
  %1657 = vmatmul.f32.gmra.mxu0 %v1176
  %v1658 = vpop.f32.mrf.mxu0
  %v1659 = vadd.f32 0.0, %v1658
  %1660 = vmatmul.f32.gmra.mxu0 %v1177
  %v1661 = vpop.f32.mrf.mxu0
  %v1662 = vadd.f32 0.0, %v1661
  %1663 = vmatmul.f32.gmra.mxu0 %v1178
  %v1664 = vpop.f32.mrf.mxu0
  %v1665 = vadd.f32 0.0, %v1664
  %1666 = vmatmul.f32.gmra.mxu0 %v1179
  %v1667 = vpop.f32.mrf.mxu0
  %v1668 = vadd.f32 0.0, %v1667
  %1669 = vmatmul.f32.gmra.mxu0 %v1180
  %v1670 = vpop.f32.mrf.mxu0
  %v1671 = vadd.f32 0.0, %v1670
  %1672 = vmatmul.f32.gmra.mxu0 %v1181
  %v1673 = vpop.f32.mrf.mxu0
  %v1674 = vadd.f32 0.0, %v1673
  %1675 = vmatmul.f32.gmra.mxu0 %v1182
  %v1676 = vpop.f32.mrf.mxu0
  %v1677 = vadd.f32 0.0, %v1676
  %1678 = vmatmul.f32.gmra.mxu0 %v1183
  %v1679 = vpop.f32.mrf.mxu0
  %v1680 = vadd.f32 0.0, %v1679
  %1681 = vmatmul.f32.gmra.mxu0 %v1184
  %v1682 = vpop.f32.mrf.mxu0
  %v1683 = vadd.f32 0.0, %v1682
  %1684 = vmatmul.f32.gmra.mxu0 %v1185
  %v1685 = vpop.f32.mrf.mxu0
  %v1686 = vadd.f32 0.0, %v1685
  %1687 = vmatmul.f32.gmra.mxu0 %v1186
  %v1688 = vpop.f32.mrf.mxu0
  %v1689 = vadd.f32 0.0, %v1688
  %1690 = vmatmul.f32.gmra.mxu0 %v1187
  %v1691 = vpop.f32.mrf.mxu0
  %v1692 = vadd.f32 0.0, %v1691
  %1693 = vmatmul.f32.gmra.mxu0 %v1188
  %v1694 = vpop.f32.mrf.mxu0
  %v1695 = vadd.f32 0.0, %v1694
  %1696 = vmatmul.f32.gmra.mxu0 %v1189
  %v1697 = vpop.f32.mrf.mxu0
  %v1698 = vadd.f32 0.0, %v1697
  %1699 = vmatmul.f32.gmra.mxu0 %v1190
  %v1700 = vpop.f32.mrf.mxu0
  %v1701 = vadd.f32 0.0, %v1700
  %1702 = vmatmul.f32.gmra.mxu0 %v1191
  %v1703 = vpop.f32.mrf.mxu0
  %v1704 = vadd.f32 0.0, %v1703
  %1705 = vmatmul.f32.gmra.mxu0 %v1192
  %v1706 = vpop.f32.mrf.mxu0
  %v1707 = vadd.f32 0.0, %v1706
  %1708 = vmatmul.f32.gmra.mxu0 %v1193
  %v1709 = vpop.f32.mrf.mxu0
  %v1710 = vadd.f32 0.0, %v1709
  %1711 = vdwg.mxu0
  %v1712 = vadd.f32 %v1422, %v1521
  %v1713 = vadd.f32 %v1423, %v1524
  %v1714 = vadd.f32 %v1424, %v1527
  %v1715 = vadd.f32 %v1425, %v1530
  %v1716 = vadd.f32 %v1426, %v1533
  %v1717 = vadd.f32 %v1427, %v1536
  %v1718 = vadd.f32 %v1428, %v1539
  %v1719 = vadd.f32 %v1429, %v1542
  %v1720 = vadd.f32 %v1430, %v1545
  %v1721 = vadd.f32 %v1431, %v1548
  %v1722 = vadd.f32 %v1432, %v1551
  %v1723 = vadd.f32 %v1433, %v1554
  %v1724 = vadd.f32 %v1434, %v1557
  %v1725 = vadd.f32 %v1435, %v1560
  %v1726 = vadd.f32 %v1436, %v1563
  %v1727 = vadd.f32 %v1437, %v1566
  %v1728 = vadd.f32 %v1438, %v1569
  %v1729 = vadd.f32 %v1439, %v1572
  %v1730 = vadd.f32 %v1440, %v1575
  %v1731 = vadd.f32 %v1441, %v1578
  %v1732 = vadd.f32 %v1442, %v1581
  %v1733 = vadd.f32 %v1443, %v1584
  %v1734 = vadd.f32 %v1444, %v1587
  %v1735 = vadd.f32 %v1445, %v1590
  %v1736 = vadd.f32 %v1446, %v1593
  %v1737 = vadd.f32 %v1447, %v1596
  %v1738 = vadd.f32 %v1448, %v1599
  %v1739 = vadd.f32 %v1449, %v1602
  %v1740 = vadd.f32 %v1450, %v1605
  %v1741 = vadd.f32 %v1451, %v1608
  %v1742 = vadd.f32 %v1452, %v1611
  %v1743 = vadd.f32 %v1453, %v1614
  %v1744 = vadd.f32 %v1454, %v1617
  %v1745 = vadd.f32 %v1455, %v1620
  %v1746 = vadd.f32 %v1456, %v1623
  %v1747 = vadd.f32 %v1457, %v1626
  %v1748 = vadd.f32 %v1458, %v1629
  %v1749 = vadd.f32 %v1459, %v1632
  %v1750 = vadd.f32 %v1460, %v1635
  %v1751 = vadd.f32 %v1461, %v1638
  %v1752 = vadd.f32 %v1462, %v1641
  %v1753 = vadd.f32 %v1463, %v1644
  %v1754 = vadd.f32 %v1464, %v1647
  %v1755 = vadd.f32 %v1465, %v1650
  %v1756 = vadd.f32 %v1466, %v1653
  %v1757 = vadd.f32 %v1467, %v1656
  %v1758 = vadd.f32 %v1468, %v1659
  %v1759 = vadd.f32 %v1469, %v1662
  %v1760 = vadd.f32 %v1470, %v1665
  %v1761 = vadd.f32 %v1471, %v1668
  %v1762 = vadd.f32 %v1472, %v1671
  %v1763 = vadd.f32 %v1473, %v1674
  %v1764 = vadd.f32 %v1474, %v1677
  %v1765 = vadd.f32 %v1475, %v1680
  %v1766 = vadd.f32 %v1476, %v1683
  %v1767 = vadd.f32 %v1477, %v1686
  %v1768 = vadd.f32 %v1478, %v1689
  %v1769 = vadd.f32 %v1479, %v1692
  %v1770 = vadd.f32 %v1480, %v1695
  %v1771 = vadd.f32 %v1481, %v1698
  %v1772 = vadd.f32 %v1482, %v1701
  %v1773 = vadd.f32 %v1483, %v1704
  %v1774 = vadd.f32 %v1484, %v1707
  %v1775 = vadd.f32 %v1485, %v1710
  %s1776 = scalar_lea.vmem %s1, 640
  %v1777 = vld [vmem:[%s1776] sm:$0xff]
  %v1778 = vld [vmem:[%s1776 + $0x8] sm:$0xff]
  %v1779 = vld [vmem:[%s1776 + $0x10] sm:$0xff]
  %v1780 = vld [vmem:[%s1776 + $0x18] sm:$0xff]
  %v1781 = vld [vmem:[%s1776 + $0x20] sm:$0xff]
  %v1782 = vld [vmem:[%s1776 + $0x28] sm:$0xff]
  %v1783 = vld [vmem:[%s1776 + $0x30] sm:$0xff]
  %v1784 = vld [vmem:[%s1776 + $0x38] sm:$0xff]
  %v1785 = vld [vmem:[%s1776 + $0x40] sm:$0xff]
  %v1786 = vld [vmem:[%s1776 + $0x48] sm:$0xff]
  %v1787 = vld [vmem:[%s1776 + $0x50] sm:$0xff]
  %v1788 = vld [vmem:[%s1776 + $0x58] sm:$0xff]
  %v1789 = vld [vmem:[%s1776 + $0x60] sm:$0xff]
  %v1790 = vld [vmem:[%s1776 + $0x68] sm:$0xff]
  %v1791 = vld [vmem:[%s1776 + $0x70] sm:$0xff]
  %v1792 = vld [vmem:[%s1776 + $0x78] sm:$0xff]
  %1793 = vmatpush.msra.mxu0 %v1792
  %1794 = vmatpush.msra.mxu0 %v1791
  %1795 = vmatpush.msra.mxu0 %v1790
  %1796 = vmatpush.msra.mxu0 %v1789
  %1797 = vmatpush.msra.mxu0 %v1788
  %1798 = vmatpush.msra.mxu0 %v1787
  %1799 = vmatpush.msra.mxu0 %v1786
  %1800 = vmatpush.msra.mxu0 %v1785
  %1801 = vmatpush.msra.mxu0 %v1784
  %1802 = vmatpush.msra.mxu0 %v1783
  %1803 = vmatpush.msra.mxu0 %v1782
  %1804 = vmatpush.msra.mxu0 %v1781
  %1805 = vmatpush.msra.mxu0 %v1780
  %1806 = vmatpush.msra.mxu0 %v1779
  %1807 = vmatpush.msra.mxu0 %v1778
  %1808 = vmatpush.msra.mxu0 %v1777
  %1809 = vmatmul.f32.gmra.mxu0 %v1128
  %v1810 = vpop.f32.mrf.mxu0
  %v1811 = vadd.f32 0.0, %v1810
  %1812 = vmatmul.f32.gmra.mxu0 %v1129
  %v1813 = vpop.f32.mrf.mxu0
  %v1814 = vadd.f32 0.0, %v1813
  %1815 = vmatmul.f32.gmra.mxu0 %v1130
  %v1816 = vpop.f32.mrf.mxu0
  %v1817 = vadd.f32 0.0, %v1816
  %1818 = vmatmul.f32.gmra.mxu0 %v1131
  %v1819 = vpop.f32.mrf.mxu0
  %v1820 = vadd.f32 0.0, %v1819
  %1821 = vmatmul.f32.gmra.mxu0 %v1132
  %v1822 = vpop.f32.mrf.mxu0
  %v1823 = vadd.f32 0.0, %v1822
  %1824 = vmatmul.f32.gmra.mxu0 %v1133
  %v1825 = vpop.f32.mrf.mxu0
  %v1826 = vadd.f32 0.0, %v1825
  %1827 = vmatmul.f32.gmra.mxu0 %v1134
  %v1828 = vpop.f32.mrf.mxu0
  %v1829 = vadd.f32 0.0, %v1828
  %1830 = vmatmul.f32.gmra.mxu0 %v1135
  %v1831 = vpop.f32.mrf.mxu0
  %v1832 = vadd.f32 0.0, %v1831
  %1833 = vmatmul.f32.gmra.mxu0 %v1136
  %v1834 = vpop.f32.mrf.mxu0
  %v1835 = vadd.f32 0.0, %v1834
  %1836 = vmatmul.f32.gmra.mxu0 %v1137
  %v1837 = vpop.f32.mrf.mxu0
  %v1838 = vadd.f32 0.0, %v1837
  %1839 = vmatmul.f32.gmra.mxu0 %v1138
  %v1840 = vpop.f32.mrf.mxu0
  %v1841 = vadd.f32 0.0, %v1840
  %1842 = vmatmul.f32.gmra.mxu0 %v1139
  %v1843 = vpop.f32.mrf.mxu0
  %v1844 = vadd.f32 0.0, %v1843
  %1845 = vmatmul.f32.gmra.mxu0 %v1140
  %v1846 = vpop.f32.mrf.mxu0
  %v1847 = vadd.f32 0.0, %v1846
  %1848 = vmatmul.f32.gmra.mxu0 %v1141
  %v1849 = vpop.f32.mrf.mxu0
  %v1850 = vadd.f32 0.0, %v1849
  %1851 = vmatmul.f32.gmra.mxu0 %v1142
  %v1852 = vpop.f32.mrf.mxu0
  %v1853 = vadd.f32 0.0, %v1852
  %1854 = vmatmul.f32.gmra.mxu0 %v1143
  %v1855 = vpop.f32.mrf.mxu0
  %v1856 = vadd.f32 0.0, %v1855
  %1857 = vmatmul.f32.gmra.mxu0 %v1144
  %v1858 = vpop.f32.mrf.mxu0
  %v1859 = vadd.f32 0.0, %v1858
  %1860 = vmatmul.f32.gmra.mxu0 %v1145
  %v1861 = vpop.f32.mrf.mxu0
  %v1862 = vadd.f32 0.0, %v1861
  %1863 = vmatmul.f32.gmra.mxu0 %v1146
  %v1864 = vpop.f32.mrf.mxu0
  %v1865 = vadd.f32 0.0, %v1864
  %1866 = vmatmul.f32.gmra.mxu0 %v1147
  %v1867 = vpop.f32.mrf.mxu0
  %v1868 = vadd.f32 0.0, %v1867
  %1869 = vmatmul.f32.gmra.mxu0 %v1148
  %v1870 = vpop.f32.mrf.mxu0
  %v1871 = vadd.f32 0.0, %v1870
  %1872 = vmatmul.f32.gmra.mxu0 %v1149
  %v1873 = vpop.f32.mrf.mxu0
  %v1874 = vadd.f32 0.0, %v1873
  %1875 = vmatmul.f32.gmra.mxu0 %v1150
  %v1876 = vpop.f32.mrf.mxu0
  %v1877 = vadd.f32 0.0, %v1876
  %1878 = vmatmul.f32.gmra.mxu0 %v1151
  %v1879 = vpop.f32.mrf.mxu0
  %v1880 = vadd.f32 0.0, %v1879
  %1881 = vmatmul.f32.gmra.mxu0 %v1152
  %v1882 = vpop.f32.mrf.mxu0
  %v1883 = vadd.f32 0.0, %v1882
  %1884 = vmatmul.f32.gmra.mxu0 %v1153
  %v1885 = vpop.f32.mrf.mxu0
  %v1886 = vadd.f32 0.0, %v1885
  %1887 = vmatmul.f32.gmra.mxu0 %v1154
  %v1888 = vpop.f32.mrf.mxu0
  %v1889 = vadd.f32 0.0, %v1888
  %1890 = vmatmul.f32.gmra.mxu0 %v1155
  %v1891 = vpop.f32.mrf.mxu0
  %v1892 = vadd.f32 0.0, %v1891
  %1893 = vmatmul.f32.gmra.mxu0 %v1156
  %v1894 = vpop.f32.mrf.mxu0
  %v1895 = vadd.f32 0.0, %v1894
  %1896 = vmatmul.f32.gmra.mxu0 %v1157
  %v1897 = vpop.f32.mrf.mxu0
  %v1898 = vadd.f32 0.0, %v1897
  %1899 = vmatmul.f32.gmra.mxu0 %v1158
  %v1900 = vpop.f32.mrf.mxu0
  %v1901 = vadd.f32 0.0, %v1900
  %1902 = vmatmul.f32.gmra.mxu0 %v1159
  %v1903 = vpop.f32.mrf.mxu0
  %v1904 = vadd.f32 0.0, %v1903
  %1905 = vmatmul.f32.gmra.mxu0 %v1164
  %v1906 = vpop.f32.mrf.mxu0
  %v1907 = vadd.f32 0.0, %v1906
  %1908 = vmatmul.f32.gmra.mxu0 %v1165
  %v1909 = vpop.f32.mrf.mxu0
  %v1910 = vadd.f32 0.0, %v1909
  %1911 = vmatmul.f32.gmra.mxu0 %v1166
  %v1912 = vpop.f32.mrf.mxu0
  %v1913 = vadd.f32 0.0, %v1912
  %1914 = vmatmul.f32.gmra.mxu0 %v1167
  %v1915 = vpop.f32.mrf.mxu0
  %v1916 = vadd.f32 0.0, %v1915
  %1917 = vmatmul.f32.gmra.mxu0 %v1168
  %v1918 = vpop.f32.mrf.mxu0
  %v1919 = vadd.f32 0.0, %v1918
  %1920 = vmatmul.f32.gmra.mxu0 %v1169
  %v1921 = vpop.f32.mrf.mxu0
  %v1922 = vadd.f32 0.0, %v1921
  %1923 = vmatmul.f32.gmra.mxu0 %v1170
  %v1924 = vpop.f32.mrf.mxu0
  %v1925 = vadd.f32 0.0, %v1924
  %1926 = vmatmul.f32.gmra.mxu0 %v1171
  %v1927 = vpop.f32.mrf.mxu0
  %v1928 = vadd.f32 0.0, %v1927
  %1929 = vmatmul.f32.gmra.mxu0 %v1172
  %v1930 = vpop.f32.mrf.mxu0
  %v1931 = vadd.f32 0.0, %v1930
  %1932 = vmatmul.f32.gmra.mxu0 %v1173
  %v1933 = vpop.f32.mrf.mxu0
  %v1934 = vadd.f32 0.0, %v1933
  %1935 = vmatmul.f32.gmra.mxu0 %v1174
  %v1936 = vpop.f32.mrf.mxu0
  %v1937 = vadd.f32 0.0, %v1936
  %1938 = vmatmul.f32.gmra.mxu0 %v1175
  %v1939 = vpop.f32.mrf.mxu0
  %v1940 = vadd.f32 0.0, %v1939
  %1941 = vmatmul.f32.gmra.mxu0 %v1176
  %v1942 = vpop.f32.mrf.mxu0
  %v1943 = vadd.f32 0.0, %v1942
  %1944 = vmatmul.f32.gmra.mxu0 %v1177
  %v1945 = vpop.f32.mrf.mxu0
  %v1946 = vadd.f32 0.0, %v1945
  %1947 = vmatmul.f32.gmra.mxu0 %v1178
  %v1948 = vpop.f32.mrf.mxu0
  %v1949 = vadd.f32 0.0, %v1948
  %1950 = vmatmul.f32.gmra.mxu0 %v1179
  %v1951 = vpop.f32.mrf.mxu0
  %v1952 = vadd.f32 0.0, %v1951
  %1953 = vmatmul.f32.gmra.mxu0 %v1180
  %v1954 = vpop.f32.mrf.mxu0
  %v1955 = vadd.f32 0.0, %v1954
  %1956 = vmatmul.f32.gmra.mxu0 %v1181
  %v1957 = vpop.f32.mrf.mxu0
  %v1958 = vadd.f32 0.0, %v1957
  %1959 = vmatmul.f32.gmra.mxu0 %v1182
  %v1960 = vpop.f32.mrf.mxu0
  %v1961 = vadd.f32 0.0, %v1960
  %1962 = vmatmul.f32.gmra.mxu0 %v1183
  %v1963 = vpop.f32.mrf.mxu0
  %v1964 = vadd.f32 0.0, %v1963
  %1965 = vmatmul.f32.gmra.mxu0 %v1184
  %v1966 = vpop.f32.mrf.mxu0
  %v1967 = vadd.f32 0.0, %v1966
  %1968 = vmatmul.f32.gmra.mxu0 %v1185
  %v1969 = vpop.f32.mrf.mxu0
  %v1970 = vadd.f32 0.0, %v1969
  %1971 = vmatmul.f32.gmra.mxu0 %v1186
  %v1972 = vpop.f32.mrf.mxu0
  %v1973 = vadd.f32 0.0, %v1972
  %1974 = vmatmul.f32.gmra.mxu0 %v1187
  %v1975 = vpop.f32.mrf.mxu0
  %v1976 = vadd.f32 0.0, %v1975
  %1977 = vmatmul.f32.gmra.mxu0 %v1188
  %v1978 = vpop.f32.mrf.mxu0
  %v1979 = vadd.f32 0.0, %v1978
  %1980 = vmatmul.f32.gmra.mxu0 %v1189
  %v1981 = vpop.f32.mrf.mxu0
  %v1982 = vadd.f32 0.0, %v1981
  %1983 = vmatmul.f32.gmra.mxu0 %v1190
  %v1984 = vpop.f32.mrf.mxu0
  %v1985 = vadd.f32 0.0, %v1984
  %1986 = vmatmul.f32.gmra.mxu0 %v1191
  %v1987 = vpop.f32.mrf.mxu0
  %v1988 = vadd.f32 0.0, %v1987
  %1989 = vmatmul.f32.gmra.mxu0 %v1192
  %v1990 = vpop.f32.mrf.mxu0
  %v1991 = vadd.f32 0.0, %v1990
  %1992 = vmatmul.f32.gmra.mxu0 %v1193
  %v1993 = vpop.f32.mrf.mxu0
  %v1994 = vadd.f32 0.0, %v1993
  %1995 = vmatmul.f32.gmra.mxu0 %v1194
  %v1996 = vpop.f32.mrf.mxu0
  %v1997 = vadd.f32 0.0, %v1996
  %1998 = vmatmul.f32.gmra.mxu0 %v1195
  %v1999 = vpop.f32.mrf.mxu0
  %v2000 = vadd.f32 0.0, %v1999
  %2001 = vdwg.mxu0
  %v2002 = vadd.f32 %v1712, %v1811
  %v2003 = vadd.f32 %v1713, %v1814
  %v2004 = vadd.f32 %v1714, %v1817
  %v2005 = vadd.f32 %v1715, %v1820
  %v2006 = vadd.f32 %v1716, %v1823
  %v2007 = vadd.f32 %v1717, %v1826
  %v2008 = vadd.f32 %v1718, %v1829
  %v2009 = vadd.f32 %v1719, %v1832
  %v2010 = vadd.f32 %v1720, %v1835
  %v2011 = vadd.f32 %v1721, %v1838
  %v2012 = vadd.f32 %v1722, %v1841
  %v2013 = vadd.f32 %v1723, %v1844
  %v2014 = vadd.f32 %v1724, %v1847
  %v2015 = vadd.f32 %v1725, %v1850
  %v2016 = vadd.f32 %v1726, %v1853
  %v2017 = vadd.f32 %v1727, %v1856
  %v2018 = vadd.f32 %v1728, %v1859
  %v2019 = vadd.f32 %v1729, %v1862
  %v2020 = vadd.f32 %v1730, %v1865
  %v2021 = vadd.f32 %v1731, %v1868
  %v2022 = vadd.f32 %v1732, %v1871
  %v2023 = vadd.f32 %v1733, %v1874
  %v2024 = vadd.f32 %v1734, %v1877
  %v2025 = vadd.f32 %v1735, %v1880
  %v2026 = vadd.f32 %v1736, %v1883
  %v2027 = vadd.f32 %v1737, %v1886
  %v2028 = vadd.f32 %v1738, %v1889
  %v2029 = vadd.f32 %v1739, %v1892
  %v2030 = vadd.f32 %v1740, %v1895
  %v2031 = vadd.f32 %v1741, %v1898
  %v2032 = vadd.f32 %v1742, %v1901
  %v2033 = vadd.f32 %v1743, %v1904
  %v2034 = vadd.f32 %v1744, %v1907
  %v2035 = vadd.f32 %v1745, %v1910
  %v2036 = vadd.f32 %v1746, %v1913
  %v2037 = vadd.f32 %v1747, %v1916
  %v2038 = vadd.f32 %v1748, %v1919
  %v2039 = vadd.f32 %v1749, %v1922
  %v2040 = vadd.f32 %v1750, %v1925
  %v2041 = vadd.f32 %v1751, %v1928
  %v2042 = vadd.f32 %v1752, %v1931
  %v2043 = vadd.f32 %v1753, %v1934
  %v2044 = vadd.f32 %v1754, %v1937
  %v2045 = vadd.f32 %v1755, %v1940
  %v2046 = vadd.f32 %v1756, %v1943
  %v2047 = vadd.f32 %v1757, %v1946
  %v2048 = vadd.f32 %v1758, %v1949
  %v2049 = vadd.f32 %v1759, %v1952
  %v2050 = vadd.f32 %v1760, %v1955
  %v2051 = vadd.f32 %v1761, %v1958
  %v2052 = vadd.f32 %v1762, %v1961
  %v2053 = vadd.f32 %v1763, %v1964
  %v2054 = vadd.f32 %v1764, %v1967
  %v2055 = vadd.f32 %v1765, %v1970
  %v2056 = vadd.f32 %v1766, %v1973
  %v2057 = vadd.f32 %v1767, %v1976
  %v2058 = vadd.f32 %v1768, %v1979
  %v2059 = vadd.f32 %v1769, %v1982
  %v2060 = vadd.f32 %v1770, %v1985
  %v2061 = vadd.f32 %v1771, %v1988
  %v2062 = vadd.f32 %v1772, %v1991
  %v2063 = vadd.f32 %v1773, %v1994
  %v2064 = vadd.f32 %v1774, %v1997
  %v2065 = vadd.f32 %v1775, %v2000
  %v2066 = vld [vmem:[#allocation2 + $0x2] sm:$0xff]
  %v2067 = vld [vmem:[#allocation2 + $0xa] sm:$0xff]
  %v2068 = vld [vmem:[#allocation2 + $0x1a] sm:$0xff]
  %v2069 = vld [vmem:[#allocation2 + $0x22] sm:$0xff]
  %v2070 = vld [vmem:[#allocation2 + $0x32] sm:$0xff]
  %v2071 = vld [vmem:[#allocation2 + $0x3a] sm:$0xff]
  %v2072 = vld [vmem:[#allocation2 + $0x4a] sm:$0xff]
  %v2073 = vld [vmem:[#allocation2 + $0x52] sm:$0xff]
  %v2074 = vld [vmem:[#allocation2 + $0x62] sm:$0xff]
  %v2075 = vld [vmem:[#allocation2 + $0x6a] sm:$0xff]
  %v2076 = vld [vmem:[#allocation2 + $0x7a] sm:$0xff]
  %v2077 = vld [vmem:[#allocation2 + $0x82] sm:$0xff]
  %v2078 = vld [vmem:[#allocation2 + $0x92] sm:$0xff]
  %v2079 = vld [vmem:[#allocation2 + $0x9a] sm:$0xff]
  %v2080 = vld [vmem:[#allocation2 + $0xaa] sm:$0xff]
  %v2081 = vld [vmem:[#allocation2 + $0xb2] sm:$0xff]
  %v2082 = vld [vmem:[#allocation2 + $0xc2] sm:$0xff]
  %v2083 = vld [vmem:[#allocation2 + $0xca] sm:$0xff]
  %v2084 = vld [vmem:[#allocation2 + $0xda] sm:$0xff]
  %v2085 = vld [vmem:[#allocation2 + $0xe2] sm:$0xff]
  %v2086 = vld [vmem:[#allocation2 + $0xf2] sm:$0xff]
  %v2087 = vld [vmem:[#allocation2 + $0xfa] sm:$0xff]
  %v2088 = vld [vmem:[#allocation2 + $0x10a] sm:$0xff]
  %v2089 = vld [vmem:[#allocation2 + $0x112] sm:$0xff]
  %v2090 = vld [vmem:[#allocation2 + $0x122] sm:$0xff]
  %v2091 = vld [vmem:[#allocation2 + $0x12a] sm:$0xff]
  %v2092 = vld [vmem:[#allocation2 + $0x13a] sm:$0xff]
  %v2093 = vld [vmem:[#allocation2 + $0x142] sm:$0xff]
  %v2094 = vld [vmem:[#allocation2 + $0x152] sm:$0xff]
  %v2095 = vld [vmem:[#allocation2 + $0x15a] sm:$0xff]
  %v2096 = vld [vmem:[#allocation2 + $0x16a] sm:$0xff]
  %v2097 = vld [vmem:[#allocation2 + $0x172] sm:$0xff]
  %v2098 = vld [vmem:[#allocation2 + $0x182] sm:$0xff]
  %v2099 = vld [vmem:[#allocation2 + $0x18a] sm:$0xff]
  %v2100 = vld [vmem:[#allocation2 + $0x19a] sm:$0xff]
  %v2101 = vld [vmem:[#allocation2 + $0x1a2] sm:$0xff]
  %v2102 = vld [vmem:[#allocation2 + $0x1b2] sm:$0xff]
  %v2103 = vld [vmem:[#allocation2 + $0x1ba] sm:$0xff]
  %v2104 = vld [vmem:[#allocation2 + $0x1ca] sm:$0xff]
  %v2105 = vld [vmem:[#allocation2 + $0x1d2] sm:$0xff]
  %v2106 = vld [vmem:[#allocation2 + $0x1e2] sm:$0xff]
  %v2107 = vld [vmem:[#allocation2 + $0x1ea] sm:$0xff]
  %v2108 = vld [vmem:[#allocation2 + $0x1fa] sm:$0xff]
  %v2109 = vld [vmem:[#allocation2 + $0x202] sm:$0xff]
  %v2110 = vld [vmem:[#allocation2 + $0x212] sm:$0xff]
  %v2111 = vld [vmem:[#allocation2 + $0x21a] sm:$0xff]
  %v2112 = vld [vmem:[#allocation2 + $0x22a] sm:$0xff]
  %v2113 = vld [vmem:[#allocation2 + $0x232] sm:$0xff]
  %v2114 = vld [vmem:[#allocation2 + $0x242] sm:$0xff]
  %v2115 = vld [vmem:[#allocation2 + $0x24a] sm:$0xff]
  %v2116 = vld [vmem:[#allocation2 + $0x25a] sm:$0xff]
  %v2117 = vld [vmem:[#allocation2 + $0x262] sm:$0xff]
  %v2118 = vld [vmem:[#allocation2 + $0x272] sm:$0xff]
  %v2119 = vld [vmem:[#allocation2 + $0x27a] sm:$0xff]
  %v2120 = vld [vmem:[#allocation2 + $0x28a] sm:$0xff]
  %v2121 = vld [vmem:[#allocation2 + $0x292] sm:$0xff]
  %v2122 = vld [vmem:[#allocation2 + $0x2a2] sm:$0xff]
  %v2123 = vld [vmem:[#allocation2 + $0x2aa] sm:$0xff]
  %v2124 = vld [vmem:[#allocation2 + $0x2ba] sm:$0xff]
  %v2125 = vld [vmem:[#allocation2 + $0x2c2] sm:$0xff]
  %v2126 = vld [vmem:[#allocation2 + $0x2d2] sm:$0xff]
  %v2127 = vld [vmem:[#allocation2 + $0x2da] sm:$0xff]
  %v2128 = vld [vmem:[#allocation2 + $0x2ea] sm:$0xff]
  %v2129 = vld [vmem:[#allocation2 + $0x2f2] sm:$0xff]
  %v2130 = vld [vmem:[#allocation2 + $0x302] sm:$0xff]
  %v2131 = vld [vmem:[#allocation2 + $0x30a] sm:$0xff]
  %v2132 = vld [vmem:[#allocation2 + $0x31a] sm:$0xff]
  %v2133 = vld [vmem:[#allocation2 + $0x322] sm:$0xff]
  %v2134 = vld [vmem:[#allocation2 + $0x332] sm:$0xff]
  %v2135 = vld [vmem:[#allocation2 + $0x33a] sm:$0xff]
  %v2136 = vld [vmem:[#allocation2 + $0x34a] sm:$0xff]
  %v2137 = vld [vmem:[#allocation2 + $0x352] sm:$0xff]
  %s2138 = scalar_lea.vmem %s1, 768
  %v2139 = vld [vmem:[%s2138] sm:$0xff]
  %v2140 = vld [vmem:[%s2138 + $0x8] sm:$0xff]
  %v2141 = vld [vmem:[%s2138 + $0x10] sm:$0xff]
  %v2142 = vld [vmem:[%s2138 + $0x18] sm:$0xff]
  %v2143 = vld [vmem:[%s2138 + $0x20] sm:$0xff]
  %v2144 = vld [vmem:[%s2138 + $0x28] sm:$0xff]
  %v2145 = vld [vmem:[%s2138 + $0x30] sm:$0xff]
  %v2146 = vld [vmem:[%s2138 + $0x38] sm:$0xff]
  %v2147 = vld [vmem:[%s2138 + $0x40] sm:$0xff]
  %v2148 = vld [vmem:[%s2138 + $0x48] sm:$0xff]
  %v2149 = vld [vmem:[%s2138 + $0x50] sm:$0xff]
  %v2150 = vld [vmem:[%s2138 + $0x58] sm:$0xff]
  %v2151 = vld [vmem:[%s2138 + $0x60] sm:$0xff]
  %v2152 = vld [vmem:[%s2138 + $0x68] sm:$0xff]
  %v2153 = vld [vmem:[%s2138 + $0x70] sm:$0xff]
  %v2154 = vld [vmem:[%s2138 + $0x78] sm:$0xff]
  %2155 = vmatpush.msra.mxu0 %v2154
  %2156 = vmatpush.msra.mxu0 %v2153
  %2157 = vmatpush.msra.mxu0 %v2152
  %2158 = vmatpush.msra.mxu0 %v2151
  %2159 = vmatpush.msra.mxu0 %v2150
  %2160 = vmatpush.msra.mxu0 %v2149
  %2161 = vmatpush.msra.mxu0 %v2148
  %2162 = vmatpush.msra.mxu0 %v2147
  %2163 = vmatpush.msra.mxu0 %v2146
  %2164 = vmatpush.msra.mxu0 %v2145
  %2165 = vmatpush.msra.mxu0 %v2144
  %2166 = vmatpush.msra.mxu0 %v2143
  %2167 = vmatpush.msra.mxu0 %v2142
  %2168 = vmatpush.msra.mxu0 %v2141
  %2169 = vmatpush.msra.mxu0 %v2140
  %2170 = vmatpush.msra.mxu0 %v2139
  %2171 = vmatmul.f32.gmra.mxu0 %v2066
  %v2172 = vpop.f32.mrf.mxu0
  %v2173 = vadd.f32 0.0, %v2172
  %2174 = vmatmul.f32.gmra.mxu0 %v2067
  %v2175 = vpop.f32.mrf.mxu0
  %v2176 = vadd.f32 0.0, %v2175
  %2177 = vmatmul.f32.gmra.mxu0 %v2068
  %v2178 = vpop.f32.mrf.mxu0
  %v2179 = vadd.f32 0.0, %v2178
  %2180 = vmatmul.f32.gmra.mxu0 %v2069
  %v2181 = vpop.f32.mrf.mxu0
  %v2182 = vadd.f32 0.0, %v2181
  %2183 = vmatmul.f32.gmra.mxu0 %v2070
  %v2184 = vpop.f32.mrf.mxu0
  %v2185 = vadd.f32 0.0, %v2184
  %2186 = vmatmul.f32.gmra.mxu0 %v2071
  %v2187 = vpop.f32.mrf.mxu0
  %v2188 = vadd.f32 0.0, %v2187
  %2189 = vmatmul.f32.gmra.mxu0 %v2072
  %v2190 = vpop.f32.mrf.mxu0
  %v2191 = vadd.f32 0.0, %v2190
  %2192 = vmatmul.f32.gmra.mxu0 %v2073
  %v2193 = vpop.f32.mrf.mxu0
  %v2194 = vadd.f32 0.0, %v2193
  %2195 = vmatmul.f32.gmra.mxu0 %v2074
  %v2196 = vpop.f32.mrf.mxu0
  %v2197 = vadd.f32 0.0, %v2196
  %2198 = vmatmul.f32.gmra.mxu0 %v2075
  %v2199 = vpop.f32.mrf.mxu0
  %v2200 = vadd.f32 0.0, %v2199
  %2201 = vmatmul.f32.gmra.mxu0 %v2076
  %v2202 = vpop.f32.mrf.mxu0
  %v2203 = vadd.f32 0.0, %v2202
  %2204 = vmatmul.f32.gmra.mxu0 %v2077
  %v2205 = vpop.f32.mrf.mxu0
  %v2206 = vadd.f32 0.0, %v2205
  %2207 = vmatmul.f32.gmra.mxu0 %v2078
  %v2208 = vpop.f32.mrf.mxu0
  %v2209 = vadd.f32 0.0, %v2208
  %2210 = vmatmul.f32.gmra.mxu0 %v2079
  %v2211 = vpop.f32.mrf.mxu0
  %v2212 = vadd.f32 0.0, %v2211
  %2213 = vmatmul.f32.gmra.mxu0 %v2080
  %v2214 = vpop.f32.mrf.mxu0
  %v2215 = vadd.f32 0.0, %v2214
  %2216 = vmatmul.f32.gmra.mxu0 %v2081
  %v2217 = vpop.f32.mrf.mxu0
  %v2218 = vadd.f32 0.0, %v2217
  %2219 = vmatmul.f32.gmra.mxu0 %v2082
  %v2220 = vpop.f32.mrf.mxu0
  %v2221 = vadd.f32 0.0, %v2220
  %2222 = vmatmul.f32.gmra.mxu0 %v2083
  %v2223 = vpop.f32.mrf.mxu0
  %v2224 = vadd.f32 0.0, %v2223
  %2225 = vmatmul.f32.gmra.mxu0 %v2084
  %v2226 = vpop.f32.mrf.mxu0
  %v2227 = vadd.f32 0.0, %v2226
  %2228 = vmatmul.f32.gmra.mxu0 %v2085
  %v2229 = vpop.f32.mrf.mxu0
  %v2230 = vadd.f32 0.0, %v2229
  %2231 = vmatmul.f32.gmra.mxu0 %v2086
  %v2232 = vpop.f32.mrf.mxu0
  %v2233 = vadd.f32 0.0, %v2232
  %2234 = vmatmul.f32.gmra.mxu0 %v2087
  %v2235 = vpop.f32.mrf.mxu0
  %v2236 = vadd.f32 0.0, %v2235
  %2237 = vmatmul.f32.gmra.mxu0 %v2088
  %v2238 = vpop.f32.mrf.mxu0
  %v2239 = vadd.f32 0.0, %v2238
  %2240 = vmatmul.f32.gmra.mxu0 %v2089
  %v2241 = vpop.f32.mrf.mxu0
  %v2242 = vadd.f32 0.0, %v2241
  %2243 = vmatmul.f32.gmra.mxu0 %v2090
  %v2244 = vpop.f32.mrf.mxu0
  %v2245 = vadd.f32 0.0, %v2244
  %2246 = vmatmul.f32.gmra.mxu0 %v2091
  %v2247 = vpop.f32.mrf.mxu0
  %v2248 = vadd.f32 0.0, %v2247
  %2249 = vmatmul.f32.gmra.mxu0 %v2092
  %v2250 = vpop.f32.mrf.mxu0
  %v2251 = vadd.f32 0.0, %v2250
  %2252 = vmatmul.f32.gmra.mxu0 %v2093
  %v2253 = vpop.f32.mrf.mxu0
  %v2254 = vadd.f32 0.0, %v2253
  %2255 = vmatmul.f32.gmra.mxu0 %v2094
  %v2256 = vpop.f32.mrf.mxu0
  %v2257 = vadd.f32 0.0, %v2256
  %2258 = vmatmul.f32.gmra.mxu0 %v2095
  %v2259 = vpop.f32.mrf.mxu0
  %v2260 = vadd.f32 0.0, %v2259
  %2261 = vmatmul.f32.gmra.mxu0 %v2096
  %v2262 = vpop.f32.mrf.mxu0
  %v2263 = vadd.f32 0.0, %v2262
  %2264 = vmatmul.f32.gmra.mxu0 %v2097
  %v2265 = vpop.f32.mrf.mxu0
  %v2266 = vadd.f32 0.0, %v2265
  %2267 = vmatmul.f32.gmra.mxu0 %v2102
  %v2268 = vpop.f32.mrf.mxu0
  %v2269 = vadd.f32 0.0, %v2268
  %2270 = vmatmul.f32.gmra.mxu0 %v2103
  %v2271 = vpop.f32.mrf.mxu0
  %v2272 = vadd.f32 0.0, %v2271
  %2273 = vmatmul.f32.gmra.mxu0 %v2104
  %v2274 = vpop.f32.mrf.mxu0
  %v2275 = vadd.f32 0.0, %v2274
  %2276 = vmatmul.f32.gmra.mxu0 %v2105
  %v2277 = vpop.f32.mrf.mxu0
  %v2278 = vadd.f32 0.0, %v2277
  %2279 = vmatmul.f32.gmra.mxu0 %v2106
  %v2280 = vpop.f32.mrf.mxu0
  %v2281 = vadd.f32 0.0, %v2280
  %2282 = vmatmul.f32.gmra.mxu0 %v2107
  %v2283 = vpop.f32.mrf.mxu0
  %v2284 = vadd.f32 0.0, %v2283
  %2285 = vmatmul.f32.gmra.mxu0 %v2108
  %v2286 = vpop.f32.mrf.mxu0
  %v2287 = vadd.f32 0.0, %v2286
  %2288 = vmatmul.f32.gmra.mxu0 %v2109
  %v2289 = vpop.f32.mrf.mxu0
  %v2290 = vadd.f32 0.0, %v2289
  %2291 = vmatmul.f32.gmra.mxu0 %v2110
  %v2292 = vpop.f32.mrf.mxu0
  %v2293 = vadd.f32 0.0, %v2292
  %2294 = vmatmul.f32.gmra.mxu0 %v2111
  %v2295 = vpop.f32.mrf.mxu0
  %v2296 = vadd.f32 0.0, %v2295
  %2297 = vmatmul.f32.gmra.mxu0 %v2112
  %v2298 = vpop.f32.mrf.mxu0
  %v2299 = vadd.f32 0.0, %v2298
  %2300 = vmatmul.f32.gmra.mxu0 %v2113
  %v2301 = vpop.f32.mrf.mxu0
  %v2302 = vadd.f32 0.0, %v2301
  %2303 = vmatmul.f32.gmra.mxu0 %v2114
  %v2304 = vpop.f32.mrf.mxu0
  %v2305 = vadd.f32 0.0, %v2304
  %2306 = vmatmul.f32.gmra.mxu0 %v2115
  %v2307 = vpop.f32.mrf.mxu0
  %v2308 = vadd.f32 0.0, %v2307
  %2309 = vmatmul.f32.gmra.mxu0 %v2116
  %v2310 = vpop.f32.mrf.mxu0
  %v2311 = vadd.f32 0.0, %v2310
  %2312 = vmatmul.f32.gmra.mxu0 %v2117
  %v2313 = vpop.f32.mrf.mxu0
  %v2314 = vadd.f32 0.0, %v2313
  %2315 = vmatmul.f32.gmra.mxu0 %v2118
  %v2316 = vpop.f32.mrf.mxu0
  %v2317 = vadd.f32 0.0, %v2316
  %2318 = vmatmul.f32.gmra.mxu0 %v2119
  %v2319 = vpop.f32.mrf.mxu0
  %v2320 = vadd.f32 0.0, %v2319
  %2321 = vmatmul.f32.gmra.mxu0 %v2120
  %v2322 = vpop.f32.mrf.mxu0
  %v2323 = vadd.f32 0.0, %v2322
  %2324 = vmatmul.f32.gmra.mxu0 %v2121
  %v2325 = vpop.f32.mrf.mxu0
  %v2326 = vadd.f32 0.0, %v2325
  %2327 = vmatmul.f32.gmra.mxu0 %v2122
  %v2328 = vpop.f32.mrf.mxu0
  %v2329 = vadd.f32 0.0, %v2328
  %2330 = vmatmul.f32.gmra.mxu0 %v2123
  %v2331 = vpop.f32.mrf.mxu0
  %v2332 = vadd.f32 0.0, %v2331
  %2333 = vmatmul.f32.gmra.mxu0 %v2124
  %v2334 = vpop.f32.mrf.mxu0
  %v2335 = vadd.f32 0.0, %v2334
  %2336 = vmatmul.f32.gmra.mxu0 %v2125
  %v2337 = vpop.f32.mrf.mxu0
  %v2338 = vadd.f32 0.0, %v2337
  %2339 = vmatmul.f32.gmra.mxu0 %v2126
  %v2340 = vpop.f32.mrf.mxu0
  %v2341 = vadd.f32 0.0, %v2340
  %2342 = vmatmul.f32.gmra.mxu0 %v2127
  %v2343 = vpop.f32.mrf.mxu0
  %v2344 = vadd.f32 0.0, %v2343
  %2345 = vmatmul.f32.gmra.mxu0 %v2128
  %v2346 = vpop.f32.mrf.mxu0
  %v2347 = vadd.f32 0.0, %v2346
  %2348 = vmatmul.f32.gmra.mxu0 %v2129
  %v2349 = vpop.f32.mrf.mxu0
  %v2350 = vadd.f32 0.0, %v2349
  %2351 = vmatmul.f32.gmra.mxu0 %v2130
  %v2352 = vpop.f32.mrf.mxu0
  %v2353 = vadd.f32 0.0, %v2352
  %2354 = vmatmul.f32.gmra.mxu0 %v2131
  %v2355 = vpop.f32.mrf.mxu0
  %v2356 = vadd.f32 0.0, %v2355
  %2357 = vmatmul.f32.gmra.mxu0 %v2132
  %v2358 = vpop.f32.mrf.mxu0
  %v2359 = vadd.f32 0.0, %v2358
  %2360 = vmatmul.f32.gmra.mxu0 %v2133
  %v2361 = vpop.f32.mrf.mxu0
  %v2362 = vadd.f32 0.0, %v2361
  %2363 = vdwg.mxu0
  %v2364 = vadd.f32 %v2002, %v2173
  %v2365 = vadd.f32 %v2003, %v2176
  %v2366 = vadd.f32 %v2004, %v2179
  %v2367 = vadd.f32 %v2005, %v2182
  %v2368 = vadd.f32 %v2006, %v2185
  %v2369 = vadd.f32 %v2007, %v2188
  %v2370 = vadd.f32 %v2008, %v2191
  %v2371 = vadd.f32 %v2009, %v2194
  %v2372 = vadd.f32 %v2010, %v2197
  %v2373 = vadd.f32 %v2011, %v2200
  %v2374 = vadd.f32 %v2012, %v2203
  %v2375 = vadd.f32 %v2013, %v2206
  %v2376 = vadd.f32 %v2014, %v2209
  %v2377 = vadd.f32 %v2015, %v2212
  %v2378 = vadd.f32 %v2016, %v2215
  %v2379 = vadd.f32 %v2017, %v2218
  %v2380 = vadd.f32 %v2018, %v2221
  %v2381 = vadd.f32 %v2019, %v2224
  %v2382 = vadd.f32 %v2020, %v2227
  %v2383 = vadd.f32 %v2021, %v2230
  %v2384 = vadd.f32 %v2022, %v2233
  %v2385 = vadd.f32 %v2023, %v2236
  %v2386 = vadd.f32 %v2024, %v2239
  %v2387 = vadd.f32 %v2025, %v2242
  %v2388 = vadd.f32 %v2026, %v2245
  %v2389 = vadd.f32 %v2027, %v2248
  %v2390 = vadd.f32 %v2028, %v2251
  %v2391 = vadd.f32 %v2029, %v2254
  %v2392 = vadd.f32 %v2030, %v2257
  %v2393 = vadd.f32 %v2031, %v2260
  %v2394 = vadd.f32 %v2032, %v2263
  %v2395 = vadd.f32 %v2033, %v2266
  %v2396 = vadd.f32 %v2034, %v2269
  %v2397 = vadd.f32 %v2035, %v2272
  %v2398 = vadd.f32 %v2036, %v2275
  %v2399 = vadd.f32 %v2037, %v2278
  %v2400 = vadd.f32 %v2038, %v2281
  %v2401 = vadd.f32 %v2039, %v2284
  %v2402 = vadd.f32 %v2040, %v2287
  %v2403 = vadd.f32 %v2041, %v2290
  %v2404 = vadd.f32 %v2042, %v2293
  %v2405 = vadd.f32 %v2043, %v2296
  %v2406 = vadd.f32 %v2044, %v2299
  %v2407 = vadd.f32 %v2045, %v2302
  %v2408 = vadd.f32 %v2046, %v2305
  %v2409 = vadd.f32 %v2047, %v2308
  %v2410 = vadd.f32 %v2048, %v2311
  %v2411 = vadd.f32 %v2049, %v2314
  %v2412 = vadd.f32 %v2050, %v2317
  %v2413 = vadd.f32 %v2051, %v2320
  %v2414 = vadd.f32 %v2052, %v2323
  %v2415 = vadd.f32 %v2053, %v2326
  %v2416 = vadd.f32 %v2054, %v2329
  %v2417 = vadd.f32 %v2055, %v2332
  %v2418 = vadd.f32 %v2056, %v2335
  %v2419 = vadd.f32 %v2057, %v2338
  %v2420 = vadd.f32 %v2058, %v2341
  %v2421 = vadd.f32 %v2059, %v2344
  %v2422 = vadd.f32 %v2060, %v2347
  %v2423 = vadd.f32 %v2061, %v2350
  %v2424 = vadd.f32 %v2062, %v2353
  %v2425 = vadd.f32 %v2063, %v2356
  %v2426 = vadd.f32 %v2064, %v2359
  %v2427 = vadd.f32 %v2065, %v2362
  %s2428 = scalar_lea.vmem %s1, 896
  %v2429 = vld [vmem:[%s2428] sm:$0xff]
  %v2430 = vld [vmem:[%s2428 + $0x8] sm:$0xff]
  %v2431 = vld [vmem:[%s2428 + $0x10] sm:$0xff]
  %v2432 = vld [vmem:[%s2428 + $0x18] sm:$0xff]
  %v2433 = vld [vmem:[%s2428 + $0x20] sm:$0xff]
  %v2434 = vld [vmem:[%s2428 + $0x28] sm:$0xff]
  %v2435 = vld [vmem:[%s2428 + $0x30] sm:$0xff]
  %v2436 = vld [vmem:[%s2428 + $0x38] sm:$0xff]
  %v2437 = vld [vmem:[%s2428 + $0x40] sm:$0xff]
  %v2438 = vld [vmem:[%s2428 + $0x48] sm:$0xff]
  %v2439 = vld [vmem:[%s2428 + $0x50] sm:$0xff]
  %v2440 = vld [vmem:[%s2428 + $0x58] sm:$0xff]
  %v2441 = vld [vmem:[%s2428 + $0x60] sm:$0xff]
  %v2442 = vld [vmem:[%s2428 + $0x68] sm:$0xff]
  %v2443 = vld [vmem:[%s2428 + $0x70] sm:$0xff]
  %v2444 = vld [vmem:[%s2428 + $0x78] sm:$0xff]
  %2445 = vmatpush.msra.mxu0 %v2444
  %2446 = vmatpush.msra.mxu0 %v2443
  %2447 = vmatpush.msra.mxu0 %v2442
  %2448 = vmatpush.msra.mxu0 %v2441
  %2449 = vmatpush.msra.mxu0 %v2440
  %2450 = vmatpush.msra.mxu0 %v2439
  %2451 = vmatpush.msra.mxu0 %v2438
  %2452 = vmatpush.msra.mxu0 %v2437
  %2453 = vmatpush.msra.mxu0 %v2436
  %2454 = vmatpush.msra.mxu0 %v2435
  %2455 = vmatpush.msra.mxu0 %v2434
  %2456 = vmatpush.msra.mxu0 %v2433
  %2457 = vmatpush.msra.mxu0 %v2432
  %2458 = vmatpush.msra.mxu0 %v2431
  %2459 = vmatpush.msra.mxu0 %v2430
  %2460 = vmatpush.msra.mxu0 %v2429
  %2461 = vmatmul.f32.gmra.mxu0 %v2068
  %v2462 = vpop.f32.mrf.mxu0
  %v2463 = vadd.f32 0.0, %v2462
  %2464 = vmatmul.f32.gmra.mxu0 %v2069
  %v2465 = vpop.f32.mrf.mxu0
  %v2466 = vadd.f32 0.0, %v2465
  %2467 = vmatmul.f32.gmra.mxu0 %v2070
  %v2468 = vpop.f32.mrf.mxu0
  %v2469 = vadd.f32 0.0, %v2468
  %2470 = vmatmul.f32.gmra.mxu0 %v2071
  %v2471 = vpop.f32.mrf.mxu0
  %v2472 = vadd.f32 0.0, %v2471
  %2473 = vmatmul.f32.gmra.mxu0 %v2072
  %v2474 = vpop.f32.mrf.mxu0
  %v2475 = vadd.f32 0.0, %v2474
  %2476 = vmatmul.f32.gmra.mxu0 %v2073
  %v2477 = vpop.f32.mrf.mxu0
  %v2478 = vadd.f32 0.0, %v2477
  %2479 = vmatmul.f32.gmra.mxu0 %v2074
  %v2480 = vpop.f32.mrf.mxu0
  %v2481 = vadd.f32 0.0, %v2480
  %2482 = vmatmul.f32.gmra.mxu0 %v2075
  %v2483 = vpop.f32.mrf.mxu0
  %v2484 = vadd.f32 0.0, %v2483
  %2485 = vmatmul.f32.gmra.mxu0 %v2076
  %v2486 = vpop.f32.mrf.mxu0
  %v2487 = vadd.f32 0.0, %v2486
  %2488 = vmatmul.f32.gmra.mxu0 %v2077
  %v2489 = vpop.f32.mrf.mxu0
  %v2490 = vadd.f32 0.0, %v2489
  %2491 = vmatmul.f32.gmra.mxu0 %v2078
  %v2492 = vpop.f32.mrf.mxu0
  %v2493 = vadd.f32 0.0, %v2492
  %2494 = vmatmul.f32.gmra.mxu0 %v2079
  %v2495 = vpop.f32.mrf.mxu0
  %v2496 = vadd.f32 0.0, %v2495
  %2497 = vmatmul.f32.gmra.mxu0 %v2080
  %v2498 = vpop.f32.mrf.mxu0
  %v2499 = vadd.f32 0.0, %v2498
  %2500 = vmatmul.f32.gmra.mxu0 %v2081
  %v2501 = vpop.f32.mrf.mxu0
  %v2502 = vadd.f32 0.0, %v2501
  %2503 = vmatmul.f32.gmra.mxu0 %v2082
  %v2504 = vpop.f32.mrf.mxu0
  %v2505 = vadd.f32 0.0, %v2504
  %2506 = vmatmul.f32.gmra.mxu0 %v2083
  %v2507 = vpop.f32.mrf.mxu0
  %v2508 = vadd.f32 0.0, %v2507
  %2509 = vmatmul.f32.gmra.mxu0 %v2084
  %v2510 = vpop.f32.mrf.mxu0
  %v2511 = vadd.f32 0.0, %v2510
  %2512 = vmatmul.f32.gmra.mxu0 %v2085
  %v2513 = vpop.f32.mrf.mxu0
  %v2514 = vadd.f32 0.0, %v2513
  %2515 = vmatmul.f32.gmra.mxu0 %v2086
  %v2516 = vpop.f32.mrf.mxu0
  %v2517 = vadd.f32 0.0, %v2516
  %2518 = vmatmul.f32.gmra.mxu0 %v2087
  %v2519 = vpop.f32.mrf.mxu0
  %v2520 = vadd.f32 0.0, %v2519
  %2521 = vmatmul.f32.gmra.mxu0 %v2088
  %v2522 = vpop.f32.mrf.mxu0
  %v2523 = vadd.f32 0.0, %v2522
  %2524 = vmatmul.f32.gmra.mxu0 %v2089
  %v2525 = vpop.f32.mrf.mxu0
  %v2526 = vadd.f32 0.0, %v2525
  %2527 = vmatmul.f32.gmra.mxu0 %v2090
  %v2528 = vpop.f32.mrf.mxu0
  %v2529 = vadd.f32 0.0, %v2528
  %2530 = vmatmul.f32.gmra.mxu0 %v2091
  %v2531 = vpop.f32.mrf.mxu0
  %v2532 = vadd.f32 0.0, %v2531
  %2533 = vmatmul.f32.gmra.mxu0 %v2092
  %v2534 = vpop.f32.mrf.mxu0
  %v2535 = vadd.f32 0.0, %v2534
  %2536 = vmatmul.f32.gmra.mxu0 %v2093
  %v2537 = vpop.f32.mrf.mxu0
  %v2538 = vadd.f32 0.0, %v2537
  %2539 = vmatmul.f32.gmra.mxu0 %v2094
  %v2540 = vpop.f32.mrf.mxu0
  %v2541 = vadd.f32 0.0, %v2540
  %2542 = vmatmul.f32.gmra.mxu0 %v2095
  %v2543 = vpop.f32.mrf.mxu0
  %v2544 = vadd.f32 0.0, %v2543
  %2545 = vmatmul.f32.gmra.mxu0 %v2096
  %v2546 = vpop.f32.mrf.mxu0
  %v2547 = vadd.f32 0.0, %v2546
  %2548 = vmatmul.f32.gmra.mxu0 %v2097
  %v2549 = vpop.f32.mrf.mxu0
  %v2550 = vadd.f32 0.0, %v2549
  %2551 = vmatmul.f32.gmra.mxu0 %v2098
  %v2552 = vpop.f32.mrf.mxu0
  %v2553 = vadd.f32 0.0, %v2552
  %2554 = vmatmul.f32.gmra.mxu0 %v2099
  %v2555 = vpop.f32.mrf.mxu0
  %v2556 = vadd.f32 0.0, %v2555
  %2557 = vmatmul.f32.gmra.mxu0 %v2104
  %v2558 = vpop.f32.mrf.mxu0
  %v2559 = vadd.f32 0.0, %v2558
  %2560 = vmatmul.f32.gmra.mxu0 %v2105
  %v2561 = vpop.f32.mrf.mxu0
  %v2562 = vadd.f32 0.0, %v2561
  %2563 = vmatmul.f32.gmra.mxu0 %v2106
  %v2564 = vpop.f32.mrf.mxu0
  %v2565 = vadd.f32 0.0, %v2564
  %2566 = vmatmul.f32.gmra.mxu0 %v2107
  %v2567 = vpop.f32.mrf.mxu0
  %v2568 = vadd.f32 0.0, %v2567
  %2569 = vmatmul.f32.gmra.mxu0 %v2108
  %v2570 = vpop.f32.mrf.mxu0
  %v2571 = vadd.f32 0.0, %v2570
  %2572 = vmatmul.f32.gmra.mxu0 %v2109
  %v2573 = vpop.f32.mrf.mxu0
  %v2574 = vadd.f32 0.0, %v2573
  %2575 = vmatmul.f32.gmra.mxu0 %v2110
  %v2576 = vpop.f32.mrf.mxu0
  %v2577 = vadd.f32 0.0, %v2576
  %2578 = vmatmul.f32.gmra.mxu0 %v2111
  %v2579 = vpop.f32.mrf.mxu0
  %v2580 = vadd.f32 0.0, %v2579
  %2581 = vmatmul.f32.gmra.mxu0 %v2112
  %v2582 = vpop.f32.mrf.mxu0
  %v2583 = vadd.f32 0.0, %v2582
  %2584 = vmatmul.f32.gmra.mxu0 %v2113
  %v2585 = vpop.f32.mrf.mxu0
  %v2586 = vadd.f32 0.0, %v2585
  %2587 = vmatmul.f32.gmra.mxu0 %v2114
  %v2588 = vpop.f32.mrf.mxu0
  %v2589 = vadd.f32 0.0, %v2588
  %2590 = vmatmul.f32.gmra.mxu0 %v2115
  %v2591 = vpop.f32.mrf.mxu0
  %v2592 = vadd.f32 0.0, %v2591
  %2593 = vmatmul.f32.gmra.mxu0 %v2116
  %v2594 = vpop.f32.mrf.mxu0
  %v2595 = vadd.f32 0.0, %v2594
  %2596 = vmatmul.f32.gmra.mxu0 %v2117
  %v2597 = vpop.f32.mrf.mxu0
  %v2598 = vadd.f32 0.0, %v2597
  %2599 = vmatmul.f32.gmra.mxu0 %v2118
  %v2600 = vpop.f32.mrf.mxu0
  %v2601 = vadd.f32 0.0, %v2600
  %2602 = vmatmul.f32.gmra.mxu0 %v2119
  %v2603 = vpop.f32.mrf.mxu0
  %v2604 = vadd.f32 0.0, %v2603
  %2605 = vmatmul.f32.gmra.mxu0 %v2120
  %v2606 = vpop.f32.mrf.mxu0
  %v2607 = vadd.f32 0.0, %v2606
  %2608 = vmatmul.f32.gmra.mxu0 %v2121
  %v2609 = vpop.f32.mrf.mxu0
  %v2610 = vadd.f32 0.0, %v2609
  %2611 = vmatmul.f32.gmra.mxu0 %v2122
  %v2612 = vpop.f32.mrf.mxu0
  %v2613 = vadd.f32 0.0, %v2612
  %2614 = vmatmul.f32.gmra.mxu0 %v2123
  %v2615 = vpop.f32.mrf.mxu0
  %v2616 = vadd.f32 0.0, %v2615
  %2617 = vmatmul.f32.gmra.mxu0 %v2124
  %v2618 = vpop.f32.mrf.mxu0
  %v2619 = vadd.f32 0.0, %v2618
  %2620 = vmatmul.f32.gmra.mxu0 %v2125
  %v2621 = vpop.f32.mrf.mxu0
  %v2622 = vadd.f32 0.0, %v2621
  %2623 = vmatmul.f32.gmra.mxu0 %v2126
  %v2624 = vpop.f32.mrf.mxu0
  %v2625 = vadd.f32 0.0, %v2624
  %2626 = vmatmul.f32.gmra.mxu0 %v2127
  %v2627 = vpop.f32.mrf.mxu0
  %v2628 = vadd.f32 0.0, %v2627
  %2629 = vmatmul.f32.gmra.mxu0 %v2128
  %v2630 = vpop.f32.mrf.mxu0
  %v2631 = vadd.f32 0.0, %v2630
  %2632 = vmatmul.f32.gmra.mxu0 %v2129
  %v2633 = vpop.f32.mrf.mxu0
  %v2634 = vadd.f32 0.0, %v2633
  %2635 = vmatmul.f32.gmra.mxu0 %v2130
  %v2636 = vpop.f32.mrf.mxu0
  %v2637 = vadd.f32 0.0, %v2636
  %2638 = vmatmul.f32.gmra.mxu0 %v2131
  %v2639 = vpop.f32.mrf.mxu0
  %v2640 = vadd.f32 0.0, %v2639
  %2641 = vmatmul.f32.gmra.mxu0 %v2132
  %v2642 = vpop.f32.mrf.mxu0
  %v2643 = vadd.f32 0.0, %v2642
  %2644 = vmatmul.f32.gmra.mxu0 %v2133
  %v2645 = vpop.f32.mrf.mxu0
  %v2646 = vadd.f32 0.0, %v2645
  %2647 = vmatmul.f32.gmra.mxu0 %v2134
  %v2648 = vpop.f32.mrf.mxu0
  %v2649 = vadd.f32 0.0, %v2648
  %2650 = vmatmul.f32.gmra.mxu0 %v2135
  %v2651 = vpop.f32.mrf.mxu0
  %v2652 = vadd.f32 0.0, %v2651
  %2653 = vdwg.mxu0
  %v2654 = vadd.f32 %v2364, %v2463
  %v2655 = vadd.f32 %v2365, %v2466
  %v2656 = vadd.f32 %v2366, %v2469
  %v2657 = vadd.f32 %v2367, %v2472
  %v2658 = vadd.f32 %v2368, %v2475
  %v2659 = vadd.f32 %v2369, %v2478
  %v2660 = vadd.f32 %v2370, %v2481
  %v2661 = vadd.f32 %v2371, %v2484
  %v2662 = vadd.f32 %v2372, %v2487
  %v2663 = vadd.f32 %v2373, %v2490
  %v2664 = vadd.f32 %v2374, %v2493
  %v2665 = vadd.f32 %v2375, %v2496
  %v2666 = vadd.f32 %v2376, %v2499
  %v2667 = vadd.f32 %v2377, %v2502
  %v2668 = vadd.f32 %v2378, %v2505
  %v2669 = vadd.f32 %v2379, %v2508
  %v2670 = vadd.f32 %v2380, %v2511
  %v2671 = vadd.f32 %v2381, %v2514
  %v2672 = vadd.f32 %v2382, %v2517
  %v2673 = vadd.f32 %v2383, %v2520
  %v2674 = vadd.f32 %v2384, %v2523
  %v2675 = vadd.f32 %v2385, %v2526
  %v2676 = vadd.f32 %v2386, %v2529
  %v2677 = vadd.f32 %v2387, %v2532
  %v2678 = vadd.f32 %v2388, %v2535
  %v2679 = vadd.f32 %v2389, %v2538
  %v2680 = vadd.f32 %v2390, %v2541
  %v2681 = vadd.f32 %v2391, %v2544
  %v2682 = vadd.f32 %v2392, %v2547
  %v2683 = vadd.f32 %v2393, %v2550
  %v2684 = vadd.f32 %v2394, %v2553
  %v2685 = vadd.f32 %v2395, %v2556
  %v2686 = vadd.f32 %v2396, %v2559
  %v2687 = vadd.f32 %v2397, %v2562
  %v2688 = vadd.f32 %v2398, %v2565
  %v2689 = vadd.f32 %v2399, %v2568
  %v2690 = vadd.f32 %v2400, %v2571
  %v2691 = vadd.f32 %v2401, %v2574
  %v2692 = vadd.f32 %v2402, %v2577
  %v2693 = vadd.f32 %v2403, %v2580
  %v2694 = vadd.f32 %v2404, %v2583
  %v2695 = vadd.f32 %v2405, %v2586
  %v2696 = vadd.f32 %v2406, %v2589
  %v2697 = vadd.f32 %v2407, %v2592
  %v2698 = vadd.f32 %v2408, %v2595
  %v2699 = vadd.f32 %v2409, %v2598
  %v2700 = vadd.f32 %v2410, %v2601
  %v2701 = vadd.f32 %v2411, %v2604
  %v2702 = vadd.f32 %v2412, %v2607
  %v2703 = vadd.f32 %v2413, %v2610
  %v2704 = vadd.f32 %v2414, %v2613
  %v2705 = vadd.f32 %v2415, %v2616
  %v2706 = vadd.f32 %v2416, %v2619
  %v2707 = vadd.f32 %v2417, %v2622
  %v2708 = vadd.f32 %v2418, %v2625
  %v2709 = vadd.f32 %v2419, %v2628
  %v2710 = vadd.f32 %v2420, %v2631
  %v2711 = vadd.f32 %v2421, %v2634
  %v2712 = vadd.f32 %v2422, %v2637
  %v2713 = vadd.f32 %v2423, %v2640
  %v2714 = vadd.f32 %v2424, %v2643
  %v2715 = vadd.f32 %v2425, %v2646
  %v2716 = vadd.f32 %v2426, %v2649
  %v2717 = vadd.f32 %v2427, %v2652
  %s2718 = scalar_lea.vmem %s1, 1024
  %v2719 = vld [vmem:[%s2718] sm:$0xff]
  %v2720 = vld [vmem:[%s2718 + $0x8] sm:$0xff]
  %v2721 = vld [vmem:[%s2718 + $0x10] sm:$0xff]
  %v2722 = vld [vmem:[%s2718 + $0x18] sm:$0xff]
  %v2723 = vld [vmem:[%s2718 + $0x20] sm:$0xff]
  %v2724 = vld [vmem:[%s2718 + $0x28] sm:$0xff]
  %v2725 = vld [vmem:[%s2718 + $0x30] sm:$0xff]
  %v2726 = vld [vmem:[%s2718 + $0x38] sm:$0xff]
  %v2727 = vld [vmem:[%s2718 + $0x40] sm:$0xff]
  %v2728 = vld [vmem:[%s2718 + $0x48] sm:$0xff]
  %v2729 = vld [vmem:[%s2718 + $0x50] sm:$0xff]
  %v2730 = vld [vmem:[%s2718 + $0x58] sm:$0xff]
  %v2731 = vld [vmem:[%s2718 + $0x60] sm:$0xff]
  %v2732 = vld [vmem:[%s2718 + $0x68] sm:$0xff]
  %v2733 = vld [vmem:[%s2718 + $0x70] sm:$0xff]
  %v2734 = vld [vmem:[%s2718 + $0x78] sm:$0xff]
  %2735 = vmatpush.msra.mxu0 %v2734
  %2736 = vmatpush.msra.mxu0 %v2733
  %2737 = vmatpush.msra.mxu0 %v2732
  %2738 = vmatpush.msra.mxu0 %v2731
  %2739 = vmatpush.msra.mxu0 %v2730
  %2740 = vmatpush.msra.mxu0 %v2729
  %2741 = vmatpush.msra.mxu0 %v2728
  %2742 = vmatpush.msra.mxu0 %v2727
  %2743 = vmatpush.msra.mxu0 %v2726
  %2744 = vmatpush.msra.mxu0 %v2725
  %2745 = vmatpush.msra.mxu0 %v2724
  %2746 = vmatpush.msra.mxu0 %v2723
  %2747 = vmatpush.msra.mxu0 %v2722
  %2748 = vmatpush.msra.mxu0 %v2721
  %2749 = vmatpush.msra.mxu0 %v2720
  %2750 = vmatpush.msra.mxu0 %v2719
  %2751 = vmatmul.f32.gmra.mxu0 %v2070
  %v2752 = vpop.f32.mrf.mxu0
  %v2753 = vadd.f32 0.0, %v2752
  %2754 = vmatmul.f32.gmra.mxu0 %v2071
  %v2755 = vpop.f32.mrf.mxu0
  %v2756 = vadd.f32 0.0, %v2755
  %2757 = vmatmul.f32.gmra.mxu0 %v2072
  %v2758 = vpop.f32.mrf.mxu0
  %v2759 = vadd.f32 0.0, %v2758
  %2760 = vmatmul.f32.gmra.mxu0 %v2073
  %v2761 = vpop.f32.mrf.mxu0
  %v2762 = vadd.f32 0.0, %v2761
  %2763 = vmatmul.f32.gmra.mxu0 %v2074
  %v2764 = vpop.f32.mrf.mxu0
  %v2765 = vadd.f32 0.0, %v2764
  %2766 = vmatmul.f32.gmra.mxu0 %v2075
  %v2767 = vpop.f32.mrf.mxu0
  %v2768 = vadd.f32 0.0, %v2767
  %2769 = vmatmul.f32.gmra.mxu0 %v2076
  %v2770 = vpop.f32.mrf.mxu0
  %v2771 = vadd.f32 0.0, %v2770
  %2772 = vmatmul.f32.gmra.mxu0 %v2077
  %v2773 = vpop.f32.mrf.mxu0
  %v2774 = vadd.f32 0.0, %v2773
  %2775 = vmatmul.f32.gmra.mxu0 %v2078
  %v2776 = vpop.f32.mrf.mxu0
  %v2777 = vadd.f32 0.0, %v2776
  %2778 = vmatmul.f32.gmra.mxu0 %v2079
  %v2779 = vpop.f32.mrf.mxu0
  %v2780 = vadd.f32 0.0, %v2779
  %2781 = vmatmul.f32.gmra.mxu0 %v2080
  %v2782 = vpop.f32.mrf.mxu0
  %v2783 = vadd.f32 0.0, %v2782
  %2784 = vmatmul.f32.gmra.mxu0 %v2081
  %v2785 = vpop.f32.mrf.mxu0
  %v2786 = vadd.f32 0.0, %v2785
  %2787 = vmatmul.f32.gmra.mxu0 %v2082
  %v2788 = vpop.f32.mrf.mxu0
  %v2789 = vadd.f32 0.0, %v2788
  %2790 = vmatmul.f32.gmra.mxu0 %v2083
  %v2791 = vpop.f32.mrf.mxu0
  %v2792 = vadd.f32 0.0, %v2791
  %2793 = vmatmul.f32.gmra.mxu0 %v2084
  %v2794 = vpop.f32.mrf.mxu0
  %v2795 = vadd.f32 0.0, %v2794
  %2796 = vmatmul.f32.gmra.mxu0 %v2085
  %v2797 = vpop.f32.mrf.mxu0
  %v2798 = vadd.f32 0.0, %v2797
  %2799 = vmatmul.f32.gmra.mxu0 %v2086
  %v2800 = vpop.f32.mrf.mxu0
  %v2801 = vadd.f32 0.0, %v2800
  %2802 = vmatmul.f32.gmra.mxu0 %v2087
  %v2803 = vpop.f32.mrf.mxu0
  %v2804 = vadd.f32 0.0, %v2803
  %2805 = vmatmul.f32.gmra.mxu0 %v2088
  %v2806 = vpop.f32.mrf.mxu0
  %v2807 = vadd.f32 0.0, %v2806
  %2808 = vmatmul.f32.gmra.mxu0 %v2089
  %v2809 = vpop.f32.mrf.mxu0
  %v2810 = vadd.f32 0.0, %v2809
  %2811 = vmatmul.f32.gmra.mxu0 %v2090
  %v2812 = vpop.f32.mrf.mxu0
  %v2813 = vadd.f32 0.0, %v2812
  %2814 = vmatmul.f32.gmra.mxu0 %v2091
  %v2815 = vpop.f32.mrf.mxu0
  %v2816 = vadd.f32 0.0, %v2815
  %2817 = vmatmul.f32.gmra.mxu0 %v2092
  %v2818 = vpop.f32.mrf.mxu0
  %v2819 = vadd.f32 0.0, %v2818
  %2820 = vmatmul.f32.gmra.mxu0 %v2093
  %v2821 = vpop.f32.mrf.mxu0
  %v2822 = vadd.f32 0.0, %v2821
  %2823 = vmatmul.f32.gmra.mxu0 %v2094
  %v2824 = vpop.f32.mrf.mxu0
  %v2825 = vadd.f32 0.0, %v2824
  %2826 = vmatmul.f32.gmra.mxu0 %v2095
  %v2827 = vpop.f32.mrf.mxu0
  %v2828 = vadd.f32 0.0, %v2827
  %2829 = vmatmul.f32.gmra.mxu0 %v2096
  %v2830 = vpop.f32.mrf.mxu0
  %v2831 = vadd.f32 0.0, %v2830
  %2832 = vmatmul.f32.gmra.mxu0 %v2097
  %v2833 = vpop.f32.mrf.mxu0
  %v2834 = vadd.f32 0.0, %v2833
  %2835 = vmatmul.f32.gmra.mxu0 %v2098
  %v2836 = vpop.f32.mrf.mxu0
  %v2837 = vadd.f32 0.0, %v2836
  %2838 = vmatmul.f32.gmra.mxu0 %v2099
  %v2839 = vpop.f32.mrf.mxu0
  %v2840 = vadd.f32 0.0, %v2839
  %2841 = vmatmul.f32.gmra.mxu0 %v2100
  %v2842 = vpop.f32.mrf.mxu0
  %v2843 = vadd.f32 0.0, %v2842
  %2844 = vmatmul.f32.gmra.mxu0 %v2101
  %v2845 = vpop.f32.mrf.mxu0
  %v2846 = vadd.f32 0.0, %v2845
  %2847 = vmatmul.f32.gmra.mxu0 %v2106
  %v2848 = vpop.f32.mrf.mxu0
  %v2849 = vadd.f32 0.0, %v2848
  %2850 = vmatmul.f32.gmra.mxu0 %v2107
  %v2851 = vpop.f32.mrf.mxu0
  %v2852 = vadd.f32 0.0, %v2851
  %2853 = vmatmul.f32.gmra.mxu0 %v2108
  %v2854 = vpop.f32.mrf.mxu0
  %v2855 = vadd.f32 0.0, %v2854
  %2856 = vmatmul.f32.gmra.mxu0 %v2109
  %v2857 = vpop.f32.mrf.mxu0
  %v2858 = vadd.f32 0.0, %v2857
  %2859 = vmatmul.f32.gmra.mxu0 %v2110
  %v2860 = vpop.f32.mrf.mxu0
  %v2861 = vadd.f32 0.0, %v2860
  %2862 = vmatmul.f32.gmra.mxu0 %v2111
  %v2863 = vpop.f32.mrf.mxu0
  %v2864 = vadd.f32 0.0, %v2863
  %2865 = vmatmul.f32.gmra.mxu0 %v2112
  %v2866 = vpop.f32.mrf.mxu0
  %v2867 = vadd.f32 0.0, %v2866
  %2868 = vmatmul.f32.gmra.mxu0 %v2113
  %v2869 = vpop.f32.mrf.mxu0
  %v2870 = vadd.f32 0.0, %v2869
  %2871 = vmatmul.f32.gmra.mxu0 %v2114
  %v2872 = vpop.f32.mrf.mxu0
  %v2873 = vadd.f32 0.0, %v2872
  %2874 = vmatmul.f32.gmra.mxu0 %v2115
  %v2875 = vpop.f32.mrf.mxu0
  %v2876 = vadd.f32 0.0, %v2875
  %2877 = vmatmul.f32.gmra.mxu0 %v2116
  %v2878 = vpop.f32.mrf.mxu0
  %v2879 = vadd.f32 0.0, %v2878
  %2880 = vmatmul.f32.gmra.mxu0 %v2117
  %v2881 = vpop.f32.mrf.mxu0
  %v2882 = vadd.f32 0.0, %v2881
  %2883 = vmatmul.f32.gmra.mxu0 %v2118
  %v2884 = vpop.f32.mrf.mxu0
  %v2885 = vadd.f32 0.0, %v2884
  %2886 = vmatmul.f32.gmra.mxu0 %v2119
  %v2887 = vpop.f32.mrf.mxu0
  %v2888 = vadd.f32 0.0, %v2887
  %2889 = vmatmul.f32.gmra.mxu0 %v2120
  %v2890 = vpop.f32.mrf.mxu0
  %v2891 = vadd.f32 0.0, %v2890
  %2892 = vmatmul.f32.gmra.mxu0 %v2121
  %v2893 = vpop.f32.mrf.mxu0
  %v2894 = vadd.f32 0.0, %v2893
  %2895 = vmatmul.f32.gmra.mxu0 %v2122
  %v2896 = vpop.f32.mrf.mxu0
  %v2897 = vadd.f32 0.0, %v2896
  %2898 = vmatmul.f32.gmra.mxu0 %v2123
  %v2899 = vpop.f32.mrf.mxu0
  %v2900 = vadd.f32 0.0, %v2899
  %2901 = vmatmul.f32.gmra.mxu0 %v2124
  %v2902 = vpop.f32.mrf.mxu0
  %v2903 = vadd.f32 0.0, %v2902
  %2904 = vmatmul.f32.gmra.mxu0 %v2125
  %v2905 = vpop.f32.mrf.mxu0
  %v2906 = vadd.f32 0.0, %v2905
  %2907 = vmatmul.f32.gmra.mxu0 %v2126
  %v2908 = vpop.f32.mrf.mxu0
  %v2909 = vadd.f32 0.0, %v2908
  %2910 = vmatmul.f32.gmra.mxu0 %v2127
  %v2911 = vpop.f32.mrf.mxu0
  %v2912 = vadd.f32 0.0, %v2911
  %2913 = vmatmul.f32.gmra.mxu0 %v2128
  %v2914 = vpop.f32.mrf.mxu0
  %v2915 = vadd.f32 0.0, %v2914
  %2916 = vmatmul.f32.gmra.mxu0 %v2129
  %v2917 = vpop.f32.mrf.mxu0
  %v2918 = vadd.f32 0.0, %v2917
  %2919 = vmatmul.f32.gmra.mxu0 %v2130
  %v2920 = vpop.f32.mrf.mxu0
  %v2921 = vadd.f32 0.0, %v2920
  %2922 = vmatmul.f32.gmra.mxu0 %v2131
  %v2923 = vpop.f32.mrf.mxu0
  %v2924 = vadd.f32 0.0, %v2923
  %2925 = vmatmul.f32.gmra.mxu0 %v2132
  %v2926 = vpop.f32.mrf.mxu0
  %v2927 = vadd.f32 0.0, %v2926
  %2928 = vmatmul.f32.gmra.mxu0 %v2133
  %v2929 = vpop.f32.mrf.mxu0
  %v2930 = vadd.f32 0.0, %v2929
  %2931 = vmatmul.f32.gmra.mxu0 %v2134
  %v2932 = vpop.f32.mrf.mxu0
  %v2933 = vadd.f32 0.0, %v2932
  %2934 = vmatmul.f32.gmra.mxu0 %v2135
  %v2935 = vpop.f32.mrf.mxu0
  %v2936 = vadd.f32 0.0, %v2935
  %2937 = vmatmul.f32.gmra.mxu0 %v2136
  %v2938 = vpop.f32.mrf.mxu0
  %v2939 = vadd.f32 0.0, %v2938
  %2940 = vmatmul.f32.gmra.mxu0 %v2137
  %v2941 = vpop.f32.mrf.mxu0
  %v2942 = vadd.f32 0.0, %v2941
  %2943 = vdwg.mxu0
  %v2944 = vadd.f32 %v2654, %v2753
  %v2945 = vadd.f32 %v2655, %v2756
  %v2946 = vadd.f32 %v2656, %v2759
  %v2947 = vadd.f32 %v2657, %v2762
  %v2948 = vadd.f32 %v2658, %v2765
  %v2949 = vadd.f32 %v2659, %v2768
  %v2950 = vadd.f32 %v2660, %v2771
  %v2951 = vadd.f32 %v2661, %v2774
  %v2952 = vadd.f32 %v2662, %v2777
  %v2953 = vadd.f32 %v2663, %v2780
  %v2954 = vadd.f32 %v2664, %v2783
  %v2955 = vadd.f32 %v2665, %v2786
  %v2956 = vadd.f32 %v2666, %v2789
  %v2957 = vadd.f32 %v2667, %v2792
  %v2958 = vadd.f32 %v2668, %v2795
  %v2959 = vadd.f32 %v2669, %v2798
  %v2960 = vadd.f32 %v2670, %v2801
  %v2961 = vadd.f32 %v2671, %v2804
  %v2962 = vadd.f32 %v2672, %v2807
  %v2963 = vadd.f32 %v2673, %v2810
  %v2964 = vadd.f32 %v2674, %v2813
  %v2965 = vadd.f32 %v2675, %v2816
  %v2966 = vadd.f32 %v2676, %v2819
  %v2967 = vadd.f32 %v2677, %v2822
  %v2968 = vadd.f32 %v2678, %v2825
  %v2969 = vadd.f32 %v2679, %v2828
  %v2970 = vadd.f32 %v2680, %v2831
  %v2971 = vadd.f32 %v2681, %v2834
  %v2972 = vadd.f32 %v2682, %v2837
  %v2973 = vadd.f32 %v2683, %v2840
  %v2974 = vadd.f32 %v2684, %v2843
  %v2975 = vadd.f32 %v2685, %v2846
  %v2976 = vadd.f32 %v2686, %v2849
  %v2977 = vadd.f32 %v2687, %v2852
  %v2978 = vadd.f32 %v2688, %v2855
  %v2979 = vadd.f32 %v2689, %v2858
  %v2980 = vadd.f32 %v2690, %v2861
  %v2981 = vadd.f32 %v2691, %v2864
  %v2982 = vadd.f32 %v2692, %v2867
  %v2983 = vadd.f32 %v2693, %v2870
  %v2984 = vadd.f32 %v2694, %v2873
  %v2985 = vadd.f32 %v2695, %v2876
  %v2986 = vadd.f32 %v2696, %v2879
  %v2987 = vadd.f32 %v2697, %v2882
  %v2988 = vadd.f32 %v2698, %v2885
  %v2989 = vadd.f32 %v2699, %v2888
  %v2990 = vadd.f32 %v2700, %v2891
  %v2991 = vadd.f32 %v2701, %v2894
  %v2992 = vadd.f32 %v2702, %v2897
  %v2993 = vadd.f32 %v2703, %v2900
  %v2994 = vadd.f32 %v2704, %v2903
  %v2995 = vadd.f32 %v2705, %v2906
  %v2996 = vadd.f32 %v2706, %v2909
  %v2997 = vadd.f32 %v2707, %v2912
  %v2998 = vadd.f32 %v2708, %v2915
  %v2999 = vadd.f32 %v2709, %v2918
  %v3000 = vadd.f32 %v2710, %v2921
  %v3001 = vadd.f32 %v2711, %v2924
  %v3002 = vadd.f32 %v2712, %v2927
  %v3003 = vadd.f32 %v2713, %v2930
  %v3004 = vadd.f32 %v2714, %v2933
  %v3005 = vadd.f32 %v2715, %v2936
  %v3006 = vadd.f32 %v2716, %v2939
  %v3007 = vadd.f32 %v2717, %v2942
  %v3008 = vld [vmem:[%s2] sm:$0x1]
  %v3010 = vperm.slane %v3008, 0
  %v3012 = vadd.f32 %v2944, %v3010
  %v3013 = vadd.f32 %v2945, %v3010
  %v3014 = vadd.f32 %v2946, %v3010
  %v3015 = vadd.f32 %v2947, %v3010
  %v3016 = vadd.f32 %v2948, %v3010
  %v3017 = vadd.f32 %v2949, %v3010
  %v3018 = vadd.f32 %v2950, %v3010
  %v3019 = vadd.f32 %v2951, %v3010
  %v3020 = vadd.f32 %v2952, %v3010
  %v3021 = vadd.f32 %v2953, %v3010
  %v3022 = vadd.f32 %v2954, %v3010
  %v3023 = vadd.f32 %v2955, %v3010
  %v3024 = vadd.f32 %v2956, %v3010
  %v3025 = vadd.f32 %v2957, %v3010
  %v3026 = vadd.f32 %v2958, %v3010
  %v3027 = vadd.f32 %v2959, %v3010
  %v3028 = vadd.f32 %v2960, %v3010
  %v3029 = vadd.f32 %v2961, %v3010
  %v3030 = vadd.f32 %v2962, %v3010
  %v3031 = vadd.f32 %v2963, %v3010
  %v3032 = vadd.f32 %v2964, %v3010
  %v3033 = vadd.f32 %v2965, %v3010
  %v3034 = vadd.f32 %v2966, %v3010
  %v3035 = vadd.f32 %v2967, %v3010
  %v3036 = vadd.f32 %v2968, %v3010
  %v3037 = vadd.f32 %v2969, %v3010
  %v3038 = vadd.f32 %v2970, %v3010
  %v3039 = vadd.f32 %v2971, %v3010
  %v3040 = vadd.f32 %v2972, %v3010
  %v3041 = vadd.f32 %v2973, %v3010
  %v3042 = vadd.f32 %v2974, %v3010
  %v3043 = vadd.f32 %v2975, %v3010
  %v3044 = vadd.f32 %v2976, %v3010
  %v3045 = vadd.f32 %v2977, %v3010
  %v3046 = vadd.f32 %v2978, %v3010
  %v3047 = vadd.f32 %v2979, %v3010
  %v3048 = vadd.f32 %v2980, %v3010
  %v3049 = vadd.f32 %v2981, %v3010
  %v3050 = vadd.f32 %v2982, %v3010
  %v3051 = vadd.f32 %v2983, %v3010
  %v3052 = vadd.f32 %v2984, %v3010
  %v3053 = vadd.f32 %v2985, %v3010
  %v3054 = vadd.f32 %v2986, %v3010
  %v3055 = vadd.f32 %v2987, %v3010
  %v3056 = vadd.f32 %v2988, %v3010
  %v3057 = vadd.f32 %v2989, %v3010
  %v3058 = vadd.f32 %v2990, %v3010
  %v3059 = vadd.f32 %v2991, %v3010
  %v3060 = vadd.f32 %v2992, %v3010
  %v3061 = vadd.f32 %v2993, %v3010
  %v3062 = vadd.f32 %v2994, %v3010
  %v3063 = vadd.f32 %v2995, %v3010
  %v3064 = vadd.f32 %v2996, %v3010
  %v3065 = vadd.f32 %v2997, %v3010
  %v3066 = vadd.f32 %v2998, %v3010
  %v3067 = vadd.f32 %v2999, %v3010
  %v3068 = vadd.f32 %v3000, %v3010
  %v3069 = vadd.f32 %v3001, %v3010
  %v3070 = vadd.f32 %v3002, %v3010
  %v3071 = vadd.f32 %v3003, %v3010
  %v3072 = vadd.f32 %v3004, %v3010
  %v3073 = vadd.f32 %v3005, %v3010
  %v3074 = vadd.f32 %v3006, %v3010
  %v3075 = vadd.f32 %v3007, %v3010
  %v3076 = vadd.f32 %v3012, %v3013
  %v3077 = vadd.f32 %v3076, %v3014
  %v3078 = vadd.f32 %v3077, %v3015
  %v3079 = vadd.f32 %v3078, %v3016
  %v3080 = vadd.f32 %v3079, %v3017
  %v3081 = vadd.f32 %v3080, %v3018
  %v3082 = vadd.f32 %v3081, %v3019
  %v3083 = vadd.f32 %v3082, %v3020
  %v3084 = vadd.f32 %v3083, %v3021
  %v3085 = vadd.f32 %v3084, %v3022
  %v3086 = vadd.f32 %v3085, %v3023
  %v3087 = vadd.f32 %v3086, %v3024
  %v3088 = vadd.f32 %v3087, %v3025
  %v3089 = vadd.f32 %v3088, %v3026
  %v3090 = vadd.f32 %v3089, %v3027
  %v3091 = vadd.f32 %v3090, %v3028
  %v3092 = vadd.f32 %v3091, %v3029
  %v3093 = vadd.f32 %v3092, %v3030
  %v3094 = vadd.f32 %v3093, %v3031
  %v3095 = vadd.f32 %v3094, %v3032
  %v3096 = vadd.f32 %v3095, %v3033
  %v3097 = vadd.f32 %v3096, %v3034
  %v3098 = vadd.f32 %v3097, %v3035
  %v3099 = vadd.f32 %v3098, %v3036
  %v3100 = vadd.f32 %v3099, %v3037
  %v3101 = vadd.f32 %v3100, %v3038
  %v3102 = vadd.f32 %v3101, %v3039
  %v3103 = vadd.f32 %v3102, %v3040
  %v3104 = vadd.f32 %v3103, %v3041
  %v3105 = vadd.f32 %v3104, %v3042
  %v3106 = vadd.f32 %v3105, %v3043
  %v3107 = vadd.f32 %v3106, %v3044
  %v3108 = vadd.f32 %v3107, %v3045
  %v3109 = vadd.f32 %v3108, %v3046
  %v3110 = vadd.f32 %v3109, %v3047
  %v3111 = vadd.f32 %v3110, %v3048
  %v3112 = vadd.f32 %v3111, %v3049
  %v3113 = vadd.f32 %v3112, %v3050
  %v3114 = vadd.f32 %v3113, %v3051
  %v3115 = vadd.f32 %v3114, %v3052
  %v3116 = vadd.f32 %v3115, %v3053
  %v3117 = vadd.f32 %v3116, %v3054
  %v3118 = vadd.f32 %v3117, %v3055
  %v3119 = vadd.f32 %v3118, %v3056
  %v3120 = vadd.f32 %v3119, %v3057
  %v3121 = vadd.f32 %v3120, %v3058
  %v3122 = vadd.f32 %v3121, %v3059
  %v3123 = vadd.f32 %v3122, %v3060
  %v3124 = vadd.f32 %v3123, %v3061
  %v3125 = vadd.f32 %v3124, %v3062
  %v3126 = vadd.f32 %v3125, %v3063
  %v3127 = vadd.f32 %v3126, %v3064
  %v3128 = vadd.f32 %v3127, %v3065
  %v3129 = vadd.f32 %v3128, %v3066
  %v3130 = vadd.f32 %v3129, %v3067
  %v3131 = vadd.f32 %v3130, %v3068
  %v3132 = vadd.f32 %v3131, %v3069
  %v3133 = vadd.f32 %v3132, %v3070
  %v3134 = vadd.f32 %v3133, %v3071
  %v3135 = vadd.f32 %v3134, %v3072
  %v3136 = vadd.f32 %v3135, %v3073
  %v3137 = vadd.f32 %v3136, %v3074
  %v3138 = vadd.f32 %v3137, %v3075
  %v3139 = vrot.slane %v3138, 4
  %v3140 = vadd.f32 %v3138, %v3139
  %v3141 = vrot.slane %v3140, 2
  %v3142 = vadd.f32 %v3140, %v3141
  %v3143 = vrot.slane %v3142, 1
  %v3144 = vadd.f32 %v3142, %v3143
  %v3145 = vmul.f32 %v3144, 0.001953125
  %v3146 = vsub.f32 %v3012, %v3145
  %v3147 = vsub.f32 %v3013, %v3145
  %v3148 = vsub.f32 %v3014, %v3145
  %v3149 = vsub.f32 %v3015, %v3145
  %v3150 = vsub.f32 %v3016, %v3145
  %v3151 = vsub.f32 %v3017, %v3145
  %v3152 = vsub.f32 %v3018, %v3145
  %v3153 = vsub.f32 %v3019, %v3145
  %v3154 = vsub.f32 %v3020, %v3145
  %v3155 = vsub.f32 %v3021, %v3145
  %v3156 = vsub.f32 %v3022, %v3145
  %v3157 = vsub.f32 %v3023, %v3145
  %v3158 = vsub.f32 %v3024, %v3145
  %v3159 = vsub.f32 %v3025, %v3145
  %v3160 = vsub.f32 %v3026, %v3145
  %v3161 = vsub.f32 %v3027, %v3145
  %v3162 = vsub.f32 %v3028, %v3145
  %v3163 = vsub.f32 %v3029, %v3145
  %v3164 = vsub.f32 %v3030, %v3145
  %v3165 = vsub.f32 %v3031, %v3145
  %v3166 = vsub.f32 %v3032, %v3145
  %v3167 = vsub.f32 %v3033, %v3145
  %v3168 = vsub.f32 %v3034, %v3145
  %v3169 = vsub.f32 %v3035, %v3145
  %v3170 = vsub.f32 %v3036, %v3145
  %v3171 = vsub.f32 %v3037, %v3145
  %v3172 = vsub.f32 %v3038, %v3145
  %v3173 = vsub.f32 %v3039, %v3145
  %v3174 = vsub.f32 %v3040, %v3145
  %v3175 = vsub.f32 %v3041, %v3145
  %v3176 = vsub.f32 %v3042, %v3145
  %v3177 = vsub.f32 %v3043, %v3145
  %v3178 = vsub.f32 %v3044, %v3145
  %v3179 = vsub.f32 %v3045, %v3145
  %v3180 = vsub.f32 %v3046, %v3145
  %v3181 = vsub.f32 %v3047, %v3145
  %v3182 = vsub.f32 %v3048, %v3145
  %v3183 = vsub.f32 %v3049, %v3145
  %v3184 = vsub.f32 %v3050, %v3145
  %v3185 = vsub.f32 %v3051, %v3145
  %v3186 = vsub.f32 %v3052, %v3145
  %v3187 = vsub.f32 %v3053, %v3145
  %v3188 = vsub.f32 %v3054, %v3145
  %v3189 = vsub.f32 %v3055, %v3145
  %v3190 = vsub.f32 %v3056, %v3145
  %v3191 = vsub.f32 %v3057, %v3145
  %v3192 = vsub.f32 %v3058, %v3145
  %v3193 = vsub.f32 %v3059, %v3145
  %v3194 = vsub.f32 %v3060, %v3145
  %v3195 = vsub.f32 %v3061, %v3145
  %v3196 = vsub.f32 %v3062, %v3145
  %v3197 = vsub.f32 %v3063, %v3145
  %v3198 = vsub.f32 %v3064, %v3145
  %v3199 = vsub.f32 %v3065, %v3145
  %v3200 = vsub.f32 %v3066, %v3145
  %v3201 = vsub.f32 %v3067, %v3145
  %v3202 = vsub.f32 %v3068, %v3145
  %v3203 = vsub.f32 %v3069, %v3145
  %v3204 = vsub.f32 %v3070, %v3145
  %v3205 = vsub.f32 %v3071, %v3145
  %v3206 = vsub.f32 %v3072, %v3145
  %v3207 = vsub.f32 %v3073, %v3145
  %v3208 = vsub.f32 %v3074, %v3145
  %v3209 = vsub.f32 %v3075, %v3145
  %v3210 = vmul.f32 %v3146, %v3146
  %v3211 = vmul.f32 %v3147, %v3147
  %v3212 = vmul.f32 %v3148, %v3148
  %v3213 = vmul.f32 %v3149, %v3149
  %v3214 = vmul.f32 %v3150, %v3150
  %v3215 = vmul.f32 %v3151, %v3151
  %v3216 = vmul.f32 %v3152, %v3152
  %v3217 = vmul.f32 %v3153, %v3153
  %v3218 = vmul.f32 %v3154, %v3154
  %v3219 = vmul.f32 %v3155, %v3155
  %v3220 = vmul.f32 %v3156, %v3156
  %v3221 = vmul.f32 %v3157, %v3157
  %v3222 = vmul.f32 %v3158, %v3158
  %v3223 = vmul.f32 %v3159, %v3159
  %v3224 = vmul.f32 %v3160, %v3160
  %v3225 = vmul.f32 %v3161, %v3161
  %v3226 = vmul.f32 %v3162, %v3162
  %v3227 = vmul.f32 %v3163, %v3163
  %v3228 = vmul.f32 %v3164, %v3164
  %v3229 = vmul.f32 %v3165, %v3165
  %v3230 = vmul.f32 %v3166, %v3166
  %v3231 = vmul.f32 %v3167, %v3167
  %v3232 = vmul.f32 %v3168, %v3168
  %v3233 = vmul.f32 %v3169, %v3169
  %v3234 = vmul.f32 %v3170, %v3170
  %v3235 = vmul.f32 %v3171, %v3171
  %v3236 = vmul.f32 %v3172, %v3172
  %v3237 = vmul.f32 %v3173, %v3173
  %v3238 = vmul.f32 %v3174, %v3174
  %v3239 = vmul.f32 %v3175, %v3175
  %v3240 = vmul.f32 %v3176, %v3176
  %v3241 = vmul.f32 %v3177, %v3177
  %v3242 = vmul.f32 %v3178, %v3178
  %v3243 = vmul.f32 %v3179, %v3179
  %v3244 = vmul.f32 %v3180, %v3180
  %v3245 = vmul.f32 %v3181, %v3181
  %v3246 = vmul.f32 %v3182, %v3182
  %v3247 = vmul.f32 %v3183, %v3183
  %v3248 = vmul.f32 %v3184, %v3184
  %v3249 = vmul.f32 %v3185, %v3185
  %v3250 = vmul.f32 %v3186, %v3186
  %v3251 = vmul.f32 %v3187, %v3187
  %v3252 = vmul.f32 %v3188, %v3188
  %v3253 = vmul.f32 %v3189, %v3189
  %v3254 = vmul.f32 %v3190, %v3190
  %v3255 = vmul.f32 %v3191, %v3191
  %v3256 = vmul.f32 %v3192, %v3192
  %v3257 = vmul.f32 %v3193, %v3193
  %v3258 = vmul.f32 %v3194, %v3194
  %v3259 = vmul.f32 %v3195, %v3195
  %v3260 = vmul.f32 %v3196, %v3196
  %v3261 = vmul.f32 %v3197, %v3197
  %v3262 = vmul.f32 %v3198, %v3198
  %v3263 = vmul.f32 %v3199, %v3199
  %v3264 = vmul.f32 %v3200, %v3200
  %v3265 = vmul.f32 %v3201, %v3201
  %v3266 = vmul.f32 %v3202, %v3202
  %v3267 = vmul.f32 %v3203, %v3203
  %v3268 = vmul.f32 %v3204, %v3204
  %v3269 = vmul.f32 %v3205, %v3205
  %v3270 = vmul.f32 %v3206, %v3206
  %v3271 = vmul.f32 %v3207, %v3207
  %v3272 = vmul.f32 %v3208, %v3208
  %v3273 = vmul.f32 %v3209, %v3209
  %v3274 = vadd.f32 %v3210, %v3211
  %v3275 = vadd.f32 %v3274, %v3212
  %v3276 = vadd.f32 %v3275, %v3213
  %v3277 = vadd.f32 %v3276, %v3214
  %v3278 = vadd.f32 %v3277, %v3215
  %v3279 = vadd.f32 %v3278, %v3216
  %v3280 = vadd.f32 %v3279, %v3217
  %v3281 = vadd.f32 %v3280, %v3218
  %v3282 = vadd.f32 %v3281, %v3219
  %v3283 = vadd.f32 %v3282, %v3220
  %v3284 = vadd.f32 %v3283, %v3221
  %v3285 = vadd.f32 %v3284, %v3222
  %v3286 = vadd.f32 %v3285, %v3223
  %v3287 = vadd.f32 %v3286, %v3224
  %v3288 = vadd.f32 %v3287, %v3225
  %v3289 = vadd.f32 %v3288, %v3226
  %v3290 = vadd.f32 %v3289, %v3227
  %v3291 = vadd.f32 %v3290, %v3228
  %v3292 = vadd.f32 %v3291, %v3229
  %v3293 = vadd.f32 %v3292, %v3230
  %v3294 = vadd.f32 %v3293, %v3231
  %v3295 = vadd.f32 %v3294, %v3232
  %v3296 = vadd.f32 %v3295, %v3233
  %v3297 = vadd.f32 %v3296, %v3234
  %v3298 = vadd.f32 %v3297, %v3235
  %v3299 = vadd.f32 %v3298, %v3236
  %v3300 = vadd.f32 %v3299, %v3237
  %v3301 = vadd.f32 %v3300, %v3238
  %v3302 = vadd.f32 %v3301, %v3239
  %v3303 = vadd.f32 %v3302, %v3240
  %v3304 = vadd.f32 %v3303, %v3241
  %v3305 = vadd.f32 %v3304, %v3242
  %v3306 = vadd.f32 %v3305, %v3243
  %v3307 = vadd.f32 %v3306, %v3244
  %v3308 = vadd.f32 %v3307, %v3245
  %v3309 = vadd.f32 %v3308, %v3246
  %v3310 = vadd.f32 %v3309, %v3247
  %v3311 = vadd.f32 %v3310, %v3248
  %v3312 = vadd.f32 %v3311, %v3249
  %v3313 = vadd.f32 %v3312, %v3250
  %v3314 = vadd.f32 %v3313, %v3251
  %v3315 = vadd.f32 %v3314, %v3252
  %v3316 = vadd.f32 %v3315, %v3253
  %v3317 = vadd.f32 %v3316, %v3254
  %v3318 = vadd.f32 %v3317, %v3255
  %v3319 = vadd.f32 %v3318, %v3256
  %v3320 = vadd.f32 %v3319, %v3257
  %v3321 = vadd.f32 %v3320, %v3258
  %v3322 = vadd.f32 %v3321, %v3259
  %v3323 = vadd.f32 %v3322, %v3260
  %v3324 = vadd.f32 %v3323, %v3261
  %v3325 = vadd.f32 %v3324, %v3262
  %v3326 = vadd.f32 %v3325, %v3263
  %v3327 = vadd.f32 %v3326, %v3264
  %v3328 = vadd.f32 %v3327, %v3265
  %v3329 = vadd.f32 %v3328, %v3266
  %v3330 = vadd.f32 %v3329, %v3267
  %v3331 = vadd.f32 %v3330, %v3268
  %v3332 = vadd.f32 %v3331, %v3269
  %v3333 = vadd.f32 %v3332, %v3270
  %v3334 = vadd.f32 %v3333, %v3271
  %v3335 = vadd.f32 %v3334, %v3272
  %v3336 = vadd.f32 %v3335, %v3273
  %v3337 = vrot.slane %v3336, 4
  %v3338 = vadd.f32 %v3336, %v3337
  %v3339 = vrot.slane %v3338, 2
  %v3340 = vadd.f32 %v3338, %v3339
  %v3341 = vrot.slane %v3340, 1
  %v3342 = vadd.f32 %v3340, %v3341
  %v3343 = vmul.f32 %v3342, 0.001953125
  %v3344 = vadd.f32 %v3343, 1e-05
  %v3345 = vrsqrt.pop %v3344
  %v3346 = vmul.f32 %v3345, %v3344
  %v3347 = vmul.f32 %v3346, %v3345
  %v3348 = vmul.f32 0.5, %v3347
  %v3349 = vsub.f32 1.5, %v3348
  %v3350 = vmul.f32 %v3345, %v3349
  %vm3351 = vweird.f32 %v3344
  %vm3352 = vweird.f32 %v3345
  %vm3353 = vmor %vm3351, %vm3352
  %v3354 = vsel %vm3353, %v3345, %v3350
  %v3355 = vmul.f32 %v3146, %v3354
  %v3356 = vmul.f32 %v3147, %v3354
  %v3357 = vmul.f32 %v3148, %v3354
  %v3358 = vmul.f32 %v3149, %v3354
  %v3359 = vmul.f32 %v3150, %v3354
  %v3360 = vmul.f32 %v3151, %v3354
  %v3361 = vmul.f32 %v3152, %v3354
  %v3362 = vmul.f32 %v3153, %v3354
  %v3363 = vmul.f32 %v3154, %v3354
  %v3364 = vmul.f32 %v3155, %v3354
  %v3365 = vmul.f32 %v3156, %v3354
  %v3366 = vmul.f32 %v3157, %v3354
  %v3367 = vmul.f32 %v3158, %v3354
  %v3368 = vmul.f32 %v3159, %v3354
  %v3369 = vmul.f32 %v3160, %v3354
  %v3370 = vmul.f32 %v3161, %v3354
  %v3371 = vmul.f32 %v3162, %v3354
  %v3372 = vmul.f32 %v3163, %v3354
  %v3373 = vmul.f32 %v3164, %v3354
  %v3374 = vmul.f32 %v3165, %v3354
  %v3375 = vmul.f32 %v3166, %v3354
  %v3376 = vmul.f32 %v3167, %v3354
  %v3377 = vmul.f32 %v3168, %v3354
  %v3378 = vmul.f32 %v3169, %v3354
  %v3379 = vmul.f32 %v3170, %v3354
  %v3380 = vmul.f32 %v3171, %v3354
  %v3381 = vmul.f32 %v3172, %v3354
  %v3382 = vmul.f32 %v3173, %v3354
  %v3383 = vmul.f32 %v3174, %v3354
  %v3384 = vmul.f32 %v3175, %v3354
  %v3385 = vmul.f32 %v3176, %v3354
  %v3386 = vmul.f32 %v3177, %v3354
  %v3387 = vmul.f32 %v3178, %v3354
  %v3388 = vmul.f32 %v3179, %v3354
  %v3389 = vmul.f32 %v3180, %v3354
  %v3390 = vmul.f32 %v3181, %v3354
  %v3391 = vmul.f32 %v3182, %v3354
  %v3392 = vmul.f32 %v3183, %v3354
  %v3393 = vmul.f32 %v3184, %v3354
  %v3394 = vmul.f32 %v3185, %v3354
  %v3395 = vmul.f32 %v3186, %v3354
  %v3396 = vmul.f32 %v3187, %v3354
  %v3397 = vmul.f32 %v3188, %v3354
  %v3398 = vmul.f32 %v3189, %v3354
  %v3399 = vmul.f32 %v3190, %v3354
  %v3400 = vmul.f32 %v3191, %v3354
  %v3401 = vmul.f32 %v3192, %v3354
  %v3402 = vmul.f32 %v3193, %v3354
  %v3403 = vmul.f32 %v3194, %v3354
  %v3404 = vmul.f32 %v3195, %v3354
  %v3405 = vmul.f32 %v3196, %v3354
  %v3406 = vmul.f32 %v3197, %v3354
  %v3407 = vmul.f32 %v3198, %v3354
  %v3408 = vmul.f32 %v3199, %v3354
  %v3409 = vmul.f32 %v3200, %v3354
  %v3410 = vmul.f32 %v3201, %v3354
  %v3411 = vmul.f32 %v3202, %v3354
  %v3412 = vmul.f32 %v3203, %v3354
  %v3413 = vmul.f32 %v3204, %v3354
  %v3414 = vmul.f32 %v3205, %v3354
  %v3415 = vmul.f32 %v3206, %v3354
  %v3416 = vmul.f32 %v3207, %v3354
  %v3417 = vmul.f32 %v3208, %v3354
  %v3418 = vmul.f32 %v3209, %v3354
  %v3419 = vld [vmem:[%s3] sm:$0x1]
  %v3421 = vperm.slane %v3419, 0
  %v3423 = vmul.f32 %v3355, %v3421
  %v3424 = vmul.f32 %v3356, %v3421
  %v3425 = vmul.f32 %v3357, %v3421
  %v3426 = vmul.f32 %v3358, %v3421
  %v3427 = vmul.f32 %v3359, %v3421
  %v3428 = vmul.f32 %v3360, %v3421
  %v3429 = vmul.f32 %v3361, %v3421
  %v3430 = vmul.f32 %v3362, %v3421
  %v3431 = vmul.f32 %v3363, %v3421
  %v3432 = vmul.f32 %v3364, %v3421
  %v3433 = vmul.f32 %v3365, %v3421
  %v3434 = vmul.f32 %v3366, %v3421
  %v3435 = vmul.f32 %v3367, %v3421
  %v3436 = vmul.f32 %v3368, %v3421
  %v3437 = vmul.f32 %v3369, %v3421
  %v3438 = vmul.f32 %v3370, %v3421
  %v3439 = vmul.f32 %v3371, %v3421
  %v3440 = vmul.f32 %v3372, %v3421
  %v3441 = vmul.f32 %v3373, %v3421
  %v3442 = vmul.f32 %v3374, %v3421
  %v3443 = vmul.f32 %v3375, %v3421
  %v3444 = vmul.f32 %v3376, %v3421
  %v3445 = vmul.f32 %v3377, %v3421
  %v3446 = vmul.f32 %v3378, %v3421
  %v3447 = vmul.f32 %v3379, %v3421
  %v3448 = vmul.f32 %v3380, %v3421
  %v3449 = vmul.f32 %v3381, %v3421
  %v3450 = vmul.f32 %v3382, %v3421
  %v3451 = vmul.f32 %v3383, %v3421
  %v3452 = vmul.f32 %v3384, %v3421
  %v3453 = vmul.f32 %v3385, %v3421
  %v3454 = vmul.f32 %v3386, %v3421
  %v3455 = vmul.f32 %v3387, %v3421
  %v3456 = vmul.f32 %v3388, %v3421
  %v3457 = vmul.f32 %v3389, %v3421
  %v3458 = vmul.f32 %v3390, %v3421
  %v3459 = vmul.f32 %v3391, %v3421
  %v3460 = vmul.f32 %v3392, %v3421
  %v3461 = vmul.f32 %v3393, %v3421
  %v3462 = vmul.f32 %v3394, %v3421
  %v3463 = vmul.f32 %v3395, %v3421
  %v3464 = vmul.f32 %v3396, %v3421
  %v3465 = vmul.f32 %v3397, %v3421
  %v3466 = vmul.f32 %v3398, %v3421
  %v3467 = vmul.f32 %v3399, %v3421
  %v3468 = vmul.f32 %v3400, %v3421
  %v3469 = vmul.f32 %v3401, %v3421
  %v3470 = vmul.f32 %v3402, %v3421
  %v3471 = vmul.f32 %v3403, %v3421
  %v3472 = vmul.f32 %v3404, %v3421
  %v3473 = vmul.f32 %v3405, %v3421
  %v3474 = vmul.f32 %v3406, %v3421
  %v3475 = vmul.f32 %v3407, %v3421
  %v3476 = vmul.f32 %v3408, %v3421
  %v3477 = vmul.f32 %v3409, %v3421
  %v3478 = vmul.f32 %v3410, %v3421
  %v3479 = vmul.f32 %v3411, %v3421
  %v3480 = vmul.f32 %v3412, %v3421
  %v3481 = vmul.f32 %v3413, %v3421
  %v3482 = vmul.f32 %v3414, %v3421
  %v3483 = vmul.f32 %v3415, %v3421
  %v3484 = vmul.f32 %v3416, %v3421
  %v3485 = vmul.f32 %v3417, %v3421
  %v3486 = vmul.f32 %v3418, %v3421
  %v3487 = vld [vmem:[%s4] sm:$0x1]
  %v3489 = vperm.slane %v3487, 0
  %v3491 = vadd.f32 %v3423, %v3489
  %v3492 = vadd.f32 %v3424, %v3489
  %v3493 = vadd.f32 %v3425, %v3489
  %v3494 = vadd.f32 %v3426, %v3489
  %v3495 = vadd.f32 %v3427, %v3489
  %v3496 = vadd.f32 %v3428, %v3489
  %v3497 = vadd.f32 %v3429, %v3489
  %v3498 = vadd.f32 %v3430, %v3489
  %v3499 = vadd.f32 %v3431, %v3489
  %v3500 = vadd.f32 %v3432, %v3489
  %v3501 = vadd.f32 %v3433, %v3489
  %v3502 = vadd.f32 %v3434, %v3489
  %v3503 = vadd.f32 %v3435, %v3489
  %v3504 = vadd.f32 %v3436, %v3489
  %v3505 = vadd.f32 %v3437, %v3489
  %v3506 = vadd.f32 %v3438, %v3489
  %v3507 = vadd.f32 %v3439, %v3489
  %v3508 = vadd.f32 %v3440, %v3489
  %v3509 = vadd.f32 %v3441, %v3489
  %v3510 = vadd.f32 %v3442, %v3489
  %v3511 = vadd.f32 %v3443, %v3489
  %v3512 = vadd.f32 %v3444, %v3489
  %v3513 = vadd.f32 %v3445, %v3489
  %v3514 = vadd.f32 %v3446, %v3489
  %v3515 = vadd.f32 %v3447, %v3489
  %v3516 = vadd.f32 %v3448, %v3489
  %v3517 = vadd.f32 %v3449, %v3489
  %v3518 = vadd.f32 %v3450, %v3489
  %v3519 = vadd.f32 %v3451, %v3489
  %v3520 = vadd.f32 %v3452, %v3489
  %v3521 = vadd.f32 %v3453, %v3489
  %v3522 = vadd.f32 %v3454, %v3489
  %v3523 = vadd.f32 %v3455, %v3489
  %v3524 = vadd.f32 %v3456, %v3489
  %v3525 = vadd.f32 %v3457, %v3489
  %v3526 = vadd.f32 %v3458, %v3489
  %v3527 = vadd.f32 %v3459, %v3489
  %v3528 = vadd.f32 %v3460, %v3489
  %v3529 = vadd.f32 %v3461, %v3489
  %v3530 = vadd.f32 %v3462, %v3489
  %v3531 = vadd.f32 %v3463, %v3489
  %v3532 = vadd.f32 %v3464, %v3489
  %v3533 = vadd.f32 %v3465, %v3489
  %v3534 = vadd.f32 %v3466, %v3489
  %v3535 = vadd.f32 %v3467, %v3489
  %v3536 = vadd.f32 %v3468, %v3489
  %v3537 = vadd.f32 %v3469, %v3489
  %v3538 = vadd.f32 %v3470, %v3489
  %v3539 = vadd.f32 %v3471, %v3489
  %v3540 = vadd.f32 %v3472, %v3489
  %v3541 = vadd.f32 %v3473, %v3489
  %v3542 = vadd.f32 %v3474, %v3489
  %v3543 = vadd.f32 %v3475, %v3489
  %v3544 = vadd.f32 %v3476, %v3489
  %v3545 = vadd.f32 %v3477, %v3489
  %v3546 = vadd.f32 %v3478, %v3489
  %v3547 = vadd.f32 %v3479, %v3489
  %v3548 = vadd.f32 %v3480, %v3489
  %v3549 = vadd.f32 %v3481, %v3489
  %v3550 = vadd.f32 %v3482, %v3489
  %v3551 = vadd.f32 %v3483, %v3489
  %v3552 = vadd.f32 %v3484, %v3489
  %v3553 = vadd.f32 %v3485, %v3489
  %v3554 = vadd.f32 %v3486, %v3489
  %v3555 = vmax.f32 %v3491, 0.0
  %v3556 = vmax.f32 %v3492, 0.0
  %v3557 = vmax.f32 %v3493, 0.0
  %v3558 = vmax.f32 %v3494, 0.0
  %v3559 = vmax.f32 %v3495, 0.0
  %v3560 = vmax.f32 %v3496, 0.0
  %v3561 = vmax.f32 %v3497, 0.0
  %v3562 = vmax.f32 %v3498, 0.0
  %v3563 = vmax.f32 %v3499, 0.0
  %v3564 = vmax.f32 %v3500, 0.0
  %v3565 = vmax.f32 %v3501, 0.0
  %v3566 = vmax.f32 %v3502, 0.0
  %v3567 = vmax.f32 %v3503, 0.0
  %v3568 = vmax.f32 %v3504, 0.0
  %v3569 = vmax.f32 %v3505, 0.0
  %v3570 = vmax.f32 %v3506, 0.0
  %v3571 = vmax.f32 %v3507, 0.0
  %v3572 = vmax.f32 %v3508, 0.0
  %v3573 = vmax.f32 %v3509, 0.0
  %v3574 = vmax.f32 %v3510, 0.0
  %v3575 = vmax.f32 %v3511, 0.0
  %v3576 = vmax.f32 %v3512, 0.0
  %v3577 = vmax.f32 %v3513, 0.0
  %v3578 = vmax.f32 %v3514, 0.0
  %v3579 = vmax.f32 %v3515, 0.0
  %v3580 = vmax.f32 %v3516, 0.0
  %v3581 = vmax.f32 %v3517, 0.0
  %v3582 = vmax.f32 %v3518, 0.0
  %v3583 = vmax.f32 %v3519, 0.0
  %v3584 = vmax.f32 %v3520, 0.0
  %v3585 = vmax.f32 %v3521, 0.0
  %v3586 = vmax.f32 %v3522, 0.0
  %v3587 = vmax.f32 %v3523, 0.0
  %v3588 = vmax.f32 %v3524, 0.0
  %v3589 = vmax.f32 %v3525, 0.0
  %v3590 = vmax.f32 %v3526, 0.0
  %v3591 = vmax.f32 %v3527, 0.0
  %v3592 = vmax.f32 %v3528, 0.0
  %v3593 = vmax.f32 %v3529, 0.0
  %v3594 = vmax.f32 %v3530, 0.0
  %v3595 = vmax.f32 %v3531, 0.0
  %v3596 = vmax.f32 %v3532, 0.0
  %v3597 = vmax.f32 %v3533, 0.0
  %v3598 = vmax.f32 %v3534, 0.0
  %v3599 = vmax.f32 %v3535, 0.0
  %v3600 = vmax.f32 %v3536, 0.0
  %v3601 = vmax.f32 %v3537, 0.0
  %v3602 = vmax.f32 %v3538, 0.0
  %v3603 = vmax.f32 %v3539, 0.0
  %v3604 = vmax.f32 %v3540, 0.0
  %v3605 = vmax.f32 %v3541, 0.0
  %v3606 = vmax.f32 %v3542, 0.0
  %v3607 = vmax.f32 %v3543, 0.0
  %v3608 = vmax.f32 %v3544, 0.0
  %v3609 = vmax.f32 %v3545, 0.0
  %v3610 = vmax.f32 %v3546, 0.0
  %v3611 = vmax.f32 %v3547, 0.0
  %v3612 = vmax.f32 %v3548, 0.0
  %v3613 = vmax.f32 %v3549, 0.0
  %v3614 = vmax.f32 %v3550, 0.0
  %v3615 = vmax.f32 %v3551, 0.0
  %v3616 = vmax.f32 %v3552, 0.0
  %v3617 = vmax.f32 %v3553, 0.0
  %v3618 = vmax.f32 %v3554, 0.0
  %3619 = vst [vmem:[%s246 + $0x1] sm:$0xff] %v3555
  %3620 = vst [vmem:[%s246 + $0x9] sm:$0xff] %v3556
  %3621 = vst [vmem:[%s246 + $0x19] sm:$0xff] %v3557
  %3622 = vst [vmem:[%s246 + $0x21] sm:$0xff] %v3558
  %3623 = vst [vmem:[%s246 + $0x31] sm:$0xff] %v3559
  %3624 = vst [vmem:[%s246 + $0x39] sm:$0xff] %v3560
  %3625 = vst [vmem:[%s246 + $0x49] sm:$0xff] %v3561
  %3626 = vst [vmem:[%s246 + $0x51] sm:$0xff] %v3562
  %3627 = vst [vmem:[%s246 + $0x61] sm:$0xff] %v3563
  %3628 = vst [vmem:[%s246 + $0x69] sm:$0xff] %v3564
  %3629 = vst [vmem:[%s246 + $0x79] sm:$0xff] %v3565
  %3630 = vst [vmem:[%s246 + $0x81] sm:$0xff] %v3566
  %3631 = vst [vmem:[%s246 + $0x91] sm:$0xff] %v3567
  %3632 = vst [vmem:[%s246 + $0x99] sm:$0xff] %v3568
  %3633 = vst [vmem:[%s246 + $0xa9] sm:$0xff] %v3569
  %3634 = vst [vmem:[%s246 + $0xb1] sm:$0xff] %v3570
  %3635 = vst [vmem:[%s246 + $0xc1] sm:$0xff] %v3571
  %3636 = vst [vmem:[%s246 + $0xc9] sm:$0xff] %v3572
  %3637 = vst [vmem:[%s246 + $0xd9] sm:$0xff] %v3573
  %3638 = vst [vmem:[%s246 + $0xe1] sm:$0xff] %v3574
  %3639 = vst [vmem:[%s246 + $0xf1] sm:$0xff] %v3575
  %3640 = vst [vmem:[%s246 + $0xf9] sm:$0xff] %v3576
  %3641 = vst [vmem:[%s246 + $0x109] sm:$0xff] %v3577
  %3642 = vst [vmem:[%s246 + $0x111] sm:$0xff] %v3578
  %3643 = vst [vmem:[%s246 + $0x121] sm:$0xff] %v3579
  %3644 = vst [vmem:[%s246 + $0x129] sm:$0xff] %v3580
  %3645 = vst [vmem:[%s246 + $0x139] sm:$0xff] %v3581
  %3646 = vst [vmem:[%s246 + $0x141] sm:$0xff] %v3582
  %3647 = vst [vmem:[%s246 + $0x151] sm:$0xff] %v3583
  %3648 = vst [vmem:[%s246 + $0x159] sm:$0xff] %v3584
  %3649 = vst [vmem:[%s246 + $0x169] sm:$0xff] %v3585
  %3650 = vst [vmem:[%s246 + $0x171] sm:$0xff] %v3586
  %3651 = vst [vmem:[%s246 + $0x1b1] sm:$0xff] %v3587
  %3652 = vst [vmem:[%s246 + $0x1b9] sm:$0xff] %v3588
  %3653 = vst [vmem:[%s246 + $0x1c9] sm:$0xff] %v3589
  %3654 = vst [vmem:[%s246 + $0x1d1] sm:$0xff] %v3590
  %3655 = vst [vmem:[%s246 + $0x1e1] sm:$0xff] %v3591
  %3656 = vst [vmem:[%s246 + $0x1e9] sm:$0xff] %v3592
  %3657 = vst [vmem:[%s246 + $0x1f9] sm:$0xff] %v3593
  %3658 = vst [vmem:[%s246 + $0x201] sm:$0xff] %v3594
  %3659 = vst [vmem:[%s246 + $0x211] sm:$0xff] %v3595
  %3660 = vst [vmem:[%s246 + $0x219] sm:$0xff] %v3596
  %3661 = vst [vmem:[%s246 + $0x229] sm:$0xff] %v3597
  %3662 = vst [vmem:[%s246 + $0x231] sm:$0xff] %v3598
  %3663 = vst [vmem:[%s246 + $0x241] sm:$0xff] %v3599
  %3664 = vst [vmem:[%s246 + $0x249] sm:$0xff] %v3600
  %3665 = vst [vmem:[%s246 + $0x259] sm:$0xff] %v3601
  %3666 = vst [vmem:[%s246 + $0x261] sm:$0xff] %v3602
  %3667 = vst [vmem:[%s246 + $0x271] sm:$0xff] %v3603
  %3668 = vst [vmem:[%s246 + $0x279] sm:$0xff] %v3604
  %3669 = vst [vmem:[%s246 + $0x289] sm:$0xff] %v3605
  %3670 = vst [vmem:[%s246 + $0x291] sm:$0xff] %v3606
  %3671 = vst [vmem:[%s246 + $0x2a1] sm:$0xff] %v3607
  %3672 = vst [vmem:[%s246 + $0x2a9] sm:$0xff] %v3608
  %3673 = vst [vmem:[%s246 + $0x2b9] sm:$0xff] %v3609
  %3674 = vst [vmem:[%s246 + $0x2c1] sm:$0xff] %v3610
  %3675 = vst [vmem:[%s246 + $0x2d1] sm:$0xff] %v3611
  %3676 = vst [vmem:[%s246 + $0x2d9] sm:$0xff] %v3612
  %3677 = vst [vmem:[%s246 + $0x2e9] sm:$0xff] %v3613
  %3678 = vst [vmem:[%s246 + $0x2f1] sm:$0xff] %v3614
  %3679 = vst [vmem:[%s246 + $0x301] sm:$0xff] %v3615
  %3680 = vst [vmem:[%s246 + $0x309] sm:$0xff] %v3616
  %3681 = vst [vmem:[%s246 + $0x319] sm:$0xff] %v3617
  %3682 = vst [vmem:[%s246 + $0x321] sm:$0xff] %v3618
  %v3683 = vld [vmem:[#allocation2] sm:$0xff]
  %v3684 = vld [vmem:[#allocation2 + $0x8] sm:$0xff]
  %v3685 = vld [vmem:[#allocation2 + $0x18] sm:$0xff]
  %v3686 = vld [vmem:[#allocation2 + $0x20] sm:$0xff]
  %v3687 = vld [vmem:[#allocation2 + $0x30] sm:$0xff]
  %v3688 = vld [vmem:[#allocation2 + $0x38] sm:$0xff]
  %v3689 = vld [vmem:[#allocation2 + $0x48] sm:$0xff]
  %v3690 = vld [vmem:[#allocation2 + $0x50] sm:$0xff]
  %v3691 = vld [vmem:[#allocation2 + $0x60] sm:$0xff]
  %v3692 = vld [vmem:[#allocation2 + $0x68] sm:$0xff]
  %v3693 = vld [vmem:[#allocation2 + $0x78] sm:$0xff]
  %v3694 = vld [vmem:[#allocation2 + $0x80] sm:$0xff]
  %v3695 = vld [vmem:[#allocation2 + $0x90] sm:$0xff]
  %v3696 = vld [vmem:[#allocation2 + $0x98] sm:$0xff]
  %v3697 = vld [vmem:[#allocation2 + $0xa8] sm:$0xff]
  %v3698 = vld [vmem:[#allocation2 + $0xb0] sm:$0xff]
  %v3699 = vld [vmem:[#allocation2 + $0xc0] sm:$0xff]
  %v3700 = vld [vmem:[#allocation2 + $0xc8] sm:$0xff]
  %v3701 = vld [vmem:[#allocation2 + $0xd8] sm:$0xff]
  %v3702 = vld [vmem:[#allocation2 + $0xe0] sm:$0xff]
  %v3703 = vld [vmem:[#allocation2 + $0xf0] sm:$0xff]
  %v3704 = vld [vmem:[#allocation2 + $0xf8] sm:$0xff]
  %v3705 = vld [vmem:[#allocation2 + $0x108] sm:$0xff]
  %v3706 = vld [vmem:[#allocation2 + $0x110] sm:$0xff]
  %v3707 = vld [vmem:[#allocation2 + $0x120] sm:$0xff]
  %v3708 = vld [vmem:[#allocation2 + $0x128] sm:$0xff]
  %v3709 = vld [vmem:[#allocation2 + $0x138] sm:$0xff]
  %v3710 = vld [vmem:[#allocation2 + $0x140] sm:$0xff]
  %v3711 = vld [vmem:[#allocation2 + $0x150] sm:$0xff]
  %v3712 = vld [vmem:[#allocation2 + $0x158] sm:$0xff]
  %v3713 = vld [vmem:[#allocation2 + $0x168] sm:$0xff]
  %v3714 = vld [vmem:[#allocation2 + $0x170] sm:$0xff]
  %v3715 = vld [vmem:[#allocation2 + $0x180] sm:$0xff]
  %v3716 = vld [vmem:[#allocation2 + $0x188] sm:$0xff]
  %v3717 = vld [vmem:[#allocation2 + $0x198] sm:$0xff]
  %v3718 = vld [vmem:[#allocation2 + $0x1a0] sm:$0xff]
  %v3719 = vld [vmem:[#allocation2 + $0x1b0] sm:$0xff]
  %v3720 = vld [vmem:[#allocation2 + $0x1b8] sm:$0xff]
  %v3721 = vld [vmem:[#allocation2 + $0x1c8] sm:$0xff]
  %v3722 = vld [vmem:[#allocation2 + $0x1d0] sm:$0xff]
  %v3723 = vld [vmem:[#allocation2 + $0x1e0] sm:$0xff]
  %v3724 = vld [vmem:[#allocation2 + $0x1e8] sm:$0xff]
  %v3725 = vld [vmem:[#allocation2 + $0x1f8] sm:$0xff]
  %v3726 = vld [vmem:[#allocation2 + $0x200] sm:$0xff]
  %v3727 = vld [vmem:[#allocation2 + $0x210] sm:$0xff]
  %v3728 = vld [vmem:[#allocation2 + $0x218] sm:$0xff]
  %v3729 = vld [vmem:[#allocation2 + $0x228] sm:$0xff]
  %v3730 = vld [vmem:[#allocation2 + $0x230] sm:$0xff]
  %v3731 = vld [vmem:[#allocation2 + $0x240] sm:$0xff]
  %v3732 = vld [vmem:[#allocation2 + $0x248] sm:$0xff]
  %v3733 = vld [vmem:[#allocation2 + $0x258] sm:$0xff]
  %v3734 = vld [vmem:[#allocation2 + $0x260] sm:$0xff]
  %v3735 = vld [vmem:[#allocation2 + $0x270] sm:$0xff]
  %v3736 = vld [vmem:[#allocation2 + $0x278] sm:$0xff]
  %v3737 = vld [vmem:[#allocation2 + $0x288] sm:$0xff]
  %v3738 = vld [vmem:[#allocation2 + $0x290] sm:$0xff]
  %v3739 = vld [vmem:[#allocation2 + $0x2a0] sm:$0xff]
  %v3740 = vld [vmem:[#allocation2 + $0x2a8] sm:$0xff]
  %v3741 = vld [vmem:[#allocation2 + $0x2b8] sm:$0xff]
  %v3742 = vld [vmem:[#allocation2 + $0x2c0] sm:$0xff]
  %v3743 = vld [vmem:[#allocation2 + $0x2d0] sm:$0xff]
  %v3744 = vld [vmem:[#allocation2 + $0x2d8] sm:$0xff]
  %v3745 = vld [vmem:[#allocation2 + $0x2e8] sm:$0xff]
  %v3746 = vld [vmem:[#allocation2 + $0x2f0] sm:$0xff]
  %v3747 = vld [vmem:[#allocation2 + $0x300] sm:$0xff]
  %v3748 = vld [vmem:[#allocation2 + $0x308] sm:$0xff]
  %v3749 = vld [vmem:[#allocation2 + $0x318] sm:$0xff]
  %v3750 = vld [vmem:[#allocation2 + $0x320] sm:$0xff]
  %v3751 = vld [vmem:[#allocation2 + $0x330] sm:$0xff]
  %v3752 = vld [vmem:[#allocation2 + $0x338] sm:$0xff]
  %v3753 = vld [vmem:[#allocation2 + $0x348] sm:$0xff]
  %v3754 = vld [vmem:[#allocation2 + $0x350] sm:$0xff]
  %v3755 = vld [vmem:[%s5] sm:$0xff]
  %v3756 = vld [vmem:[%s5 + $0x8] sm:$0xff]
  %v3757 = vld [vmem:[%s5 + $0x10] sm:$0xff]
  %v3758 = vld [vmem:[%s5 + $0x18] sm:$0xff]
  %v3759 = vld [vmem:[%s5 + $0x20] sm:$0xff]
  %v3760 = vld [vmem:[%s5 + $0x28] sm:$0xff]
  %v3761 = vld [vmem:[%s5 + $0x30] sm:$0xff]
  %v3762 = vld [vmem:[%s5 + $0x38] sm:$0xff]
  %v3763 = vld [vmem:[%s5 + $0x40] sm:$0xff]
  %v3764 = vld [vmem:[%s5 + $0x48] sm:$0xff]
  %v3765 = vld [vmem:[%s5 + $0x50] sm:$0xff]
  %v3766 = vld [vmem:[%s5 + $0x58] sm:$0xff]
  %v3767 = vld [vmem:[%s5 + $0x60] sm:$0xff]
  %v3768 = vld [vmem:[%s5 + $0x68] sm:$0xff]
  %v3769 = vld [vmem:[%s5 + $0x70] sm:$0xff]
  %v3770 = vld [vmem:[%s5 + $0x78] sm:$0xff]
  %s3771 = scalar_lea.vmem %s5, 128
  %v3772 = vld [vmem:[%s3771] sm:$0xff]
  %v3773 = vld [vmem:[%s3771 + $0x8] sm:$0xff]
  %v3774 = vld [vmem:[%s3771 + $0x10] sm:$0xff]
  %v3775 = vld [vmem:[%s3771 + $0x18] sm:$0xff]
  %v3776 = vld [vmem:[%s3771 + $0x20] sm:$0xff]
  %v3777 = vld [vmem:[%s3771 + $0x28] sm:$0xff]
  %v3778 = vld [vmem:[%s3771 + $0x30] sm:$0xff]
  %v3779 = vld [vmem:[%s3771 + $0x38] sm:$0xff]
  %v3780 = vld [vmem:[%s3771 + $0x40] sm:$0xff]
  %v3781 = vld [vmem:[%s3771 + $0x48] sm:$0xff]
  %v3782 = vld [vmem:[%s3771 + $0x50] sm:$0xff]
  %v3783 = vld [vmem:[%s3771 + $0x58] sm:$0xff]
  %v3784 = vld [vmem:[%s3771 + $0x60] sm:$0xff]
  %v3785 = vld [vmem:[%s3771 + $0x68] sm:$0xff]
  %v3786 = vld [vmem:[%s3771 + $0x70] sm:$0xff]
  %v3787 = vld [vmem:[%s3771 + $0x78] sm:$0xff]
  %3788 = vmatpush.msra.mxu0 %v3787
  %3789 = vmatpush.msra.mxu0 %v3786
  %3790 = vmatpush.msra.mxu0 %v3785
  %3791 = vmatpush.msra.mxu0 %v3784
  %3792 = vmatpush.msra.mxu0 %v3783
  %3793 = vmatpush.msra.mxu0 %v3782
  %3794 = vmatpush.msra.mxu0 %v3781
  %3795 = vmatpush.msra.mxu0 %v3780
  %3796 = vmatpush.msra.mxu0 %v3779
  %3797 = vmatpush.msra.mxu0 %v3778
  %3798 = vmatpush.msra.mxu0 %v3777
  %3799 = vmatpush.msra.mxu0 %v3776
  %3800 = vmatpush.msra.mxu0 %v3775
  %3801 = vmatpush.msra.mxu0 %v3774
  %3802 = vmatpush.msra.mxu0 %v3773
  %3803 = vmatpush.msra.mxu0 %v3772
  %3804 = vmatmul.f32.gmra.mxu0 %v3685
  %v3805 = vpop.f32.mrf.mxu0
  %v3806 = vadd.f32 0.0, %v3805
  %3807 = vmatmul.f32.gmra.mxu0 %v3686
  %v3808 = vpop.f32.mrf.mxu0
  %v3809 = vadd.f32 0.0, %v3808
  %3810 = vmatmul.f32.gmra.mxu0 %v3687
  %v3811 = vpop.f32.mrf.mxu0
  %v3812 = vadd.f32 0.0, %v3811
  %3813 = vmatmul.f32.gmra.mxu0 %v3688
  %v3814 = vpop.f32.mrf.mxu0
  %v3815 = vadd.f32 0.0, %v3814
  %3816 = vmatmul.f32.gmra.mxu0 %v3689
  %v3817 = vpop.f32.mrf.mxu0
  %v3818 = vadd.f32 0.0, %v3817
  %3819 = vmatmul.f32.gmra.mxu0 %v3690
  %v3820 = vpop.f32.mrf.mxu0
  %v3821 = vadd.f32 0.0, %v3820
  %3822 = vmatmul.f32.gmra.mxu0 %v3691
  %v3823 = vpop.f32.mrf.mxu0
  %v3824 = vadd.f32 0.0, %v3823
  %3825 = vmatmul.f32.gmra.mxu0 %v3692
  %v3826 = vpop.f32.mrf.mxu0
  %v3827 = vadd.f32 0.0, %v3826
  %3828 = vmatmul.f32.gmra.mxu0 %v3693
  %v3829 = vpop.f32.mrf.mxu0
  %v3830 = vadd.f32 0.0, %v3829
  %3831 = vmatmul.f32.gmra.mxu0 %v3694
  %v3832 = vpop.f32.mrf.mxu0
  %v3833 = vadd.f32 0.0, %v3832
  %3834 = vmatmul.f32.gmra.mxu0 %v3695
  %v3835 = vpop.f32.mrf.mxu0
  %v3836 = vadd.f32 0.0, %v3835
  %3837 = vmatmul.f32.gmra.mxu0 %v3696
  %v3838 = vpop.f32.mrf.mxu0
  %v3839 = vadd.f32 0.0, %v3838
  %3840 = vmatmul.f32.gmra.mxu0 %v3697
  %v3841 = vpop.f32.mrf.mxu0
  %v3842 = vadd.f32 0.0, %v3841
  %3843 = vmatmul.f32.gmra.mxu0 %v3698
  %v3844 = vpop.f32.mrf.mxu0
  %v3845 = vadd.f32 0.0, %v3844
  %3846 = vmatmul.f32.gmra.mxu0 %v3699
  %v3847 = vpop.f32.mrf.mxu0
  %v3848 = vadd.f32 0.0, %v3847
  %3849 = vmatmul.f32.gmra.mxu0 %v3700
  %v3850 = vpop.f32.mrf.mxu0
  %v3851 = vadd.f32 0.0, %v3850
  %3852 = vmatmul.f32.gmra.mxu0 %v3701
  %v3853 = vpop.f32.mrf.mxu0
  %v3854 = vadd.f32 0.0, %v3853
  %3855 = vmatmul.f32.gmra.mxu0 %v3702
  %v3856 = vpop.f32.mrf.mxu0
  %v3857 = vadd.f32 0.0, %v3856
  %3858 = vmatmul.f32.gmra.mxu0 %v3703
  %v3859 = vpop.f32.mrf.mxu0
  %v3860 = vadd.f32 0.0, %v3859
  %3861 = vmatmul.f32.gmra.mxu0 %v3704
  %v3862 = vpop.f32.mrf.mxu0
  %v3863 = vadd.f32 0.0, %v3862
  %3864 = vmatmul.f32.gmra.mxu0 %v3705
  %v3865 = vpop.f32.mrf.mxu0
  %v3866 = vadd.f32 0.0, %v3865
  %3867 = vmatmul.f32.gmra.mxu0 %v3706
  %v3868 = vpop.f32.mrf.mxu0
  %v3869 = vadd.f32 0.0, %v3868
  %3870 = vmatmul.f32.gmra.mxu0 %v3707
  %v3871 = vpop.f32.mrf.mxu0
  %v3872 = vadd.f32 0.0, %v3871
  %3873 = vmatmul.f32.gmra.mxu0 %v3708
  %v3874 = vpop.f32.mrf.mxu0
  %v3875 = vadd.f32 0.0, %v3874
  %3876 = vmatmul.f32.gmra.mxu0 %v3709
  %v3877 = vpop.f32.mrf.mxu0
  %v3878 = vadd.f32 0.0, %v3877
  %3879 = vmatmul.f32.gmra.mxu0 %v3710
  %v3880 = vpop.f32.mrf.mxu0
  %v3881 = vadd.f32 0.0, %v3880
  %3882 = vmatmul.f32.gmra.mxu0 %v3711
  %v3883 = vpop.f32.mrf.mxu0
  %v3884 = vadd.f32 0.0, %v3883
  %3885 = vmatmul.f32.gmra.mxu0 %v3712
  %v3886 = vpop.f32.mrf.mxu0
  %v3887 = vadd.f32 0.0, %v3886
  %3888 = vmatmul.f32.gmra.mxu0 %v3713
  %v3889 = vpop.f32.mrf.mxu0
  %v3890 = vadd.f32 0.0, %v3889
  %3891 = vmatmul.f32.gmra.mxu0 %v3714
  %v3892 = vpop.f32.mrf.mxu0
  %v3893 = vadd.f32 0.0, %v3892
  %3894 = vmatmul.f32.gmra.mxu0 %v3715
  %v3895 = vpop.f32.mrf.mxu0
  %v3896 = vadd.f32 0.0, %v3895
  %3897 = vmatmul.f32.gmra.mxu0 %v3716
  %v3898 = vpop.f32.mrf.mxu0
  %v3899 = vadd.f32 0.0, %v3898
  %3900 = vmatmul.f32.gmra.mxu0 %v3721
  %v3901 = vpop.f32.mrf.mxu0
  %v3902 = vadd.f32 0.0, %v3901
  %3903 = vmatmul.f32.gmra.mxu0 %v3722
  %v3904 = vpop.f32.mrf.mxu0
  %v3905 = vadd.f32 0.0, %v3904
  %3906 = vmatmul.f32.gmra.mxu0 %v3723
  %v3907 = vpop.f32.mrf.mxu0
  %v3908 = vadd.f32 0.0, %v3907
  %3909 = vmatmul.f32.gmra.mxu0 %v3724
  %v3910 = vpop.f32.mrf.mxu0
  %v3911 = vadd.f32 0.0, %v3910
  %3912 = vmatmul.f32.gmra.mxu0 %v3725
  %v3913 = vpop.f32.mrf.mxu0
  %v3914 = vadd.f32 0.0, %v3913
  %3915 = vmatmul.f32.gmra.mxu0 %v3726
  %v3916 = vpop.f32.mrf.mxu0
  %v3917 = vadd.f32 0.0, %v3916
  %3918 = vmatmul.f32.gmra.mxu0 %v3727
  %v3919 = vpop.f32.mrf.mxu0
  %v3920 = vadd.f32 0.0, %v3919
  %3921 = vmatmul.f32.gmra.mxu0 %v3728
  %v3922 = vpop.f32.mrf.mxu0
  %v3923 = vadd.f32 0.0, %v3922
  %3924 = vmatmul.f32.gmra.mxu0 %v3729
  %v3925 = vpop.f32.mrf.mxu0
  %v3926 = vadd.f32 0.0, %v3925
  %3927 = vmatmul.f32.gmra.mxu0 %v3730
  %v3928 = vpop.f32.mrf.mxu0
  %v3929 = vadd.f32 0.0, %v3928
  %3930 = vmatmul.f32.gmra.mxu0 %v3731
  %v3931 = vpop.f32.mrf.mxu0
  %v3932 = vadd.f32 0.0, %v3931
  %3933 = vmatmul.f32.gmra.mxu0 %v3732
  %v3934 = vpop.f32.mrf.mxu0
  %v3935 = vadd.f32 0.0, %v3934
  %3936 = vmatmul.f32.gmra.mxu0 %v3733
  %v3937 = vpop.f32.mrf.mxu0
  %v3938 = vadd.f32 0.0, %v3937
  %3939 = vmatmul.f32.gmra.mxu0 %v3734
  %v3940 = vpop.f32.mrf.mxu0
  %v3941 = vadd.f32 0.0, %v3940
  %3942 = vmatmul.f32.gmra.mxu0 %v3735
  %v3943 = vpop.f32.mrf.mxu0
  %v3944 = vadd.f32 0.0, %v3943
  %3945 = vmatmul.f32.gmra.mxu0 %v3736
  %v3946 = vpop.f32.mrf.mxu0
  %v3947 = vadd.f32 0.0, %v3946
  %3948 = vmatmul.f32.gmra.mxu0 %v3737
  %v3949 = vpop.f32.mrf.mxu0
  %v3950 = vadd.f32 0.0, %v3949
  %3951 = vmatmul.f32.gmra.mxu0 %v3738
  %v3952 = vpop.f32.mrf.mxu0
  %v3953 = vadd.f32 0.0, %v3952
  %3954 = vmatmul.f32.gmra.mxu0 %v3739
  %v3955 = vpop.f32.mrf.mxu0
  %v3956 = vadd.f32 0.0, %v3955
  %3957 = vmatmul.f32.gmra.mxu0 %v3740
  %v3958 = vpop.f32.mrf.mxu0
  %v3959 = vadd.f32 0.0, %v3958
  %3960 = vmatmul.f32.gmra.mxu0 %v3741
  %v3961 = vpop.f32.mrf.mxu0
  %v3962 = vadd.f32 0.0, %v3961
  %3963 = vmatmul.f32.gmra.mxu0 %v3742
  %v3964 = vpop.f32.mrf.mxu0
  %v3965 = vadd.f32 0.0, %v3964
  %3966 = vmatmul.f32.gmra.mxu0 %v3743
  %v3967 = vpop.f32.mrf.mxu0
  %v3968 = vadd.f32 0.0, %v3967
  %3969 = vmatmul.f32.gmra.mxu0 %v3744
  %v3970 = vpop.f32.mrf.mxu0
  %v3971 = vadd.f32 0.0, %v3970
  %3972 = vmatmul.f32.gmra.mxu0 %v3745
  %v3973 = vpop.f32.mrf.mxu0
  %v3974 = vadd.f32 0.0, %v3973
  %3975 = vmatmul.f32.gmra.mxu0 %v3746
  %v3976 = vpop.f32.mrf.mxu0
  %v3977 = vadd.f32 0.0, %v3976
  %3978 = vmatmul.f32.gmra.mxu0 %v3747
  %v3979 = vpop.f32.mrf.mxu0
  %v3980 = vadd.f32 0.0, %v3979
  %3981 = vmatmul.f32.gmra.mxu0 %v3748
  %v3982 = vpop.f32.mrf.mxu0
  %v3983 = vadd.f32 0.0, %v3982
  %3984 = vmatmul.f32.gmra.mxu0 %v3749
  %v3985 = vpop.f32.mrf.mxu0
  %v3986 = vadd.f32 0.0, %v3985
  %3987 = vmatmul.f32.gmra.mxu0 %v3750
  %v3988 = vpop.f32.mrf.mxu0
  %v3989 = vadd.f32 0.0, %v3988
  %3990 = vmatmul.f32.gmra.mxu0 %v3751
  %v3991 = vpop.f32.mrf.mxu0
  %v3992 = vadd.f32 0.0, %v3991
  %3993 = vmatmul.f32.gmra.mxu0 %v3752
  %v3994 = vpop.f32.mrf.mxu0
  %v3995 = vadd.f32 0.0, %v3994
  %3996 = vdwg.mxu0
  %3997 = vmatpush.msra.mxu0 %v3770
  %3998 = vmatpush.msra.mxu0 %v3769
  %3999 = vmatpush.msra.mxu0 %v3768
  %4000 = vmatpush.msra.mxu0 %v3767
  %4001 = vmatpush.msra.mxu0 %v3766
  %4002 = vmatpush.msra.mxu0 %v3765
  %4003 = vmatpush.msra.mxu0 %v3764
  %4004 = vmatpush.msra.mxu0 %v3763
  %4005 = vmatpush.msra.mxu0 %v3762
  %4006 = vmatpush.msra.mxu0 %v3761
  %4007 = vmatpush.msra.mxu0 %v3760
  %4008 = vmatpush.msra.mxu0 %v3759
  %4009 = vmatpush.msra.mxu0 %v3758
  %4010 = vmatpush.msra.mxu0 %v3757
  %4011 = vmatpush.msra.mxu0 %v3756
  %4012 = vmatpush.msra.mxu0 %v3755
  %4013 = vmatmul.f32.gmra.mxu0 %v3683
  %v4014 = vpop.f32.mrf.mxu0
  %v4015 = vadd.f32 %v3806, %v4014
  %4016 = vmatmul.f32.gmra.mxu0 %v3684
  %v4017 = vpop.f32.mrf.mxu0
  %v4018 = vadd.f32 %v3809, %v4017
  %4019 = vmatmul.f32.gmra.mxu0 %v3685
  %v4020 = vpop.f32.mrf.mxu0
  %v4021 = vadd.f32 %v3812, %v4020
  %4022 = vmatmul.f32.gmra.mxu0 %v3686
  %v4023 = vpop.f32.mrf.mxu0
  %v4024 = vadd.f32 %v3815, %v4023
  %4025 = vmatmul.f32.gmra.mxu0 %v3687
  %v4026 = vpop.f32.mrf.mxu0
  %v4027 = vadd.f32 %v3818, %v4026
  %4028 = vmatmul.f32.gmra.mxu0 %v3688
  %v4029 = vpop.f32.mrf.mxu0
  %v4030 = vadd.f32 %v3821, %v4029
  %4031 = vmatmul.f32.gmra.mxu0 %v3689
  %v4032 = vpop.f32.mrf.mxu0
  %v4033 = vadd.f32 %v3824, %v4032
  %4034 = vmatmul.f32.gmra.mxu0 %v3690
  %v4035 = vpop.f32.mrf.mxu0
  %v4036 = vadd.f32 %v3827, %v4035
  %4037 = vmatmul.f32.gmra.mxu0 %v3691
  %v4038 = vpop.f32.mrf.mxu0
  %v4039 = vadd.f32 %v3830, %v4038
  %4040 = vmatmul.f32.gmra.mxu0 %v3692
  %v4041 = vpop.f32.mrf.mxu0
  %v4042 = vadd.f32 %v3833, %v4041
  %4043 = vmatmul.f32.gmra.mxu0 %v3693
  %v4044 = vpop.f32.mrf.mxu0
  %v4045 = vadd.f32 %v3836, %v4044
  %4046 = vmatmul.f32.gmra.mxu0 %v3694
  %v4047 = vpop.f32.mrf.mxu0
  %v4048 = vadd.f32 %v3839, %v4047
  %4049 = vmatmul.f32.gmra.mxu0 %v3695
  %v4050 = vpop.f32.mrf.mxu0
  %v4051 = vadd.f32 %v3842, %v4050
  %4052 = vmatmul.f32.gmra.mxu0 %v3696
  %v4053 = vpop.f32.mrf.mxu0
  %v4054 = vadd.f32 %v3845, %v4053
  %4055 = vmatmul.f32.gmra.mxu0 %v3697
  %v4056 = vpop.f32.mrf.mxu0
  %v4057 = vadd.f32 %v3848, %v4056
  %4058 = vmatmul.f32.gmra.mxu0 %v3698
  %v4059 = vpop.f32.mrf.mxu0
  %v4060 = vadd.f32 %v3851, %v4059
  %4061 = vmatmul.f32.gmra.mxu0 %v3699
  %v4062 = vpop.f32.mrf.mxu0
  %v4063 = vadd.f32 %v3854, %v4062
  %4064 = vmatmul.f32.gmra.mxu0 %v3700
  %v4065 = vpop.f32.mrf.mxu0
  %v4066 = vadd.f32 %v3857, %v4065
  %4067 = vmatmul.f32.gmra.mxu0 %v3701
  %v4068 = vpop.f32.mrf.mxu0
  %v4069 = vadd.f32 %v3860, %v4068
  %4070 = vmatmul.f32.gmra.mxu0 %v3702
  %v4071 = vpop.f32.mrf.mxu0
  %v4072 = vadd.f32 %v3863, %v4071
  %4073 = vmatmul.f32.gmra.mxu0 %v3703
  %v4074 = vpop.f32.mrf.mxu0
  %v4075 = vadd.f32 %v3866, %v4074
  %4076 = vmatmul.f32.gmra.mxu0 %v3704
  %v4077 = vpop.f32.mrf.mxu0
  %v4078 = vadd.f32 %v3869, %v4077
  %4079 = vmatmul.f32.gmra.mxu0 %v3705
  %v4080 = vpop.f32.mrf.mxu0
  %v4081 = vadd.f32 %v3872, %v4080
  %4082 = vmatmul.f32.gmra.mxu0 %v3706
  %v4083 = vpop.f32.mrf.mxu0
  %v4084 = vadd.f32 %v3875, %v4083
  %4085 = vmatmul.f32.gmra.mxu0 %v3707
  %v4086 = vpop.f32.mrf.mxu0
  %v4087 = vadd.f32 %v3878, %v4086
  %4088 = vmatmul.f32.gmra.mxu0 %v3708
  %v4089 = vpop.f32.mrf.mxu0
  %v4090 = vadd.f32 %v3881, %v4089
  %4091 = vmatmul.f32.gmra.mxu0 %v3709
  %v4092 = vpop.f32.mrf.mxu0
  %v4093 = vadd.f32 %v3884, %v4092
  %4094 = vmatmul.f32.gmra.mxu0 %v3710
  %v4095 = vpop.f32.mrf.mxu0
  %v4096 = vadd.f32 %v3887, %v4095
  %4097 = vmatmul.f32.gmra.mxu0 %v3711
  %v4098 = vpop.f32.mrf.mxu0
  %v4099 = vadd.f32 %v3890, %v4098
  %4100 = vmatmul.f32.gmra.mxu0 %v3712
  %v4101 = vpop.f32.mrf.mxu0
  %v4102 = vadd.f32 %v3893, %v4101
  %4103 = vmatmul.f32.gmra.mxu0 %v3713
  %v4104 = vpop.f32.mrf.mxu0
  %v4105 = vadd.f32 %v3896, %v4104
  %4106 = vmatmul.f32.gmra.mxu0 %v3714
  %v4107 = vpop.f32.mrf.mxu0
  %v4108 = vadd.f32 %v3899, %v4107
  %4109 = vmatmul.f32.gmra.mxu0 %v3719
  %v4110 = vpop.f32.mrf.mxu0
  %v4111 = vadd.f32 %v3902, %v4110
  %4112 = vmatmul.f32.gmra.mxu0 %v3720
  %v4113 = vpop.f32.mrf.mxu0
  %v4114 = vadd.f32 %v3905, %v4113
  %4115 = vmatmul.f32.gmra.mxu0 %v3721
  %v4116 = vpop.f32.mrf.mxu0
  %v4117 = vadd.f32 %v3908, %v4116
  %4118 = vmatmul.f32.gmra.mxu0 %v3722
  %v4119 = vpop.f32.mrf.mxu0
  %v4120 = vadd.f32 %v3911, %v4119
  %4121 = vmatmul.f32.gmra.mxu0 %v3723
  %v4122 = vpop.f32.mrf.mxu0
  %v4123 = vadd.f32 %v3914, %v4122
  %4124 = vmatmul.f32.gmra.mxu0 %v3724
  %v4125 = vpop.f32.mrf.mxu0
  %v4126 = vadd.f32 %v3917, %v4125
  %4127 = vmatmul.f32.gmra.mxu0 %v3725
  %v4128 = vpop.f32.mrf.mxu0
  %v4129 = vadd.f32 %v3920, %v4128
  %4130 = vmatmul.f32.gmra.mxu0 %v3726
  %v4131 = vpop.f32.mrf.mxu0
  %v4132 = vadd.f32 %v3923, %v4131
  %4133 = vmatmul.f32.gmra.mxu0 %v3727
  %v4134 = vpop.f32.mrf.mxu0
  %v4135 = vadd.f32 %v3926, %v4134
  %4136 = vmatmul.f32.gmra.mxu0 %v3728
  %v4137 = vpop.f32.mrf.mxu0
  %v4138 = vadd.f32 %v3929, %v4137
  %4139 = vmatmul.f32.gmra.mxu0 %v3729
  %v4140 = vpop.f32.mrf.mxu0
  %v4141 = vadd.f32 %v3932, %v4140
  %4142 = vmatmul.f32.gmra.mxu0 %v3730
  %v4143 = vpop.f32.mrf.mxu0
  %v4144 = vadd.f32 %v3935, %v4143
  %4145 = vmatmul.f32.gmra.mxu0 %v3731
  %v4146 = vpop.f32.mrf.mxu0
  %v4147 = vadd.f32 %v3938, %v4146
  %4148 = vmatmul.f32.gmra.mxu0 %v3732
  %v4149 = vpop.f32.mrf.mxu0
  %v4150 = vadd.f32 %v3941, %v4149
  %4151 = vmatmul.f32.gmra.mxu0 %v3733
  %v4152 = vpop.f32.mrf.mxu0
  %v4153 = vadd.f32 %v3944, %v4152
  %4154 = vmatmul.f32.gmra.mxu0 %v3734
  %v4155 = vpop.f32.mrf.mxu0
  %v4156 = vadd.f32 %v3947, %v4155
  %4157 = vmatmul.f32.gmra.mxu0 %v3735
  %v4158 = vpop.f32.mrf.mxu0
  %v4159 = vadd.f32 %v3950, %v4158
  %4160 = vmatmul.f32.gmra.mxu0 %v3736
  %v4161 = vpop.f32.mrf.mxu0
  %v4162 = vadd.f32 %v3953, %v4161
  %4163 = vmatmul.f32.gmra.mxu0 %v3737
  %v4164 = vpop.f32.mrf.mxu0
  %v4165 = vadd.f32 %v3956, %v4164
  %4166 = vmatmul.f32.gmra.mxu0 %v3738
  %v4167 = vpop.f32.mrf.mxu0
  %v4168 = vadd.f32 %v3959, %v4167
  %4169 = vmatmul.f32.gmra.mxu0 %v3739
  %v4170 = vpop.f32.mrf.mxu0
  %v4171 = vadd.f32 %v3962, %v4170
  %4172 = vmatmul.f32.gmra.mxu0 %v3740
  %v4173 = vpop.f32.mrf.mxu0
  %v4174 = vadd.f32 %v3965, %v4173
  %4175 = vmatmul.f32.gmra.mxu0 %v3741
  %v4176 = vpop.f32.mrf.mxu0
  %v4177 = vadd.f32 %v3968, %v4176
  %4178 = vmatmul.f32.gmra.mxu0 %v3742
  %v4179 = vpop.f32.mrf.mxu0
  %v4180 = vadd.f32 %v3971, %v4179
  %4181 = vmatmul.f32.gmra.mxu0 %v3743
  %v4182 = vpop.f32.mrf.mxu0
  %v4183 = vadd.f32 %v3974, %v4182
  %4184 = vmatmul.f32.gmra.mxu0 %v3744
  %v4185 = vpop.f32.mrf.mxu0
  %v4186 = vadd.f32 %v3977, %v4185
  %4187 = vmatmul.f32.gmra.mxu0 %v3745
  %v4188 = vpop.f32.mrf.mxu0
  %v4189 = vadd.f32 %v3980, %v4188
  %4190 = vmatmul.f32.gmra.mxu0 %v3746
  %v4191 = vpop.f32.mrf.mxu0
  %v4192 = vadd.f32 %v3983, %v4191
  %4193 = vmatmul.f32.gmra.mxu0 %v3747
  %v4194 = vpop.f32.mrf.mxu0
  %v4195 = vadd.f32 %v3986, %v4194
  %4196 = vmatmul.f32.gmra.mxu0 %v3748
  %v4197 = vpop.f32.mrf.mxu0
  %v4198 = vadd.f32 %v3989, %v4197
  %4199 = vmatmul.f32.gmra.mxu0 %v3749
  %v4200 = vpop.f32.mrf.mxu0
  %v4201 = vadd.f32 %v3992, %v4200
  %4202 = vmatmul.f32.gmra.mxu0 %v3750
  %v4203 = vpop.f32.mrf.mxu0
  %v4204 = vadd.f32 %v3995, %v4203
  %4205 = vdwg.mxu0
  %s4206 = scalar_lea.vmem %s5, 256
  %v4207 = vld [vmem:[%s4206] sm:$0xff]
  %v4208 = vld [vmem:[%s4206 + $0x8] sm:$0xff]
  %v4209 = vld [vmem:[%s4206 + $0x10] sm:$0xff]
  %v4210 = vld [vmem:[%s4206 + $0x18] sm:$0xff]
  %v4211 = vld [vmem:[%s4206 + $0x20] sm:$0xff]
  %v4212 = vld [vmem:[%s4206 + $0x28] sm:$0xff]
  %v4213 = vld [vmem:[%s4206 + $0x30] sm:$0xff]
  %v4214 = vld [vmem:[%s4206 + $0x38] sm:$0xff]
  %v4215 = vld [vmem:[%s4206 + $0x40] sm:$0xff]
  %v4216 = vld [vmem:[%s4206 + $0x48] sm:$0xff]
  %v4217 = vld [vmem:[%s4206 + $0x50] sm:$0xff]
  %v4218 = vld [vmem:[%s4206 + $0x58] sm:$0xff]
  %v4219 = vld [vmem:[%s4206 + $0x60] sm:$0xff]
  %v4220 = vld [vmem:[%s4206 + $0x68] sm:$0xff]
  %v4221 = vld [vmem:[%s4206 + $0x70] sm:$0xff]
  %v4222 = vld [vmem:[%s4206 + $0x78] sm:$0xff]
  %4223 = vmatpush.msra.mxu0 %v4222
  %4224 = vmatpush.msra.mxu0 %v4221
  %4225 = vmatpush.msra.mxu0 %v4220
  %4226 = vmatpush.msra.mxu0 %v4219
  %4227 = vmatpush.msra.mxu0 %v4218
  %4228 = vmatpush.msra.mxu0 %v4217
  %4229 = vmatpush.msra.mxu0 %v4216
  %4230 = vmatpush.msra.mxu0 %v4215
  %4231 = vmatpush.msra.mxu0 %v4214
  %4232 = vmatpush.msra.mxu0 %v4213
  %4233 = vmatpush.msra.mxu0 %v4212
  %4234 = vmatpush.msra.mxu0 %v4211
  %4235 = vmatpush.msra.mxu0 %v4210
  %4236 = vmatpush.msra.mxu0 %v4209
  %4237 = vmatpush.msra.mxu0 %v4208
  %4238 = vmatpush.msra.mxu0 %v4207
  %4239 = vmatmul.f32.gmra.mxu0 %v3687
  %v4240 = vpop.f32.mrf.mxu0
  %v4241 = vadd.f32 0.0, %v4240
  %4242 = vmatmul.f32.gmra.mxu0 %v3688
  %v4243 = vpop.f32.mrf.mxu0
  %v4244 = vadd.f32 0.0, %v4243
  %4245 = vmatmul.f32.gmra.mxu0 %v3689
  %v4246 = vpop.f32.mrf.mxu0
  %v4247 = vadd.f32 0.0, %v4246
  %4248 = vmatmul.f32.gmra.mxu0 %v3690
  %v4249 = vpop.f32.mrf.mxu0
  %v4250 = vadd.f32 0.0, %v4249
  %4251 = vmatmul.f32.gmra.mxu0 %v3691
  %v4252 = vpop.f32.mrf.mxu0
  %v4253 = vadd.f32 0.0, %v4252
  %4254 = vmatmul.f32.gmra.mxu0 %v3692
  %v4255 = vpop.f32.mrf.mxu0
  %v4256 = vadd.f32 0.0, %v4255
  %4257 = vmatmul.f32.gmra.mxu0 %v3693
  %v4258 = vpop.f32.mrf.mxu0
  %v4259 = vadd.f32 0.0, %v4258
  %4260 = vmatmul.f32.gmra.mxu0 %v3694
  %v4261 = vpop.f32.mrf.mxu0
  %v4262 = vadd.f32 0.0, %v4261
  %4263 = vmatmul.f32.gmra.mxu0 %v3695
  %v4264 = vpop.f32.mrf.mxu0
  %v4265 = vadd.f32 0.0, %v4264
  %4266 = vmatmul.f32.gmra.mxu0 %v3696
  %v4267 = vpop.f32.mrf.mxu0
  %v4268 = vadd.f32 0.0, %v4267
  %4269 = vmatmul.f32.gmra.mxu0 %v3697
  %v4270 = vpop.f32.mrf.mxu0
  %v4271 = vadd.f32 0.0, %v4270
  %4272 = vmatmul.f32.gmra.mxu0 %v3698
  %v4273 = vpop.f32.mrf.mxu0
  %v4274 = vadd.f32 0.0, %v4273
  %4275 = vmatmul.f32.gmra.mxu0 %v3699
  %v4276 = vpop.f32.mrf.mxu0
  %v4277 = vadd.f32 0.0, %v4276
  %4278 = vmatmul.f32.gmra.mxu0 %v3700
  %v4279 = vpop.f32.mrf.mxu0
  %v4280 = vadd.f32 0.0, %v4279
  %4281 = vmatmul.f32.gmra.mxu0 %v3701
  %v4282 = vpop.f32.mrf.mxu0
  %v4283 = vadd.f32 0.0, %v4282
  %4284 = vmatmul.f32.gmra.mxu0 %v3702
  %v4285 = vpop.f32.mrf.mxu0
  %v4286 = vadd.f32 0.0, %v4285
  %4287 = vmatmul.f32.gmra.mxu0 %v3703
  %v4288 = vpop.f32.mrf.mxu0
  %v4289 = vadd.f32 0.0, %v4288
  %4290 = vmatmul.f32.gmra.mxu0 %v3704
  %v4291 = vpop.f32.mrf.mxu0
  %v4292 = vadd.f32 0.0, %v4291
  %4293 = vmatmul.f32.gmra.mxu0 %v3705
  %v4294 = vpop.f32.mrf.mxu0
  %v4295 = vadd.f32 0.0, %v4294
  %4296 = vmatmul.f32.gmra.mxu0 %v3706
  %v4297 = vpop.f32.mrf.mxu0
  %v4298 = vadd.f32 0.0, %v4297
  %4299 = vmatmul.f32.gmra.mxu0 %v3707
  %v4300 = vpop.f32.mrf.mxu0
  %v4301 = vadd.f32 0.0, %v4300
  %4302 = vmatmul.f32.gmra.mxu0 %v3708
  %v4303 = vpop.f32.mrf.mxu0
  %v4304 = vadd.f32 0.0, %v4303
  %4305 = vmatmul.f32.gmra.mxu0 %v3709
  %v4306 = vpop.f32.mrf.mxu0
  %v4307 = vadd.f32 0.0, %v4306
  %4308 = vmatmul.f32.gmra.mxu0 %v3710
  %v4309 = vpop.f32.mrf.mxu0
  %v4310 = vadd.f32 0.0, %v4309
  %4311 = vmatmul.f32.gmra.mxu0 %v3711
  %v4312 = vpop.f32.mrf.mxu0
  %v4313 = vadd.f32 0.0, %v4312
  %4314 = vmatmul.f32.gmra.mxu0 %v3712
  %v4315 = vpop.f32.mrf.mxu0
  %v4316 = vadd.f32 0.0, %v4315
  %4317 = vmatmul.f32.gmra.mxu0 %v3713
  %v4318 = vpop.f32.mrf.mxu0
  %v4319 = vadd.f32 0.0, %v4318
  %4320 = vmatmul.f32.gmra.mxu0 %v3714
  %v4321 = vpop.f32.mrf.mxu0
  %v4322 = vadd.f32 0.0, %v4321
  %4323 = vmatmul.f32.gmra.mxu0 %v3715
  %v4324 = vpop.f32.mrf.mxu0
  %v4325 = vadd.f32 0.0, %v4324
  %4326 = vmatmul.f32.gmra.mxu0 %v3716
  %v4327 = vpop.f32.mrf.mxu0
  %v4328 = vadd.f32 0.0, %v4327
  %4329 = vmatmul.f32.gmra.mxu0 %v3717
  %v4330 = vpop.f32.mrf.mxu0
  %v4331 = vadd.f32 0.0, %v4330
  %4332 = vmatmul.f32.gmra.mxu0 %v3718
  %v4333 = vpop.f32.mrf.mxu0
  %v4334 = vadd.f32 0.0, %v4333
  %4335 = vmatmul.f32.gmra.mxu0 %v3723
  %v4336 = vpop.f32.mrf.mxu0
  %v4337 = vadd.f32 0.0, %v4336
  %4338 = vmatmul.f32.gmra.mxu0 %v3724
  %v4339 = vpop.f32.mrf.mxu0
  %v4340 = vadd.f32 0.0, %v4339
  %4341 = vmatmul.f32.gmra.mxu0 %v3725
  %v4342 = vpop.f32.mrf.mxu0
  %v4343 = vadd.f32 0.0, %v4342
  %4344 = vmatmul.f32.gmra.mxu0 %v3726
  %v4345 = vpop.f32.mrf.mxu0
  %v4346 = vadd.f32 0.0, %v4345
  %4347 = vmatmul.f32.gmra.mxu0 %v3727
  %v4348 = vpop.f32.mrf.mxu0
  %v4349 = vadd.f32 0.0, %v4348
  %4350 = vmatmul.f32.gmra.mxu0 %v3728
  %v4351 = vpop.f32.mrf.mxu0
  %v4352 = vadd.f32 0.0, %v4351
  %4353 = vmatmul.f32.gmra.mxu0 %v3729
  %v4354 = vpop.f32.mrf.mxu0
  %v4355 = vadd.f32 0.0, %v4354
  %4356 = vmatmul.f32.gmra.mxu0 %v3730
  %v4357 = vpop.f32.mrf.mxu0
  %v4358 = vadd.f32 0.0, %v4357
  %4359 = vmatmul.f32.gmra.mxu0 %v3731
  %v4360 = vpop.f32.mrf.mxu0
  %v4361 = vadd.f32 0.0, %v4360
  %4362 = vmatmul.f32.gmra.mxu0 %v3732
  %v4363 = vpop.f32.mrf.mxu0
  %v4364 = vadd.f32 0.0, %v4363
  %4365 = vmatmul.f32.gmra.mxu0 %v3733
  %v4366 = vpop.f32.mrf.mxu0
  %v4367 = vadd.f32 0.0, %v4366
  %4368 = vmatmul.f32.gmra.mxu0 %v3734
  %v4369 = vpop.f32.mrf.mxu0
  %v4370 = vadd.f32 0.0, %v4369
  %4371 = vmatmul.f32.gmra.mxu0 %v3735
  %v4372 = vpop.f32.mrf.mxu0
  %v4373 = vadd.f32 0.0, %v4372
  %4374 = vmatmul.f32.gmra.mxu0 %v3736
  %v4375 = vpop.f32.mrf.mxu0
  %v4376 = vadd.f32 0.0, %v4375
  %4377 = vmatmul.f32.gmra.mxu0 %v3737
  %v4378 = vpop.f32.mrf.mxu0
  %v4379 = vadd.f32 0.0, %v4378
  %4380 = vmatmul.f32.gmra.mxu0 %v3738
  %v4381 = vpop.f32.mrf.mxu0
  %v4382 = vadd.f32 0.0, %v4381
  %4383 = vmatmul.f32.gmra.mxu0 %v3739
  %v4384 = vpop.f32.mrf.mxu0
  %v4385 = vadd.f32 0.0, %v4384
  %4386 = vmatmul.f32.gmra.mxu0 %v3740
  %v4387 = vpop.f32.mrf.mxu0
  %v4388 = vadd.f32 0.0, %v4387
  %4389 = vmatmul.f32.gmra.mxu0 %v3741
  %v4390 = vpop.f32.mrf.mxu0
  %v4391 = vadd.f32 0.0, %v4390
  %4392 = vmatmul.f32.gmra.mxu0 %v3742
  %v4393 = vpop.f32.mrf.mxu0
  %v4394 = vadd.f32 0.0, %v4393
  %4395 = vmatmul.f32.gmra.mxu0 %v3743
  %v4396 = vpop.f32.mrf.mxu0
  %v4397 = vadd.f32 0.0, %v4396
  %4398 = vmatmul.f32.gmra.mxu0 %v3744
  %v4399 = vpop.f32.mrf.mxu0
  %v4400 = vadd.f32 0.0, %v4399
  %4401 = vmatmul.f32.gmra.mxu0 %v3745
  %v4402 = vpop.f32.mrf.mxu0
  %v4403 = vadd.f32 0.0, %v4402
  %4404 = vmatmul.f32.gmra.mxu0 %v3746
  %v4405 = vpop.f32.mrf.mxu0
  %v4406 = vadd.f32 0.0, %v4405
  %4407 = vmatmul.f32.gmra.mxu0 %v3747
  %v4408 = vpop.f32.mrf.mxu0
  %v4409 = vadd.f32 0.0, %v4408
  %4410 = vmatmul.f32.gmra.mxu0 %v3748
  %v4411 = vpop.f32.mrf.mxu0
  %v4412 = vadd.f32 0.0, %v4411
  %4413 = vmatmul.f32.gmra.mxu0 %v3749
  %v4414 = vpop.f32.mrf.mxu0
  %v4415 = vadd.f32 0.0, %v4414
  %4416 = vmatmul.f32.gmra.mxu0 %v3750
  %v4417 = vpop.f32.mrf.mxu0
  %v4418 = vadd.f32 0.0, %v4417
  %4419 = vmatmul.f32.gmra.mxu0 %v3751
  %v4420 = vpop.f32.mrf.mxu0
  %v4421 = vadd.f32 0.0, %v4420
  %4422 = vmatmul.f32.gmra.mxu0 %v3752
  %v4423 = vpop.f32.mrf.mxu0
  %v4424 = vadd.f32 0.0, %v4423
  %4425 = vmatmul.f32.gmra.mxu0 %v3753
  %v4426 = vpop.f32.mrf.mxu0
  %v4427 = vadd.f32 0.0, %v4426
  %4428 = vmatmul.f32.gmra.mxu0 %v3754
  %v4429 = vpop.f32.mrf.mxu0
  %v4430 = vadd.f32 0.0, %v4429
  %4431 = vdwg.mxu0
  %v4432 = vadd.f32 %v4015, %v4241
  %v4433 = vadd.f32 %v4018, %v4244
  %v4434 = vadd.f32 %v4021, %v4247
  %v4435 = vadd.f32 %v4024, %v4250
  %v4436 = vadd.f32 %v4027, %v4253
  %v4437 = vadd.f32 %v4030, %v4256
  %v4438 = vadd.f32 %v4033, %v4259
  %v4439 = vadd.f32 %v4036, %v4262
  %v4440 = vadd.f32 %v4039, %v4265
  %v4441 = vadd.f32 %v4042, %v4268
  %v4442 = vadd.f32 %v4045, %v4271
  %v4443 = vadd.f32 %v4048, %v4274
  %v4444 = vadd.f32 %v4051, %v4277
  %v4445 = vadd.f32 %v4054, %v4280
  %v4446 = vadd.f32 %v4057, %v4283
  %v4447 = vadd.f32 %v4060, %v4286
  %v4448 = vadd.f32 %v4063, %v4289
  %v4449 = vadd.f32 %v4066, %v4292
  %v4450 = vadd.f32 %v4069, %v4295
  %v4451 = vadd.f32 %v4072, %v4298
  %v4452 = vadd.f32 %v4075, %v4301
  %v4453 = vadd.f32 %v4078, %v4304
  %v4454 = vadd.f32 %v4081, %v4307
  %v4455 = vadd.f32 %v4084, %v4310
  %v4456 = vadd.f32 %v4087, %v4313
  %v4457 = vadd.f32 %v4090, %v4316
  %v4458 = vadd.f32 %v4093, %v4319
  %v4459 = vadd.f32 %v4096, %v4322
  %v4460 = vadd.f32 %v4099, %v4325
  %v4461 = vadd.f32 %v4102, %v4328
  %v4462 = vadd.f32 %v4105, %v4331
  %v4463 = vadd.f32 %v4108, %v4334
  %v4464 = vadd.f32 %v4111, %v4337
  %v4465 = vadd.f32 %v4114, %v4340
  %v4466 = vadd.f32 %v4117, %v4343
  %v4467 = vadd.f32 %v4120, %v4346
  %v4468 = vadd.f32 %v4123, %v4349
  %v4469 = vadd.f32 %v4126, %v4352
  %v4470 = vadd.f32 %v4129, %v4355
  %v4471 = vadd.f32 %v4132, %v4358
  %v4472 = vadd.f32 %v4135, %v4361
  %v4473 = vadd.f32 %v4138, %v4364
  %v4474 = vadd.f32 %v4141, %v4367
  %v4475 = vadd.f32 %v4144, %v4370
  %v4476 = vadd.f32 %v4147, %v4373
  %v4477 = vadd.f32 %v4150, %v4376
  %v4478 = vadd.f32 %v4153, %v4379
  %v4479 = vadd.f32 %v4156, %v4382
  %v4480 = vadd.f32 %v4159, %v4385
  %v4481 = vadd.f32 %v4162, %v4388
  %v4482 = vadd.f32 %v4165, %v4391
  %v4483 = vadd.f32 %v4168, %v4394
  %v4484 = vadd.f32 %v4171, %v4397
  %v4485 = vadd.f32 %v4174, %v4400
  %v4486 = vadd.f32 %v4177, %v4403
  %v4487 = vadd.f32 %v4180, %v4406
  %v4488 = vadd.f32 %v4183, %v4409
  %v4489 = vadd.f32 %v4186, %v4412
  %v4490 = vadd.f32 %v4189, %v4415
  %v4491 = vadd.f32 %v4192, %v4418
  %v4492 = vadd.f32 %v4195, %v4421
  %v4493 = vadd.f32 %v4198, %v4424
  %v4494 = vadd.f32 %v4201, %v4427
  %v4495 = vadd.f32 %v4204, %v4430
  %v4496 = vld [vmem:[#allocation2 + $0x1] sm:$0xff]
  %v4497 = vld [vmem:[#allocation2 + $0x9] sm:$0xff]
  %v4498 = vld [vmem:[#allocation2 + $0x19] sm:$0xff]
  %v4499 = vld [vmem:[#allocation2 + $0x21] sm:$0xff]
  %v4500 = vld [vmem:[#allocation2 + $0x31] sm:$0xff]
  %v4501 = vld [vmem:[#allocation2 + $0x39] sm:$0xff]
  %v4502 = vld [vmem:[#allocation2 + $0x49] sm:$0xff]
  %v4503 = vld [vmem:[#allocation2 + $0x51] sm:$0xff]
  %v4504 = vld [vmem:[#allocation2 + $0x61] sm:$0xff]
  %v4505 = vld [vmem:[#allocation2 + $0x69] sm:$0xff]
  %v4506 = vld [vmem:[#allocation2 + $0x79] sm:$0xff]
  %v4507 = vld [vmem:[#allocation2 + $0x81] sm:$0xff]
  %v4508 = vld [vmem:[#allocation2 + $0x91] sm:$0xff]
  %v4509 = vld [vmem:[#allocation2 + $0x99] sm:$0xff]
  %v4510 = vld [vmem:[#allocation2 + $0xa9] sm:$0xff]
  %v4511 = vld [vmem:[#allocation2 + $0xb1] sm:$0xff]
  %v4512 = vld [vmem:[#allocation2 + $0xc1] sm:$0xff]
  %v4513 = vld [vmem:[#allocation2 + $0xc9] sm:$0xff]
  %v4514 = vld [vmem:[#allocation2 + $0xd9] sm:$0xff]
  %v4515 = vld [vmem:[#allocation2 + $0xe1] sm:$0xff]
  %v4516 = vld [vmem:[#allocation2 + $0xf1] sm:$0xff]
  %v4517 = vld [vmem:[#allocation2 + $0xf9] sm:$0xff]
  %v4518 = vld [vmem:[#allocation2 + $0x109] sm:$0xff]
  %v4519 = vld [vmem:[#allocation2 + $0x111] sm:$0xff]
  %v4520 = vld [vmem:[#allocation2 + $0x121] sm:$0xff]
  %v4521 = vld [vmem:[#allocation2 + $0x129] sm:$0xff]
  %v4522 = vld [vmem:[#allocation2 + $0x139] sm:$0xff]
  %v4523 = vld [vmem:[#allocation2 + $0x141] sm:$0xff]
  %v4524 = vld [vmem:[#allocation2 + $0x151] sm:$0xff]
  %v4525 = vld [vmem:[#allocation2 + $0x159] sm:$0xff]
  %v4526 = vld [vmem:[#allocation2 + $0x169] sm:$0xff]
  %v4527 = vld [vmem:[#allocation2 + $0x171] sm:$0xff]
  %v4528 = vld [vmem:[#allocation2 + $0x181] sm:$0xff]
  %v4529 = vld [vmem:[#allocation2 + $0x189] sm:$0xff]
  %v4530 = vld [vmem:[#allocation2 + $0x199] sm:$0xff]
  %v4531 = vld [vmem:[#allocation2 + $0x1a1] sm:$0xff]
  %v4532 = vld [vmem:[#allocation2 + $0x1b1] sm:$0xff]
  %v4533 = vld [vmem:[#allocation2 + $0x1b9] sm:$0xff]
  %v4534 = vld [vmem:[#allocation2 + $0x1c9] sm:$0xff]
  %v4535 = vld [vmem:[#allocation2 + $0x1d1] sm:$0xff]
  %v4536 = vld [vmem:[#allocation2 + $0x1e1] sm:$0xff]
  %v4537 = vld [vmem:[#allocation2 + $0x1e9] sm:$0xff]
  %v4538 = vld [vmem:[#allocation2 + $0x1f9] sm:$0xff]
  %v4539 = vld [vmem:[#allocation2 + $0x201] sm:$0xff]
  %v4540 = vld [vmem:[#allocation2 + $0x211] sm:$0xff]
  %v4541 = vld [vmem:[#allocation2 + $0x219] sm:$0xff]
  %v4542 = vld [vmem:[#allocation2 + $0x229] sm:$0xff]
  %v4543 = vld [vmem:[#allocation2 + $0x231] sm:$0xff]
  %v4544 = vld [vmem:[#allocation2 + $0x241] sm:$0xff]
  %v4545 = vld [vmem:[#allocation2 + $0x249] sm:$0xff]
  %v4546 = vld [vmem:[#allocation2 + $0x259] sm:$0xff]
  %v4547 = vld [vmem:[#allocation2 + $0x261] sm:$0xff]
  %v4548 = vld [vmem:[#allocation2 + $0x271] sm:$0xff]
  %v4549 = vld [vmem:[#allocation2 + $0x279] sm:$0xff]
  %v4550 = vld [vmem:[#allocation2 + $0x289] sm:$0xff]
  %v4551 = vld [vmem:[#allocation2 + $0x291] sm:$0xff]
  %v4552 = vld [vmem:[#allocation2 + $0x2a1] sm:$0xff]
  %v4553 = vld [vmem:[#allocation2 + $0x2a9] sm:$0xff]
  %v4554 = vld [vmem:[#allocation2 + $0x2b9] sm:$0xff]
  %v4555 = vld [vmem:[#allocation2 + $0x2c1] sm:$0xff]
  %v4556 = vld [vmem:[#allocation2 + $0x2d1] sm:$0xff]
  %v4557 = vld [vmem:[#allocation2 + $0x2d9] sm:$0xff]
  %v4558 = vld [vmem:[#allocation2 + $0x2e9] sm:$0xff]
  %v4559 = vld [vmem:[#allocation2 + $0x2f1] sm:$0xff]
  %v4560 = vld [vmem:[#allocation2 + $0x301] sm:$0xff]
  %v4561 = vld [vmem:[#allocation2 + $0x309] sm:$0xff]
  %v4562 = vld [vmem:[#allocation2 + $0x319] sm:$0xff]
  %v4563 = vld [vmem:[#allocation2 + $0x321] sm:$0xff]
  %v4564 = vld [vmem:[#allocation2 + $0x331] sm:$0xff]
  %v4565 = vld [vmem:[#allocation2 + $0x339] sm:$0xff]
  %v4566 = vld [vmem:[#allocation2 + $0x349] sm:$0xff]
  %v4567 = vld [vmem:[#allocation2 + $0x351] sm:$0xff]
  %s4568 = scalar_lea.vmem %s5, 384
  %v4569 = vld [vmem:[%s4568] sm:$0xff]
  %v4570 = vld [vmem:[%s4568 + $0x8] sm:$0xff]
  %v4571 = vld [vmem:[%s4568 + $0x10] sm:$0xff]
  %v4572 = vld [vmem:[%s4568 + $0x18] sm:$0xff]
  %v4573 = vld [vmem:[%s4568 + $0x20] sm:$0xff]
  %v4574 = vld [vmem:[%s4568 + $0x28] sm:$0xff]
  %v4575 = vld [vmem:[%s4568 + $0x30] sm:$0xff]
  %v4576 = vld [vmem:[%s4568 + $0x38] sm:$0xff]
  %v4577 = vld [vmem:[%s4568 + $0x40] sm:$0xff]
  %v4578 = vld [vmem:[%s4568 + $0x48] sm:$0xff]
  %v4579 = vld [vmem:[%s4568 + $0x50] sm:$0xff]
  %v4580 = vld [vmem:[%s4568 + $0x58] sm:$0xff]
  %v4581 = vld [vmem:[%s4568 + $0x60] sm:$0xff]
  %v4582 = vld [vmem:[%s4568 + $0x68] sm:$0xff]
  %v4583 = vld [vmem:[%s4568 + $0x70] sm:$0xff]
  %v4584 = vld [vmem:[%s4568 + $0x78] sm:$0xff]
  %4585 = vmatpush.msra.mxu0 %v4584
  %4586 = vmatpush.msra.mxu0 %v4583
  %4587 = vmatpush.msra.mxu0 %v4582
  %4588 = vmatpush.msra.mxu0 %v4581
  %4589 = vmatpush.msra.mxu0 %v4580
  %4590 = vmatpush.msra.mxu0 %v4579
  %4591 = vmatpush.msra.mxu0 %v4578
  %4592 = vmatpush.msra.mxu0 %v4577
  %4593 = vmatpush.msra.mxu0 %v4576
  %4594 = vmatpush.msra.mxu0 %v4575
  %4595 = vmatpush.msra.mxu0 %v4574
  %4596 = vmatpush.msra.mxu0 %v4573
  %4597 = vmatpush.msra.mxu0 %v4572
  %4598 = vmatpush.msra.mxu0 %v4571
  %4599 = vmatpush.msra.mxu0 %v4570
  %4600 = vmatpush.msra.mxu0 %v4569
  %4601 = vmatmul.f32.gmra.mxu0 %v4496
  %v4602 = vpop.f32.mrf.mxu0
  %v4603 = vadd.f32 0.0, %v4602
  %4604 = vmatmul.f32.gmra.mxu0 %v4497
  %v4605 = vpop.f32.mrf.mxu0
  %v4606 = vadd.f32 0.0, %v4605
  %4607 = vmatmul.f32.gmra.mxu0 %v4498
  %v4608 = vpop.f32.mrf.mxu0
  %v4609 = vadd.f32 0.0, %v4608
  %4610 = vmatmul.f32.gmra.mxu0 %v4499
  %v4611 = vpop.f32.mrf.mxu0
  %v4612 = vadd.f32 0.0, %v4611
  %4613 = vmatmul.f32.gmra.mxu0 %v4500
  %v4614 = vpop.f32.mrf.mxu0
  %v4615 = vadd.f32 0.0, %v4614
  %4616 = vmatmul.f32.gmra.mxu0 %v4501
  %v4617 = vpop.f32.mrf.mxu0
  %v4618 = vadd.f32 0.0, %v4617
  %4619 = vmatmul.f32.gmra.mxu0 %v4502
  %v4620 = vpop.f32.mrf.mxu0
  %v4621 = vadd.f32 0.0, %v4620
  %4622 = vmatmul.f32.gmra.mxu0 %v4503
  %v4623 = vpop.f32.mrf.mxu0
  %v4624 = vadd.f32 0.0, %v4623
  %4625 = vmatmul.f32.gmra.mxu0 %v4504
  %v4626 = vpop.f32.mrf.mxu0
  %v4627 = vadd.f32 0.0, %v4626
  %4628 = vmatmul.f32.gmra.mxu0 %v4505
  %v4629 = vpop.f32.mrf.mxu0
  %v4630 = vadd.f32 0.0, %v4629
  %4631 = vmatmul.f32.gmra.mxu0 %v4506
  %v4632 = vpop.f32.mrf.mxu0
  %v4633 = vadd.f32 0.0, %v4632
  %4634 = vmatmul.f32.gmra.mxu0 %v4507
  %v4635 = vpop.f32.mrf.mxu0
  %v4636 = vadd.f32 0.0, %v4635
  %4637 = vmatmul.f32.gmra.mxu0 %v4508
  %v4638 = vpop.f32.mrf.mxu0
  %v4639 = vadd.f32 0.0, %v4638
  %4640 = vmatmul.f32.gmra.mxu0 %v4509
  %v4641 = vpop.f32.mrf.mxu0
  %v4642 = vadd.f32 0.0, %v4641
  %4643 = vmatmul.f32.gmra.mxu0 %v4510
  %v4644 = vpop.f32.mrf.mxu0
  %v4645 = vadd.f32 0.0, %v4644
  %4646 = vmatmul.f32.gmra.mxu0 %v4511
  %v4647 = vpop.f32.mrf.mxu0
  %v4648 = vadd.f32 0.0, %v4647
  %4649 = vmatmul.f32.gmra.mxu0 %v4512
  %v4650 = vpop.f32.mrf.mxu0
  %v4651 = vadd.f32 0.0, %v4650
  %4652 = vmatmul.f32.gmra.mxu0 %v4513
  %v4653 = vpop.f32.mrf.mxu0
  %v4654 = vadd.f32 0.0, %v4653
  %4655 = vmatmul.f32.gmra.mxu0 %v4514
  %v4656 = vpop.f32.mrf.mxu0
  %v4657 = vadd.f32 0.0, %v4656
  %4658 = vmatmul.f32.gmra.mxu0 %v4515
  %v4659 = vpop.f32.mrf.mxu0
  %v4660 = vadd.f32 0.0, %v4659
  %4661 = vmatmul.f32.gmra.mxu0 %v4516
  %v4662 = vpop.f32.mrf.mxu0
  %v4663 = vadd.f32 0.0, %v4662
  %4664 = vmatmul.f32.gmra.mxu0 %v4517
  %v4665 = vpop.f32.mrf.mxu0
  %v4666 = vadd.f32 0.0, %v4665
  %4667 = vmatmul.f32.gmra.mxu0 %v4518
  %v4668 = vpop.f32.mrf.mxu0
  %v4669 = vadd.f32 0.0, %v4668
  %4670 = vmatmul.f32.gmra.mxu0 %v4519
  %v4671 = vpop.f32.mrf.mxu0
  %v4672 = vadd.f32 0.0, %v4671
  %4673 = vmatmul.f32.gmra.mxu0 %v4520
  %v4674 = vpop.f32.mrf.mxu0
  %v4675 = vadd.f32 0.0, %v4674
  %4676 = vmatmul.f32.gmra.mxu0 %v4521
  %v4677 = vpop.f32.mrf.mxu0
  %v4678 = vadd.f32 0.0, %v4677
  %4679 = vmatmul.f32.gmra.mxu0 %v4522
  %v4680 = vpop.f32.mrf.mxu0
  %v4681 = vadd.f32 0.0, %v4680
  %4682 = vmatmul.f32.gmra.mxu0 %v4523
  %v4683 = vpop.f32.mrf.mxu0
  %v4684 = vadd.f32 0.0, %v4683
  %4685 = vmatmul.f32.gmra.mxu0 %v4524
  %v4686 = vpop.f32.mrf.mxu0
  %v4687 = vadd.f32 0.0, %v4686
  %4688 = vmatmul.f32.gmra.mxu0 %v4525
  %v4689 = vpop.f32.mrf.mxu0
  %v4690 = vadd.f32 0.0, %v4689
  %4691 = vmatmul.f32.gmra.mxu0 %v4526
  %v4692 = vpop.f32.mrf.mxu0
  %v4693 = vadd.f32 0.0, %v4692
  %4694 = vmatmul.f32.gmra.mxu0 %v4527
  %v4695 = vpop.f32.mrf.mxu0
  %v4696 = vadd.f32 0.0, %v4695
  %4697 = vmatmul.f32.gmra.mxu0 %v4532
  %v4698 = vpop.f32.mrf.mxu0
  %v4699 = vadd.f32 0.0, %v4698
  %4700 = vmatmul.f32.gmra.mxu0 %v4533
  %v4701 = vpop.f32.mrf.mxu0
  %v4702 = vadd.f32 0.0, %v4701
  %4703 = vmatmul.f32.gmra.mxu0 %v4534
  %v4704 = vpop.f32.mrf.mxu0
  %v4705 = vadd.f32 0.0, %v4704
  %4706 = vmatmul.f32.gmra.mxu0 %v4535
  %v4707 = vpop.f32.mrf.mxu0
  %v4708 = vadd.f32 0.0, %v4707
  %4709 = vmatmul.f32.gmra.mxu0 %v4536
  %v4710 = vpop.f32.mrf.mxu0
  %v4711 = vadd.f32 0.0, %v4710
  %4712 = vmatmul.f32.gmra.mxu0 %v4537
  %v4713 = vpop.f32.mrf.mxu0
  %v4714 = vadd.f32 0.0, %v4713
  %4715 = vmatmul.f32.gmra.mxu0 %v4538
  %v4716 = vpop.f32.mrf.mxu0
  %v4717 = vadd.f32 0.0, %v4716
  %4718 = vmatmul.f32.gmra.mxu0 %v4539
  %v4719 = vpop.f32.mrf.mxu0
  %v4720 = vadd.f32 0.0, %v4719
  %4721 = vmatmul.f32.gmra.mxu0 %v4540
  %v4722 = vpop.f32.mrf.mxu0
  %v4723 = vadd.f32 0.0, %v4722
  %4724 = vmatmul.f32.gmra.mxu0 %v4541
  %v4725 = vpop.f32.mrf.mxu0
  %v4726 = vadd.f32 0.0, %v4725
  %4727 = vmatmul.f32.gmra.mxu0 %v4542
  %v4728 = vpop.f32.mrf.mxu0
  %v4729 = vadd.f32 0.0, %v4728
  %4730 = vmatmul.f32.gmra.mxu0 %v4543
  %v4731 = vpop.f32.mrf.mxu0
  %v4732 = vadd.f32 0.0, %v4731
  %4733 = vmatmul.f32.gmra.mxu0 %v4544
  %v4734 = vpop.f32.mrf.mxu0
  %v4735 = vadd.f32 0.0, %v4734
  %4736 = vmatmul.f32.gmra.mxu0 %v4545
  %v4737 = vpop.f32.mrf.mxu0
  %v4738 = vadd.f32 0.0, %v4737
  %4739 = vmatmul.f32.gmra.mxu0 %v4546
  %v4740 = vpop.f32.mrf.mxu0
  %v4741 = vadd.f32 0.0, %v4740
  %4742 = vmatmul.f32.gmra.mxu0 %v4547
  %v4743 = vpop.f32.mrf.mxu0
  %v4744 = vadd.f32 0.0, %v4743
  %4745 = vmatmul.f32.gmra.mxu0 %v4548
  %v4746 = vpop.f32.mrf.mxu0
  %v4747 = vadd.f32 0.0, %v4746
  %4748 = vmatmul.f32.gmra.mxu0 %v4549
  %v4749 = vpop.f32.mrf.mxu0
  %v4750 = vadd.f32 0.0, %v4749
  %4751 = vmatmul.f32.gmra.mxu0 %v4550
  %v4752 = vpop.f32.mrf.mxu0
  %v4753 = vadd.f32 0.0, %v4752
  %4754 = vmatmul.f32.gmra.mxu0 %v4551
  %v4755 = vpop.f32.mrf.mxu0
  %v4756 = vadd.f32 0.0, %v4755
  %4757 = vmatmul.f32.gmra.mxu0 %v4552
  %v4758 = vpop.f32.mrf.mxu0
  %v4759 = vadd.f32 0.0, %v4758
  %4760 = vmatmul.f32.gmra.mxu0 %v4553
  %v4761 = vpop.f32.mrf.mxu0
  %v4762 = vadd.f32 0.0, %v4761
  %4763 = vmatmul.f32.gmra.mxu0 %v4554
  %v4764 = vpop.f32.mrf.mxu0
  %v4765 = vadd.f32 0.0, %v4764
  %4766 = vmatmul.f32.gmra.mxu0 %v4555
  %v4767 = vpop.f32.mrf.mxu0
  %v4768 = vadd.f32 0.0, %v4767
  %4769 = vmatmul.f32.gmra.mxu0 %v4556
  %v4770 = vpop.f32.mrf.mxu0
  %v4771 = vadd.f32 0.0, %v4770
  %4772 = vmatmul.f32.gmra.mxu0 %v4557
  %v4773 = vpop.f32.mrf.mxu0
  %v4774 = vadd.f32 0.0, %v4773
  %4775 = vmatmul.f32.gmra.mxu0 %v4558
  %v4776 = vpop.f32.mrf.mxu0
  %v4777 = vadd.f32 0.0, %v4776
  %4778 = vmatmul.f32.gmra.mxu0 %v4559
  %v4779 = vpop.f32.mrf.mxu0
  %v4780 = vadd.f32 0.0, %v4779
  %4781 = vmatmul.f32.gmra.mxu0 %v4560
  %v4782 = vpop.f32.mrf.mxu0
  %v4783 = vadd.f32 0.0, %v4782
  %4784 = vmatmul.f32.gmra.mxu0 %v4561
  %v4785 = vpop.f32.mrf.mxu0
  %v4786 = vadd.f32 0.0, %v4785
  %4787 = vmatmul.f32.gmra.mxu0 %v4562
  %v4788 = vpop.f32.mrf.mxu0
  %v4789 = vadd.f32 0.0, %v4788
  %4790 = vmatmul.f32.gmra.mxu0 %v4563
  %v4791 = vpop.f32.mrf.mxu0
  %v4792 = vadd.f32 0.0, %v4791
  %4793 = vdwg.mxu0
  %v4794 = vadd.f32 %v4432, %v4603
  %v4795 = vadd.f32 %v4433, %v4606
  %v4796 = vadd.f32 %v4434, %v4609
  %v4797 = vadd.f32 %v4435, %v4612
  %v4798 = vadd.f32 %v4436, %v4615
  %v4799 = vadd.f32 %v4437, %v4618
  %v4800 = vadd.f32 %v4438, %v4621
  %v4801 = vadd.f32 %v4439, %v4624
  %v4802 = vadd.f32 %v4440, %v4627
  %v4803 = vadd.f32 %v4441, %v4630
  %v4804 = vadd.f32 %v4442, %v4633
  %v4805 = vadd.f32 %v4443, %v4636
  %v4806 = vadd.f32 %v4444, %v4639
  %v4807 = vadd.f32 %v4445, %v4642
  %v4808 = vadd.f32 %v4446, %v4645
  %v4809 = vadd.f32 %v4447, %v4648
  %v4810 = vadd.f32 %v4448, %v4651
  %v4811 = vadd.f32 %v4449, %v4654
  %v4812 = vadd.f32 %v4450, %v4657
  %v4813 = vadd.f32 %v4451, %v4660
  %v4814 = vadd.f32 %v4452, %v4663
  %v4815 = vadd.f32 %v4453, %v4666
  %v4816 = vadd.f32 %v4454, %v4669
  %v4817 = vadd.f32 %v4455, %v4672
  %v4818 = vadd.f32 %v4456, %v4675
  %v4819 = vadd.f32 %v4457, %v4678
  %v4820 = vadd.f32 %v4458, %v4681
  %v4821 = vadd.f32 %v4459, %v4684
  %v4822 = vadd.f32 %v4460, %v4687
  %v4823 = vadd.f32 %v4461, %v4690
  %v4824 = vadd.f32 %v4462, %v4693
  %v4825 = vadd.f32 %v4463, %v4696
  %v4826 = vadd.f32 %v4464, %v4699
  %v4827 = vadd.f32 %v4465, %v4702
  %v4828 = vadd.f32 %v4466, %v4705
  %v4829 = vadd.f32 %v4467, %v4708
  %v4830 = vadd.f32 %v4468, %v4711
  %v4831 = vadd.f32 %v4469, %v4714
  %v4832 = vadd.f32 %v4470, %v4717
  %v4833 = vadd.f32 %v4471, %v4720
  %v4834 = vadd.f32 %v4472, %v4723
  %v4835 = vadd.f32 %v4473, %v4726
  %v4836 = vadd.f32 %v4474, %v4729
  %v4837 = vadd.f32 %v4475, %v4732
  %v4838 = vadd.f32 %v4476, %v4735
  %v4839 = vadd.f32 %v4477, %v4738
  %v4840 = vadd.f32 %v4478, %v4741
  %v4841 = vadd.f32 %v4479, %v4744
  %v4842 = vadd.f32 %v4480, %v4747
  %v4843 = vadd.f32 %v4481, %v4750
  %v4844 = vadd.f32 %v4482, %v4753
  %v4845 = vadd.f32 %v4483, %v4756
  %v4846 = vadd.f32 %v4484, %v4759
  %v4847 = vadd.f32 %v4485, %v4762
  %v4848 = vadd.f32 %v4486, %v4765
  %v4849 = vadd.f32 %v4487, %v4768
  %v4850 = vadd.f32 %v4488, %v4771
  %v4851 = vadd.f32 %v4489, %v4774
  %v4852 = vadd.f32 %v4490, %v4777
  %v4853 = vadd.f32 %v4491, %v4780
  %v4854 = vadd.f32 %v4492, %v4783
  %v4855 = vadd.f32 %v4493, %v4786
  %v4856 = vadd.f32 %v4494, %v4789
  %v4857 = vadd.f32 %v4495, %v4792
  %s4858 = scalar_lea.vmem %s5, 512
  %v4859 = vld [vmem:[%s4858] sm:$0xff]
  %v4860 = vld [vmem:[%s4858 + $0x8] sm:$0xff]
  %v4861 = vld [vmem:[%s4858 + $0x10] sm:$0xff]
  %v4862 = vld [vmem:[%s4858 + $0x18] sm:$0xff]
  %v4863 = vld [vmem:[%s4858 + $0x20] sm:$0xff]
  %v4864 = vld [vmem:[%s4858 + $0x28] sm:$0xff]
  %v4865 = vld [vmem:[%s4858 + $0x30] sm:$0xff]
  %v4866 = vld [vmem:[%s4858 + $0x38] sm:$0xff]
  %v4867 = vld [vmem:[%s4858 + $0x40] sm:$0xff]
  %v4868 = vld [vmem:[%s4858 + $0x48] sm:$0xff]
  %v4869 = vld [vmem:[%s4858 + $0x50] sm:$0xff]
  %v4870 = vld [vmem:[%s4858 + $0x58] sm:$0xff]
  %v4871 = vld [vmem:[%s4858 + $0x60] sm:$0xff]
  %v4872 = vld [vmem:[%s4858 + $0x68] sm:$0xff]
  %v4873 = vld [vmem:[%s4858 + $0x70] sm:$0xff]
  %v4874 = vld [vmem:[%s4858 + $0x78] sm:$0xff]
  %4875 = vmatpush.msra.mxu0 %v4874
  %4876 = vmatpush.msra.mxu0 %v4873
  %4877 = vmatpush.msra.mxu0 %v4872
  %4878 = vmatpush.msra.mxu0 %v4871
  %4879 = vmatpush.msra.mxu0 %v4870
  %4880 = vmatpush.msra.mxu0 %v4869
  %4881 = vmatpush.msra.mxu0 %v4868
  %4882 = vmatpush.msra.mxu0 %v4867
  %4883 = vmatpush.msra.mxu0 %v4866
  %4884 = vmatpush.msra.mxu0 %v4865
  %4885 = vmatpush.msra.mxu0 %v4864
  %4886 = vmatpush.msra.mxu0 %v4863
  %4887 = vmatpush.msra.mxu0 %v4862
  %4888 = vmatpush.msra.mxu0 %v4861
  %4889 = vmatpush.msra.mxu0 %v4860
  %4890 = vmatpush.msra.mxu0 %v4859
  %4891 = vmatmul.f32.gmra.mxu0 %v4498
  %v4892 = vpop.f32.mrf.mxu0
  %v4893 = vadd.f32 0.0, %v4892
  %4894 = vmatmul.f32.gmra.mxu0 %v4499
  %v4895 = vpop.f32.mrf.mxu0
  %v4896 = vadd.f32 0.0, %v4895
  %4897 = vmatmul.f32.gmra.mxu0 %v4500
  %v4898 = vpop.f32.mrf.mxu0
  %v4899 = vadd.f32 0.0, %v4898
  %4900 = vmatmul.f32.gmra.mxu0 %v4501
  %v4901 = vpop.f32.mrf.mxu0
  %v4902 = vadd.f32 0.0, %v4901
  %4903 = vmatmul.f32.gmra.mxu0 %v4502
  %v4904 = vpop.f32.mrf.mxu0
  %v4905 = vadd.f32 0.0, %v4904
  %4906 = vmatmul.f32.gmra.mxu0 %v4503
  %v4907 = vpop.f32.mrf.mxu0
  %v4908 = vadd.f32 0.0, %v4907
  %4909 = vmatmul.f32.gmra.mxu0 %v4504
  %v4910 = vpop.f32.mrf.mxu0
  %v4911 = vadd.f32 0.0, %v4910
  %4912 = vmatmul.f32.gmra.mxu0 %v4505
  %v4913 = vpop.f32.mrf.mxu0
  %v4914 = vadd.f32 0.0, %v4913
  %4915 = vmatmul.f32.gmra.mxu0 %v4506
  %v4916 = vpop.f32.mrf.mxu0
  %v4917 = vadd.f32 0.0, %v4916
  %4918 = vmatmul.f32.gmra.mxu0 %v4507
  %v4919 = vpop.f32.mrf.mxu0
  %v4920 = vadd.f32 0.0, %v4919
  %4921 = vmatmul.f32.gmra.mxu0 %v4508
  %v4922 = vpop.f32.mrf.mxu0
  %v4923 = vadd.f32 0.0, %v4922
  %4924 = vmatmul.f32.gmra.mxu0 %v4509
  %v4925 = vpop.f32.mrf.mxu0
  %v4926 = vadd.f32 0.0, %v4925
  %4927 = vmatmul.f32.gmra.mxu0 %v4510
  %v4928 = vpop.f32.mrf.mxu0
  %v4929 = vadd.f32 0.0, %v4928
  %4930 = vmatmul.f32.gmra.mxu0 %v4511
  %v4931 = vpop.f32.mrf.mxu0
  %v4932 = vadd.f32 0.0, %v4931
  %4933 = vmatmul.f32.gmra.mxu0 %v4512
  %v4934 = vpop.f32.mrf.mxu0
  %v4935 = vadd.f32 0.0, %v4934
  %4936 = vmatmul.f32.gmra.mxu0 %v4513
  %v4937 = vpop.f32.mrf.mxu0
  %v4938 = vadd.f32 0.0, %v4937
  %4939 = vmatmul.f32.gmra.mxu0 %v4514
  %v4940 = vpop.f32.mrf.mxu0
  %v4941 = vadd.f32 0.0, %v4940
  %4942 = vmatmul.f32.gmra.mxu0 %v4515
  %v4943 = vpop.f32.mrf.mxu0
  %v4944 = vadd.f32 0.0, %v4943
  %4945 = vmatmul.f32.gmra.mxu0 %v4516
  %v4946 = vpop.f32.mrf.mxu0
  %v4947 = vadd.f32 0.0, %v4946
  %4948 = vmatmul.f32.gmra.mxu0 %v4517
  %v4949 = vpop.f32.mrf.mxu0
  %v4950 = vadd.f32 0.0, %v4949
  %4951 = vmatmul.f32.gmra.mxu0 %v4518
  %v4952 = vpop.f32.mrf.mxu0
  %v4953 = vadd.f32 0.0, %v4952
  %4954 = vmatmul.f32.gmra.mxu0 %v4519
  %v4955 = vpop.f32.mrf.mxu0
  %v4956 = vadd.f32 0.0, %v4955
  %4957 = vmatmul.f32.gmra.mxu0 %v4520
  %v4958 = vpop.f32.mrf.mxu0
  %v4959 = vadd.f32 0.0, %v4958
  %4960 = vmatmul.f32.gmra.mxu0 %v4521
  %v4961 = vpop.f32.mrf.mxu0
  %v4962 = vadd.f32 0.0, %v4961
  %4963 = vmatmul.f32.gmra.mxu0 %v4522
  %v4964 = vpop.f32.mrf.mxu0
  %v4965 = vadd.f32 0.0, %v4964
  %4966 = vmatmul.f32.gmra.mxu0 %v4523
  %v4967 = vpop.f32.mrf.mxu0
  %v4968 = vadd.f32 0.0, %v4967
  %4969 = vmatmul.f32.gmra.mxu0 %v4524
  %v4970 = vpop.f32.mrf.mxu0
  %v4971 = vadd.f32 0.0, %v4970
  %4972 = vmatmul.f32.gmra.mxu0 %v4525
  %v4973 = vpop.f32.mrf.mxu0
  %v4974 = vadd.f32 0.0, %v4973
  %4975 = vmatmul.f32.gmra.mxu0 %v4526
  %v4976 = vpop.f32.mrf.mxu0
  %v4977 = vadd.f32 0.0, %v4976
  %4978 = vmatmul.f32.gmra.mxu0 %v4527
  %v4979 = vpop.f32.mrf.mxu0
  %v4980 = vadd.f32 0.0, %v4979
  %4981 = vmatmul.f32.gmra.mxu0 %v4528
  %v4982 = vpop.f32.mrf.mxu0
  %v4983 = vadd.f32 0.0, %v4982
  %4984 = vmatmul.f32.gmra.mxu0 %v4529
  %v4985 = vpop.f32.mrf.mxu0
  %v4986 = vadd.f32 0.0, %v4985
  %4987 = vmatmul.f32.gmra.mxu0 %v4534
  %v4988 = vpop.f32.mrf.mxu0
  %v4989 = vadd.f32 0.0, %v4988
  %4990 = vmatmul.f32.gmra.mxu0 %v4535
  %v4991 = vpop.f32.mrf.mxu0
  %v4992 = vadd.f32 0.0, %v4991
  %4993 = vmatmul.f32.gmra.mxu0 %v4536
  %v4994 = vpop.f32.mrf.mxu0
  %v4995 = vadd.f32 0.0, %v4994
  %4996 = vmatmul.f32.gmra.mxu0 %v4537
  %v4997 = vpop.f32.mrf.mxu0
  %v4998 = vadd.f32 0.0, %v4997
  %4999 = vmatmul.f32.gmra.mxu0 %v4538
  %v5000 = vpop.f32.mrf.mxu0
  %v5001 = vadd.f32 0.0, %v5000
  %5002 = vmatmul.f32.gmra.mxu0 %v4539
  %v5003 = vpop.f32.mrf.mxu0
  %v5004 = vadd.f32 0.0, %v5003
  %5005 = vmatmul.f32.gmra.mxu0 %v4540
  %v5006 = vpop.f32.mrf.mxu0
  %v5007 = vadd.f32 0.0, %v5006
  %5008 = vmatmul.f32.gmra.mxu0 %v4541
  %v5009 = vpop.f32.mrf.mxu0
  %v5010 = vadd.f32 0.0, %v5009
  %5011 = vmatmul.f32.gmra.mxu0 %v4542
  %v5012 = vpop.f32.mrf.mxu0
  %v5013 = vadd.f32 0.0, %v5012
  %5014 = vmatmul.f32.gmra.mxu0 %v4543
  %v5015 = vpop.f32.mrf.mxu0
  %v5016 = vadd.f32 0.0, %v5015
  %5017 = vmatmul.f32.gmra.mxu0 %v4544
  %v5018 = vpop.f32.mrf.mxu0
  %v5019 = vadd.f32 0.0, %v5018
  %5020 = vmatmul.f32.gmra.mxu0 %v4545
  %v5021 = vpop.f32.mrf.mxu0
  %v5022 = vadd.f32 0.0, %v5021
  %5023 = vmatmul.f32.gmra.mxu0 %v4546
  %v5024 = vpop.f32.mrf.mxu0
  %v5025 = vadd.f32 0.0, %v5024
  %5026 = vmatmul.f32.gmra.mxu0 %v4547
  %v5027 = vpop.f32.mrf.mxu0
  %v5028 = vadd.f32 0.0, %v5027
  %5029 = vmatmul.f32.gmra.mxu0 %v4548
  %v5030 = vpop.f32.mrf.mxu0
  %v5031 = vadd.f32 0.0, %v5030
  %5032 = vmatmul.f32.gmra.mxu0 %v4549
  %v5033 = vpop.f32.mrf.mxu0
  %v5034 = vadd.f32 0.0, %v5033
  %5035 = vmatmul.f32.gmra.mxu0 %v4550
  %v5036 = vpop.f32.mrf.mxu0
  %v5037 = vadd.f32 0.0, %v5036
  %5038 = vmatmul.f32.gmra.mxu0 %v4551
  %v5039 = vpop.f32.mrf.mxu0
  %v5040 = vadd.f32 0.0, %v5039
  %5041 = vmatmul.f32.gmra.mxu0 %v4552
  %v5042 = vpop.f32.mrf.mxu0
  %v5043 = vadd.f32 0.0, %v5042
  %5044 = vmatmul.f32.gmra.mxu0 %v4553
  %v5045 = vpop.f32.mrf.mxu0
  %v5046 = vadd.f32 0.0, %v5045
  %5047 = vmatmul.f32.gmra.mxu0 %v4554
  %v5048 = vpop.f32.mrf.mxu0
  %v5049 = vadd.f32 0.0, %v5048
  %5050 = vmatmul.f32.gmra.mxu0 %v4555
  %v5051 = vpop.f32.mrf.mxu0
  %v5052 = vadd.f32 0.0, %v5051
  %5053 = vmatmul.f32.gmra.mxu0 %v4556
  %v5054 = vpop.f32.mrf.mxu0
  %v5055 = vadd.f32 0.0, %v5054
  %5056 = vmatmul.f32.gmra.mxu0 %v4557
  %v5057 = vpop.f32.mrf.mxu0
  %v5058 = vadd.f32 0.0, %v5057
  %5059 = vmatmul.f32.gmra.mxu0 %v4558
  %v5060 = vpop.f32.mrf.mxu0
  %v5061 = vadd.f32 0.0, %v5060
  %5062 = vmatmul.f32.gmra.mxu0 %v4559
  %v5063 = vpop.f32.mrf.mxu0
  %v5064 = vadd.f32 0.0, %v5063
  %5065 = vmatmul.f32.gmra.mxu0 %v4560
  %v5066 = vpop.f32.mrf.mxu0
  %v5067 = vadd.f32 0.0, %v5066
  %5068 = vmatmul.f32.gmra.mxu0 %v4561
  %v5069 = vpop.f32.mrf.mxu0
  %v5070 = vadd.f32 0.0, %v5069
  %5071 = vmatmul.f32.gmra.mxu0 %v4562
  %v5072 = vpop.f32.mrf.mxu0
  %v5073 = vadd.f32 0.0, %v5072
  %5074 = vmatmul.f32.gmra.mxu0 %v4563
  %v5075 = vpop.f32.mrf.mxu0
  %v5076 = vadd.f32 0.0, %v5075
  %5077 = vmatmul.f32.gmra.mxu0 %v4564
  %v5078 = vpop.f32.mrf.mxu0
  %v5079 = vadd.f32 0.0, %v5078
  %5080 = vmatmul.f32.gmra.mxu0 %v4565
  %v5081 = vpop.f32.mrf.mxu0
  %v5082 = vadd.f32 0.0, %v5081
  %5083 = vdwg.mxu0
  %v5084 = vadd.f32 %v4794, %v4893
  %v5085 = vadd.f32 %v4795, %v4896
  %v5086 = vadd.f32 %v4796, %v4899
  %v5087 = vadd.f32 %v4797, %v4902
  %v5088 = vadd.f32 %v4798, %v4905
  %v5089 = vadd.f32 %v4799, %v4908
  %v5090 = vadd.f32 %v4800, %v4911
  %v5091 = vadd.f32 %v4801, %v4914
  %v5092 = vadd.f32 %v4802, %v4917
  %v5093 = vadd.f32 %v4803, %v4920
  %v5094 = vadd.f32 %v4804, %v4923
  %v5095 = vadd.f32 %v4805, %v4926
  %v5096 = vadd.f32 %v4806, %v4929
  %v5097 = vadd.f32 %v4807, %v4932
  %v5098 = vadd.f32 %v4808, %v4935
  %v5099 = vadd.f32 %v4809, %v4938
  %v5100 = vadd.f32 %v4810, %v4941
  %v5101 = vadd.f32 %v4811, %v4944
  %v5102 = vadd.f32 %v4812, %v4947
  %v5103 = vadd.f32 %v4813, %v4950
  %v5104 = vadd.f32 %v4814, %v4953
  %v5105 = vadd.f32 %v4815, %v4956
  %v5106 = vadd.f32 %v4816, %v4959
  %v5107 = vadd.f32 %v4817, %v4962
  %v5108 = vadd.f32 %v4818, %v4965
  %v5109 = vadd.f32 %v4819, %v4968
  %v5110 = vadd.f32 %v4820, %v4971
  %v5111 = vadd.f32 %v4821, %v4974
  %v5112 = vadd.f32 %v4822, %v4977
  %v5113 = vadd.f32 %v4823, %v4980
  %v5114 = vadd.f32 %v4824, %v4983
  %v5115 = vadd.f32 %v4825, %v4986
  %v5116 = vadd.f32 %v4826, %v4989
  %v5117 = vadd.f32 %v4827, %v4992
  %v5118 = vadd.f32 %v4828, %v4995
  %v5119 = vadd.f32 %v4829, %v4998
  %v5120 = vadd.f32 %v4830, %v5001
  %v5121 = vadd.f32 %v4831, %v5004
  %v5122 = vadd.f32 %v4832, %v5007
  %v5123 = vadd.f32 %v4833, %v5010
  %v5124 = vadd.f32 %v4834, %v5013
  %v5125 = vadd.f32 %v4835, %v5016
  %v5126 = vadd.f32 %v4836, %v5019
  %v5127 = vadd.f32 %v4837, %v5022
  %v5128 = vadd.f32 %v4838, %v5025
  %v5129 = vadd.f32 %v4839, %v5028
  %v5130 = vadd.f32 %v4840, %v5031
  %v5131 = vadd.f32 %v4841, %v5034
  %v5132 = vadd.f32 %v4842, %v5037
  %v5133 = vadd.f32 %v4843, %v5040
  %v5134 = vadd.f32 %v4844, %v5043
  %v5135 = vadd.f32 %v4845, %v5046
  %v5136 = vadd.f32 %v4846, %v5049
  %v5137 = vadd.f32 %v4847, %v5052
  %v5138 = vadd.f32 %v4848, %v5055
  %v5139 = vadd.f32 %v4849, %v5058
  %v5140 = vadd.f32 %v4850, %v5061
  %v5141 = vadd.f32 %v4851, %v5064
  %v5142 = vadd.f32 %v4852, %v5067
  %v5143 = vadd.f32 %v4853, %v5070
  %v5144 = vadd.f32 %v4854, %v5073
  %v5145 = vadd.f32 %v4855, %v5076
  %v5146 = vadd.f32 %v4856, %v5079
  %v5147 = vadd.f32 %v4857, %v5082
  %s5148 = scalar_lea.vmem %s5, 640
  %v5149 = vld [vmem:[%s5148] sm:$0xff]
  %v5150 = vld [vmem:[%s5148 + $0x8] sm:$0xff]
  %v5151 = vld [vmem:[%s5148 + $0x10] sm:$0xff]
  %v5152 = vld [vmem:[%s5148 + $0x18] sm:$0xff]
  %v5153 = vld [vmem:[%s5148 + $0x20] sm:$0xff]
  %v5154 = vld [vmem:[%s5148 + $0x28] sm:$0xff]
  %v5155 = vld [vmem:[%s5148 + $0x30] sm:$0xff]
  %v5156 = vld [vmem:[%s5148 + $0x38] sm:$0xff]
  %v5157 = vld [vmem:[%s5148 + $0x40] sm:$0xff]
  %v5158 = vld [vmem:[%s5148 + $0x48] sm:$0xff]
  %v5159 = vld [vmem:[%s5148 + $0x50] sm:$0xff]
  %v5160 = vld [vmem:[%s5148 + $0x58] sm:$0xff]
  %v5161 = vld [vmem:[%s5148 + $0x60] sm:$0xff]
  %v5162 = vld [vmem:[%s5148 + $0x68] sm:$0xff]
  %v5163 = vld [vmem:[%s5148 + $0x70] sm:$0xff]
  %v5164 = vld [vmem:[%s5148 + $0x78] sm:$0xff]
  %5165 = vmatpush.msra.mxu0 %v5164
  %5166 = vmatpush.msra.mxu0 %v5163
  %5167 = vmatpush.msra.mxu0 %v5162
  %5168 = vmatpush.msra.mxu0 %v5161
  %5169 = vmatpush.msra.mxu0 %v5160
  %5170 = vmatpush.msra.mxu0 %v5159
  %5171 = vmatpush.msra.mxu0 %v5158
  %5172 = vmatpush.msra.mxu0 %v5157
  %5173 = vmatpush.msra.mxu0 %v5156
  %5174 = vmatpush.msra.mxu0 %v5155
  %5175 = vmatpush.msra.mxu0 %v5154
  %5176 = vmatpush.msra.mxu0 %v5153
  %5177 = vmatpush.msra.mxu0 %v5152
  %5178 = vmatpush.msra.mxu0 %v5151
  %5179 = vmatpush.msra.mxu0 %v5150
  %5180 = vmatpush.msra.mxu0 %v5149
  %5181 = vmatmul.f32.gmra.mxu0 %v4500
  %v5182 = vpop.f32.mrf.mxu0
  %v5183 = vadd.f32 0.0, %v5182
  %5184 = vmatmul.f32.gmra.mxu0 %v4501
  %v5185 = vpop.f32.mrf.mxu0
  %v5186 = vadd.f32 0.0, %v5185
  %5187 = vmatmul.f32.gmra.mxu0 %v4502
  %v5188 = vpop.f32.mrf.mxu0
  %v5189 = vadd.f32 0.0, %v5188
  %5190 = vmatmul.f32.gmra.mxu0 %v4503
  %v5191 = vpop.f32.mrf.mxu0
  %v5192 = vadd.f32 0.0, %v5191
  %5193 = vmatmul.f32.gmra.mxu0 %v4504
  %v5194 = vpop.f32.mrf.mxu0
  %v5195 = vadd.f32 0.0, %v5194
  %5196 = vmatmul.f32.gmra.mxu0 %v4505
  %v5197 = vpop.f32.mrf.mxu0
  %v5198 = vadd.f32 0.0, %v5197
  %5199 = vmatmul.f32.gmra.mxu0 %v4506
  %v5200 = vpop.f32.mrf.mxu0
  %v5201 = vadd.f32 0.0, %v5200
  %5202 = vmatmul.f32.gmra.mxu0 %v4507
  %v5203 = vpop.f32.mrf.mxu0
  %v5204 = vadd.f32 0.0, %v5203
  %5205 = vmatmul.f32.gmra.mxu0 %v4508
  %v5206 = vpop.f32.mrf.mxu0
  %v5207 = vadd.f32 0.0, %v5206
  %5208 = vmatmul.f32.gmra.mxu0 %v4509
  %v5209 = vpop.f32.mrf.mxu0
  %v5210 = vadd.f32 0.0, %v5209
  %5211 = vmatmul.f32.gmra.mxu0 %v4510
  %v5212 = vpop.f32.mrf.mxu0
  %v5213 = vadd.f32 0.0, %v5212
  %5214 = vmatmul.f32.gmra.mxu0 %v4511
  %v5215 = vpop.f32.mrf.mxu0
  %v5216 = vadd.f32 0.0, %v5215
  %5217 = vmatmul.f32.gmra.mxu0 %v4512
  %v5218 = vpop.f32.mrf.mxu0
  %v5219 = vadd.f32 0.0, %v5218
  %5220 = vmatmul.f32.gmra.mxu0 %v4513
  %v5221 = vpop.f32.mrf.mxu0
  %v5222 = vadd.f32 0.0, %v5221
  %5223 = vmatmul.f32.gmra.mxu0 %v4514
  %v5224 = vpop.f32.mrf.mxu0
  %v5225 = vadd.f32 0.0, %v5224
  %5226 = vmatmul.f32.gmra.mxu0 %v4515
  %v5227 = vpop.f32.mrf.mxu0
  %v5228 = vadd.f32 0.0, %v5227
  %5229 = vmatmul.f32.gmra.mxu0 %v4516
  %v5230 = vpop.f32.mrf.mxu0
  %v5231 = vadd.f32 0.0, %v5230
  %5232 = vmatmul.f32.gmra.mxu0 %v4517
  %v5233 = vpop.f32.mrf.mxu0
  %v5234 = vadd.f32 0.0, %v5233
  %5235 = vmatmul.f32.gmra.mxu0 %v4518
  %v5236 = vpop.f32.mrf.mxu0
  %v5237 = vadd.f32 0.0, %v5236
  %5238 = vmatmul.f32.gmra.mxu0 %v4519
  %v5239 = vpop.f32.mrf.mxu0
  %v5240 = vadd.f32 0.0, %v5239
  %5241 = vmatmul.f32.gmra.mxu0 %v4520
  %v5242 = vpop.f32.mrf.mxu0
  %v5243 = vadd.f32 0.0, %v5242
  %5244 = vmatmul.f32.gmra.mxu0 %v4521
  %v5245 = vpop.f32.mrf.mxu0
  %v5246 = vadd.f32 0.0, %v5245
  %5247 = vmatmul.f32.gmra.mxu0 %v4522
  %v5248 = vpop.f32.mrf.mxu0
  %v5249 = vadd.f32 0.0, %v5248
  %5250 = vmatmul.f32.gmra.mxu0 %v4523
  %v5251 = vpop.f32.mrf.mxu0
  %v5252 = vadd.f32 0.0, %v5251
  %5253 = vmatmul.f32.gmra.mxu0 %v4524
  %v5254 = vpop.f32.mrf.mxu0
  %v5255 = vadd.f32 0.0, %v5254
  %5256 = vmatmul.f32.gmra.mxu0 %v4525
  %v5257 = vpop.f32.mrf.mxu0
  %v5258 = vadd.f32 0.0, %v5257
  %5259 = vmatmul.f32.gmra.mxu0 %v4526
  %v5260 = vpop.f32.mrf.mxu0
  %v5261 = vadd.f32 0.0, %v5260
  %5262 = vmatmul.f32.gmra.mxu0 %v4527
  %v5263 = vpop.f32.mrf.mxu0
  %v5264 = vadd.f32 0.0, %v5263
  %5265 = vmatmul.f32.gmra.mxu0 %v4528
  %v5266 = vpop.f32.mrf.mxu0
  %v5267 = vadd.f32 0.0, %v5266
  %5268 = vmatmul.f32.gmra.mxu0 %v4529
  %v5269 = vpop.f32.mrf.mxu0
  %v5270 = vadd.f32 0.0, %v5269
  %5271 = vmatmul.f32.gmra.mxu0 %v4530
  %v5272 = vpop.f32.mrf.mxu0
  %v5273 = vadd.f32 0.0, %v5272
  %5274 = vmatmul.f32.gmra.mxu0 %v4531
  %v5275 = vpop.f32.mrf.mxu0
  %v5276 = vadd.f32 0.0, %v5275
  %5277 = vmatmul.f32.gmra.mxu0 %v4536
  %v5278 = vpop.f32.mrf.mxu0
  %v5279 = vadd.f32 0.0, %v5278
  %5280 = vmatmul.f32.gmra.mxu0 %v4537
  %v5281 = vpop.f32.mrf.mxu0
  %v5282 = vadd.f32 0.0, %v5281
  %5283 = vmatmul.f32.gmra.mxu0 %v4538
  %v5284 = vpop.f32.mrf.mxu0
  %v5285 = vadd.f32 0.0, %v5284
  %5286 = vmatmul.f32.gmra.mxu0 %v4539
  %v5287 = vpop.f32.mrf.mxu0
  %v5288 = vadd.f32 0.0, %v5287
  %5289 = vmatmul.f32.gmra.mxu0 %v4540
  %v5290 = vpop.f32.mrf.mxu0
  %v5291 = vadd.f32 0.0, %v5290
  %5292 = vmatmul.f32.gmra.mxu0 %v4541
  %v5293 = vpop.f32.mrf.mxu0
  %v5294 = vadd.f32 0.0, %v5293
  %5295 = vmatmul.f32.gmra.mxu0 %v4542
  %v5296 = vpop.f32.mrf.mxu0
  %v5297 = vadd.f32 0.0, %v5296
  %5298 = vmatmul.f32.gmra.mxu0 %v4543
  %v5299 = vpop.f32.mrf.mxu0
  %v5300 = vadd.f32 0.0, %v5299
  %5301 = vmatmul.f32.gmra.mxu0 %v4544
  %v5302 = vpop.f32.mrf.mxu0
  %v5303 = vadd.f32 0.0, %v5302
  %5304 = vmatmul.f32.gmra.mxu0 %v4545
  %v5305 = vpop.f32.mrf.mxu0
  %v5306 = vadd.f32 0.0, %v5305
  %5307 = vmatmul.f32.gmra.mxu0 %v4546
  %v5308 = vpop.f32.mrf.mxu0
  %v5309 = vadd.f32 0.0, %v5308
  %5310 = vmatmul.f32.gmra.mxu0 %v4547
  %v5311 = vpop.f32.mrf.mxu0
  %v5312 = vadd.f32 0.0, %v5311
  %5313 = vmatmul.f32.gmra.mxu0 %v4548
  %v5314 = vpop.f32.mrf.mxu0
  %v5315 = vadd.f32 0.0, %v5314
  %5316 = vmatmul.f32.gmra.mxu0 %v4549
  %v5317 = vpop.f32.mrf.mxu0
  %v5318 = vadd.f32 0.0, %v5317
  %5319 = vmatmul.f32.gmra.mxu0 %v4550
  %v5320 = vpop.f32.mrf.mxu0
  %v5321 = vadd.f32 0.0, %v5320
  %5322 = vmatmul.f32.gmra.mxu0 %v4551
  %v5323 = vpop.f32.mrf.mxu0
  %v5324 = vadd.f32 0.0, %v5323
  %5325 = vmatmul.f32.gmra.mxu0 %v4552
  %v5326 = vpop.f32.mrf.mxu0
  %v5327 = vadd.f32 0.0, %v5326
  %5328 = vmatmul.f32.gmra.mxu0 %v4553
  %v5329 = vpop.f32.mrf.mxu0
  %v5330 = vadd.f32 0.0, %v5329
  %5331 = vmatmul.f32.gmra.mxu0 %v4554
  %v5332 = vpop.f32.mrf.mxu0
  %v5333 = vadd.f32 0.0, %v5332
  %5334 = vmatmul.f32.gmra.mxu0 %v4555
  %v5335 = vpop.f32.mrf.mxu0
  %v5336 = vadd.f32 0.0, %v5335
  %5337 = vmatmul.f32.gmra.mxu0 %v4556
  %v5338 = vpop.f32.mrf.mxu0
  %v5339 = vadd.f32 0.0, %v5338
  %5340 = vmatmul.f32.gmra.mxu0 %v4557
  %v5341 = vpop.f32.mrf.mxu0
  %v5342 = vadd.f32 0.0, %v5341
  %5343 = vmatmul.f32.gmra.mxu0 %v4558
  %v5344 = vpop.f32.mrf.mxu0
  %v5345 = vadd.f32 0.0, %v5344
  %5346 = vmatmul.f32.gmra.mxu0 %v4559
  %v5347 = vpop.f32.mrf.mxu0
  %v5348 = vadd.f32 0.0, %v5347
  %5349 = vmatmul.f32.gmra.mxu0 %v4560
  %v5350 = vpop.f32.mrf.mxu0
  %v5351 = vadd.f32 0.0, %v5350
  %5352 = vmatmul.f32.gmra.mxu0 %v4561
  %v5353 = vpop.f32.mrf.mxu0
  %v5354 = vadd.f32 0.0, %v5353
  %5355 = vmatmul.f32.gmra.mxu0 %v4562
  %v5356 = vpop.f32.mrf.mxu0
  %v5357 = vadd.f32 0.0, %v5356
  %5358 = vmatmul.f32.gmra.mxu0 %v4563
  %v5359 = vpop.f32.mrf.mxu0
  %v5360 = vadd.f32 0.0, %v5359
  %5361 = vmatmul.f32.gmra.mxu0 %v4564
  %v5362 = vpop.f32.mrf.mxu0
  %v5363 = vadd.f32 0.0, %v5362
  %5364 = vmatmul.f32.gmra.mxu0 %v4565
  %v5365 = vpop.f32.mrf.mxu0
  %v5366 = vadd.f32 0.0, %v5365
  %5367 = vmatmul.f32.gmra.mxu0 %v4566
  %v5368 = vpop.f32.mrf.mxu0
  %v5369 = vadd.f32 0.0, %v5368
  %5370 = vmatmul.f32.gmra.mxu0 %v4567
  %v5371 = vpop.f32.mrf.mxu0
  %v5372 = vadd.f32 0.0, %v5371
  %5373 = vdwg.mxu0
  %v5374 = vadd.f32 %v5084, %v5183
  %v5375 = vadd.f32 %v5085, %v5186
  %v5376 = vadd.f32 %v5086, %v5189
  %v5377 = vadd.f32 %v5087, %v5192
  %v5378 = vadd.f32 %v5088, %v5195
  %v5379 = vadd.f32 %v5089, %v5198
  %v5380 = vadd.f32 %v5090, %v5201
  %v5381 = vadd.f32 %v5091, %v5204
  %v5382 = vadd.f32 %v5092, %v5207
  %v5383 = vadd.f32 %v5093, %v5210
  %v5384 = vadd.f32 %v5094, %v5213
  %v5385 = vadd.f32 %v5095, %v5216
  %v5386 = vadd.f32 %v5096, %v5219
  %v5387 = vadd.f32 %v5097, %v5222
  %v5388 = vadd.f32 %v5098, %v5225
  %v5389 = vadd.f32 %v5099, %v5228
  %v5390 = vadd.f32 %v5100, %v5231
  %v5391 = vadd.f32 %v5101, %v5234
  %v5392 = vadd.f32 %v5102, %v5237
  %v5393 = vadd.f32 %v5103, %v5240
  %v5394 = vadd.f32 %v5104, %v5243
  %v5395 = vadd.f32 %v5105, %v5246
  %v5396 = vadd.f32 %v5106, %v5249
  %v5397 = vadd.f32 %v5107, %v5252
  %v5398 = vadd.f32 %v5108, %v5255
  %v5399 = vadd.f32 %v5109, %v5258
  %v5400 = vadd.f32 %v5110, %v5261
  %v5401 = vadd.f32 %v5111, %v5264
  %v5402 = vadd.f32 %v5112, %v5267
  %v5403 = vadd.f32 %v5113, %v5270
  %v5404 = vadd.f32 %v5114, %v5273
  %v5405 = vadd.f32 %v5115, %v5276
  %v5406 = vadd.f32 %v5116, %v5279
  %v5407 = vadd.f32 %v5117, %v5282
  %v5408 = vadd.f32 %v5118, %v5285
  %v5409 = vadd.f32 %v5119, %v5288
  %v5410 = vadd.f32 %v5120, %v5291
  %v5411 = vadd.f32 %v5121, %v5294
  %v5412 = vadd.f32 %v5122, %v5297
  %v5413 = vadd.f32 %v5123, %v5300
  %v5414 = vadd.f32 %v5124, %v5303
  %v5415 = vadd.f32 %v5125, %v5306
  %v5416 = vadd.f32 %v5126, %v5309
  %v5417 = vadd.f32 %v5127, %v5312
  %v5418 = vadd.f32 %v5128, %v5315
  %v5419 = vadd.f32 %v5129, %v5318
  %v5420 = vadd.f32 %v5130, %v5321
  %v5421 = vadd.f32 %v5131, %v5324
  %v5422 = vadd.f32 %v5132, %v5327
  %v5423 = vadd.f32 %v5133, %v5330
  %v5424 = vadd.f32 %v5134, %v5333
  %v5425 = vadd.f32 %v5135, %v5336
  %v5426 = vadd.f32 %v5136, %v5339
  %v5427 = vadd.f32 %v5137, %v5342
  %v5428 = vadd.f32 %v5138, %v5345
  %v5429 = vadd.f32 %v5139, %v5348
  %v5430 = vadd.f32 %v5140, %v5351
  %v5431 = vadd.f32 %v5141, %v5354
  %v5432 = vadd.f32 %v5142, %v5357
  %v5433 = vadd.f32 %v5143, %v5360
  %v5434 = vadd.f32 %v5144, %v5363
  %v5435 = vadd.f32 %v5145, %v5366
  %v5436 = vadd.f32 %v5146, %v5369
  %v5437 = vadd.f32 %v5147, %v5372
  %v5438 = vld [vmem:[#allocation2 + $0x2] sm:$0xff]
  %v5439 = vld [vmem:[#allocation2 + $0xa] sm:$0xff]
  %v5440 = vld [vmem:[#allocation2 + $0x1a] sm:$0xff]
  %v5441 = vld [vmem:[#allocation2 + $0x22] sm:$0xff]
  %v5442 = vld [vmem:[#allocation2 + $0x32] sm:$0xff]
  %v5443 = vld [vmem:[#allocation2 + $0x3a] sm:$0xff]
  %v5444 = vld [vmem:[#allocation2 + $0x4a] sm:$0xff]
  %v5445 = vld [vmem:[#allocation2 + $0x52] sm:$0xff]
  %v5446 = vld [vmem:[#allocation2 + $0x62] sm:$0xff]
  %v5447 = vld [vmem:[#allocation2 + $0x6a] sm:$0xff]
  %v5448 = vld [vmem:[#allocation2 + $0x7a] sm:$0xff]
  %v5449 = vld [vmem:[#allocation2 + $0x82] sm:$0xff]
  %v5450 = vld [vmem:[#allocation2 + $0x92] sm:$0xff]
  %v5451 = vld [vmem:[#allocation2 + $0x9a] sm:$0xff]
  %v5452 = vld [vmem:[#allocation2 + $0xaa] sm:$0xff]
  %v5453 = vld [vmem:[#allocation2 + $0xb2] sm:$0xff]
  %v5454 = vld [vmem:[#allocation2 + $0xc2] sm:$0xff]
  %v5455 = vld [vmem:[#allocation2 + $0xca] sm:$0xff]
  %v5456 = vld [vmem:[#allocation2 + $0xda] sm:$0xff]
  %v5457 = vld [vmem:[#allocation2 + $0xe2] sm:$0xff]
  %v5458 = vld [vmem:[#allocation2 + $0xf2] sm:$0xff]
  %v5459 = vld [vmem:[#allocation2 + $0xfa] sm:$0xff]
  %v5460 = vld [vmem:[#allocation2 + $0x10a] sm:$0xff]
  %v5461 = vld [vmem:[#allocation2 + $0x112] sm:$0xff]
  %v5462 = vld [vmem:[#allocation2 + $0x122] sm:$0xff]
  %v5463 = vld [vmem:[#allocation2 + $0x12a] sm:$0xff]
  %v5464 = vld [vmem:[#allocation2 + $0x13a] sm:$0xff]
  %v5465 = vld [vmem:[#allocation2 + $0x142] sm:$0xff]
  %v5466 = vld [vmem:[#allocation2 + $0x152] sm:$0xff]
  %v5467 = vld [vmem:[#allocation2 + $0x15a] sm:$0xff]
  %v5468 = vld [vmem:[#allocation2 + $0x16a] sm:$0xff]
  %v5469 = vld [vmem:[#allocation2 + $0x172] sm:$0xff]
  %v5470 = vld [vmem:[#allocation2 + $0x182] sm:$0xff]
  %v5471 = vld [vmem:[#allocation2 + $0x18a] sm:$0xff]
  %v5472 = vld [vmem:[#allocation2 + $0x19a] sm:$0xff]
  %v5473 = vld [vmem:[#allocation2 + $0x1a2] sm:$0xff]
  %v5474 = vld [vmem:[#allocation2 + $0x1b2] sm:$0xff]
  %v5475 = vld [vmem:[#allocation2 + $0x1ba] sm:$0xff]
  %v5476 = vld [vmem:[#allocation2 + $0x1ca] sm:$0xff]
  %v5477 = vld [vmem:[#allocation2 + $0x1d2] sm:$0xff]
  %v5478 = vld [vmem:[#allocation2 + $0x1e2] sm:$0xff]
  %v5479 = vld [vmem:[#allocation2 + $0x1ea] sm:$0xff]
  %v5480 = vld [vmem:[#allocation2 + $0x1fa] sm:$0xff]
  %v5481 = vld [vmem:[#allocation2 + $0x202] sm:$0xff]
  %v5482 = vld [vmem:[#allocation2 + $0x212] sm:$0xff]
  %v5483 = vld [vmem:[#allocation2 + $0x21a] sm:$0xff]
  %v5484 = vld [vmem:[#allocation2 + $0x22a] sm:$0xff]
  %v5485 = vld [vmem:[#allocation2 + $0x232] sm:$0xff]
  %v5486 = vld [vmem:[#allocation2 + $0x242] sm:$0xff]
  %v5487 = vld [vmem:[#allocation2 + $0x24a] sm:$0xff]
  %v5488 = vld [vmem:[#allocation2 + $0x25a] sm:$0xff]
  %v5489 = vld [vmem:[#allocation2 + $0x262] sm:$0xff]
  %v5490 = vld [vmem:[#allocation2 + $0x272] sm:$0xff]
  %v5491 = vld [vmem:[#allocation2 + $0x27a] sm:$0xff]
  %v5492 = vld [vmem:[#allocation2 + $0x28a] sm:$0xff]
  %v5493 = vld [vmem:[#allocation2 + $0x292] sm:$0xff]
  %v5494 = vld [vmem:[#allocation2 + $0x2a2] sm:$0xff]
  %v5495 = vld [vmem:[#allocation2 + $0x2aa] sm:$0xff]
  %v5496 = vld [vmem:[#allocation2 + $0x2ba] sm:$0xff]
  %v5497 = vld [vmem:[#allocation2 + $0x2c2] sm:$0xff]
  %v5498 = vld [vmem:[#allocation2 + $0x2d2] sm:$0xff]
  %v5499 = vld [vmem:[#allocation2 + $0x2da] sm:$0xff]
  %v5500 = vld [vmem:[#allocation2 + $0x2ea] sm:$0xff]
  %v5501 = vld [vmem:[#allocation2 + $0x2f2] sm:$0xff]
  %v5502 = vld [vmem:[#allocation2 + $0x302] sm:$0xff]
  %v5503 = vld [vmem:[#allocation2 + $0x30a] sm:$0xff]
  %v5504 = vld [vmem:[#allocation2 + $0x31a] sm:$0xff]
  %v5505 = vld [vmem:[#allocation2 + $0x322] sm:$0xff]
  %v5506 = vld [vmem:[#allocation2 + $0x332] sm:$0xff]
  %v5507 = vld [vmem:[#allocation2 + $0x33a] sm:$0xff]
  %v5508 = vld [vmem:[#allocation2 + $0x34a] sm:$0xff]
  %v5509 = vld [vmem:[#allocation2 + $0x352] sm:$0xff]
  %s5510 = scalar_lea.vmem %s5, 768
  %v5511 = vld [vmem:[%s5510] sm:$0xff]
  %v5512 = vld [vmem:[%s5510 + $0x8] sm:$0xff]
  %v5513 = vld [vmem:[%s5510 + $0x10] sm:$0xff]
  %v5514 = vld [vmem:[%s5510 + $0x18] sm:$0xff]
  %v5515 = vld [vmem:[%s5510 + $0x20] sm:$0xff]
  %v5516 = vld [vmem:[%s5510 + $0x28] sm:$0xff]
  %v5517 = vld [vmem:[%s5510 + $0x30] sm:$0xff]
  %v5518 = vld [vmem:[%s5510 + $0x38] sm:$0xff]
  %v5519 = vld [vmem:[%s5510 + $0x40] sm:$0xff]
  %v5520 = vld [vmem:[%s5510 + $0x48] sm:$0xff]
  %v5521 = vld [vmem:[%s5510 + $0x50] sm:$0xff]
  %v5522 = vld [vmem:[%s5510 + $0x58] sm:$0xff]
  %v5523 = vld [vmem:[%s5510 + $0x60] sm:$0xff]
  %v5524 = vld [vmem:[%s5510 + $0x68] sm:$0xff]
  %v5525 = vld [vmem:[%s5510 + $0x70] sm:$0xff]
  %v5526 = vld [vmem:[%s5510 + $0x78] sm:$0xff]
  %5527 = vmatpush.msra.mxu0 %v5526
  %5528 = vmatpush.msra.mxu0 %v5525
  %5529 = vmatpush.msra.mxu0 %v5524
  %5530 = vmatpush.msra.mxu0 %v5523
  %5531 = vmatpush.msra.mxu0 %v5522
  %5532 = vmatpush.msra.mxu0 %v5521
  %5533 = vmatpush.msra.mxu0 %v5520
  %5534 = vmatpush.msra.mxu0 %v5519
  %5535 = vmatpush.msra.mxu0 %v5518
  %5536 = vmatpush.msra.mxu0 %v5517
  %5537 = vmatpush.msra.mxu0 %v5516
  %5538 = vmatpush.msra.mxu0 %v5515
  %5539 = vmatpush.msra.mxu0 %v5514
  %5540 = vmatpush.msra.mxu0 %v5513
  %5541 = vmatpush.msra.mxu0 %v5512
  %5542 = vmatpush.msra.mxu0 %v5511
  %5543 = vmatmul.f32.gmra.mxu0 %v5438
  %v5544 = vpop.f32.mrf.mxu0
  %v5545 = vadd.f32 0.0, %v5544
  %5546 = vmatmul.f32.gmra.mxu0 %v5439
  %v5547 = vpop.f32.mrf.mxu0
  %v5548 = vadd.f32 0.0, %v5547
  %5549 = vmatmul.f32.gmra.mxu0 %v5440
  %v5550 = vpop.f32.mrf.mxu0
  %v5551 = vadd.f32 0.0, %v5550
  %5552 = vmatmul.f32.gmra.mxu0 %v5441
  %v5553 = vpop.f32.mrf.mxu0
  %v5554 = vadd.f32 0.0, %v5553
  %5555 = vmatmul.f32.gmra.mxu0 %v5442
  %v5556 = vpop.f32.mrf.mxu0
  %v5557 = vadd.f32 0.0, %v5556
  %5558 = vmatmul.f32.gmra.mxu0 %v5443
  %v5559 = vpop.f32.mrf.mxu0
  %v5560 = vadd.f32 0.0, %v5559
  %5561 = vmatmul.f32.gmra.mxu0 %v5444
  %v5562 = vpop.f32.mrf.mxu0
  %v5563 = vadd.f32 0.0, %v5562
  %5564 = vmatmul.f32.gmra.mxu0 %v5445
  %v5565 = vpop.f32.mrf.mxu0
  %v5566 = vadd.f32 0.0, %v5565
  %5567 = vmatmul.f32.gmra.mxu0 %v5446
  %v5568 = vpop.f32.mrf.mxu0
  %v5569 = vadd.f32 0.0, %v5568
  %5570 = vmatmul.f32.gmra.mxu0 %v5447
  %v5571 = vpop.f32.mrf.mxu0
  %v5572 = vadd.f32 0.0, %v5571
  %5573 = vmatmul.f32.gmra.mxu0 %v5448
  %v5574 = vpop.f32.mrf.mxu0
  %v5575 = vadd.f32 0.0, %v5574
  %5576 = vmatmul.f32.gmra.mxu0 %v5449
  %v5577 = vpop.f32.mrf.mxu0
  %v5578 = vadd.f32 0.0, %v5577
  %5579 = vmatmul.f32.gmra.mxu0 %v5450
  %v5580 = vpop.f32.mrf.mxu0
  %v5581 = vadd.f32 0.0, %v5580
  %5582 = vmatmul.f32.gmra.mxu0 %v5451
  %v5583 = vpop.f32.mrf.mxu0
  %v5584 = vadd.f32 0.0, %v5583
  %5585 = vmatmul.f32.gmra.mxu0 %v5452
  %v5586 = vpop.f32.mrf.mxu0
  %v5587 = vadd.f32 0.0, %v5586
  %5588 = vmatmul.f32.gmra.mxu0 %v5453
  %v5589 = vpop.f32.mrf.mxu0
  %v5590 = vadd.f32 0.0, %v5589
  %5591 = vmatmul.f32.gmra.mxu0 %v5454
  %v5592 = vpop.f32.mrf.mxu0
  %v5593 = vadd.f32 0.0, %v5592
  %5594 = vmatmul.f32.gmra.mxu0 %v5455
  %v5595 = vpop.f32.mrf.mxu0
  %v5596 = vadd.f32 0.0, %v5595
  %5597 = vmatmul.f32.gmra.mxu0 %v5456
  %v5598 = vpop.f32.mrf.mxu0
  %v5599 = vadd.f32 0.0, %v5598
  %5600 = vmatmul.f32.gmra.mxu0 %v5457
  %v5601 = vpop.f32.mrf.mxu0
  %v5602 = vadd.f32 0.0, %v5601
  %5603 = vmatmul.f32.gmra.mxu0 %v5458
  %v5604 = vpop.f32.mrf.mxu0
  %v5605 = vadd.f32 0.0, %v5604
  %5606 = vmatmul.f32.gmra.mxu0 %v5459
  %v5607 = vpop.f32.mrf.mxu0
  %v5608 = vadd.f32 0.0, %v5607
  %5609 = vmatmul.f32.gmra.mxu0 %v5460
  %v5610 = vpop.f32.mrf.mxu0
  %v5611 = vadd.f32 0.0, %v5610
  %5612 = vmatmul.f32.gmra.mxu0 %v5461
  %v5613 = vpop.f32.mrf.mxu0
  %v5614 = vadd.f32 0.0, %v5613
  %5615 = vmatmul.f32.gmra.mxu0 %v5462
  %v5616 = vpop.f32.mrf.mxu0
  %v5617 = vadd.f32 0.0, %v5616
  %5618 = vmatmul.f32.gmra.mxu0 %v5463
  %v5619 = vpop.f32.mrf.mxu0
  %v5620 = vadd.f32 0.0, %v5619
  %5621 = vmatmul.f32.gmra.mxu0 %v5464
  %v5622 = vpop.f32.mrf.mxu0
  %v5623 = vadd.f32 0.0, %v5622
  %5624 = vmatmul.f32.gmra.mxu0 %v5465
  %v5625 = vpop.f32.mrf.mxu0
  %v5626 = vadd.f32 0.0, %v5625
  %5627 = vmatmul.f32.gmra.mxu0 %v5466
  %v5628 = vpop.f32.mrf.mxu0
  %v5629 = vadd.f32 0.0, %v5628
  %5630 = vmatmul.f32.gmra.mxu0 %v5467
  %v5631 = vpop.f32.mrf.mxu0
  %v5632 = vadd.f32 0.0, %v5631
  %5633 = vmatmul.f32.gmra.mxu0 %v5468
  %v5634 = vpop.f32.mrf.mxu0
  %v5635 = vadd.f32 0.0, %v5634
  %5636 = vmatmul.f32.gmra.mxu0 %v5469
  %v5637 = vpop.f32.mrf.mxu0
  %v5638 = vadd.f32 0.0, %v5637
  %5639 = vmatmul.f32.gmra.mxu0 %v5474
  %v5640 = vpop.f32.mrf.mxu0
  %v5641 = vadd.f32 0.0, %v5640
  %5642 = vmatmul.f32.gmra.mxu0 %v5475
  %v5643 = vpop.f32.mrf.mxu0
  %v5644 = vadd.f32 0.0, %v5643
  %5645 = vmatmul.f32.gmra.mxu0 %v5476
  %v5646 = vpop.f32.mrf.mxu0
  %v5647 = vadd.f32 0.0, %v5646
  %5648 = vmatmul.f32.gmra.mxu0 %v5477
  %v5649 = vpop.f32.mrf.mxu0
  %v5650 = vadd.f32 0.0, %v5649
  %5651 = vmatmul.f32.gmra.mxu0 %v5478
  %v5652 = vpop.f32.mrf.mxu0
  %v5653 = vadd.f32 0.0, %v5652
  %5654 = vmatmul.f32.gmra.mxu0 %v5479
  %v5655 = vpop.f32.mrf.mxu0
  %v5656 = vadd.f32 0.0, %v5655
  %5657 = vmatmul.f32.gmra.mxu0 %v5480
  %v5658 = vpop.f32.mrf.mxu0
  %v5659 = vadd.f32 0.0, %v5658
  %5660 = vmatmul.f32.gmra.mxu0 %v5481
  %v5661 = vpop.f32.mrf.mxu0
  %v5662 = vadd.f32 0.0, %v5661
  %5663 = vmatmul.f32.gmra.mxu0 %v5482
  %v5664 = vpop.f32.mrf.mxu0
  %v5665 = vadd.f32 0.0, %v5664
  %5666 = vmatmul.f32.gmra.mxu0 %v5483
  %v5667 = vpop.f32.mrf.mxu0
  %v5668 = vadd.f32 0.0, %v5667
  %5669 = vmatmul.f32.gmra.mxu0 %v5484
  %v5670 = vpop.f32.mrf.mxu0
  %v5671 = vadd.f32 0.0, %v5670
  %5672 = vmatmul.f32.gmra.mxu0 %v5485
  %v5673 = vpop.f32.mrf.mxu0
  %v5674 = vadd.f32 0.0, %v5673
  %5675 = vmatmul.f32.gmra.mxu0 %v5486
  %v5676 = vpop.f32.mrf.mxu0
  %v5677 = vadd.f32 0.0, %v5676
  %5678 = vmatmul.f32.gmra.mxu0 %v5487
  %v5679 = vpop.f32.mrf.mxu0
  %v5680 = vadd.f32 0.0, %v5679
  %5681 = vmatmul.f32.gmra.mxu0 %v5488
  %v5682 = vpop.f32.mrf.mxu0
  %v5683 = vadd.f32 0.0, %v5682
  %5684 = vmatmul.f32.gmra.mxu0 %v5489
  %v5685 = vpop.f32.mrf.mxu0
  %v5686 = vadd.f32 0.0, %v5685
  %5687 = vmatmul.f32.gmra.mxu0 %v5490
  %v5688 = vpop.f32.mrf.mxu0
  %v5689 = vadd.f32 0.0, %v5688
  %5690 = vmatmul.f32.gmra.mxu0 %v5491
  %v5691 = vpop.f32.mrf.mxu0
  %v5692 = vadd.f32 0.0, %v5691
  %5693 = vmatmul.f32.gmra.mxu0 %v5492
  %v5694 = vpop.f32.mrf.mxu0
  %v5695 = vadd.f32 0.0, %v5694
  %5696 = vmatmul.f32.gmra.mxu0 %v5493
  %v5697 = vpop.f32.mrf.mxu0
  %v5698 = vadd.f32 0.0, %v5697
  %5699 = vmatmul.f32.gmra.mxu0 %v5494
  %v5700 = vpop.f32.mrf.mxu0
  %v5701 = vadd.f32 0.0, %v5700
  %5702 = vmatmul.f32.gmra.mxu0 %v5495
  %v5703 = vpop.f32.mrf.mxu0
  %v5704 = vadd.f32 0.0, %v5703
  %5705 = vmatmul.f32.gmra.mxu0 %v5496
  %v5706 = vpop.f32.mrf.mxu0
  %v5707 = vadd.f32 0.0, %v5706
  %5708 = vmatmul.f32.gmra.mxu0 %v5497
  %v5709 = vpop.f32.mrf.mxu0
  %v5710 = vadd.f32 0.0, %v5709
  %5711 = vmatmul.f32.gmra.mxu0 %v5498
  %v5712 = vpop.f32.mrf.mxu0
  %v5713 = vadd.f32 0.0, %v5712
  %5714 = vmatmul.f32.gmra.mxu0 %v5499
  %v5715 = vpop.f32.mrf.mxu0
  %v5716 = vadd.f32 0.0, %v5715
  %5717 = vmatmul.f32.gmra.mxu0 %v5500
  %v5718 = vpop.f32.mrf.mxu0
  %v5719 = vadd.f32 0.0, %v5718
  %5720 = vmatmul.f32.gmra.mxu0 %v5501
  %v5721 = vpop.f32.mrf.mxu0
  %v5722 = vadd.f32 0.0, %v5721
  %5723 = vmatmul.f32.gmra.mxu0 %v5502
  %v5724 = vpop.f32.mrf.mxu0
  %v5725 = vadd.f32 0.0, %v5724
  %5726 = vmatmul.f32.gmra.mxu0 %v5503
  %v5727 = vpop.f32.mrf.mxu0
  %v5728 = vadd.f32 0.0, %v5727
  %5729 = vmatmul.f32.gmra.mxu0 %v5504
  %v5730 = vpop.f32.mrf.mxu0
  %v5731 = vadd.f32 0.0, %v5730
  %5732 = vmatmul.f32.gmra.mxu0 %v5505
  %v5733 = vpop.f32.mrf.mxu0
  %v5734 = vadd.f32 0.0, %v5733
  %5735 = vdwg.mxu0
  %v5736 = vadd.f32 %v5374, %v5545
  %v5737 = vadd.f32 %v5375, %v5548
  %v5738 = vadd.f32 %v5376, %v5551
  %v5739 = vadd.f32 %v5377, %v5554
  %v5740 = vadd.f32 %v5378, %v5557
  %v5741 = vadd.f32 %v5379, %v5560
  %v5742 = vadd.f32 %v5380, %v5563
  %v5743 = vadd.f32 %v5381, %v5566
  %v5744 = vadd.f32 %v5382, %v5569
  %v5745 = vadd.f32 %v5383, %v5572
  %v5746 = vadd.f32 %v5384, %v5575
  %v5747 = vadd.f32 %v5385, %v5578
  %v5748 = vadd.f32 %v5386, %v5581
  %v5749 = vadd.f32 %v5387, %v5584
  %v5750 = vadd.f32 %v5388, %v5587
  %v5751 = vadd.f32 %v5389, %v5590
  %v5752 = vadd.f32 %v5390, %v5593
  %v5753 = vadd.f32 %v5391, %v5596
  %v5754 = vadd.f32 %v5392, %v5599
  %v5755 = vadd.f32 %v5393, %v5602
  %v5756 = vadd.f32 %v5394, %v5605
  %v5757 = vadd.f32 %v5395, %v5608
  %v5758 = vadd.f32 %v5396, %v5611
  %v5759 = vadd.f32 %v5397, %v5614
  %v5760 = vadd.f32 %v5398, %v5617
  %v5761 = vadd.f32 %v5399, %v5620
  %v5762 = vadd.f32 %v5400, %v5623
  %v5763 = vadd.f32 %v5401, %v5626
  %v5764 = vadd.f32 %v5402, %v5629
  %v5765 = vadd.f32 %v5403, %v5632
  %v5766 = vadd.f32 %v5404, %v5635
  %v5767 = vadd.f32 %v5405, %v5638
  %v5768 = vadd.f32 %v5406, %v5641
  %v5769 = vadd.f32 %v5407, %v5644
  %v5770 = vadd.f32 %v5408, %v5647
  %v5771 = vadd.f32 %v5409, %v5650
  %v5772 = vadd.f32 %v5410, %v5653
  %v5773 = vadd.f32 %v5411, %v5656
  %v5774 = vadd.f32 %v5412, %v5659
  %v5775 = vadd.f32 %v5413, %v5662
  %v5776 = vadd.f32 %v5414, %v5665
  %v5777 = vadd.f32 %v5415, %v5668
  %v5778 = vadd.f32 %v5416, %v5671
  %v5779 = vadd.f32 %v5417, %v5674
  %v5780 = vadd.f32 %v5418, %v5677
  %v5781 = vadd.f32 %v5419, %v5680
  %v5782 = vadd.f32 %v5420, %v5683
  %v5783 = vadd.f32 %v5421, %v5686
  %v5784 = vadd.f32 %v5422, %v5689
  %v5785 = vadd.f32 %v5423, %v5692
  %v5786 = vadd.f32 %v5424, %v5695
  %v5787 = vadd.f32 %v5425, %v5698
  %v5788 = vadd.f32 %v5426, %v5701
  %v5789 = vadd.f32 %v5427, %v5704
  %v5790 = vadd.f32 %v5428, %v5707
  %v5791 = vadd.f32 %v5429, %v5710
  %v5792 = vadd.f32 %v5430, %v5713
  %v5793 = vadd.f32 %v5431, %v5716
  %v5794 = vadd.f32 %v5432, %v5719
  %v5795 = vadd.f32 %v5433, %v5722
  %v5796 = vadd.f32 %v5434, %v5725
  %v5797 = vadd.f32 %v5435, %v5728
  %v5798 = vadd.f32 %v5436, %v5731
  %v5799 = vadd.f32 %v5437, %v5734
  %s5800 = scalar_lea.vmem %s5, 896
  %v5801 = vld [vmem:[%s5800] sm:$0xff]
  %v5802 = vld [vmem:[%s5800 + $0x8] sm:$0xff]
  %v5803 = vld [vmem:[%s5800 + $0x10] sm:$0xff]
  %v5804 = vld [vmem:[%s5800 + $0x18] sm:$0xff]
  %v5805 = vld [vmem:[%s5800 + $0x20] sm:$0xff]
  %v5806 = vld [vmem:[%s5800 + $0x28] sm:$0xff]
  %v5807 = vld [vmem:[%s5800 + $0x30] sm:$0xff]
  %v5808 = vld [vmem:[%s5800 + $0x38] sm:$0xff]
  %v5809 = vld [vmem:[%s5800 + $0x40] sm:$0xff]
  %v5810 = vld [vmem:[%s5800 + $0x48] sm:$0xff]
  %v5811 = vld [vmem:[%s5800 + $0x50] sm:$0xff]
  %v5812 = vld [vmem:[%s5800 + $0x58] sm:$0xff]
  %v5813 = vld [vmem:[%s5800 + $0x60] sm:$0xff]
  %v5814 = vld [vmem:[%s5800 + $0x68] sm:$0xff]
  %v5815 = vld [vmem:[%s5800 + $0x70] sm:$0xff]
  %v5816 = vld [vmem:[%s5800 + $0x78] sm:$0xff]
  %5817 = vmatpush.msra.mxu0 %v5816
  %5818 = vmatpush.msra.mxu0 %v5815
  %5819 = vmatpush.msra.mxu0 %v5814
  %5820 = vmatpush.msra.mxu0 %v5813
  %5821 = vmatpush.msra.mxu0 %v5812
  %5822 = vmatpush.msra.mxu0 %v5811
  %5823 = vmatpush.msra.mxu0 %v5810
  %5824 = vmatpush.msra.mxu0 %v5809
  %5825 = vmatpush.msra.mxu0 %v5808
  %5826 = vmatpush.msra.mxu0 %v5807
  %5827 = vmatpush.msra.mxu0 %v5806
  %5828 = vmatpush.msra.mxu0 %v5805
  %5829 = vmatpush.msra.mxu0 %v5804
  %5830 = vmatpush.msra.mxu0 %v5803
  %5831 = vmatpush.msra.mxu0 %v5802
  %5832 = vmatpush.msra.mxu0 %v5801
  %5833 = vmatmul.f32.gmra.mxu0 %v5440
  %v5834 = vpop.f32.mrf.mxu0
  %v5835 = vadd.f32 0.0, %v5834
  %5836 = vmatmul.f32.gmra.mxu0 %v5441
  %v5837 = vpop.f32.mrf.mxu0
  %v5838 = vadd.f32 0.0, %v5837
  %5839 = vmatmul.f32.gmra.mxu0 %v5442
  %v5840 = vpop.f32.mrf.mxu0
  %v5841 = vadd.f32 0.0, %v5840
  %5842 = vmatmul.f32.gmra.mxu0 %v5443
  %v5843 = vpop.f32.mrf.mxu0
  %v5844 = vadd.f32 0.0, %v5843
  %5845 = vmatmul.f32.gmra.mxu0 %v5444
  %v5846 = vpop.f32.mrf.mxu0
  %v5847 = vadd.f32 0.0, %v5846
  %5848 = vmatmul.f32.gmra.mxu0 %v5445
  %v5849 = vpop.f32.mrf.mxu0
  %v5850 = vadd.f32 0.0, %v5849
  %5851 = vmatmul.f32.gmra.mxu0 %v5446
  %v5852 = vpop.f32.mrf.mxu0
  %v5853 = vadd.f32 0.0, %v5852
  %5854 = vmatmul.f32.gmra.mxu0 %v5447
  %v5855 = vpop.f32.mrf.mxu0
  %v5856 = vadd.f32 0.0, %v5855
  %5857 = vmatmul.f32.gmra.mxu0 %v5448
  %v5858 = vpop.f32.mrf.mxu0
  %v5859 = vadd.f32 0.0, %v5858
  %5860 = vmatmul.f32.gmra.mxu0 %v5449
  %v5861 = vpop.f32.mrf.mxu0
  %v5862 = vadd.f32 0.0, %v5861
  %5863 = vmatmul.f32.gmra.mxu0 %v5450
  %v5864 = vpop.f32.mrf.mxu0
  %v5865 = vadd.f32 0.0, %v5864
  %5866 = vmatmul.f32.gmra.mxu0 %v5451
  %v5867 = vpop.f32.mrf.mxu0
  %v5868 = vadd.f32 0.0, %v5867
  %5869 = vmatmul.f32.gmra.mxu0 %v5452
  %v5870 = vpop.f32.mrf.mxu0
  %v5871 = vadd.f32 0.0, %v5870
  %5872 = vmatmul.f32.gmra.mxu0 %v5453
  %v5873 = vpop.f32.mrf.mxu0
  %v5874 = vadd.f32 0.0, %v5873
  %5875 = vmatmul.f32.gmra.mxu0 %v5454
  %v5876 = vpop.f32.mrf.mxu0
  %v5877 = vadd.f32 0.0, %v5876
  %5878 = vmatmul.f32.gmra.mxu0 %v5455
  %v5879 = vpop.f32.mrf.mxu0
  %v5880 = vadd.f32 0.0, %v5879
  %5881 = vmatmul.f32.gmra.mxu0 %v5456
  %v5882 = vpop.f32.mrf.mxu0
  %v5883 = vadd.f32 0.0, %v5882
  %5884 = vmatmul.f32.gmra.mxu0 %v5457
  %v5885 = vpop.f32.mrf.mxu0
  %v5886 = vadd.f32 0.0, %v5885
  %5887 = vmatmul.f32.gmra.mxu0 %v5458
  %v5888 = vpop.f32.mrf.mxu0
  %v5889 = vadd.f32 0.0, %v5888
  %5890 = vmatmul.f32.gmra.mxu0 %v5459
  %v5891 = vpop.f32.mrf.mxu0
  %v5892 = vadd.f32 0.0, %v5891
  %5893 = vmatmul.f32.gmra.mxu0 %v5460
  %v5894 = vpop.f32.mrf.mxu0
  %v5895 = vadd.f32 0.0, %v5894
  %5896 = vmatmul.f32.gmra.mxu0 %v5461
  %v5897 = vpop.f32.mrf.mxu0
  %v5898 = vadd.f32 0.0, %v5897
  %5899 = vmatmul.f32.gmra.mxu0 %v5462
  %v5900 = vpop.f32.mrf.mxu0
  %v5901 = vadd.f32 0.0, %v5900
  %5902 = vmatmul.f32.gmra.mxu0 %v5463
  %v5903 = vpop.f32.mrf.mxu0
  %v5904 = vadd.f32 0.0, %v5903
  %5905 = vmatmul.f32.gmra.mxu0 %v5464
  %v5906 = vpop.f32.mrf.mxu0
  %v5907 = vadd.f32 0.0, %v5906
  %5908 = vmatmul.f32.gmra.mxu0 %v5465
  %v5909 = vpop.f32.mrf.mxu0
  %v5910 = vadd.f32 0.0, %v5909
  %5911 = vmatmul.f32.gmra.mxu0 %v5466
  %v5912 = vpop.f32.mrf.mxu0
  %v5913 = vadd.f32 0.0, %v5912
  %5914 = vmatmul.f32.gmra.mxu0 %v5467
  %v5915 = vpop.f32.mrf.mxu0
  %v5916 = vadd.f32 0.0, %v5915
  %5917 = vmatmul.f32.gmra.mxu0 %v5468
  %v5918 = vpop.f32.mrf.mxu0
  %v5919 = vadd.f32 0.0, %v5918
  %5920 = vmatmul.f32.gmra.mxu0 %v5469
  %v5921 = vpop.f32.mrf.mxu0
  %v5922 = vadd.f32 0.0, %v5921
  %5923 = vmatmul.f32.gmra.mxu0 %v5470
  %v5924 = vpop.f32.mrf.mxu0
  %v5925 = vadd.f32 0.0, %v5924
  %5926 = vmatmul.f32.gmra.mxu0 %v5471
  %v5927 = vpop.f32.mrf.mxu0
  %v5928 = vadd.f32 0.0, %v5927
  %5929 = vmatmul.f32.gmra.mxu0 %v5476
  %v5930 = vpop.f32.mrf.mxu0
  %v5931 = vadd.f32 0.0, %v5930
  %5932 = vmatmul.f32.gmra.mxu0 %v5477
  %v5933 = vpop.f32.mrf.mxu0
  %v5934 = vadd.f32 0.0, %v5933
  %5935 = vmatmul.f32.gmra.mxu0 %v5478
  %v5936 = vpop.f32.mrf.mxu0
  %v5937 = vadd.f32 0.0, %v5936
  %5938 = vmatmul.f32.gmra.mxu0 %v5479
  %v5939 = vpop.f32.mrf.mxu0
  %v5940 = vadd.f32 0.0, %v5939
  %5941 = vmatmul.f32.gmra.mxu0 %v5480
  %v5942 = vpop.f32.mrf.mxu0
  %v5943 = vadd.f32 0.0, %v5942
  %5944 = vmatmul.f32.gmra.mxu0 %v5481
  %v5945 = vpop.f32.mrf.mxu0
  %v5946 = vadd.f32 0.0, %v5945
  %5947 = vmatmul.f32.gmra.mxu0 %v5482
  %v5948 = vpop.f32.mrf.mxu0
  %v5949 = vadd.f32 0.0, %v5948
  %5950 = vmatmul.f32.gmra.mxu0 %v5483
  %v5951 = vpop.f32.mrf.mxu0
  %v5952 = vadd.f32 0.0, %v5951
  %5953 = vmatmul.f32.gmra.mxu0 %v5484
  %v5954 = vpop.f32.mrf.mxu0
  %v5955 = vadd.f32 0.0, %v5954
  %5956 = vmatmul.f32.gmra.mxu0 %v5485
  %v5957 = vpop.f32.mrf.mxu0
  %v5958 = vadd.f32 0.0, %v5957
  %5959 = vmatmul.f32.gmra.mxu0 %v5486
  %v5960 = vpop.f32.mrf.mxu0
  %v5961 = vadd.f32 0.0, %v5960
  %5962 = vmatmul.f32.gmra.mxu0 %v5487
  %v5963 = vpop.f32.mrf.mxu0
  %v5964 = vadd.f32 0.0, %v5963
  %5965 = vmatmul.f32.gmra.mxu0 %v5488
  %v5966 = vpop.f32.mrf.mxu0
  %v5967 = vadd.f32 0.0, %v5966
  %5968 = vmatmul.f32.gmra.mxu0 %v5489
  %v5969 = vpop.f32.mrf.mxu0
  %v5970 = vadd.f32 0.0, %v5969
  %5971 = vmatmul.f32.gmra.mxu0 %v5490
  %v5972 = vpop.f32.mrf.mxu0
  %v5973 = vadd.f32 0.0, %v5972
  %5974 = vmatmul.f32.gmra.mxu0 %v5491
  %v5975 = vpop.f32.mrf.mxu0
  %v5976 = vadd.f32 0.0, %v5975
  %5977 = vmatmul.f32.gmra.mxu0 %v5492
  %v5978 = vpop.f32.mrf.mxu0
  %v5979 = vadd.f32 0.0, %v5978
  %5980 = vmatmul.f32.gmra.mxu0 %v5493
  %v5981 = vpop.f32.mrf.mxu0
  %v5982 = vadd.f32 0.0, %v5981
  %5983 = vmatmul.f32.gmra.mxu0 %v5494
  %v5984 = vpop.f32.mrf.mxu0
  %v5985 = vadd.f32 0.0, %v5984
  %5986 = vmatmul.f32.gmra.mxu0 %v5495
  %v5987 = vpop.f32.mrf.mxu0
  %v5988 = vadd.f32 0.0, %v5987
  %5989 = vmatmul.f32.gmra.mxu0 %v5496
  %v5990 = vpop.f32.mrf.mxu0
  %v5991 = vadd.f32 0.0, %v5990
  %5992 = vmatmul.f32.gmra.mxu0 %v5497
  %v5993 = vpop.f32.mrf.mxu0
  %v5994 = vadd.f32 0.0, %v5993
  %5995 = vmatmul.f32.gmra.mxu0 %v5498
  %v5996 = vpop.f32.mrf.mxu0
  %v5997 = vadd.f32 0.0, %v5996
  %5998 = vmatmul.f32.gmra.mxu0 %v5499
  %v5999 = vpop.f32.mrf.mxu0
  %v6000 = vadd.f32 0.0, %v5999
  %6001 = vmatmul.f32.gmra.mxu0 %v5500
  %v6002 = vpop.f32.mrf.mxu0
  %v6003 = vadd.f32 0.0, %v6002
  %6004 = vmatmul.f32.gmra.mxu0 %v5501
  %v6005 = vpop.f32.mrf.mxu0
  %v6006 = vadd.f32 0.0, %v6005
  %6007 = vmatmul.f32.gmra.mxu0 %v5502
  %v6008 = vpop.f32.mrf.mxu0
  %v6009 = vadd.f32 0.0, %v6008
  %6010 = vmatmul.f32.gmra.mxu0 %v5503
  %v6011 = vpop.f32.mrf.mxu0
  %v6012 = vadd.f32 0.0, %v6011
  %6013 = vmatmul.f32.gmra.mxu0 %v5504
  %v6014 = vpop.f32.mrf.mxu0
  %v6015 = vadd.f32 0.0, %v6014
  %6016 = vmatmul.f32.gmra.mxu0 %v5505
  %v6017 = vpop.f32.mrf.mxu0
  %v6018 = vadd.f32 0.0, %v6017
  %6019 = vmatmul.f32.gmra.mxu0 %v5506
  %v6020 = vpop.f32.mrf.mxu0
  %v6021 = vadd.f32 0.0, %v6020
  %6022 = vmatmul.f32.gmra.mxu0 %v5507
  %v6023 = vpop.f32.mrf.mxu0
  %v6024 = vadd.f32 0.0, %v6023
  %6025 = vdwg.mxu0
  %v6026 = vadd.f32 %v5736, %v5835
  %v6027 = vadd.f32 %v5737, %v5838
  %v6028 = vadd.f32 %v5738, %v5841
  %v6029 = vadd.f32 %v5739, %v5844
  %v6030 = vadd.f32 %v5740, %v5847
  %v6031 = vadd.f32 %v5741, %v5850
  %v6032 = vadd.f32 %v5742, %v5853
  %v6033 = vadd.f32 %v5743, %v5856
  %v6034 = vadd.f32 %v5744, %v5859
  %v6035 = vadd.f32 %v5745, %v5862
  %v6036 = vadd.f32 %v5746, %v5865
  %v6037 = vadd.f32 %v5747, %v5868
  %v6038 = vadd.f32 %v5748, %v5871
  %v6039 = vadd.f32 %v5749, %v5874
  %v6040 = vadd.f32 %v5750, %v5877
  %v6041 = vadd.f32 %v5751, %v5880
  %v6042 = vadd.f32 %v5752, %v5883
  %v6043 = vadd.f32 %v5753, %v5886
  %v6044 = vadd.f32 %v5754, %v5889
  %v6045 = vadd.f32 %v5755, %v5892
  %v6046 = vadd.f32 %v5756, %v5895
  %v6047 = vadd.f32 %v5757, %v5898
  %v6048 = vadd.f32 %v5758, %v5901
  %v6049 = vadd.f32 %v5759, %v5904
  %v6050 = vadd.f32 %v5760, %v5907
  %v6051 = vadd.f32 %v5761, %v5910
  %v6052 = vadd.f32 %v5762, %v5913
  %v6053 = vadd.f32 %v5763, %v5916
  %v6054 = vadd.f32 %v5764, %v5919
  %v6055 = vadd.f32 %v5765, %v5922
  %v6056 = vadd.f32 %v5766, %v5925
  %v6057 = vadd.f32 %v5767, %v5928
  %v6058 = vadd.f32 %v5768, %v5931
  %v6059 = vadd.f32 %v5769, %v5934
  %v6060 = vadd.f32 %v5770, %v5937
  %v6061 = vadd.f32 %v5771, %v5940
  %v6062 = vadd.f32 %v5772, %v5943
  %v6063 = vadd.f32 %v5773, %v5946
  %v6064 = vadd.f32 %v5774, %v5949
  %v6065 = vadd.f32 %v5775, %v5952
  %v6066 = vadd.f32 %v5776, %v5955
  %v6067 = vadd.f32 %v5777, %v5958
  %v6068 = vadd.f32 %v5778, %v5961
  %v6069 = vadd.f32 %v5779, %v5964
  %v6070 = vadd.f32 %v5780, %v5967
  %v6071 = vadd.f32 %v5781, %v5970
  %v6072 = vadd.f32 %v5782, %v5973
  %v6073 = vadd.f32 %v5783, %v5976
  %v6074 = vadd.f32 %v5784, %v5979
  %v6075 = vadd.f32 %v5785, %v5982
  %v6076 = vadd.f32 %v5786, %v5985
  %v6077 = vadd.f32 %v5787, %v5988
  %v6078 = vadd.f32 %v5788, %v5991
  %v6079 = vadd.f32 %v5789, %v5994
  %v6080 = vadd.f32 %v5790, %v5997
  %v6081 = vadd.f32 %v5791, %v6000
  %v6082 = vadd.f32 %v5792, %v6003
  %v6083 = vadd.f32 %v5793, %v6006
  %v6084 = vadd.f32 %v5794, %v6009
  %v6085 = vadd.f32 %v5795, %v6012
  %v6086 = vadd.f32 %v5796, %v6015
  %v6087 = vadd.f32 %v5797, %v6018
  %v6088 = vadd.f32 %v5798, %v6021
  %v6089 = vadd.f32 %v5799, %v6024
  %s6090 = scalar_lea.vmem %s5, 1024
  %v6091 = vld [vmem:[%s6090] sm:$0xff]
  %v6092 = vld [vmem:[%s6090 + $0x8] sm:$0xff]
  %v6093 = vld [vmem:[%s6090 + $0x10] sm:$0xff]
  %v6094 = vld [vmem:[%s6090 + $0x18] sm:$0xff]
  %v6095 = vld [vmem:[%s6090 + $0x20] sm:$0xff]
  %v6096 = vld [vmem:[%s6090 + $0x28] sm:$0xff]
  %v6097 = vld [vmem:[%s6090 + $0x30] sm:$0xff]
  %v6098 = vld [vmem:[%s6090 + $0x38] sm:$0xff]
  %v6099 = vld [vmem:[%s6090 + $0x40] sm:$0xff]
  %v6100 = vld [vmem:[%s6090 + $0x48] sm:$0xff]
  %v6101 = vld [vmem:[%s6090 + $0x50] sm:$0xff]
  %v6102 = vld [vmem:[%s6090 + $0x58] sm:$0xff]
  %v6103 = vld [vmem:[%s6090 + $0x60] sm:$0xff]
  %v6104 = vld [vmem:[%s6090 + $0x68] sm:$0xff]
  %v6105 = vld [vmem:[%s6090 + $0x70] sm:$0xff]
  %v6106 = vld [vmem:[%s6090 + $0x78] sm:$0xff]
  %6107 = vmatpush.msra.mxu0 %v6106
  %6108 = vmatpush.msra.mxu0 %v6105
  %6109 = vmatpush.msra.mxu0 %v6104
  %6110 = vmatpush.msra.mxu0 %v6103
  %6111 = vmatpush.msra.mxu0 %v6102
  %6112 = vmatpush.msra.mxu0 %v6101
  %6113 = vmatpush.msra.mxu0 %v6100
  %6114 = vmatpush.msra.mxu0 %v6099
  %6115 = vmatpush.msra.mxu0 %v6098
  %6116 = vmatpush.msra.mxu0 %v6097
  %6117 = vmatpush.msra.mxu0 %v6096
  %6118 = vmatpush.msra.mxu0 %v6095
  %6119 = vmatpush.msra.mxu0 %v6094
  %6120 = vmatpush.msra.mxu0 %v6093
  %6121 = vmatpush.msra.mxu0 %v6092
  %6122 = vmatpush.msra.mxu0 %v6091
  %6123 = vmatmul.f32.gmra.mxu0 %v5442
  %v6124 = vpop.f32.mrf.mxu0
  %v6125 = vadd.f32 0.0, %v6124
  %6126 = vmatmul.f32.gmra.mxu0 %v5443
  %v6127 = vpop.f32.mrf.mxu0
  %v6128 = vadd.f32 0.0, %v6127
  %6129 = vmatmul.f32.gmra.mxu0 %v5444
  %v6130 = vpop.f32.mrf.mxu0
  %v6131 = vadd.f32 0.0, %v6130
  %6132 = vmatmul.f32.gmra.mxu0 %v5445
  %v6133 = vpop.f32.mrf.mxu0
  %v6134 = vadd.f32 0.0, %v6133
  %6135 = vmatmul.f32.gmra.mxu0 %v5446
  %v6136 = vpop.f32.mrf.mxu0
  %v6137 = vadd.f32 0.0, %v6136
  %6138 = vmatmul.f32.gmra.mxu0 %v5447
  %v6139 = vpop.f32.mrf.mxu0
  %v6140 = vadd.f32 0.0, %v6139
  %6141 = vmatmul.f32.gmra.mxu0 %v5448
  %v6142 = vpop.f32.mrf.mxu0
  %v6143 = vadd.f32 0.0, %v6142
  %6144 = vmatmul.f32.gmra.mxu0 %v5449
  %v6145 = vpop.f32.mrf.mxu0
  %v6146 = vadd.f32 0.0, %v6145
  %6147 = vmatmul.f32.gmra.mxu0 %v5450
  %v6148 = vpop.f32.mrf.mxu0
  %v6149 = vadd.f32 0.0, %v6148
  %6150 = vmatmul.f32.gmra.mxu0 %v5451
  %v6151 = vpop.f32.mrf.mxu0
  %v6152 = vadd.f32 0.0, %v6151
  %6153 = vmatmul.f32.gmra.mxu0 %v5452
  %v6154 = vpop.f32.mrf.mxu0
  %v6155 = vadd.f32 0.0, %v6154
  %6156 = vmatmul.f32.gmra.mxu0 %v5453
  %v6157 = vpop.f32.mrf.mxu0
  %v6158 = vadd.f32 0.0, %v6157
  %6159 = vmatmul.f32.gmra.mxu0 %v5454
  %v6160 = vpop.f32.mrf.mxu0
  %v6161 = vadd.f32 0.0, %v6160
  %6162 = vmatmul.f32.gmra.mxu0 %v5455
  %v6163 = vpop.f32.mrf.mxu0
  %v6164 = vadd.f32 0.0, %v6163
  %6165 = vmatmul.f32.gmra.mxu0 %v5456
  %v6166 = vpop.f32.mrf.mxu0
  %v6167 = vadd.f32 0.0, %v6166
  %6168 = vmatmul.f32.gmra.mxu0 %v5457
  %v6169 = vpop.f32.mrf.mxu0
  %v6170 = vadd.f32 0.0, %v6169
  %6171 = vmatmul.f32.gmra.mxu0 %v5458
  %v6172 = vpop.f32.mrf.mxu0
  %v6173 = vadd.f32 0.0, %v6172
  %6174 = vmatmul.f32.gmra.mxu0 %v5459
  %v6175 = vpop.f32.mrf.mxu0
  %v6176 = vadd.f32 0.0, %v6175
  %6177 = vmatmul.f32.gmra.mxu0 %v5460
  %v6178 = vpop.f32.mrf.mxu0
  %v6179 = vadd.f32 0.0, %v6178
  %6180 = vmatmul.f32.gmra.mxu0 %v5461
  %v6181 = vpop.f32.mrf.mxu0
  %v6182 = vadd.f32 0.0, %v6181
  %6183 = vmatmul.f32.gmra.mxu0 %v5462
  %v6184 = vpop.f32.mrf.mxu0
  %v6185 = vadd.f32 0.0, %v6184
  %6186 = vmatmul.f32.gmra.mxu0 %v5463
  %v6187 = vpop.f32.mrf.mxu0
  %v6188 = vadd.f32 0.0, %v6187
  %6189 = vmatmul.f32.gmra.mxu0 %v5464
  %v6190 = vpop.f32.mrf.mxu0
  %v6191 = vadd.f32 0.0, %v6190
  %6192 = vmatmul.f32.gmra.mxu0 %v5465
  %v6193 = vpop.f32.mrf.mxu0
  %v6194 = vadd.f32 0.0, %v6193
  %6195 = vmatmul.f32.gmra.mxu0 %v5466
  %v6196 = vpop.f32.mrf.mxu0
  %v6197 = vadd.f32 0.0, %v6196
  %6198 = vmatmul.f32.gmra.mxu0 %v5467
  %v6199 = vpop.f32.mrf.mxu0
  %v6200 = vadd.f32 0.0, %v6199
  %6201 = vmatmul.f32.gmra.mxu0 %v5468
  %v6202 = vpop.f32.mrf.mxu0
  %v6203 = vadd.f32 0.0, %v6202
  %6204 = vmatmul.f32.gmra.mxu0 %v5469
  %v6205 = vpop.f32.mrf.mxu0
  %v6206 = vadd.f32 0.0, %v6205
  %6207 = vmatmul.f32.gmra.mxu0 %v5470
  %v6208 = vpop.f32.mrf.mxu0
  %v6209 = vadd.f32 0.0, %v6208
  %6210 = vmatmul.f32.gmra.mxu0 %v5471
  %v6211 = vpop.f32.mrf.mxu0
  %v6212 = vadd.f32 0.0, %v6211
  %6213 = vmatmul.f32.gmra.mxu0 %v5472
  %v6214 = vpop.f32.mrf.mxu0
  %v6215 = vadd.f32 0.0, %v6214
  %6216 = vmatmul.f32.gmra.mxu0 %v5473
  %v6217 = vpop.f32.mrf.mxu0
  %v6218 = vadd.f32 0.0, %v6217
  %6219 = vmatmul.f32.gmra.mxu0 %v5478
  %v6220 = vpop.f32.mrf.mxu0
  %v6221 = vadd.f32 0.0, %v6220
  %6222 = vmatmul.f32.gmra.mxu0 %v5479
  %v6223 = vpop.f32.mrf.mxu0
  %v6224 = vadd.f32 0.0, %v6223
  %6225 = vmatmul.f32.gmra.mxu0 %v5480
  %v6226 = vpop.f32.mrf.mxu0
  %v6227 = vadd.f32 0.0, %v6226
  %6228 = vmatmul.f32.gmra.mxu0 %v5481
  %v6229 = vpop.f32.mrf.mxu0
  %v6230 = vadd.f32 0.0, %v6229
  %6231 = vmatmul.f32.gmra.mxu0 %v5482
  %v6232 = vpop.f32.mrf.mxu0
  %v6233 = vadd.f32 0.0, %v6232
  %6234 = vmatmul.f32.gmra.mxu0 %v5483
  %v6235 = vpop.f32.mrf.mxu0
  %v6236 = vadd.f32 0.0, %v6235
  %6237 = vmatmul.f32.gmra.mxu0 %v5484
  %v6238 = vpop.f32.mrf.mxu0
  %v6239 = vadd.f32 0.0, %v6238
  %6240 = vmatmul.f32.gmra.mxu0 %v5485
  %v6241 = vpop.f32.mrf.mxu0
  %v6242 = vadd.f32 0.0, %v6241
  %6243 = vmatmul.f32.gmra.mxu0 %v5486
  %v6244 = vpop.f32.mrf.mxu0
  %v6245 = vadd.f32 0.0, %v6244
  %6246 = vmatmul.f32.gmra.mxu0 %v5487
  %v6247 = vpop.f32.mrf.mxu0
  %v6248 = vadd.f32 0.0, %v6247
  %6249 = vmatmul.f32.gmra.mxu0 %v5488
  %v6250 = vpop.f32.mrf.mxu0
  %v6251 = vadd.f32 0.0, %v6250
  %6252 = vmatmul.f32.gmra.mxu0 %v5489
  %v6253 = vpop.f32.mrf.mxu0
  %v6254 = vadd.f32 0.0, %v6253
  %6255 = vmatmul.f32.gmra.mxu0 %v5490
  %v6256 = vpop.f32.mrf.mxu0
  %v6257 = vadd.f32 0.0, %v6256
  %6258 = vmatmul.f32.gmra.mxu0 %v5491
  %v6259 = vpop.f32.mrf.mxu0
  %v6260 = vadd.f32 0.0, %v6259
  %6261 = vmatmul.f32.gmra.mxu0 %v5492
  %v6262 = vpop.f32.mrf.mxu0
  %v6263 = vadd.f32 0.0, %v6262
  %6264 = vmatmul.f32.gmra.mxu0 %v5493
  %v6265 = vpop.f32.mrf.mxu0
  %v6266 = vadd.f32 0.0, %v6265
  %6267 = vmatmul.f32.gmra.mxu0 %v5494
  %v6268 = vpop.f32.mrf.mxu0
  %v6269 = vadd.f32 0.0, %v6268
  %6270 = vmatmul.f32.gmra.mxu0 %v5495
  %v6271 = vpop.f32.mrf.mxu0
  %v6272 = vadd.f32 0.0, %v6271
  %6273 = vmatmul.f32.gmra.mxu0 %v5496
  %v6274 = vpop.f32.mrf.mxu0
  %v6275 = vadd.f32 0.0, %v6274
  %6276 = vmatmul.f32.gmra.mxu0 %v5497
  %v6277 = vpop.f32.mrf.mxu0
  %v6278 = vadd.f32 0.0, %v6277
  %6279 = vmatmul.f32.gmra.mxu0 %v5498
  %v6280 = vpop.f32.mrf.mxu0
  %v6281 = vadd.f32 0.0, %v6280
  %6282 = vmatmul.f32.gmra.mxu0 %v5499
  %v6283 = vpop.f32.mrf.mxu0
  %v6284 = vadd.f32 0.0, %v6283
  %6285 = vmatmul.f32.gmra.mxu0 %v5500
  %v6286 = vpop.f32.mrf.mxu0
  %v6287 = vadd.f32 0.0, %v6286
  %6288 = vmatmul.f32.gmra.mxu0 %v5501
  %v6289 = vpop.f32.mrf.mxu0
  %v6290 = vadd.f32 0.0, %v6289
  %6291 = vmatmul.f32.gmra.mxu0 %v5502
  %v6292 = vpop.f32.mrf.mxu0
  %v6293 = vadd.f32 0.0, %v6292
  %6294 = vmatmul.f32.gmra.mxu0 %v5503
  %v6295 = vpop.f32.mrf.mxu0
  %v6296 = vadd.f32 0.0, %v6295
  %6297 = vmatmul.f32.gmra.mxu0 %v5504
  %v6298 = vpop.f32.mrf.mxu0
  %v6299 = vadd.f32 0.0, %v6298
  %6300 = vmatmul.f32.gmra.mxu0 %v5505
  %v6301 = vpop.f32.mrf.mxu0
  %v6302 = vadd.f32 0.0, %v6301
  %6303 = vmatmul.f32.gmra.mxu0 %v5506
  %v6304 = vpop.f32.mrf.mxu0
  %v6305 = vadd.f32 0.0, %v6304
  %6306 = vmatmul.f32.gmra.mxu0 %v5507
  %v6307 = vpop.f32.mrf.mxu0
  %v6308 = vadd.f32 0.0, %v6307
  %6309 = vmatmul.f32.gmra.mxu0 %v5508
  %v6310 = vpop.f32.mrf.mxu0
  %v6311 = vadd.f32 0.0, %v6310
  %6312 = vmatmul.f32.gmra.mxu0 %v5509
  %v6313 = vpop.f32.mrf.mxu0
  %v6314 = vadd.f32 0.0, %v6313
  %6315 = vdwg.mxu0
  %v6316 = vadd.f32 %v6026, %v6125
  %v6317 = vadd.f32 %v6027, %v6128
  %v6318 = vadd.f32 %v6028, %v6131
  %v6319 = vadd.f32 %v6029, %v6134
  %v6320 = vadd.f32 %v6030, %v6137
  %v6321 = vadd.f32 %v6031, %v6140
  %v6322 = vadd.f32 %v6032, %v6143
  %v6323 = vadd.f32 %v6033, %v6146
  %v6324 = vadd.f32 %v6034, %v6149
  %v6325 = vadd.f32 %v6035, %v6152
  %v6326 = vadd.f32 %v6036, %v6155
  %v6327 = vadd.f32 %v6037, %v6158
  %v6328 = vadd.f32 %v6038, %v6161
  %v6329 = vadd.f32 %v6039, %v6164
  %v6330 = vadd.f32 %v6040, %v6167
  %v6331 = vadd.f32 %v6041, %v6170
  %v6332 = vadd.f32 %v6042, %v6173
  %v6333 = vadd.f32 %v6043, %v6176
  %v6334 = vadd.f32 %v6044, %v6179
  %v6335 = vadd.f32 %v6045, %v6182
  %v6336 = vadd.f32 %v6046, %v6185
  %v6337 = vadd.f32 %v6047, %v6188
  %v6338 = vadd.f32 %v6048, %v6191
  %v6339 = vadd.f32 %v6049, %v6194
  %v6340 = vadd.f32 %v6050, %v6197
  %v6341 = vadd.f32 %v6051, %v6200
  %v6342 = vadd.f32 %v6052, %v6203
  %v6343 = vadd.f32 %v6053, %v6206
  %v6344 = vadd.f32 %v6054, %v6209
  %v6345 = vadd.f32 %v6055, %v6212
  %v6346 = vadd.f32 %v6056, %v6215
  %v6347 = vadd.f32 %v6057, %v6218
  %v6348 = vadd.f32 %v6058, %v6221
  %v6349 = vadd.f32 %v6059, %v6224
  %v6350 = vadd.f32 %v6060, %v6227
  %v6351 = vadd.f32 %v6061, %v6230
  %v6352 = vadd.f32 %v6062, %v6233
  %v6353 = vadd.f32 %v6063, %v6236
  %v6354 = vadd.f32 %v6064, %v6239
  %v6355 = vadd.f32 %v6065, %v6242
  %v6356 = vadd.f32 %v6066, %v6245
  %v6357 = vadd.f32 %v6067, %v6248
  %v6358 = vadd.f32 %v6068, %v6251
  %v6359 = vadd.f32 %v6069, %v6254
  %v6360 = vadd.f32 %v6070, %v6257
  %v6361 = vadd.f32 %v6071, %v6260
  %v6362 = vadd.f32 %v6072, %v6263
  %v6363 = vadd.f32 %v6073, %v6266
  %v6364 = vadd.f32 %v6074, %v6269
  %v6365 = vadd.f32 %v6075, %v6272
  %v6366 = vadd.f32 %v6076, %v6275
  %v6367 = vadd.f32 %v6077, %v6278
  %v6368 = vadd.f32 %v6078, %v6281
  %v6369 = vadd.f32 %v6079, %v6284
  %v6370 = vadd.f32 %v6080, %v6287
  %v6371 = vadd.f32 %v6081, %v6290
  %v6372 = vadd.f32 %v6082, %v6293
  %v6373 = vadd.f32 %v6083, %v6296
  %v6374 = vadd.f32 %v6084, %v6299
  %v6375 = vadd.f32 %v6085, %v6302
  %v6376 = vadd.f32 %v6086, %v6305
  %v6377 = vadd.f32 %v6087, %v6308
  %v6378 = vadd.f32 %v6088, %v6311
  %v6379 = vadd.f32 %v6089, %v6314
  %v6380 = vld [vmem:[%s6] sm:$0x1]
  %v6382 = vperm.slane %v6380, 0
  %v6384 = vadd.f32 %v6316, %v6382
  %v6385 = vadd.f32 %v6317, %v6382
  %v6386 = vadd.f32 %v6318, %v6382
  %v6387 = vadd.f32 %v6319, %v6382
  %v6388 = vadd.f32 %v6320, %v6382
  %v6389 = vadd.f32 %v6321, %v6382
  %v6390 = vadd.f32 %v6322, %v6382
  %v6391 = vadd.f32 %v6323, %v6382
  %v6392 = vadd.f32 %v6324, %v6382
  %v6393 = vadd.f32 %v6325, %v6382
  %v6394 = vadd.f32 %v6326, %v6382
  %v6395 = vadd.f32 %v6327, %v6382
  %v6396 = vadd.f32 %v6328, %v6382
  %v6397 = vadd.f32 %v6329, %v6382
  %v6398 = vadd.f32 %v6330, %v6382
  %v6399 = vadd.f32 %v6331, %v6382
  %v6400 = vadd.f32 %v6332, %v6382
  %v6401 = vadd.f32 %v6333, %v6382
  %v6402 = vadd.f32 %v6334, %v6382
  %v6403 = vadd.f32 %v6335, %v6382
  %v6404 = vadd.f32 %v6336, %v6382
  %v6405 = vadd.f32 %v6337, %v6382
  %v6406 = vadd.f32 %v6338, %v6382
  %v6407 = vadd.f32 %v6339, %v6382
  %v6408 = vadd.f32 %v6340, %v6382
  %v6409 = vadd.f32 %v6341, %v6382
  %v6410 = vadd.f32 %v6342, %v6382
  %v6411 = vadd.f32 %v6343, %v6382
  %v6412 = vadd.f32 %v6344, %v6382
  %v6413 = vadd.f32 %v6345, %v6382
  %v6414 = vadd.f32 %v6346, %v6382
  %v6415 = vadd.f32 %v6347, %v6382
  %v6416 = vadd.f32 %v6348, %v6382
  %v6417 = vadd.f32 %v6349, %v6382
  %v6418 = vadd.f32 %v6350, %v6382
  %v6419 = vadd.f32 %v6351, %v6382
  %v6420 = vadd.f32 %v6352, %v6382
  %v6421 = vadd.f32 %v6353, %v6382
  %v6422 = vadd.f32 %v6354, %v6382
  %v6423 = vadd.f32 %v6355, %v6382
  %v6424 = vadd.f32 %v6356, %v6382
  %v6425 = vadd.f32 %v6357, %v6382
  %v6426 = vadd.f32 %v6358, %v6382
  %v6427 = vadd.f32 %v6359, %v6382
  %v6428 = vadd.f32 %v6360, %v6382
  %v6429 = vadd.f32 %v6361, %v6382
  %v6430 = vadd.f32 %v6362, %v6382
  %v6431 = vadd.f32 %v6363, %v6382
  %v6432 = vadd.f32 %v6364, %v6382
  %v6433 = vadd.f32 %v6365, %v6382
  %v6434 = vadd.f32 %v6366, %v6382
  %v6435 = vadd.f32 %v6367, %v6382
  %v6436 = vadd.f32 %v6368, %v6382
  %v6437 = vadd.f32 %v6369, %v6382
  %v6438 = vadd.f32 %v6370, %v6382
  %v6439 = vadd.f32 %v6371, %v6382
  %v6440 = vadd.f32 %v6372, %v6382
  %v6441 = vadd.f32 %v6373, %v6382
  %v6442 = vadd.f32 %v6374, %v6382
  %v6443 = vadd.f32 %v6375, %v6382
  %v6444 = vadd.f32 %v6376, %v6382
  %v6445 = vadd.f32 %v6377, %v6382
  %v6446 = vadd.f32 %v6378, %v6382
  %v6447 = vadd.f32 %v6379, %v6382
  %v6448 = vadd.f32 %v6384, %v6385
  %v6449 = vadd.f32 %v6448, %v6386
  %v6450 = vadd.f32 %v6449, %v6387
  %v6451 = vadd.f32 %v6450, %v6388
  %v6452 = vadd.f32 %v6451, %v6389
  %v6453 = vadd.f32 %v6452, %v6390
  %v6454 = vadd.f32 %v6453, %v6391
  %v6455 = vadd.f32 %v6454, %v6392
  %v6456 = vadd.f32 %v6455, %v6393
  %v6457 = vadd.f32 %v6456, %v6394
  %v6458 = vadd.f32 %v6457, %v6395
  %v6459 = vadd.f32 %v6458, %v6396
  %v6460 = vadd.f32 %v6459, %v6397
  %v6461 = vadd.f32 %v6460, %v6398
  %v6462 = vadd.f32 %v6461, %v6399
  %v6463 = vadd.f32 %v6462, %v6400
  %v6464 = vadd.f32 %v6463, %v6401
  %v6465 = vadd.f32 %v6464, %v6402
  %v6466 = vadd.f32 %v6465, %v6403
  %v6467 = vadd.f32 %v6466, %v6404
  %v6468 = vadd.f32 %v6467, %v6405
  %v6469 = vadd.f32 %v6468, %v6406
  %v6470 = vadd.f32 %v6469, %v6407
  %v6471 = vadd.f32 %v6470, %v6408
  %v6472 = vadd.f32 %v6471, %v6409
  %v6473 = vadd.f32 %v6472, %v6410
  %v6474 = vadd.f32 %v6473, %v6411
  %v6475 = vadd.f32 %v6474, %v6412
  %v6476 = vadd.f32 %v6475, %v6413
  %v6477 = vadd.f32 %v6476, %v6414
  %v6478 = vadd.f32 %v6477, %v6415
  %v6479 = vadd.f32 %v6478, %v6416
  %v6480 = vadd.f32 %v6479, %v6417
  %v6481 = vadd.f32 %v6480, %v6418
  %v6482 = vadd.f32 %v6481, %v6419
  %v6483 = vadd.f32 %v6482, %v6420
  %v6484 = vadd.f32 %v6483, %v6421
  %v6485 = vadd.f32 %v6484, %v6422
  %v6486 = vadd.f32 %v6485, %v6423
  %v6487 = vadd.f32 %v6486, %v6424
  %v6488 = vadd.f32 %v6487, %v6425
  %v6489 = vadd.f32 %v6488, %v6426
  %v6490 = vadd.f32 %v6489, %v6427
  %v6491 = vadd.f32 %v6490, %v6428
  %v6492 = vadd.f32 %v6491, %v6429
  %v6493 = vadd.f32 %v6492, %v6430
  %v6494 = vadd.f32 %v6493, %v6431
  %v6495 = vadd.f32 %v6494, %v6432
  %v6496 = vadd.f32 %v6495, %v6433
  %v6497 = vadd.f32 %v6496, %v6434
  %v6498 = vadd.f32 %v6497, %v6435
  %v6499 = vadd.f32 %v6498, %v6436
  %v6500 = vadd.f32 %v6499, %v6437
  %v6501 = vadd.f32 %v6500, %v6438
  %v6502 = vadd.f32 %v6501, %v6439
  %v6503 = vadd.f32 %v6502, %v6440
  %v6504 = vadd.f32 %v6503, %v6441
  %v6505 = vadd.f32 %v6504, %v6442
  %v6506 = vadd.f32 %v6505, %v6443
  %v6507 = vadd.f32 %v6506, %v6444
  %v6508 = vadd.f32 %v6507, %v6445
  %v6509 = vadd.f32 %v6508, %v6446
  %v6510 = vadd.f32 %v6509, %v6447
  %v6511 = vrot.slane %v6510, 4
  %v6512 = vadd.f32 %v6510, %v6511
  %v6513 = vrot.slane %v6512, 2
  %v6514 = vadd.f32 %v6512, %v6513
  %v6515 = vrot.slane %v6514, 1
  %v6516 = vadd.f32 %v6514, %v6515
  %v6517 = vmul.f32 %v6516, 0.001953125
  %v6518 = vsub.f32 %v6384, %v6517
  %v6519 = vsub.f32 %v6385, %v6517
  %v6520 = vsub.f32 %v6386, %v6517
  %v6521 = vsub.f32 %v6387, %v6517
  %v6522 = vsub.f32 %v6388, %v6517
  %v6523 = vsub.f32 %v6389, %v6517
  %v6524 = vsub.f32 %v6390, %v6517
  %v6525 = vsub.f32 %v6391, %v6517
  %v6526 = vsub.f32 %v6392, %v6517
  %v6527 = vsub.f32 %v6393, %v6517
  %v6528 = vsub.f32 %v6394, %v6517
  %v6529 = vsub.f32 %v6395, %v6517
  %v6530 = vsub.f32 %v6396, %v6517
  %v6531 = vsub.f32 %v6397, %v6517
  %v6532 = vsub.f32 %v6398, %v6517
  %v6533 = vsub.f32 %v6399, %v6517
  %v6534 = vsub.f32 %v6400, %v6517
  %v6535 = vsub.f32 %v6401, %v6517
  %v6536 = vsub.f32 %v6402, %v6517
  %v6537 = vsub.f32 %v6403, %v6517
  %v6538 = vsub.f32 %v6404, %v6517
  %v6539 = vsub.f32 %v6405, %v6517
  %v6540 = vsub.f32 %v6406, %v6517
  %v6541 = vsub.f32 %v6407, %v6517
  %v6542 = vsub.f32 %v6408, %v6517
  %v6543 = vsub.f32 %v6409, %v6517
  %v6544 = vsub.f32 %v6410, %v6517
  %v6545 = vsub.f32 %v6411, %v6517
  %v6546 = vsub.f32 %v6412, %v6517
  %v6547 = vsub.f32 %v6413, %v6517
  %v6548 = vsub.f32 %v6414, %v6517
  %v6549 = vsub.f32 %v6415, %v6517
  %v6550 = vsub.f32 %v6416, %v6517
  %v6551 = vsub.f32 %v6417, %v6517
  %v6552 = vsub.f32 %v6418, %v6517
  %v6553 = vsub.f32 %v6419, %v6517
  %v6554 = vsub.f32 %v6420, %v6517
  %v6555 = vsub.f32 %v6421, %v6517
  %v6556 = vsub.f32 %v6422, %v6517
  %v6557 = vsub.f32 %v6423, %v6517
  %v6558 = vsub.f32 %v6424, %v6517
  %v6559 = vsub.f32 %v6425, %v6517
  %v6560 = vsub.f32 %v6426, %v6517
  %v6561 = vsub.f32 %v6427, %v6517
  %v6562 = vsub.f32 %v6428, %v6517
  %v6563 = vsub.f32 %v6429, %v6517
  %v6564 = vsub.f32 %v6430, %v6517
  %v6565 = vsub.f32 %v6431, %v6517
  %v6566 = vsub.f32 %v6432, %v6517
  %v6567 = vsub.f32 %v6433, %v6517
  %v6568 = vsub.f32 %v6434, %v6517
  %v6569 = vsub.f32 %v6435, %v6517
  %v6570 = vsub.f32 %v6436, %v6517
  %v6571 = vsub.f32 %v6437, %v6517
  %v6572 = vsub.f32 %v6438, %v6517
  %v6573 = vsub.f32 %v6439, %v6517
  %v6574 = vsub.f32 %v6440, %v6517
  %v6575 = vsub.f32 %v6441, %v6517
  %v6576 = vsub.f32 %v6442, %v6517
  %v6577 = vsub.f32 %v6443, %v6517
  %v6578 = vsub.f32 %v6444, %v6517
  %v6579 = vsub.f32 %v6445, %v6517
  %v6580 = vsub.f32 %v6446, %v6517
  %v6581 = vsub.f32 %v6447, %v6517
  %v6582 = vmul.f32 %v6518, %v6518
  %v6583 = vmul.f32 %v6519, %v6519
  %v6584 = vmul.f32 %v6520, %v6520
  %v6585 = vmul.f32 %v6521, %v6521
  %v6586 = vmul.f32 %v6522, %v6522
  %v6587 = vmul.f32 %v6523, %v6523
  %v6588 = vmul.f32 %v6524, %v6524
  %v6589 = vmul.f32 %v6525, %v6525
  %v6590 = vmul.f32 %v6526, %v6526
  %v6591 = vmul.f32 %v6527, %v6527
  %v6592 = vmul.f32 %v6528, %v6528
  %v6593 = vmul.f32 %v6529, %v6529
  %v6594 = vmul.f32 %v6530, %v6530
  %v6595 = vmul.f32 %v6531, %v6531
  %v6596 = vmul.f32 %v6532, %v6532
  %v6597 = vmul.f32 %v6533, %v6533
  %v6598 = vmul.f32 %v6534, %v6534
  %v6599 = vmul.f32 %v6535, %v6535
  %v6600 = vmul.f32 %v6536, %v6536
  %v6601 = vmul.f32 %v6537, %v6537
  %v6602 = vmul.f32 %v6538, %v6538
  %v6603 = vmul.f32 %v6539, %v6539
  %v6604 = vmul.f32 %v6540, %v6540
  %v6605 = vmul.f32 %v6541, %v6541
  %v6606 = vmul.f32 %v6542, %v6542
  %v6607 = vmul.f32 %v6543, %v6543
  %v6608 = vmul.f32 %v6544, %v6544
  %v6609 = vmul.f32 %v6545, %v6545
  %v6610 = vmul.f32 %v6546, %v6546
  %v6611 = vmul.f32 %v6547, %v6547
  %v6612 = vmul.f32 %v6548, %v6548
  %v6613 = vmul.f32 %v6549, %v6549
  %v6614 = vmul.f32 %v6550, %v6550
  %v6615 = vmul.f32 %v6551, %v6551
  %v6616 = vmul.f32 %v6552, %v6552
  %v6617 = vmul.f32 %v6553, %v6553
  %v6618 = vmul.f32 %v6554, %v6554
  %v6619 = vmul.f32 %v6555, %v6555
  %v6620 = vmul.f32 %v6556, %v6556
  %v6621 = vmul.f32 %v6557, %v6557
  %v6622 = vmul.f32 %v6558, %v6558
  %v6623 = vmul.f32 %v6559, %v6559
  %v6624 = vmul.f32 %v6560, %v6560
  %v6625 = vmul.f32 %v6561, %v6561
  %v6626 = vmul.f32 %v6562, %v6562
  %v6627 = vmul.f32 %v6563, %v6563
  %v6628 = vmul.f32 %v6564, %v6564
  %v6629 = vmul.f32 %v6565, %v6565
  %v6630 = vmul.f32 %v6566, %v6566
  %v6631 = vmul.f32 %v6567, %v6567
  %v6632 = vmul.f32 %v6568, %v6568
  %v6633 = vmul.f32 %v6569, %v6569
  %v6634 = vmul.f32 %v6570, %v6570
  %v6635 = vmul.f32 %v6571, %v6571
  %v6636 = vmul.f32 %v6572, %v6572
  %v6637 = vmul.f32 %v6573, %v6573
  %v6638 = vmul.f32 %v6574, %v6574
  %v6639 = vmul.f32 %v6575, %v6575
  %v6640 = vmul.f32 %v6576, %v6576
  %v6641 = vmul.f32 %v6577, %v6577
  %v6642 = vmul.f32 %v6578, %v6578
  %v6643 = vmul.f32 %v6579, %v6579
  %v6644 = vmul.f32 %v6580, %v6580
  %v6645 = vmul.f32 %v6581, %v6581
  %v6646 = vadd.f32 %v6582, %v6583
  %v6647 = vadd.f32 %v6646, %v6584
  %v6648 = vadd.f32 %v6647, %v6585
  %v6649 = vadd.f32 %v6648, %v6586
  %v6650 = vadd.f32 %v6649, %v6587
  %v6651 = vadd.f32 %v6650, %v6588
  %v6652 = vadd.f32 %v6651, %v6589
  %v6653 = vadd.f32 %v6652, %v6590
  %v6654 = vadd.f32 %v6653, %v6591
  %v6655 = vadd.f32 %v6654, %v6592
  %v6656 = vadd.f32 %v6655, %v6593
  %v6657 = vadd.f32 %v6656, %v6594
  %v6658 = vadd.f32 %v6657, %v6595
  %v6659 = vadd.f32 %v6658, %v6596
  %v6660 = vadd.f32 %v6659, %v6597
  %v6661 = vadd.f32 %v6660, %v6598
  %v6662 = vadd.f32 %v6661, %v6599
  %v6663 = vadd.f32 %v6662, %v6600
  %v6664 = vadd.f32 %v6663, %v6601
  %v6665 = vadd.f32 %v6664, %v6602
  %v6666 = vadd.f32 %v6665, %v6603
  %v6667 = vadd.f32 %v6666, %v6604
  %v6668 = vadd.f32 %v6667, %v6605
  %v6669 = vadd.f32 %v6668, %v6606
  %v6670 = vadd.f32 %v6669, %v6607
  %v6671 = vadd.f32 %v6670, %v6608
  %v6672 = vadd.f32 %v6671, %v6609
  %v6673 = vadd.f32 %v6672, %v6610
  %v6674 = vadd.f32 %v6673, %v6611
  %v6675 = vadd.f32 %v6674, %v6612
  %v6676 = vadd.f32 %v6675, %v6613
  %v6677 = vadd.f32 %v6676, %v6614
  %v6678 = vadd.f32 %v6677, %v6615
  %v6679 = vadd.f32 %v6678, %v6616
  %v6680 = vadd.f32 %v6679, %v6617
  %v6681 = vadd.f32 %v6680, %v6618
  %v6682 = vadd.f32 %v6681, %v6619
  %v6683 = vadd.f32 %v6682, %v6620
  %v6684 = vadd.f32 %v6683, %v6621
  %v6685 = vadd.f32 %v6684, %v6622
  %v6686 = vadd.f32 %v6685, %v6623
  %v6687 = vadd.f32 %v6686, %v6624
  %v6688 = vadd.f32 %v6687, %v6625
  %v6689 = vadd.f32 %v6688, %v6626
  %v6690 = vadd.f32 %v6689, %v6627
  %v6691 = vadd.f32 %v6690, %v6628
  %v6692 = vadd.f32 %v6691, %v6629
  %v6693 = vadd.f32 %v6692, %v6630
  %v6694 = vadd.f32 %v6693, %v6631
  %v6695 = vadd.f32 %v6694, %v6632
  %v6696 = vadd.f32 %v6695, %v6633
  %v6697 = vadd.f32 %v6696, %v6634
  %v6698 = vadd.f32 %v6697, %v6635
  %v6699 = vadd.f32 %v6698, %v6636
  %v6700 = vadd.f32 %v6699, %v6637
  %v6701 = vadd.f32 %v6700, %v6638
  %v6702 = vadd.f32 %v6701, %v6639
  %v6703 = vadd.f32 %v6702, %v6640
  %v6704 = vadd.f32 %v6703, %v6641
  %v6705 = vadd.f32 %v6704, %v6642
  %v6706 = vadd.f32 %v6705, %v6643
  %v6707 = vadd.f32 %v6706, %v6644
  %v6708 = vadd.f32 %v6707, %v6645
  %v6709 = vrot.slane %v6708, 4
  %v6710 = vadd.f32 %v6708, %v6709
  %v6711 = vrot.slane %v6710, 2
  %v6712 = vadd.f32 %v6710, %v6711
  %v6713 = vrot.slane %v6712, 1
  %v6714 = vadd.f32 %v6712, %v6713
  %v6715 = vmul.f32 %v6714, 0.001953125
  %v6716 = vadd.f32 %v6715, 1e-05
  %v6717 = vrsqrt.pop %v6716
  %v6718 = vmul.f32 %v6717, %v6716
  %v6719 = vmul.f32 %v6718, %v6717
  %v6720 = vmul.f32 0.5, %v6719
  %v6721 = vsub.f32 1.5, %v6720
  %v6722 = vmul.f32 %v6717, %v6721
  %vm6723 = vweird.f32 %v6716
  %vm6724 = vweird.f32 %v6717
  %vm6725 = vmor %vm6723, %vm6724
  %v6726 = vsel %vm6725, %v6717, %v6722
  %v6727 = vmul.f32 %v6518, %v6726
  %v6728 = vmul.f32 %v6519, %v6726
  %v6729 = vmul.f32 %v6520, %v6726
  %v6730 = vmul.f32 %v6521, %v6726
  %v6731 = vmul.f32 %v6522, %v6726
  %v6732 = vmul.f32 %v6523, %v6726
  %v6733 = vmul.f32 %v6524, %v6726
  %v6734 = vmul.f32 %v6525, %v6726
  %v6735 = vmul.f32 %v6526, %v6726
  %v6736 = vmul.f32 %v6527, %v6726
  %v6737 = vmul.f32 %v6528, %v6726
  %v6738 = vmul.f32 %v6529, %v6726
  %v6739 = vmul.f32 %v6530, %v6726
  %v6740 = vmul.f32 %v6531, %v6726
  %v6741 = vmul.f32 %v6532, %v6726
  %v6742 = vmul.f32 %v6533, %v6726
  %v6743 = vmul.f32 %v6534, %v6726
  %v6744 = vmul.f32 %v6535, %v6726
  %v6745 = vmul.f32 %v6536, %v6726
  %v6746 = vmul.f32 %v6537, %v6726
  %v6747 = vmul.f32 %v6538, %v6726
  %v6748 = vmul.f32 %v6539, %v6726
  %v6749 = vmul.f32 %v6540, %v6726
  %v6750 = vmul.f32 %v6541, %v6726
  %v6751 = vmul.f32 %v6542, %v6726
  %v6752 = vmul.f32 %v6543, %v6726
  %v6753 = vmul.f32 %v6544, %v6726
  %v6754 = vmul.f32 %v6545, %v6726
  %v6755 = vmul.f32 %v6546, %v6726
  %v6756 = vmul.f32 %v6547, %v6726
  %v6757 = vmul.f32 %v6548, %v6726
  %v6758 = vmul.f32 %v6549, %v6726
  %v6759 = vmul.f32 %v6550, %v6726
  %v6760 = vmul.f32 %v6551, %v6726
  %v6761 = vmul.f32 %v6552, %v6726
  %v6762 = vmul.f32 %v6553, %v6726
  %v6763 = vmul.f32 %v6554, %v6726
  %v6764 = vmul.f32 %v6555, %v6726
  %v6765 = vmul.f32 %v6556, %v6726
  %v6766 = vmul.f32 %v6557, %v6726
  %v6767 = vmul.f32 %v6558, %v6726
  %v6768 = vmul.f32 %v6559, %v6726
  %v6769 = vmul.f32 %v6560, %v6726
  %v6770 = vmul.f32 %v6561, %v6726
  %v6771 = vmul.f32 %v6562, %v6726
  %v6772 = vmul.f32 %v6563, %v6726
  %v6773 = vmul.f32 %v6564, %v6726
  %v6774 = vmul.f32 %v6565, %v6726
  %v6775 = vmul.f32 %v6566, %v6726
  %v6776 = vmul.f32 %v6567, %v6726
  %v6777 = vmul.f32 %v6568, %v6726
  %v6778 = vmul.f32 %v6569, %v6726
  %v6779 = vmul.f32 %v6570, %v6726
  %v6780 = vmul.f32 %v6571, %v6726
  %v6781 = vmul.f32 %v6572, %v6726
  %v6782 = vmul.f32 %v6573, %v6726
  %v6783 = vmul.f32 %v6574, %v6726
  %v6784 = vmul.f32 %v6575, %v6726
  %v6785 = vmul.f32 %v6576, %v6726
  %v6786 = vmul.f32 %v6577, %v6726
  %v6787 = vmul.f32 %v6578, %v6726
  %v6788 = vmul.f32 %v6579, %v6726
  %v6789 = vmul.f32 %v6580, %v6726
  %v6790 = vmul.f32 %v6581, %v6726
  %v6791 = vld [vmem:[%s7] sm:$0x1]
  %v6793 = vperm.slane %v6791, 0
  %v6795 = vmul.f32 %v6727, %v6793
  %v6796 = vmul.f32 %v6728, %v6793
  %v6797 = vmul.f32 %v6729, %v6793
  %v6798 = vmul.f32 %v6730, %v6793
  %v6799 = vmul.f32 %v6731, %v6793
  %v6800 = vmul.f32 %v6732, %v6793
  %v6801 = vmul.f32 %v6733, %v6793
  %v6802 = vmul.f32 %v6734, %v6793
  %v6803 = vmul.f32 %v6735, %v6793
  %v6804 = vmul.f32 %v6736, %v6793
  %v6805 = vmul.f32 %v6737, %v6793
  %v6806 = vmul.f32 %v6738, %v6793
  %v6807 = vmul.f32 %v6739, %v6793
  %v6808 = vmul.f32 %v6740, %v6793
  %v6809 = vmul.f32 %v6741, %v6793
  %v6810 = vmul.f32 %v6742, %v6793
  %v6811 = vmul.f32 %v6743, %v6793
  %v6812 = vmul.f32 %v6744, %v6793
  %v6813 = vmul.f32 %v6745, %v6793
  %v6814 = vmul.f32 %v6746, %v6793
  %v6815 = vmul.f32 %v6747, %v6793
  %v6816 = vmul.f32 %v6748, %v6793
  %v6817 = vmul.f32 %v6749, %v6793
  %v6818 = vmul.f32 %v6750, %v6793
  %v6819 = vmul.f32 %v6751, %v6793
  %v6820 = vmul.f32 %v6752, %v6793
  %v6821 = vmul.f32 %v6753, %v6793
  %v6822 = vmul.f32 %v6754, %v6793
  %v6823 = vmul.f32 %v6755, %v6793
  %v6824 = vmul.f32 %v6756, %v6793
  %v6825 = vmul.f32 %v6757, %v6793
  %v6826 = vmul.f32 %v6758, %v6793
  %v6827 = vmul.f32 %v6759, %v6793
  %v6828 = vmul.f32 %v6760, %v6793
  %v6829 = vmul.f32 %v6761, %v6793
  %v6830 = vmul.f32 %v6762, %v6793
  %v6831 = vmul.f32 %v6763, %v6793
  %v6832 = vmul.f32 %v6764, %v6793
  %v6833 = vmul.f32 %v6765, %v6793
  %v6834 = vmul.f32 %v6766, %v6793
  %v6835 = vmul.f32 %v6767, %v6793
  %v6836 = vmul.f32 %v6768, %v6793
  %v6837 = vmul.f32 %v6769, %v6793
  %v6838 = vmul.f32 %v6770, %v6793
  %v6839 = vmul.f32 %v6771, %v6793
  %v6840 = vmul.f32 %v6772, %v6793
  %v6841 = vmul.f32 %v6773, %v6793
  %v6842 = vmul.f32 %v6774, %v6793
  %v6843 = vmul.f32 %v6775, %v6793
  %v6844 = vmul.f32 %v6776, %v6793
  %v6845 = vmul.f32 %v6777, %v6793
  %v6846 = vmul.f32 %v6778, %v6793
  %v6847 = vmul.f32 %v6779, %v6793
  %v6848 = vmul.f32 %v6780, %v6793
  %v6849 = vmul.f32 %v6781, %v6793
  %v6850 = vmul.f32 %v6782, %v6793
  %v6851 = vmul.f32 %v6783, %v6793
  %v6852 = vmul.f32 %v6784, %v6793
  %v6853 = vmul.f32 %v6785, %v6793
  %v6854 = vmul.f32 %v6786, %v6793
  %v6855 = vmul.f32 %v6787, %v6793
  %v6856 = vmul.f32 %v6788, %v6793
  %v6857 = vmul.f32 %v6789, %v6793
  %v6858 = vmul.f32 %v6790, %v6793
  %v6859 = vld [vmem:[%s8] sm:$0x1]
  %v6861 = vperm.slane %v6859, 0
  %v6863 = vadd.f32 %v6795, %v6861
  %v6864 = vadd.f32 %v6796, %v6861
  %v6865 = vadd.f32 %v6797, %v6861
  %v6866 = vadd.f32 %v6798, %v6861
  %v6867 = vadd.f32 %v6799, %v6861
  %v6868 = vadd.f32 %v6800, %v6861
  %v6869 = vadd.f32 %v6801, %v6861
  %v6870 = vadd.f32 %v6802, %v6861
  %v6871 = vadd.f32 %v6803, %v6861
  %v6872 = vadd.f32 %v6804, %v6861
  %v6873 = vadd.f32 %v6805, %v6861
  %v6874 = vadd.f32 %v6806, %v6861
  %v6875 = vadd.f32 %v6807, %v6861
  %v6876 = vadd.f32 %v6808, %v6861
  %v6877 = vadd.f32 %v6809, %v6861
  %v6878 = vadd.f32 %v6810, %v6861
  %v6879 = vadd.f32 %v6811, %v6861
  %v6880 = vadd.f32 %v6812, %v6861
  %v6881 = vadd.f32 %v6813, %v6861
  %v6882 = vadd.f32 %v6814, %v6861
  %v6883 = vadd.f32 %v6815, %v6861
  %v6884 = vadd.f32 %v6816, %v6861
  %v6885 = vadd.f32 %v6817, %v6861
  %v6886 = vadd.f32 %v6818, %v6861
  %v6887 = vadd.f32 %v6819, %v6861
  %v6888 = vadd.f32 %v6820, %v6861
  %v6889 = vadd.f32 %v6821, %v6861
  %v6890 = vadd.f32 %v6822, %v6861
  %v6891 = vadd.f32 %v6823, %v6861
  %v6892 = vadd.f32 %v6824, %v6861
  %v6893 = vadd.f32 %v6825, %v6861
  %v6894 = vadd.f32 %v6826, %v6861
  %v6895 = vadd.f32 %v6827, %v6861
  %v6896 = vadd.f32 %v6828, %v6861
  %v6897 = vadd.f32 %v6829, %v6861
  %v6898 = vadd.f32 %v6830, %v6861
  %v6899 = vadd.f32 %v6831, %v6861
  %v6900 = vadd.f32 %v6832, %v6861
  %v6901 = vadd.f32 %v6833, %v6861
  %v6902 = vadd.f32 %v6834, %v6861
  %v6903 = vadd.f32 %v6835, %v6861
  %v6904 = vadd.f32 %v6836, %v6861
  %v6905 = vadd.f32 %v6837, %v6861
  %v6906 = vadd.f32 %v6838, %v6861
  %v6907 = vadd.f32 %v6839, %v6861
  %v6908 = vadd.f32 %v6840, %v6861
  %v6909 = vadd.f32 %v6841, %v6861
  %v6910 = vadd.f32 %v6842, %v6861
  %v6911 = vadd.f32 %v6843, %v6861
  %v6912 = vadd.f32 %v6844, %v6861
  %v6913 = vadd.f32 %v6845, %v6861
  %v6914 = vadd.f32 %v6846, %v6861
  %v6915 = vadd.f32 %v6847, %v6861
  %v6916 = vadd.f32 %v6848, %v6861
  %v6917 = vadd.f32 %v6849, %v6861
  %v6918 = vadd.f32 %v6850, %v6861
  %v6919 = vadd.f32 %v6851, %v6861
  %v6920 = vadd.f32 %v6852, %v6861
  %v6921 = vadd.f32 %v6853, %v6861
  %v6922 = vadd.f32 %v6854, %v6861
  %v6923 = vadd.f32 %v6855, %v6861
  %v6924 = vadd.f32 %v6856, %v6861
  %v6925 = vadd.f32 %v6857, %v6861
  %v6926 = vadd.f32 %v6858, %v6861
  %v6927 = vmax.f32 %v6863, 0.0
  %v6928 = vmax.f32 %v6864, 0.0
  %v6929 = vmax.f32 %v6865, 0.0
  %v6930 = vmax.f32 %v6866, 0.0
  %v6931 = vmax.f32 %v6867, 0.0
  %v6932 = vmax.f32 %v6868, 0.0
  %v6933 = vmax.f32 %v6869, 0.0
  %v6934 = vmax.f32 %v6870, 0.0
  %v6935 = vmax.f32 %v6871, 0.0
  %v6936 = vmax.f32 %v6872, 0.0
  %v6937 = vmax.f32 %v6873, 0.0
  %v6938 = vmax.f32 %v6874, 0.0
  %v6939 = vmax.f32 %v6875, 0.0
  %v6940 = vmax.f32 %v6876, 0.0
  %v6941 = vmax.f32 %v6877, 0.0
  %v6942 = vmax.f32 %v6878, 0.0
  %v6943 = vmax.f32 %v6879, 0.0
  %v6944 = vmax.f32 %v6880, 0.0
  %v6945 = vmax.f32 %v6881, 0.0
  %v6946 = vmax.f32 %v6882, 0.0
  %v6947 = vmax.f32 %v6883, 0.0
  %v6948 = vmax.f32 %v6884, 0.0
  %v6949 = vmax.f32 %v6885, 0.0
  %v6950 = vmax.f32 %v6886, 0.0
  %v6951 = vmax.f32 %v6887, 0.0
  %v6952 = vmax.f32 %v6888, 0.0
  %v6953 = vmax.f32 %v6889, 0.0
  %v6954 = vmax.f32 %v6890, 0.0
  %v6955 = vmax.f32 %v6891, 0.0
  %v6956 = vmax.f32 %v6892, 0.0
  %v6957 = vmax.f32 %v6893, 0.0
  %v6958 = vmax.f32 %v6894, 0.0
  %v6959 = vmax.f32 %v6895, 0.0
  %v6960 = vmax.f32 %v6896, 0.0
  %v6961 = vmax.f32 %v6897, 0.0
  %v6962 = vmax.f32 %v6898, 0.0
  %v6963 = vmax.f32 %v6899, 0.0
  %v6964 = vmax.f32 %v6900, 0.0
  %v6965 = vmax.f32 %v6901, 0.0
  %v6966 = vmax.f32 %v6902, 0.0
  %v6967 = vmax.f32 %v6903, 0.0
  %v6968 = vmax.f32 %v6904, 0.0
  %v6969 = vmax.f32 %v6905, 0.0
  %v6970 = vmax.f32 %v6906, 0.0
  %v6971 = vmax.f32 %v6907, 0.0
  %v6972 = vmax.f32 %v6908, 0.0
  %v6973 = vmax.f32 %v6909, 0.0
  %v6974 = vmax.f32 %v6910, 0.0
  %v6975 = vmax.f32 %v6911, 0.0
  %v6976 = vmax.f32 %v6912, 0.0
  %v6977 = vmax.f32 %v6913, 0.0
  %v6978 = vmax.f32 %v6914, 0.0
  %v6979 = vmax.f32 %v6915, 0.0
  %v6980 = vmax.f32 %v6916, 0.0
  %v6981 = vmax.f32 %v6917, 0.0
  %v6982 = vmax.f32 %v6918, 0.0
  %v6983 = vmax.f32 %v6919, 0.0
  %v6984 = vmax.f32 %v6920, 0.0
  %v6985 = vmax.f32 %v6921, 0.0
  %v6986 = vmax.f32 %v6922, 0.0
  %v6987 = vmax.f32 %v6923, 0.0
  %v6988 = vmax.f32 %v6924, 0.0
  %v6989 = vmax.f32 %v6925, 0.0
  %v6990 = vmax.f32 %v6926, 0.0
  %6991 = vst [vmem:[%s9] sm:$0xff] %v6927
  %6992 = vst [vmem:[%s9 + $0x8] sm:$0xff] %v6928
  %6993 = vst [vmem:[%s9 + $0x10] sm:$0xff] %v6929
  %6994 = vst [vmem:[%s9 + $0x18] sm:$0xff] %v6930
  %6995 = vst [vmem:[%s9 + $0x20] sm:$0xff] %v6931
  %6996 = vst [vmem:[%s9 + $0x28] sm:$0xff] %v6932
  %6997 = vst [vmem:[%s9 + $0x30] sm:$0xff] %v6933
  %6998 = vst [vmem:[%s9 + $0x38] sm:$0xff] %v6934
  %6999 = vst [vmem:[%s9 + $0x40] sm:$0xff] %v6935
  %7000 = vst [vmem:[%s9 + $0x48] sm:$0xff] %v6936
  %7001 = vst [vmem:[%s9 + $0x50] sm:$0xff] %v6937
  %7002 = vst [vmem:[%s9 + $0x58] sm:$0xff] %v6938
  %7003 = vst [vmem:[%s9 + $0x60] sm:$0xff] %v6939
  %7004 = vst [vmem:[%s9 + $0x68] sm:$0xff] %v6940
  %7005 = vst [vmem:[%s9 + $0x70] sm:$0xff] %v6941
  %7006 = vst [vmem:[%s9 + $0x78] sm:$0xff] %v6942
  %7007 = vst [vmem:[%s9 + $0x80] sm:$0xff] %v6943
  %7008 = vst [vmem:[%s9 + $0x88] sm:$0xff] %v6944
  %7009 = vst [vmem:[%s9 + $0x90] sm:$0xff] %v6945
  %7010 = vst [vmem:[%s9 + $0x98] sm:$0xff] %v6946
  %7011 = vst [vmem:[%s9 + $0xa0] sm:$0xff] %v6947
  %7012 = vst [vmem:[%s9 + $0xa8] sm:$0xff] %v6948
  %7013 = vst [vmem:[%s9 + $0xb0] sm:$0xff] %v6949
  %7014 = vst [vmem:[%s9 + $0xb8] sm:$0xff] %v6950
  %7015 = vst [vmem:[%s9 + $0xc0] sm:$0xff] %v6951
  %7016 = vst [vmem:[%s9 + $0xc8] sm:$0xff] %v6952
  %7017 = vst [vmem:[%s9 + $0xd0] sm:$0xff] %v6953
  %7018 = vst [vmem:[%s9 + $0xd8] sm:$0xff] %v6954
  %7019 = vst [vmem:[%s9 + $0xe0] sm:$0xff] %v6955
  %7020 = vst [vmem:[%s9 + $0xe8] sm:$0xff] %v6956
  %7021 = vst [vmem:[%s9 + $0xf0] sm:$0xff] %v6957
  %7022 = vst [vmem:[%s9 + $0xf8] sm:$0xff] %v6958
  %7023 = vst [vmem:[%s9 + $0x100] sm:$0xff] %v6959
  %7024 = vst [vmem:[%s9 + $0x108] sm:$0xff] %v6960
  %7025 = vst [vmem:[%s9 + $0x110] sm:$0xff] %v6961
  %7026 = vst [vmem:[%s9 + $0x118] sm:$0xff] %v6962
  %7027 = vst [vmem:[%s9 + $0x120] sm:$0xff] %v6963
  %7028 = vst [vmem:[%s9 + $0x128] sm:$0xff] %v6964
  %7029 = vst [vmem:[%s9 + $0x130] sm:$0xff] %v6965
  %7030 = vst [vmem:[%s9 + $0x138] sm:$0xff] %v6966
  %7031 = vst [vmem:[%s9 + $0x140] sm:$0xff] %v6967
  %7032 = vst [vmem:[%s9 + $0x148] sm:$0xff] %v6968
  %7033 = vst [vmem:[%s9 + $0x150] sm:$0xff] %v6969
  %7034 = vst [vmem:[%s9 + $0x158] sm:$0xff] %v6970
  %7035 = vst [vmem:[%s9 + $0x160] sm:$0xff] %v6971
  %7036 = vst [vmem:[%s9 + $0x168] sm:$0xff] %v6972
  %7037 = vst [vmem:[%s9 + $0x170] sm:$0xff] %v6973
  %7038 = vst [vmem:[%s9 + $0x178] sm:$0xff] %v6974
  %7039 = vst [vmem:[%s9 + $0x180] sm:$0xff] %v6975
  %7040 = vst [vmem:[%s9 + $0x188] sm:$0xff] %v6976
  %7041 = vst [vmem:[%s9 + $0x190] sm:$0xff] %v6977
  %7042 = vst [vmem:[%s9 + $0x198] sm:$0xff] %v6978
  %7043 = vst [vmem:[%s9 + $0x1a0] sm:$0xff] %v6979
  %7044 = vst [vmem:[%s9 + $0x1a8] sm:$0xff] %v6980
  %7045 = vst [vmem:[%s9 + $0x1b0] sm:$0xff] %v6981
  %7046 = vst [vmem:[%s9 + $0x1b8] sm:$0xff] %v6982
  %7047 = vst [vmem:[%s9 + $0x1c0] sm:$0xff] %v6983
  %7048 = vst [vmem:[%s9 + $0x1c8] sm:$0xff] %v6984
  %7049 = vst [vmem:[%s9 + $0x1d0] sm:$0xff] %v6985
  %7050 = vst [vmem:[%s9 + $0x1d8] sm:$0xff] %v6986
  %7051 = vst [vmem:[%s9 + $0x1e0] sm:$0xff] %v6987
  %7052 = vst [vmem:[%s9 + $0x1e8] sm:$0xff] %v6988
  %7053 = vst [vmem:[%s9 + $0x1f0] sm:$0xff] %v6989
  %7054 = vst [vmem:[%s9 + $0x1f8] sm:$0xff] %v6990
  // Predicated region
  $region38: #{conv_block_forward.1} parent=0 // pred_check
    _
  $region39: #{conv_block_forward.1} parent=0 // pred_check_branch
    %7056 = sbr.rel (0) target = $region41
  $region40: #{conv_block_forward.1} parent=0 // pred_region
    _
  $region41: #{conv_block_forward.1} parent=0 // pred_fallthru
    _
  // Predicated region
  $region42: #{conv_block_forward.1} parent=0 // pred_check
    _
  $region43: #{conv_block_forward.1} parent=0 // pred_check_branch
    %7058 = sbr.rel (0) target = $region45
  $region44: #{conv_block_forward.1} parent=0 // pred_region
    _
  $region45: #{conv_block_forward.1} parent=0 // pred_fallthru
    _

</llo_original>
